<compile_context>
chip_gen: v6e
topology: v6e:2x2x1
jax: 0.10.0
libtpu: 0.0.40
codegen_flags: <defaults>
</compile_context>

<pallas_src>
import functools

import numpy as np
import jax
import jax.numpy as jnp
from jax.experimental import pallas as pl
from jax.experimental.pallas import tpu as pltpu

_EPS = 1e-5
_VMEM = pl.BlockSpec(memory_space=pltpu.MemorySpace.VMEM)


# --------------------------- in-kernel building blocks ------------------------------
def _conv_bn_relu(x, w_taps_ref, shift, K):
    """Valid conv (stride 1) + folded BN(eval) shift + ReLU.

    x:           (B, Cin, H, W) value.
    w_taps_ref:  (Cin*K*K, 1, Cout, 1, Wo) VMEM ref; BN scale already folded in,
                 each tap's weight replicated along the lane (Wo) axis so the
                 in-kernel broadcast is a plain sublane/leading-dim broadcast.
    shift:       (1, Cout, 1, Wo) value (BN shift + conv bias, lane-replicated).
    """
    B, Cin, H, W = x.shape
    Cout = shift.shape[1]
    Ho, Wo = H - K + 1, W - K + 1
    acc = jnp.zeros((B, Cout, Ho, Wo), jnp.float32)
    t = 0
    for ci in range(Cin):
        for dy in range(K):
            for dx in range(K):
                tap = x[:, ci:ci + 1, dy:dy + Ho, dx:dx + Wo]      # (B,1,Ho,Wo)
                acc = acc + w_taps_ref[t] * tap                    # all Cout at once
                t += 1
    return jnp.maximum(acc + shift, 0.0)


def _maxpool2x2(h):
    """MaxPool2d(kernel=2, stride=2), floor mode, on the (..., H, W) minor dims.

    Only unit-stride static slices + concatenation (no strided slicing), so it
    lowers cleanly and the data never leaves vregs/VMEM.
    """
    H, W = h.shape[-2], h.shape[-1]
    Hp, Wp = (H - 2) // 2 + 1, (W - 2) // 2 + 1
    rows = [jnp.maximum(h[..., 2 * y:2 * y + 1, :], h[..., 2 * y + 1:2 * y + 2, :])
            for y in range(Hp)]
    h = jnp.concatenate(rows, axis=-2)                             # (..., Hp, W)
    cols = [jnp.maximum(h[..., 2 * x:2 * x + 1], h[..., 2 * x + 1:2 * x + 2])
            for x in range(Wp)]
    return jnp.concatenate(cols, axis=-1)                          # (..., Hp, Wp)


def _linear(x, w, bias_row):
    """x @ w + bias, as exact-fp32 rank-1-update MACs on the VPU.

    x: (B, Nin), w: (Nin, Nout), bias_row: (1, Nout).  At B=2 / Nin<=32 this is
    cheaper than an MXU push/pop and avoids any matmul-precision ambiguity.
    """
    acc = jnp.zeros((x.shape[0], w.shape[1]), jnp.float32) + bias_row
    for i in range(x.shape[1]):
        acc = acc + x[:, i:i + 1] * w[i:i + 1, :]
    return acc


# ------------------------------- fused forward kernel -------------------------------
def _net_kernel(x_ref, w1_ref, w2_ref, shifts_ref, fcw_ref, fcc_ref, o_ref, *,
                C1, C2, K, F1, F2, FOUT):
    x = x_ref[...]                                   # (B, 1, 16, 16)
    B = x.shape[0]
    shifts = shifts_ref[...]                         # (1, C1+C2, 1, Wmax)

    # ---- conv1 -> bn1 -> relu -> pool ----
    Wo1 = x.shape[3] - K + 1
    h = _conv_bn_relu(x, w1_ref, shifts[:, 0:C1, :, 0:Wo1], K)        # (B,C1,14,14)
    h = _maxpool2x2(h)                                                # (B,C1,7,7)

    # ---- conv2 -> bn2 -> relu -> pool ----
    Wo2 = h.shape[3] - K + 1
    h = _conv_bn_relu(h, w2_ref, shifts[:, C1:C1 + C2, :, 0:Wo2], K)  # (B,C2,5,5)
    h = _maxpool2x2(h)                                                # (B,C2,2,2)

    Hp, Wp = h.shape[-2], h.shape[-1]
    NIN = C2 * Hp * Wp

    # ---- packed FC weights / shifts (BN(eval) scale already folded in) ----
    fcw = fcw_ref[...]
    fcc = fcc_ref[...]
    w1 = fcw[0:NIN, 0:F1]
    w2 = fcw[0:F1, F1:F1 + F2]
    w3 = fcw[0:F2, F1 + F2:F1 + F2 + FOUT]
    t1 = fcc[:, 0:F1]
    t2 = fcc[:, F1:F1 + F2]
    b3 = fcc[:, F1 + F2:F1 + F2 + FOUT]

    # ---- fc1 + bn_fc1(eval) + relu, NCHW flatten (c*Hp*Wp + y*Wp + x) folded
    #      directly into the rank-1-update MAC loop (no explicit flatten). ----
    acc = jnp.zeros((B, F1), jnp.float32) + t1
    i = 0
    for c in range(C2):
        for y in range(Hp):
            for xx in range(Wp):
                acc = acc + h[:, c, y, xx:xx + 1] * w1[i:i + 1, :]    # (B,1)*(1,F1)
                i += 1
    h1 = jnp.maximum(acc, 0.0)

    # ---- [dropout=id] -> fc2 + bn_fc2(eval) + relu -> [dropout=id] -> fc3 ----
    h2 = jnp.maximum(_linear(h1, w2, t2), 0.0)
    o_ref[...] = _linear(h2, w3, b3)                 # (B, FOUT)


# ------------------------------------ wrapper ---------------------------------------
def net_forward(x, p):
    B, _, H0, W0 = x.shape
    C1, _, K, _ = p['conv1_w'].shape
    C2 = p['conv2_w'].shape[0]
    F1, F2, FOUT = p['fc1_w'].shape[0], p['fc2_w'].shape[0], p['fc3_w'].shape[0]

    # conv / pool widths (stride-1 valid conv, 2x2/2 floor pooling)
    Wo1 = W0 - K + 1                    # 14
    Wp1 = (Wo1 - 2) // 2 + 1            # 7
    Wo2 = Wp1 - K + 1                   # 5
    wmax = max(Wo1, Wo2)

    def fold_conv(w, b, bn, wo):
        g, be, m, v = bn
        s = g / jnp.sqrt(v + _EPS)
        wf = w * s[:, None, None, None]                       # BN scale -> weights
        shift = be + (b - m) * s                              # BN shift + conv bias
        cout, cin, k, _ = w.shape
        taps = jnp.transpose(wf, (1, 2, 3, 0)).reshape(cin * k * k, 1, cout, 1, 1)
        taps = jnp.broadcast_to(taps, (cin * k * k, 1, cout, 1, wo))
        return taps, shift

    w1t, shift1 = fold_conv(p['conv1_w'], p['conv1_b'], p['bn1'], Wo1)
    w2t, shift2 = fold_conv(p['conv2_w'], p['conv2_b'], p['bn2'], Wo2)
    shifts = jnp.concatenate(
        [jnp.broadcast_to(shift1[None, :, None, None], (1, C1, 1, wmax)),
         jnp.broadcast_to(shift2[None, :, None, None], (1, C2, 1, wmax))], axis=1)

    def fold_fc(w, b, bn):
        g, be, m, v = bn
        s = g / jnp.sqrt(v + _EPS)
        return w.T * s[None, :], be + (b - m) * s             # (in,out), (out,)

    W1f, t1 = fold_fc(p['fc1_w'], p['fc1_b'], p['bn_fc1'])
    W2f, t2 = fold_fc(p['fc2_w'], p['fc2_b'], p['bn_fc2'])
    W3t, b3 = p['fc3_w'].T, p['fc3_b']

    nrows = max(W1f.shape[0], W2f.shape[0], W3t.shape[0])
    pad_rows = lambda w: jnp.pad(w, ((0, nrows - w.shape[0]), (0, 0)))
    fcw = jnp.concatenate([pad_rows(W1f), pad_rows(W2f), pad_rows(W3t)], axis=1)
    fcc = jnp.concatenate([t1, t2, b3]).reshape(1, -1)

    kernel = functools.partial(_net_kernel, C1=C1, C2=C2, K=K,
                               F1=F1, F2=F2, FOUT=FOUT)
    # TODO(synk): for B >~ 8 add a batch grid + dimension_semantics=("parallel",)
    # (v7x megacore) and switch the FC tail to jnp.dot on the MXU.
    return pl.pallas_call(
        kernel,
        out_shape=jax.ShapeDtypeStruct((B, FOUT), jnp.float32),
        in_specs=[_VMEM] * 6,
        out_specs=_VMEM,
    )(x, w1t, w2t, shifts, fcw, fcc)


# --------------------------- deterministic parameter init ---------------------------
def init_params(key):
    C1, C2, K, F1, F2, FOUT = 4, 8, 3, 32, 16, 1
    ks = iter(jax.random.split(key, 26))

    def uni(shape, fan_in):
        bound = 1.0 / np.sqrt(fan_in)
        return jax.random.uniform(next(ks), shape, jnp.float32, -bound, bound)

    def bn(c):
        gamma = jax.random.uniform(next(ks), (c,), jnp.float32, 0.5, 1.5)
        beta = 0.1 * jax.random.normal(next(ks), (c,), jnp.float32)
        mean = 0.1 * jax.random.normal(next(ks), (c,), jnp.float32)
        var = jax.random.uniform(next(ks), (c,), jnp.float32, 0.5, 1.5)
        return (gamma, beta, mean, var)

    return {
        'conv1_w': uni((C1, 1, K, K), 1 * K * K),
        'conv1_b': uni((C1,), 1 * K * K),
        'bn1': bn(C1),
        'conv2_w': uni((C2, C1, K, K), C1 * K * K),
        'conv2_b': uni((C2,), C1 * K * K),
        'bn2': bn(C2),
        'fc1_w': uni((F1, C2 * 4), C2 * 4),     # conv_output_size = 2*2 = 4
        'fc1_b': uni((F1,), C2 * 4),
        'bn_fc1': bn(F1),
        'fc2_w': uni((F2, F1), F1),
        'fc2_b': uni((F2,), F1),
        'bn_fc2': bn(F2),
        'fc3_w': uni((FOUT, F2), F2),
        'fc3_b': uni((FOUT,), F2),
    }


# ------------------------------ pure-JAX reference (eval) ----------------------------
def reference_forward(x, p):
    HI = jax.lax.Precision.HIGHEST

    def bn2d(y, g, b, m, v):
        s = (g / jnp.sqrt(v + _EPS)).reshape(1, -1, 1, 1)
        return (y - m.reshape(1, -1, 1, 1)) * s + b.reshape(1, -1, 1, 1)

    def bn1d(y, g, b, m, v):
        return (y - m) * (g / jnp.sqrt(v + _EPS)) + b

    def conv(y, w, b):
        out = jax.lax.conv_general_dilated(
            y, w, (1, 1), 'VALID',
            dimension_numbers=('NCHW', 'OIHW', 'NCHW'), precision=HI)
        return out + b.reshape(1, -1, 1, 1)

    def pool(y):
        return jax.lax.reduce_window(y, -jnp.inf, jax.lax.max,
                                     (1, 1, 2, 2), (1, 1, 2, 2), 'VALID')

    y = pool(jnp.maximum(bn2d(conv(x, p['conv1_w'], p['conv1_b']), *p['bn1']), 0.0))
    y = pool(jnp.maximum(bn2d(conv(y, p['conv2_w'], p['conv2_b']), *p['bn2']), 0.0))
    y = y.reshape(y.shape[0], -1)
    y = jnp.maximum(bn1d(jnp.dot(y, p['fc1_w'].T, precision=HI) + p['fc1_b'],
                         *p['bn_fc1']), 0.0)
    y = jnp.maximum(bn1d(jnp.dot(y, p['fc2_w'].T, precision=HI) + p['fc2_b'],
                         *p['bn_fc2']), 0.0)
    return jnp.dot(y, p['fc3_w'].T, precision=HI) + p['fc3_b']


if __name__ == "__main__":
    B = 2
    key = jax.random.PRNGKey(0)
    kx, kp = jax.random.split(key)
    x = jax.random.normal(kx, (B, 1, 16, 16), jnp.float32)   # NCHW, 1 input channel
    params = init_params(kp)

    fwd = jax.jit(net_forward)
    out = jax.block_until_ready(fwd(x, params))
    ref = jax.block_until_ready(reference_forward(x, params))

    assert out.shape == (B, 1), out.shape
    if not np.allclose(np.asarray(out), np.asarray(ref), rtol=1e-4, atol=1e-5):
        raise AssertionError(
            "Pallas forward does not match pure-JAX reference:\n"
            f"{np.asarray(out)}\nvs\n{np.asarray(ref)}")
    print("KERNEL_OK")
</pallas_src>

<mosaic_0001>
module attributes {stable_mosaic.version = 11 : i64} {
  func.func @_net_kernel(%arg0: memref<2x1x16x16xf32, #tpu.memory_space<vmem>>, %arg1: memref<9x1x4x1x14xf32, #tpu.memory_space<vmem>>, %arg2: memref<36x1x8x1x5xf32, #tpu.memory_space<vmem>>, %arg3: memref<1x12x1x14xf32, #tpu.memory_space<vmem>>, %arg4: memref<32x49xf32, #tpu.memory_space<vmem>>, %arg5: memref<1x49xf32, #tpu.memory_space<vmem>>, %arg6: memref<2x1xf32, #tpu.memory_space<vmem>>) attributes {dimension_semantics = [], scalar_prefetch = 0 : i64, scratch_operands = 0 : i64, tpu.core_type = #tpu.core_type<tc>} {
    %c0 = arith.constant 0 : index
    %c0_0 = arith.constant 0 : index
    %c0_1 = arith.constant 0 : index
    %c0_2 = arith.constant 0 : index
    %0 = vector.load %arg0[%c0, %c0_0, %c0_1, %c0_2] : memref<2x1x16x16xf32, #tpu.memory_space<vmem>>, vector<2x1x16x16xf32>
    %c0_3 = arith.constant 0 : index
    %c0_4 = arith.constant 0 : index
    %c0_5 = arith.constant 0 : index
    %c0_6 = arith.constant 0 : index
    %1 = vector.load %arg3[%c0_3, %c0_4, %c0_5, %c0_6] : memref<1x12x1x14xf32, #tpu.memory_space<vmem>>, vector<1x12x1x14xf32>
    %2 = vector.extract_strided_slice %1 {offsets = [0, 0, 0, 0], sizes = [1, 4, 1, 14], strides = [1, 1, 1, 1]} : vector<1x12x1x14xf32> to vector<1x4x1x14xf32>
    %cst = arith.constant 0.000000e+00 : f32
    %3 = vector.broadcast %cst : f32 to vector<2x4x14x14xf32>
    %4 = vector.extract_strided_slice %0 {offsets = [0, 0, 0, 0], sizes = [2, 1, 14, 14], strides = [1, 1, 1, 1]} : vector<2x1x16x16xf32> to vector<2x1x14x14xf32>
    %c0_7 = arith.constant 0 : index
    %c0_8 = arith.constant 0 : index
    %c0_9 = arith.constant 0 : index
    %c0_10 = arith.constant 0 : index
    %c0_11 = arith.constant 0 : index
    %5 = vector.load %arg1[%c0_7, %c0_8, %c0_9, %c0_10, %c0_11] : memref<9x1x4x1x14xf32, #tpu.memory_space<vmem>>, vector<1x1x4x1x14xf32>
    %6 = vector.shape_cast %5 : vector<1x1x4x1x14xf32> to vector<1x4x1x14xf32>
    %7 = vector.broadcast %6 : vector<1x4x1x14xf32> to vector<2x4x14x14xf32>
    %8 = vector.broadcast %4 : vector<2x1x14x14xf32> to vector<2x4x14x14xf32>
    %9 = arith.mulf %7, %8 : vector<2x4x14x14xf32>
    %10 = arith.addf %3, %9 : vector<2x4x14x14xf32>
    %11 = vector.extract_strided_slice %0 {offsets = [0, 0, 0, 1], sizes = [2, 1, 14, 14], strides = [1, 1, 1, 1]} : vector<2x1x16x16xf32> to vector<2x1x14x14xf32>
    %c1 = arith.constant 1 : index
    %c0_12 = arith.constant 0 : index
    %c0_13 = arith.constant 0 : index
    %c0_14 = arith.constant 0 : index
    %c0_15 = arith.constant 0 : index
    %12 = vector.load %arg1[%c1, %c0_12, %c0_13, %c0_14, %c0_15] : memref<9x1x4x1x14xf32, #tpu.memory_space<vmem>>, vector<1x1x4x1x14xf32>
    %13 = vector.shape_cast %12 : vector<1x1x4x1x14xf32> to vector<1x4x1x14xf32>
    %14 = vector.broadcast %13 : vector<1x4x1x14xf32> to vector<2x4x14x14xf32>
    %15 = vector.broadcast %11 : vector<2x1x14x14xf32> to vector<2x4x14x14xf32>
    %16 = arith.mulf %14, %15 : vector<2x4x14x14xf32>
    %17 = arith.addf %10, %16 : vector<2x4x14x14xf32>
    %18 = vector.extract_strided_slice %0 {offsets = [0, 0, 0, 2], sizes = [2, 1, 14, 14], strides = [1, 1, 1, 1]} : vector<2x1x16x16xf32> to vector<2x1x14x14xf32>
    %c2 = arith.constant 2 : index
    %c0_16 = arith.constant 0 : index
    %c0_17 = arith.constant 0 : index
    %c0_18 = arith.constant 0 : index
    %c0_19 = arith.constant 0 : index
    %19 = vector.load %arg1[%c2, %c0_16, %c0_17, %c0_18, %c0_19] : memref<9x1x4x1x14xf32, #tpu.memory_space<vmem>>, vector<1x1x4x1x14xf32>
    %20 = vector.shape_cast %19 : vector<1x1x4x1x14xf32> to vector<1x4x1x14xf32>
    %21 = vector.broadcast %20 : vector<1x4x1x14xf32> to vector<2x4x14x14xf32>
    %22 = vector.broadcast %18 : vector<2x1x14x14xf32> to vector<2x4x14x14xf32>
    %23 = arith.mulf %21, %22 : vector<2x4x14x14xf32>
    %24 = arith.addf %17, %23 : vector<2x4x14x14xf32>
    %25 = vector.extract_strided_slice %0 {offsets = [0, 0, 1, 0], sizes = [2, 1, 14, 14], strides = [1, 1, 1, 1]} : vector<2x1x16x16xf32> to vector<2x1x14x14xf32>
    %c3 = arith.constant 3 : index
    %c0_20 = arith.constant 0 : index
    %c0_21 = arith.constant 0 : index
    %c0_22 = arith.constant 0 : index
    %c0_23 = arith.constant 0 : index
    %26 = vector.load %arg1[%c3, %c0_20, %c0_21, %c0_22, %c0_23] : memref<9x1x4x1x14xf32, #tpu.memory_space<vmem>>, vector<1x1x4x1x14xf32>
    %27 = vector.shape_cast %26 : vector<1x1x4x1x14xf32> to vector<1x4x1x14xf32>
    %28 = vector.broadcast %27 : vector<1x4x1x14xf32> to vector<2x4x14x14xf32>
    %29 = vector.broadcast %25 : vector<2x1x14x14xf32> to vector<2x4x14x14xf32>
    %30 = arith.mulf %28, %29 : vector<2x4x14x14xf32>
    %31 = arith.addf %24, %30 : vector<2x4x14x14xf32>
    %32 = vector.extract_strided_slice %0 {offsets = [0, 0, 1, 1], sizes = [2, 1, 14, 14], strides = [1, 1, 1, 1]} : vector<2x1x16x16xf32> to vector<2x1x14x14xf32>
    %c4 = arith.constant 4 : index
    %c0_24 = arith.constant 0 : index
    %c0_25 = arith.constant 0 : index
    %c0_26 = arith.constant 0 : index
    %c0_27 = arith.constant 0 : index
    %33 = vector.load %arg1[%c4, %c0_24, %c0_25, %c0_26, %c0_27] : memref<9x1x4x1x14xf32, #tpu.memory_space<vmem>>, vector<1x1x4x1x14xf32>
    %34 = vector.shape_cast %33 : vector<1x1x4x1x14xf32> to vector<1x4x1x14xf32>
    %35 = vector.broadcast %34 : vector<1x4x1x14xf32> to vector<2x4x14x14xf32>
    %36 = vector.broadcast %32 : vector<2x1x14x14xf32> to vector<2x4x14x14xf32>
    %37 = arith.mulf %35, %36 : vector<2x4x14x14xf32>
    %38 = arith.addf %31, %37 : vector<2x4x14x14xf32>
    %39 = vector.extract_strided_slice %0 {offsets = [0, 0, 1, 2], sizes = [2, 1, 14, 14], strides = [1, 1, 1, 1]} : vector<2x1x16x16xf32> to vector<2x1x14x14xf32>
    %c5 = arith.constant 5 : index
    %c0_28 = arith.constant 0 : index
    %c0_29 = arith.constant 0 : index
    %c0_30 = arith.constant 0 : index
    %c0_31 = arith.constant 0 : index
    %40 = vector.load %arg1[%c5, %c0_28, %c0_29, %c0_30, %c0_31] : memref<9x1x4x1x14xf32, #tpu.memory_space<vmem>>, vector<1x1x4x1x14xf32>
    %41 = vector.shape_cast %40 : vector<1x1x4x1x14xf32> to vector<1x4x1x14xf32>
    %42 = vector.broadcast %41 : vector<1x4x1x14xf32> to vector<2x4x14x14xf32>
    %43 = vector.broadcast %39 : vector<2x1x14x14xf32> to vector<2x4x14x14xf32>
    %44 = arith.mulf %42, %43 : vector<2x4x14x14xf32>
    %45 = arith.addf %38, %44 : vector<2x4x14x14xf32>
    %46 = vector.extract_strided_slice %0 {offsets = [0, 0, 2, 0], sizes = [2, 1, 14, 14], strides = [1, 1, 1, 1]} : vector<2x1x16x16xf32> to vector<2x1x14x14xf32>
    %c6 = arith.constant 6 : index
    %c0_32 = arith.constant 0 : index
    %c0_33 = arith.constant 0 : index
    %c0_34 = arith.constant 0 : index
    %c0_35 = arith.constant 0 : index
    %47 = vector.load %arg1[%c6, %c0_32, %c0_33, %c0_34, %c0_35] : memref<9x1x4x1x14xf32, #tpu.memory_space<vmem>>, vector<1x1x4x1x14xf32>
    %48 = vector.shape_cast %47 : vector<1x1x4x1x14xf32> to vector<1x4x1x14xf32>
    %49 = vector.broadcast %48 : vector<1x4x1x14xf32> to vector<2x4x14x14xf32>
    %50 = vector.broadcast %46 : vector<2x1x14x14xf32> to vector<2x4x14x14xf32>
    %51 = arith.mulf %49, %50 : vector<2x4x14x14xf32>
    %52 = arith.addf %45, %51 : vector<2x4x14x14xf32>
    %53 = vector.extract_strided_slice %0 {offsets = [0, 0, 2, 1], sizes = [2, 1, 14, 14], strides = [1, 1, 1, 1]} : vector<2x1x16x16xf32> to vector<2x1x14x14xf32>
    %c7 = arith.constant 7 : index
    %c0_36 = arith.constant 0 : index
    %c0_37 = arith.constant 0 : index
    %c0_38 = arith.constant 0 : index
    %c0_39 = arith.constant 0 : index
    %54 = vector.load %arg1[%c7, %c0_36, %c0_37, %c0_38, %c0_39] : memref<9x1x4x1x14xf32, #tpu.memory_space<vmem>>, vector<1x1x4x1x14xf32>
    %55 = vector.shape_cast %54 : vector<1x1x4x1x14xf32> to vector<1x4x1x14xf32>
    %56 = vector.broadcast %55 : vector<1x4x1x14xf32> to vector<2x4x14x14xf32>
    %57 = vector.broadcast %53 : vector<2x1x14x14xf32> to vector<2x4x14x14xf32>
    %58 = arith.mulf %56, %57 : vector<2x4x14x14xf32>
    %59 = arith.addf %52, %58 : vector<2x4x14x14xf32>
    %60 = vector.extract_strided_slice %0 {offsets = [0, 0, 2, 2], sizes = [2, 1, 14, 14], strides = [1, 1, 1, 1]} : vector<2x1x16x16xf32> to vector<2x1x14x14xf32>
    %c8 = arith.constant 8 : index
    %c0_40 = arith.constant 0 : index
    %c0_41 = arith.constant 0 : index
    %c0_42 = arith.constant 0 : index
    %c0_43 = arith.constant 0 : index
    %61 = vector.load %arg1[%c8, %c0_40, %c0_41, %c0_42, %c0_43] : memref<9x1x4x1x14xf32, #tpu.memory_space<vmem>>, vector<1x1x4x1x14xf32>
    %62 = vector.shape_cast %61 : vector<1x1x4x1x14xf32> to vector<1x4x1x14xf32>
    %63 = vector.broadcast %62 : vector<1x4x1x14xf32> to vector<2x4x14x14xf32>
    %64 = vector.broadcast %60 : vector<2x1x14x14xf32> to vector<2x4x14x14xf32>
    %65 = arith.mulf %63, %64 : vector<2x4x14x14xf32>
    %66 = arith.addf %59, %65 : vector<2x4x14x14xf32>
    %67 = vector.broadcast %2 : vector<1x4x1x14xf32> to vector<2x4x14x14xf32>
    %68 = arith.addf %66, %67 : vector<2x4x14x14xf32>
    %cst_44 = arith.constant 0.000000e+00 : f32
    %69 = vector.broadcast %cst_44 : f32 to vector<2x4x14x14xf32>
    %70 = arith.maximumf %68, %69 : vector<2x4x14x14xf32>
    %71 = vector.extract_strided_slice %70 {offsets = [0, 0, 0, 0], sizes = [2, 4, 1, 14], strides = [1, 1, 1, 1]} : vector<2x4x14x14xf32> to vector<2x4x1x14xf32>
    %72 = vector.extract_strided_slice %70 {offsets = [0, 0, 1, 0], sizes = [2, 4, 1, 14], strides = [1, 1, 1, 1]} : vector<2x4x14x14xf32> to vector<2x4x1x14xf32>
    %73 = arith.maximumf %71, %72 : vector<2x4x1x14xf32>
    %74 = vector.extract_strided_slice %70 {offsets = [0, 0, 2, 0], sizes = [2, 4, 1, 14], strides = [1, 1, 1, 1]} : vector<2x4x14x14xf32> to vector<2x4x1x14xf32>
    %75 = vector.extract_strided_slice %70 {offsets = [0, 0, 3, 0], sizes = [2, 4, 1, 14], strides = [1, 1, 1, 1]} : vector<2x4x14x14xf32> to vector<2x4x1x14xf32>
    %76 = arith.maximumf %74, %75 : vector<2x4x1x14xf32>
    %77 = vector.extract_strided_slice %70 {offsets = [0, 0, 4, 0], sizes = [2, 4, 1, 14], strides = [1, 1, 1, 1]} : vector<2x4x14x14xf32> to vector<2x4x1x14xf32>
    %78 = vector.extract_strided_slice %70 {offsets = [0, 0, 5, 0], sizes = [2, 4, 1, 14], strides = [1, 1, 1, 1]} : vector<2x4x14x14xf32> to vector<2x4x1x14xf32>
    %79 = arith.maximumf %77, %78 : vector<2x4x1x14xf32>
    %80 = vector.extract_strided_slice %70 {offsets = [0, 0, 6, 0], sizes = [2, 4, 1, 14], strides = [1, 1, 1, 1]} : vector<2x4x14x14xf32> to vector<2x4x1x14xf32>
    %81 = vector.extract_strided_slice %70 {offsets = [0, 0, 7, 0], sizes = [2, 4, 1, 14], strides = [1, 1, 1, 1]} : vector<2x4x14x14xf32> to vector<2x4x1x14xf32>
    %82 = arith.maximumf %80, %81 : vector<2x4x1x14xf32>
    %83 = vector.extract_strided_slice %70 {offsets = [0, 0, 8, 0], sizes = [2, 4, 1, 14], strides = [1, 1, 1, 1]} : vector<2x4x14x14xf32> to vector<2x4x1x14xf32>
    %84 = vector.extract_strided_slice %70 {offsets = [0, 0, 9, 0], sizes = [2, 4, 1, 14], strides = [1, 1, 1, 1]} : vector<2x4x14x14xf32> to vector<2x4x1x14xf32>
    %85 = arith.maximumf %83, %84 : vector<2x4x1x14xf32>
    %86 = vector.extract_strided_slice %70 {offsets = [0, 0, 10, 0], sizes = [2, 4, 1, 14], strides = [1, 1, 1, 1]} : vector<2x4x14x14xf32> to vector<2x4x1x14xf32>
    %87 = vector.extract_strided_slice %70 {offsets = [0, 0, 11, 0], sizes = [2, 4, 1, 14], strides = [1, 1, 1, 1]} : vector<2x4x14x14xf32> to vector<2x4x1x14xf32>
    %88 = arith.maximumf %86, %87 : vector<2x4x1x14xf32>
    %89 = vector.extract_strided_slice %70 {offsets = [0, 0, 12, 0], sizes = [2, 4, 1, 14], strides = [1, 1, 1, 1]} : vector<2x4x14x14xf32> to vector<2x4x1x14xf32>
    %90 = vector.extract_strided_slice %70 {offsets = [0, 0, 13, 0], sizes = [2, 4, 1, 14], strides = [1, 1, 1, 1]} : vector<2x4x14x14xf32> to vector<2x4x1x14xf32>
    %91 = arith.maximumf %89, %90 : vector<2x4x1x14xf32>
    %92 = tpu.concatenate %73, %76, %79, %82, %85, %88, %91 in 2 : vector<2x4x1x14xf32>, vector<2x4x1x14xf32>, vector<2x4x1x14xf32>, vector<2x4x1x14xf32>, vector<2x4x1x14xf32>, vector<2x4x1x14xf32>, vector<2x4x1x14xf32> -> vector<2x4x7x14xf32>
    %93 = vector.extract_strided_slice %92 {offsets = [0, 0, 0, 0], sizes = [2, 4, 7, 1], strides = [1, 1, 1, 1]} : vector<2x4x7x14xf32> to vector<2x4x7x1xf32>
    %94 = vector.extract_strided_slice %92 {offsets = [0, 0, 0, 1], sizes = [2, 4, 7, 1], strides = [1, 1, 1, 1]} : vector<2x4x7x14xf32> to vector<2x4x7x1xf32>
    %95 = arith.maximumf %93, %94 : vector<2x4x7x1xf32>
    %96 = vector.extract_strided_slice %92 {offsets = [0, 0, 0, 2], sizes = [2, 4, 7, 1], strides = [1, 1, 1, 1]} : vector<2x4x7x14xf32> to vector<2x4x7x1xf32>
    %97 = vector.extract_strided_slice %92 {offsets = [0, 0, 0, 3], sizes = [2, 4, 7, 1], strides = [1, 1, 1, 1]} : vector<2x4x7x14xf32> to vector<2x4x7x1xf32>
    %98 = arith.maximumf %96, %97 : vector<2x4x7x1xf32>
    %99 = vector.extract_strided_slice %92 {offsets = [0, 0, 0, 4], sizes = [2, 4, 7, 1], strides = [1, 1, 1, 1]} : vector<2x4x7x14xf32> to vector<2x4x7x1xf32>
    %100 = vector.extract_strided_slice %92 {offsets = [0, 0, 0, 5], sizes = [2, 4, 7, 1], strides = [1, 1, 1, 1]} : vector<2x4x7x14xf32> to vector<2x4x7x1xf32>
    %101 = arith.maximumf %99, %100 : vector<2x4x7x1xf32>
    %102 = vector.extract_strided_slice %92 {offsets = [0, 0, 0, 6], sizes = [2, 4, 7, 1], strides = [1, 1, 1, 1]} : vector<2x4x7x14xf32> to vector<2x4x7x1xf32>
    %103 = vector.extract_strided_slice %92 {offsets = [0, 0, 0, 7], sizes = [2, 4, 7, 1], strides = [1, 1, 1, 1]} : vector<2x4x7x14xf32> to vector<2x4x7x1xf32>
    %104 = arith.maximumf %102, %103 : vector<2x4x7x1xf32>
    %105 = vector.extract_strided_slice %92 {offsets = [0, 0, 0, 8], sizes = [2, 4, 7, 1], strides = [1, 1, 1, 1]} : vector<2x4x7x14xf32> to vector<2x4x7x1xf32>
    %106 = vector.extract_strided_slice %92 {offsets = [0, 0, 0, 9], sizes = [2, 4, 7, 1], strides = [1, 1, 1, 1]} : vector<2x4x7x14xf32> to vector<2x4x7x1xf32>
    %107 = arith.maximumf %105, %106 : vector<2x4x7x1xf32>
    %108 = vector.extract_strided_slice %92 {offsets = [0, 0, 0, 10], sizes = [2, 4, 7, 1], strides = [1, 1, 1, 1]} : vector<2x4x7x14xf32> to vector<2x4x7x1xf32>
    %109 = vector.extract_strided_slice %92 {offsets = [0, 0, 0, 11], sizes = [2, 4, 7, 1], strides = [1, 1, 1, 1]} : vector<2x4x7x14xf32> to vector<2x4x7x1xf32>
    %110 = arith.maximumf %108, %109 : vector<2x4x7x1xf32>
    %111 = vector.extract_strided_slice %92 {offsets = [0, 0, 0, 12], sizes = [2, 4, 7, 1], strides = [1, 1, 1, 1]} : vector<2x4x7x14xf32> to vector<2x4x7x1xf32>
    %112 = vector.extract_strided_slice %92 {offsets = [0, 0, 0, 13], sizes = [2, 4, 7, 1], strides = [1, 1, 1, 1]} : vector<2x4x7x14xf32> to vector<2x4x7x1xf32>
    %113 = arith.maximumf %111, %112 : vector<2x4x7x1xf32>
    %114 = tpu.concatenate %95, %98, %101, %104, %107, %110, %113 in 3 : vector<2x4x7x1xf32>, vector<2x4x7x1xf32>, vector<2x4x7x1xf32>, vector<2x4x7x1xf32>, vector<2x4x7x1xf32>, vector<2x4x7x1xf32>, vector<2x4x7x1xf32> -> vector<2x4x7x7xf32>
    %115 = vector.extract_strided_slice %1 {offsets = [0, 4, 0, 0], sizes = [1, 8, 1, 5], strides = [1, 1, 1, 1]} : vector<1x12x1x14xf32> to vector<1x8x1x5xf32>
    %cst_45 = arith.constant 0.000000e+00 : f32
    %116 = vector.broadcast %cst_45 : f32 to vector<2x8x5x5xf32>
    %117 = vector.extract_strided_slice %114 {offsets = [0, 0, 0, 0], sizes = [2, 1, 5, 5], strides = [1, 1, 1, 1]} : vector<2x4x7x7xf32> to vector<2x1x5x5xf32>
    %c0_46 = arith.constant 0 : index
    %c0_47 = arith.constant 0 : index
    %c0_48 = arith.constant 0 : index
    %c0_49 = arith.constant 0 : index
    %c0_50 = arith.constant 0 : index
    %118 = vector.load %arg2[%c0_46, %c0_47, %c0_48, %c0_49, %c0_50] : memref<36x1x8x1x5xf32, #tpu.memory_space<vmem>>, vector<1x1x8x1x5xf32>
    %119 = vector.shape_cast %118 : vector<1x1x8x1x5xf32> to vector<1x8x1x5xf32>
    %120 = vector.broadcast %119 : vector<1x8x1x5xf32> to vector<2x8x5x5xf32>
    %121 = vector.broadcast %117 : vector<2x1x5x5xf32> to vector<2x8x5x5xf32>
    %122 = arith.mulf %120, %121 : vector<2x8x5x5xf32>
    %123 = arith.addf %116, %122 : vector<2x8x5x5xf32>
    %124 = vector.extract_strided_slice %114 {offsets = [0, 0, 0, 1], sizes = [2, 1, 5, 5], strides = [1, 1, 1, 1]} : vector<2x4x7x7xf32> to vector<2x1x5x5xf32>
    %c1_51 = arith.constant 1 : index
    %c0_52 = arith.constant 0 : index
    %c0_53 = arith.constant 0 : index
    %c0_54 = arith.constant 0 : index
    %c0_55 = arith.constant 0 : index
    %125 = vector.load %arg2[%c1_51, %c0_52, %c0_53, %c0_54, %c0_55] : memref<36x1x8x1x5xf32, #tpu.memory_space<vmem>>, vector<1x1x8x1x5xf32>
    %126 = vector.shape_cast %125 : vector<1x1x8x1x5xf32> to vector<1x8x1x5xf32>
    %127 = vector.broadcast %126 : vector<1x8x1x5xf32> to vector<2x8x5x5xf32>
    %128 = vector.broadcast %124 : vector<2x1x5x5xf32> to vector<2x8x5x5xf32>
    %129 = arith.mulf %127, %128 : vector<2x8x5x5xf32>
    %130 = arith.addf %123, %129 : vector<2x8x5x5xf32>
    %131 = vector.extract_strided_slice %114 {offsets = [0, 0, 0, 2], sizes = [2, 1, 5, 5], strides = [1, 1, 1, 1]} : vector<2x4x7x7xf32> to vector<2x1x5x5xf32>
    %c2_56 = arith.constant 2 : index
    %c0_57 = arith.constant 0 : index
    %c0_58 = arith.constant 0 : index
    %c0_59 = arith.constant 0 : index
    %c0_60 = arith.constant 0 : index
    %132 = vector.load %arg2[%c2_56, %c0_57, %c0_58, %c0_59, %c0_60] : memref<36x1x8x1x5xf32, #tpu.memory_space<vmem>>, vector<1x1x8x1x5xf32>
    %133 = vector.shape_cast %132 : vector<1x1x8x1x5xf32> to vector<1x8x1x5xf32>
    %134 = vector.broadcast %133 : vector<1x8x1x5xf32> to vector<2x8x5x5xf32>
    %135 = vector.broadcast %131 : vector<2x1x5x5xf32> to vector<2x8x5x5xf32>
    %136 = arith.mulf %134, %135 : vector<2x8x5x5xf32>
    %137 = arith.addf %130, %136 : vector<2x8x5x5xf32>
    %138 = vector.extract_strided_slice %114 {offsets = [0, 0, 1, 0], sizes = [2, 1, 5, 5], strides = [1, 1, 1, 1]} : vector<2x4x7x7xf32> to vector<2x1x5x5xf32>
    %c3_61 = arith.constant 3 : index
    %c0_62 = arith.constant 0 : index
    %c0_63 = arith.constant 0 : index
    %c0_64 = arith.constant 0 : index
    %c0_65 = arith.constant 0 : index
    %139 = vector.load %arg2[%c3_61, %c0_62, %c0_63, %c0_64, %c0_65] : memref<36x1x8x1x5xf32, #tpu.memory_space<vmem>>, vector<1x1x8x1x5xf32>
    %140 = vector.shape_cast %139 : vector<1x1x8x1x5xf32> to vector<1x8x1x5xf32>
    %141 = vector.broadcast %140 : vector<1x8x1x5xf32> to vector<2x8x5x5xf32>
    %142 = vector.broadcast %138 : vector<2x1x5x5xf32> to vector<2x8x5x5xf32>
    %143 = arith.mulf %141, %142 : vector<2x8x5x5xf32>
    %144 = arith.addf %137, %143 : vector<2x8x5x5xf32>
    %145 = vector.extract_strided_slice %114 {offsets = [0, 0, 1, 1], sizes = [2, 1, 5, 5], strides = [1, 1, 1, 1]} : vector<2x4x7x7xf32> to vector<2x1x5x5xf32>
    %c4_66 = arith.constant 4 : index
    %c0_67 = arith.constant 0 : index
    %c0_68 = arith.constant 0 : index
    %c0_69 = arith.constant 0 : index
    %c0_70 = arith.constant 0 : index
    %146 = vector.load %arg2[%c4_66, %c0_67, %c0_68, %c0_69, %c0_70] : memref<36x1x8x1x5xf32, #tpu.memory_space<vmem>>, vector<1x1x8x1x5xf32>
    %147 = vector.shape_cast %146 : vector<1x1x8x1x5xf32> to vector<1x8x1x5xf32>
    %148 = vector.broadcast %147 : vector<1x8x1x5xf32> to vector<2x8x5x5xf32>
    %149 = vector.broadcast %145 : vector<2x1x5x5xf32> to vector<2x8x5x5xf32>
    %150 = arith.mulf %148, %149 : vector<2x8x5x5xf32>
    %151 = arith.addf %144, %150 : vector<2x8x5x5xf32>
    %152 = vector.extract_strided_slice %114 {offsets = [0, 0, 1, 2], sizes = [2, 1, 5, 5], strides = [1, 1, 1, 1]} : vector<2x4x7x7xf32> to vector<2x1x5x5xf32>
    %c5_71 = arith.constant 5 : index
    %c0_72 = arith.constant 0 : index
    %c0_73 = arith.constant 0 : index
    %c0_74 = arith.constant 0 : index
    %c0_75 = arith.constant 0 : index
    %153 = vector.load %arg2[%c5_71, %c0_72, %c0_73, %c0_74, %c0_75] : memref<36x1x8x1x5xf32, #tpu.memory_space<vmem>>, vector<1x1x8x1x5xf32>
    %154 = vector.shape_cast %153 : vector<1x1x8x1x5xf32> to vector<1x8x1x5xf32>
    %155 = vector.broadcast %154 : vector<1x8x1x5xf32> to vector<2x8x5x5xf32>
    %156 = vector.broadcast %152 : vector<2x1x5x5xf32> to vector<2x8x5x5xf32>
    %157 = arith.mulf %155, %156 : vector<2x8x5x5xf32>
    %158 = arith.addf %151, %157 : vector<2x8x5x5xf32>
    %159 = vector.extract_strided_slice %114 {offsets = [0, 0, 2, 0], sizes = [2, 1, 5, 5], strides = [1, 1, 1, 1]} : vector<2x4x7x7xf32> to vector<2x1x5x5xf32>
    %c6_76 = arith.constant 6 : index
    %c0_77 = arith.constant 0 : index
    %c0_78 = arith.constant 0 : index
    %c0_79 = arith.constant 0 : index
    %c0_80 = arith.constant 0 : index
    %160 = vector.load %arg2[%c6_76, %c0_77, %c0_78, %c0_79, %c0_80] : memref<36x1x8x1x5xf32, #tpu.memory_space<vmem>>, vector<1x1x8x1x5xf32>
    %161 = vector.shape_cast %160 : vector<1x1x8x1x5xf32> to vector<1x8x1x5xf32>
    %162 = vector.broadcast %161 : vector<1x8x1x5xf32> to vector<2x8x5x5xf32>
    %163 = vector.broadcast %159 : vector<2x1x5x5xf32> to vector<2x8x5x5xf32>
    %164 = arith.mulf %162, %163 : vector<2x8x5x5xf32>
    %165 = arith.addf %158, %164 : vector<2x8x5x5xf32>
    %166 = vector.extract_strided_slice %114 {offsets = [0, 0, 2, 1], sizes = [2, 1, 5, 5], strides = [1, 1, 1, 1]} : vector<2x4x7x7xf32> to vector<2x1x5x5xf32>
    %c7_81 = arith.constant 7 : index
    %c0_82 = arith.constant 0 : index
    %c0_83 = arith.constant 0 : index
    %c0_84 = arith.constant 0 : index
    %c0_85 = arith.constant 0 : index
    %167 = vector.load %arg2[%c7_81, %c0_82, %c0_83, %c0_84, %c0_85] : memref<36x1x8x1x5xf32, #tpu.memory_space<vmem>>, vector<1x1x8x1x5xf32>
    %168 = vector.shape_cast %167 : vector<1x1x8x1x5xf32> to vector<1x8x1x5xf32>
    %169 = vector.broadcast %168 : vector<1x8x1x5xf32> to vector<2x8x5x5xf32>
    %170 = vector.broadcast %166 : vector<2x1x5x5xf32> to vector<2x8x5x5xf32>
    %171 = arith.mulf %169, %170 : vector<2x8x5x5xf32>
    %172 = arith.addf %165, %171 : vector<2x8x5x5xf32>
    %173 = vector.extract_strided_slice %114 {offsets = [0, 0, 2, 2], sizes = [2, 1, 5, 5], strides = [1, 1, 1, 1]} : vector<2x4x7x7xf32> to vector<2x1x5x5xf32>
    %c8_86 = arith.constant 8 : index
    %c0_87 = arith.constant 0 : index
    %c0_88 = arith.constant 0 : index
    %c0_89 = arith.constant 0 : index
    %c0_90 = arith.constant 0 : index
    %174 = vector.load %arg2[%c8_86, %c0_87, %c0_88, %c0_89, %c0_90] : memref<36x1x8x1x5xf32, #tpu.memory_space<vmem>>, vector<1x1x8x1x5xf32>
    %175 = vector.shape_cast %174 : vector<1x1x8x1x5xf32> to vector<1x8x1x5xf32>
    %176 = vector.broadcast %175 : vector<1x8x1x5xf32> to vector<2x8x5x5xf32>
    %177 = vector.broadcast %173 : vector<2x1x5x5xf32> to vector<2x8x5x5xf32>
    %178 = arith.mulf %176, %177 : vector<2x8x5x5xf32>
    %179 = arith.addf %172, %178 : vector<2x8x5x5xf32>
    %180 = vector.extract_strided_slice %114 {offsets = [0, 1, 0, 0], sizes = [2, 1, 5, 5], strides = [1, 1, 1, 1]} : vector<2x4x7x7xf32> to vector<2x1x5x5xf32>
    %c9 = arith.constant 9 : index
    %c0_91 = arith.constant 0 : index
    %c0_92 = arith.constant 0 : index
    %c0_93 = arith.constant 0 : index
    %c0_94 = arith.constant 0 : index
    %181 = vector.load %arg2[%c9, %c0_91, %c0_92, %c0_93, %c0_94] : memref<36x1x8x1x5xf32, #tpu.memory_space<vmem>>, vector<1x1x8x1x5xf32>
    %182 = vector.shape_cast %181 : vector<1x1x8x1x5xf32> to vector<1x8x1x5xf32>
    %183 = vector.broadcast %182 : vector<1x8x1x5xf32> to vector<2x8x5x5xf32>
    %184 = vector.broadcast %180 : vector<2x1x5x5xf32> to vector<2x8x5x5xf32>
    %185 = arith.mulf %183, %184 : vector<2x8x5x5xf32>
    %186 = arith.addf %179, %185 : vector<2x8x5x5xf32>
    %187 = vector.extract_strided_slice %114 {offsets = [0, 1, 0, 1], sizes = [2, 1, 5, 5], strides = [1, 1, 1, 1]} : vector<2x4x7x7xf32> to vector<2x1x5x5xf32>
    %c10 = arith.constant 10 : index
    %c0_95 = arith.constant 0 : index
    %c0_96 = arith.constant 0 : index
    %c0_97 = arith.constant 0 : index
    %c0_98 = arith.constant 0 : index
    %188 = vector.load %arg2[%c10, %c0_95, %c0_96, %c0_97, %c0_98] : memref<36x1x8x1x5xf32, #tpu.memory_space<vmem>>, vector<1x1x8x1x5xf32>
    %189 = vector.shape_cast %188 : vector<1x1x8x1x5xf32> to vector<1x8x1x5xf32>
    %190 = vector.broadcast %189 : vector<1x8x1x5xf32> to vector<2x8x5x5xf32>
    %191 = vector.broadcast %187 : vector<2x1x5x5xf32> to vector<2x8x5x5xf32>
    %192 = arith.mulf %190, %191 : vector<2x8x5x5xf32>
    %193 = arith.addf %186, %192 : vector<2x8x5x5xf32>
    %194 = vector.extract_strided_slice %114 {offsets = [0, 1, 0, 2], sizes = [2, 1, 5, 5], strides = [1, 1, 1, 1]} : vector<2x4x7x7xf32> to vector<2x1x5x5xf32>
    %c11 = arith.constant 11 : index
    %c0_99 = arith.constant 0 : index
    %c0_100 = arith.constant 0 : index
    %c0_101 = arith.constant 0 : index
    %c0_102 = arith.constant 0 : index
    %195 = vector.load %arg2[%c11, %c0_99, %c0_100, %c0_101, %c0_102] : memref<36x1x8x1x5xf32, #tpu.memory_space<vmem>>, vector<1x1x8x1x5xf32>
    %196 = vector.shape_cast %195 : vector<1x1x8x1x5xf32> to vector<1x8x1x5xf32>
    %197 = vector.broadcast %196 : vector<1x8x1x5xf32> to vector<2x8x5x5xf32>
    %198 = vector.broadcast %194 : vector<2x1x5x5xf32> to vector<2x8x5x5xf32>
    %199 = arith.mulf %197, %198 : vector<2x8x5x5xf32>
    %200 = arith.addf %193, %199 : vector<2x8x5x5xf32>
    %201 = vector.extract_strided_slice %114 {offsets = [0, 1, 1, 0], sizes = [2, 1, 5, 5], strides = [1, 1, 1, 1]} : vector<2x4x7x7xf32> to vector<2x1x5x5xf32>
    %c12 = arith.constant 12 : index
    %c0_103 = arith.constant 0 : index
    %c0_104 = arith.constant 0 : index
    %c0_105 = arith.constant 0 : index
    %c0_106 = arith.constant 0 : index
    %202 = vector.load %arg2[%c12, %c0_103, %c0_104, %c0_105, %c0_106] : memref<36x1x8x1x5xf32, #tpu.memory_space<vmem>>, vector<1x1x8x1x5xf32>
    %203 = vector.shape_cast %202 : vector<1x1x8x1x5xf32> to vector<1x8x1x5xf32>
    %204 = vector.broadcast %203 : vector<1x8x1x5xf32> to vector<2x8x5x5xf32>
    %205 = vector.broadcast %201 : vector<2x1x5x5xf32> to vector<2x8x5x5xf32>
    %206 = arith.mulf %204, %205 : vector<2x8x5x5xf32>
    %207 = arith.addf %200, %206 : vector<2x8x5x5xf32>
    %208 = vector.extract_strided_slice %114 {offsets = [0, 1, 1, 1], sizes = [2, 1, 5, 5], strides = [1, 1, 1, 1]} : vector<2x4x7x7xf32> to vector<2x1x5x5xf32>
    %c13 = arith.constant 13 : index
    %c0_107 = arith.constant 0 : index
    %c0_108 = arith.constant 0 : index
    %c0_109 = arith.constant 0 : index
    %c0_110 = arith.constant 0 : index
    %209 = vector.load %arg2[%c13, %c0_107, %c0_108, %c0_109, %c0_110] : memref<36x1x8x1x5xf32, #tpu.memory_space<vmem>>, vector<1x1x8x1x5xf32>
    %210 = vector.shape_cast %209 : vector<1x1x8x1x5xf32> to vector<1x8x1x5xf32>
    %211 = vector.broadcast %210 : vector<1x8x1x5xf32> to vector<2x8x5x5xf32>
    %212 = vector.broadcast %208 : vector<2x1x5x5xf32> to vector<2x8x5x5xf32>
    %213 = arith.mulf %211, %212 : vector<2x8x5x5xf32>
    %214 = arith.addf %207, %213 : vector<2x8x5x5xf32>
    %215 = vector.extract_strided_slice %114 {offsets = [0, 1, 1, 2], sizes = [2, 1, 5, 5], strides = [1, 1, 1, 1]} : vector<2x4x7x7xf32> to vector<2x1x5x5xf32>
    %c14 = arith.constant 14 : index
    %c0_111 = arith.constant 0 : index
    %c0_112 = arith.constant 0 : index
    %c0_113 = arith.constant 0 : index
    %c0_114 = arith.constant 0 : index
    %216 = vector.load %arg2[%c14, %c0_111, %c0_112, %c0_113, %c0_114] : memref<36x1x8x1x5xf32, #tpu.memory_space<vmem>>, vector<1x1x8x1x5xf32>
    %217 = vector.shape_cast %216 : vector<1x1x8x1x5xf32> to vector<1x8x1x5xf32>
    %218 = vector.broadcast %217 : vector<1x8x1x5xf32> to vector<2x8x5x5xf32>
    %219 = vector.broadcast %215 : vector<2x1x5x5xf32> to vector<2x8x5x5xf32>
    %220 = arith.mulf %218, %219 : vector<2x8x5x5xf32>
    %221 = arith.addf %214, %220 : vector<2x8x5x5xf32>
    %222 = vector.extract_strided_slice %114 {offsets = [0, 1, 2, 0], sizes = [2, 1, 5, 5], strides = [1, 1, 1, 1]} : vector<2x4x7x7xf32> to vector<2x1x5x5xf32>
    %c15 = arith.constant 15 : index
    %c0_115 = arith.constant 0 : index
    %c0_116 = arith.constant 0 : index
    %c0_117 = arith.constant 0 : index
    %c0_118 = arith.constant 0 : index
    %223 = vector.load %arg2[%c15, %c0_115, %c0_116, %c0_117, %c0_118] : memref<36x1x8x1x5xf32, #tpu.memory_space<vmem>>, vector<1x1x8x1x5xf32>
    %224 = vector.shape_cast %223 : vector<1x1x8x1x5xf32> to vector<1x8x1x5xf32>
    %225 = vector.broadcast %224 : vector<1x8x1x5xf32> to vector<2x8x5x5xf32>
    %226 = vector.broadcast %222 : vector<2x1x5x5xf32> to vector<2x8x5x5xf32>
    %227 = arith.mulf %225, %226 : vector<2x8x5x5xf32>
    %228 = arith.addf %221, %227 : vector<2x8x5x5xf32>
    %229 = vector.extract_strided_slice %114 {offsets = [0, 1, 2, 1], sizes = [2, 1, 5, 5], strides = [1, 1, 1, 1]} : vector<2x4x7x7xf32> to vector<2x1x5x5xf32>
    %c16 = arith.constant 16 : index
    %c0_119 = arith.constant 0 : index
    %c0_120 = arith.constant 0 : index
    %c0_121 = arith.constant 0 : index
    %c0_122 = arith.constant 0 : index
    %230 = vector.load %arg2[%c16, %c0_119, %c0_120, %c0_121, %c0_122] : memref<36x1x8x1x5xf32, #tpu.memory_space<vmem>>, vector<1x1x8x1x5xf32>
    %231 = vector.shape_cast %230 : vector<1x1x8x1x5xf32> to vector<1x8x1x5xf32>
    %232 = vector.broadcast %231 : vector<1x8x1x5xf32> to vector<2x8x5x5xf32>
    %233 = vector.broadcast %229 : vector<2x1x5x5xf32> to vector<2x8x5x5xf32>
    %234 = arith.mulf %232, %233 : vector<2x8x5x5xf32>
    %235 = arith.addf %228, %234 : vector<2x8x5x5xf32>
    %236 = vector.extract_strided_slice %114 {offsets = [0, 1, 2, 2], sizes = [2, 1, 5, 5], strides = [1, 1, 1, 1]} : vector<2x4x7x7xf32> to vector<2x1x5x5xf32>
    %c17 = arith.constant 17 : index
    %c0_123 = arith.constant 0 : index
    %c0_124 = arith.constant 0 : index
    %c0_125 = arith.constant 0 : index
    %c0_126 = arith.constant 0 : index
    %237 = vector.load %arg2[%c17, %c0_123, %c0_124, %c0_125, %c0_126] : memref<36x1x8x1x5xf32, #tpu.memory_space<vmem>>, vector<1x1x8x1x5xf32>
    %238 = vector.shape_cast %237 : vector<1x1x8x1x5xf32> to vector<1x8x1x5xf32>
    %239 = vector.broadcast %238 : vector<1x8x1x5xf32> to vector<2x8x5x5xf32>
    %240 = vector.broadcast %236 : vector<2x1x5x5xf32> to vector<2x8x5x5xf32>
    %241 = arith.mulf %239, %240 : vector<2x8x5x5xf32>
    %242 = arith.addf %235, %241 : vector<2x8x5x5xf32>
    %243 = vector.extract_strided_slice %114 {offsets = [0, 2, 0, 0], sizes = [2, 1, 5, 5], strides = [1, 1, 1, 1]} : vector<2x4x7x7xf32> to vector<2x1x5x5xf32>
    %c18 = arith.constant 18 : index
    %c0_127 = arith.constant 0 : index
    %c0_128 = arith.constant 0 : index
    %c0_129 = arith.constant 0 : index
    %c0_130 = arith.constant 0 : index
    %244 = vector.load %arg2[%c18, %c0_127, %c0_128, %c0_129, %c0_130] : memref<36x1x8x1x5xf32, #tpu.memory_space<vmem>>, vector<1x1x8x1x5xf32>
    %245 = vector.shape_cast %244 : vector<1x1x8x1x5xf32> to vector<1x8x1x5xf32>
    %246 = vector.broadcast %245 : vector<1x8x1x5xf32> to vector<2x8x5x5xf32>
    %247 = vector.broadcast %243 : vector<2x1x5x5xf32> to vector<2x8x5x5xf32>
    %248 = arith.mulf %246, %247 : vector<2x8x5x5xf32>
    %249 = arith.addf %242, %248 : vector<2x8x5x5xf32>
    %250 = vector.extract_strided_slice %114 {offsets = [0, 2, 0, 1], sizes = [2, 1, 5, 5], strides = [1, 1, 1, 1]} : vector<2x4x7x7xf32> to vector<2x1x5x5xf32>
    %c19 = arith.constant 19 : index
    %c0_131 = arith.constant 0 : index
    %c0_132 = arith.constant 0 : index
    %c0_133 = arith.constant 0 : index
    %c0_134 = arith.constant 0 : index
    %251 = vector.load %arg2[%c19, %c0_131, %c0_132, %c0_133, %c0_134] : memref<36x1x8x1x5xf32, #tpu.memory_space<vmem>>, vector<1x1x8x1x5xf32>
    %252 = vector.shape_cast %251 : vector<1x1x8x1x5xf32> to vector<1x8x1x5xf32>
    %253 = vector.broadcast %252 : vector<1x8x1x5xf32> to vector<2x8x5x5xf32>
    %254 = vector.broadcast %250 : vector<2x1x5x5xf32> to vector<2x8x5x5xf32>
    %255 = arith.mulf %253, %254 : vector<2x8x5x5xf32>
    %256 = arith.addf %249, %255 : vector<2x8x5x5xf32>
    %257 = vector.extract_strided_slice %114 {offsets = [0, 2, 0, 2], sizes = [2, 1, 5, 5], strides = [1, 1, 1, 1]} : vector<2x4x7x7xf32> to vector<2x1x5x5xf32>
    %c20 = arith.constant 20 : index
    %c0_135 = arith.constant 0 : index
    %c0_136 = arith.constant 0 : index
    %c0_137 = arith.constant 0 : index
    %c0_138 = arith.constant 0 : index
    %258 = vector.load %arg2[%c20, %c0_135, %c0_136, %c0_137, %c0_138] : memref<36x1x8x1x5xf32, #tpu.memory_space<vmem>>, vector<1x1x8x1x5xf32>
    %259 = vector.shape_cast %258 : vector<1x1x8x1x5xf32> to vector<1x8x1x5xf32>
    %260 = vector.broadcast %259 : vector<1x8x1x5xf32> to vector<2x8x5x5xf32>
    %261 = vector.broadcast %257 : vector<2x1x5x5xf32> to vector<2x8x5x5xf32>
    %262 = arith.mulf %260, %261 : vector<2x8x5x5xf32>
    %263 = arith.addf %256, %262 : vector<2x8x5x5xf32>
    %264 = vector.extract_strided_slice %114 {offsets = [0, 2, 1, 0], sizes = [2, 1, 5, 5], strides = [1, 1, 1, 1]} : vector<2x4x7x7xf32> to vector<2x1x5x5xf32>
    %c21 = arith.constant 21 : index
    %c0_139 = arith.constant 0 : index
    %c0_140 = arith.constant 0 : index
    %c0_141 = arith.constant 0 : index
    %c0_142 = arith.constant 0 : index
    %265 = vector.load %arg2[%c21, %c0_139, %c0_140, %c0_141, %c0_142] : memref<36x1x8x1x5xf32, #tpu.memory_space<vmem>>, vector<1x1x8x1x5xf32>
    %266 = vector.shape_cast %265 : vector<1x1x8x1x5xf32> to vector<1x8x1x5xf32>
    %267 = vector.broadcast %266 : vector<1x8x1x5xf32> to vector<2x8x5x5xf32>
    %268 = vector.broadcast %264 : vector<2x1x5x5xf32> to vector<2x8x5x5xf32>
    %269 = arith.mulf %267, %268 : vector<2x8x5x5xf32>
    %270 = arith.addf %263, %269 : vector<2x8x5x5xf32>
    %271 = vector.extract_strided_slice %114 {offsets = [0, 2, 1, 1], sizes = [2, 1, 5, 5], strides = [1, 1, 1, 1]} : vector<2x4x7x7xf32> to vector<2x1x5x5xf32>
    %c22 = arith.constant 22 : index
    %c0_143 = arith.constant 0 : index
    %c0_144 = arith.constant 0 : index
    %c0_145 = arith.constant 0 : index
    %c0_146 = arith.constant 0 : index
    %272 = vector.load %arg2[%c22, %c0_143, %c0_144, %c0_145, %c0_146] : memref<36x1x8x1x5xf32, #tpu.memory_space<vmem>>, vector<1x1x8x1x5xf32>
    %273 = vector.shape_cast %272 : vector<1x1x8x1x5xf32> to vector<1x8x1x5xf32>
    %274 = vector.broadcast %273 : vector<1x8x1x5xf32> to vector<2x8x5x5xf32>
    %275 = vector.broadcast %271 : vector<2x1x5x5xf32> to vector<2x8x5x5xf32>
    %276 = arith.mulf %274, %275 : vector<2x8x5x5xf32>
    %277 = arith.addf %270, %276 : vector<2x8x5x5xf32>
    %278 = vector.extract_strided_slice %114 {offsets = [0, 2, 1, 2], sizes = [2, 1, 5, 5], strides = [1, 1, 1, 1]} : vector<2x4x7x7xf32> to vector<2x1x5x5xf32>
    %c23 = arith.constant 23 : index
    %c0_147 = arith.constant 0 : index
    %c0_148 = arith.constant 0 : index
    %c0_149 = arith.constant 0 : index
    %c0_150 = arith.constant 0 : index
    %279 = vector.load %arg2[%c23, %c0_147, %c0_148, %c0_149, %c0_150] : memref<36x1x8x1x5xf32, #tpu.memory_space<vmem>>, vector<1x1x8x1x5xf32>
    %280 = vector.shape_cast %279 : vector<1x1x8x1x5xf32> to vector<1x8x1x5xf32>
    %281 = vector.broadcast %280 : vector<1x8x1x5xf32> to vector<2x8x5x5xf32>
    %282 = vector.broadcast %278 : vector<2x1x5x5xf32> to vector<2x8x5x5xf32>
    %283 = arith.mulf %281, %282 : vector<2x8x5x5xf32>
    %284 = arith.addf %277, %283 : vector<2x8x5x5xf32>
    %285 = vector.extract_strided_slice %114 {offsets = [0, 2, 2, 0], sizes = [2, 1, 5, 5], strides = [1, 1, 1, 1]} : vector<2x4x7x7xf32> to vector<2x1x5x5xf32>
    %c24 = arith.constant 24 : index
    %c0_151 = arith.constant 0 : index
    %c0_152 = arith.constant 0 : index
    %c0_153 = arith.constant 0 : index
    %c0_154 = arith.constant 0 : index
    %286 = vector.load %arg2[%c24, %c0_151, %c0_152, %c0_153, %c0_154] : memref<36x1x8x1x5xf32, #tpu.memory_space<vmem>>, vector<1x1x8x1x5xf32>
    %287 = vector.shape_cast %286 : vector<1x1x8x1x5xf32> to vector<1x8x1x5xf32>
    %288 = vector.broadcast %287 : vector<1x8x1x5xf32> to vector<2x8x5x5xf32>
    %289 = vector.broadcast %285 : vector<2x1x5x5xf32> to vector<2x8x5x5xf32>
    %290 = arith.mulf %288, %289 : vector<2x8x5x5xf32>
    %291 = arith.addf %284, %290 : vector<2x8x5x5xf32>
    %292 = vector.extract_strided_slice %114 {offsets = [0, 2, 2, 1], sizes = [2, 1, 5, 5], strides = [1, 1, 1, 1]} : vector<2x4x7x7xf32> to vector<2x1x5x5xf32>
    %c25 = arith.constant 25 : index
    %c0_155 = arith.constant 0 : index
    %c0_156 = arith.constant 0 : index
    %c0_157 = arith.constant 0 : index
    %c0_158 = arith.constant 0 : index
    %293 = vector.load %arg2[%c25, %c0_155, %c0_156, %c0_157, %c0_158] : memref<36x1x8x1x5xf32, #tpu.memory_space<vmem>>, vector<1x1x8x1x5xf32>
    %294 = vector.shape_cast %293 : vector<1x1x8x1x5xf32> to vector<1x8x1x5xf32>
    %295 = vector.broadcast %294 : vector<1x8x1x5xf32> to vector<2x8x5x5xf32>
    %296 = vector.broadcast %292 : vector<2x1x5x5xf32> to vector<2x8x5x5xf32>
    %297 = arith.mulf %295, %296 : vector<2x8x5x5xf32>
    %298 = arith.addf %291, %297 : vector<2x8x5x5xf32>
    %299 = vector.extract_strided_slice %114 {offsets = [0, 2, 2, 2], sizes = [2, 1, 5, 5], strides = [1, 1, 1, 1]} : vector<2x4x7x7xf32> to vector<2x1x5x5xf32>
    %c26 = arith.constant 26 : index
    %c0_159 = arith.constant 0 : index
    %c0_160 = arith.constant 0 : index
    %c0_161 = arith.constant 0 : index
    %c0_162 = arith.constant 0 : index
    %300 = vector.load %arg2[%c26, %c0_159, %c0_160, %c0_161, %c0_162] : memref<36x1x8x1x5xf32, #tpu.memory_space<vmem>>, vector<1x1x8x1x5xf32>
    %301 = vector.shape_cast %300 : vector<1x1x8x1x5xf32> to vector<1x8x1x5xf32>
    %302 = vector.broadcast %301 : vector<1x8x1x5xf32> to vector<2x8x5x5xf32>
    %303 = vector.broadcast %299 : vector<2x1x5x5xf32> to vector<2x8x5x5xf32>
    %304 = arith.mulf %302, %303 : vector<2x8x5x5xf32>
    %305 = arith.addf %298, %304 : vector<2x8x5x5xf32>
    %306 = vector.extract_strided_slice %114 {offsets = [0, 3, 0, 0], sizes = [2, 1, 5, 5], strides = [1, 1, 1, 1]} : vector<2x4x7x7xf32> to vector<2x1x5x5xf32>
    %c27 = arith.constant 27 : index
    %c0_163 = arith.constant 0 : index
    %c0_164 = arith.constant 0 : index
    %c0_165 = arith.constant 0 : index
    %c0_166 = arith.constant 0 : index
    %307 = vector.load %arg2[%c27, %c0_163, %c0_164, %c0_165, %c0_166] : memref<36x1x8x1x5xf32, #tpu.memory_space<vmem>>, vector<1x1x8x1x5xf32>
    %308 = vector.shape_cast %307 : vector<1x1x8x1x5xf32> to vector<1x8x1x5xf32>
    %309 = vector.broadcast %308 : vector<1x8x1x5xf32> to vector<2x8x5x5xf32>
    %310 = vector.broadcast %306 : vector<2x1x5x5xf32> to vector<2x8x5x5xf32>
    %311 = arith.mulf %309, %310 : vector<2x8x5x5xf32>
    %312 = arith.addf %305, %311 : vector<2x8x5x5xf32>
    %313 = vector.extract_strided_slice %114 {offsets = [0, 3, 0, 1], sizes = [2, 1, 5, 5], strides = [1, 1, 1, 1]} : vector<2x4x7x7xf32> to vector<2x1x5x5xf32>
    %c28 = arith.constant 28 : index
    %c0_167 = arith.constant 0 : index
    %c0_168 = arith.constant 0 : index
    %c0_169 = arith.constant 0 : index
    %c0_170 = arith.constant 0 : index
    %314 = vector.load %arg2[%c28, %c0_167, %c0_168, %c0_169, %c0_170] : memref<36x1x8x1x5xf32, #tpu.memory_space<vmem>>, vector<1x1x8x1x5xf32>
    %315 = vector.shape_cast %314 : vector<1x1x8x1x5xf32> to vector<1x8x1x5xf32>
    %316 = vector.broadcast %315 : vector<1x8x1x5xf32> to vector<2x8x5x5xf32>
    %317 = vector.broadcast %313 : vector<2x1x5x5xf32> to vector<2x8x5x5xf32>
    %318 = arith.mulf %316, %317 : vector<2x8x5x5xf32>
    %319 = arith.addf %312, %318 : vector<2x8x5x5xf32>
    %320 = vector.extract_strided_slice %114 {offsets = [0, 3, 0, 2], sizes = [2, 1, 5, 5], strides = [1, 1, 1, 1]} : vector<2x4x7x7xf32> to vector<2x1x5x5xf32>
    %c29 = arith.constant 29 : index
    %c0_171 = arith.constant 0 : index
    %c0_172 = arith.constant 0 : index
    %c0_173 = arith.constant 0 : index
    %c0_174 = arith.constant 0 : index
    %321 = vector.load %arg2[%c29, %c0_171, %c0_172, %c0_173, %c0_174] : memref<36x1x8x1x5xf32, #tpu.memory_space<vmem>>, vector<1x1x8x1x5xf32>
    %322 = vector.shape_cast %321 : vector<1x1x8x1x5xf32> to vector<1x8x1x5xf32>
    %323 = vector.broadcast %322 : vector<1x8x1x5xf32> to vector<2x8x5x5xf32>
    %324 = vector.broadcast %320 : vector<2x1x5x5xf32> to vector<2x8x5x5xf32>
    %325 = arith.mulf %323, %324 : vector<2x8x5x5xf32>
    %326 = arith.addf %319, %325 : vector<2x8x5x5xf32>
    %327 = vector.extract_strided_slice %114 {offsets = [0, 3, 1, 0], sizes = [2, 1, 5, 5], strides = [1, 1, 1, 1]} : vector<2x4x7x7xf32> to vector<2x1x5x5xf32>
    %c30 = arith.constant 30 : index
    %c0_175 = arith.constant 0 : index
    %c0_176 = arith.constant 0 : index
    %c0_177 = arith.constant 0 : index
    %c0_178 = arith.constant 0 : index
    %328 = vector.load %arg2[%c30, %c0_175, %c0_176, %c0_177, %c0_178] : memref<36x1x8x1x5xf32, #tpu.memory_space<vmem>>, vector<1x1x8x1x5xf32>
    %329 = vector.shape_cast %328 : vector<1x1x8x1x5xf32> to vector<1x8x1x5xf32>
    %330 = vector.broadcast %329 : vector<1x8x1x5xf32> to vector<2x8x5x5xf32>
    %331 = vector.broadcast %327 : vector<2x1x5x5xf32> to vector<2x8x5x5xf32>
    %332 = arith.mulf %330, %331 : vector<2x8x5x5xf32>
    %333 = arith.addf %326, %332 : vector<2x8x5x5xf32>
    %334 = vector.extract_strided_slice %114 {offsets = [0, 3, 1, 1], sizes = [2, 1, 5, 5], strides = [1, 1, 1, 1]} : vector<2x4x7x7xf32> to vector<2x1x5x5xf32>
    %c31 = arith.constant 31 : index
    %c0_179 = arith.constant 0 : index
    %c0_180 = arith.constant 0 : index
    %c0_181 = arith.constant 0 : index
    %c0_182 = arith.constant 0 : index
    %335 = vector.load %arg2[%c31, %c0_179, %c0_180, %c0_181, %c0_182] : memref<36x1x8x1x5xf32, #tpu.memory_space<vmem>>, vector<1x1x8x1x5xf32>
    %336 = vector.shape_cast %335 : vector<1x1x8x1x5xf32> to vector<1x8x1x5xf32>
    %337 = vector.broadcast %336 : vector<1x8x1x5xf32> to vector<2x8x5x5xf32>
    %338 = vector.broadcast %334 : vector<2x1x5x5xf32> to vector<2x8x5x5xf32>
    %339 = arith.mulf %337, %338 : vector<2x8x5x5xf32>
    %340 = arith.addf %333, %339 : vector<2x8x5x5xf32>
    %341 = vector.extract_strided_slice %114 {offsets = [0, 3, 1, 2], sizes = [2, 1, 5, 5], strides = [1, 1, 1, 1]} : vector<2x4x7x7xf32> to vector<2x1x5x5xf32>
    %c32 = arith.constant 32 : index
    %c0_183 = arith.constant 0 : index
    %c0_184 = arith.constant 0 : index
    %c0_185 = arith.constant 0 : index
    %c0_186 = arith.constant 0 : index
    %342 = vector.load %arg2[%c32, %c0_183, %c0_184, %c0_185, %c0_186] : memref<36x1x8x1x5xf32, #tpu.memory_space<vmem>>, vector<1x1x8x1x5xf32>
    %343 = vector.shape_cast %342 : vector<1x1x8x1x5xf32> to vector<1x8x1x5xf32>
    %344 = vector.broadcast %343 : vector<1x8x1x5xf32> to vector<2x8x5x5xf32>
    %345 = vector.broadcast %341 : vector<2x1x5x5xf32> to vector<2x8x5x5xf32>
    %346 = arith.mulf %344, %345 : vector<2x8x5x5xf32>
    %347 = arith.addf %340, %346 : vector<2x8x5x5xf32>
    %348 = vector.extract_strided_slice %114 {offsets = [0, 3, 2, 0], sizes = [2, 1, 5, 5], strides = [1, 1, 1, 1]} : vector<2x4x7x7xf32> to vector<2x1x5x5xf32>
    %c33 = arith.constant 33 : index
    %c0_187 = arith.constant 0 : index
    %c0_188 = arith.constant 0 : index
    %c0_189 = arith.constant 0 : index
    %c0_190 = arith.constant 0 : index
    %349 = vector.load %arg2[%c33, %c0_187, %c0_188, %c0_189, %c0_190] : memref<36x1x8x1x5xf32, #tpu.memory_space<vmem>>, vector<1x1x8x1x5xf32>
    %350 = vector.shape_cast %349 : vector<1x1x8x1x5xf32> to vector<1x8x1x5xf32>
    %351 = vector.broadcast %350 : vector<1x8x1x5xf32> to vector<2x8x5x5xf32>
    %352 = vector.broadcast %348 : vector<2x1x5x5xf32> to vector<2x8x5x5xf32>
    %353 = arith.mulf %351, %352 : vector<2x8x5x5xf32>
    %354 = arith.addf %347, %353 : vector<2x8x5x5xf32>
    %355 = vector.extract_strided_slice %114 {offsets = [0, 3, 2, 1], sizes = [2, 1, 5, 5], strides = [1, 1, 1, 1]} : vector<2x4x7x7xf32> to vector<2x1x5x5xf32>
    %c34 = arith.constant 34 : index
    %c0_191 = arith.constant 0 : index
    %c0_192 = arith.constant 0 : index
    %c0_193 = arith.constant 0 : index
    %c0_194 = arith.constant 0 : index
    %356 = vector.load %arg2[%c34, %c0_191, %c0_192, %c0_193, %c0_194] : memref<36x1x8x1x5xf32, #tpu.memory_space<vmem>>, vector<1x1x8x1x5xf32>
    %357 = vector.shape_cast %356 : vector<1x1x8x1x5xf32> to vector<1x8x1x5xf32>
    %358 = vector.broadcast %357 : vector<1x8x1x5xf32> to vector<2x8x5x5xf32>
    %359 = vector.broadcast %355 : vector<2x1x5x5xf32> to vector<2x8x5x5xf32>
    %360 = arith.mulf %358, %359 : vector<2x8x5x5xf32>
    %361 = arith.addf %354, %360 : vector<2x8x5x5xf32>
    %362 = vector.extract_strided_slice %114 {offsets = [0, 3, 2, 2], sizes = [2, 1, 5, 5], strides = [1, 1, 1, 1]} : vector<2x4x7x7xf32> to vector<2x1x5x5xf32>
    %c35 = arith.constant 35 : index
    %c0_195 = arith.constant 0 : index
    %c0_196 = arith.constant 0 : index
    %c0_197 = arith.constant 0 : index
    %c0_198 = arith.constant 0 : index
    %363 = vector.load %arg2[%c35, %c0_195, %c0_196, %c0_197, %c0_198] : memref<36x1x8x1x5xf32, #tpu.memory_space<vmem>>, vector<1x1x8x1x5xf32>
    %364 = vector.shape_cast %363 : vector<1x1x8x1x5xf32> to vector<1x8x1x5xf32>
    %365 = vector.broadcast %364 : vector<1x8x1x5xf32> to vector<2x8x5x5xf32>
    %366 = vector.broadcast %362 : vector<2x1x5x5xf32> to vector<2x8x5x5xf32>
    %367 = arith.mulf %365, %366 : vector<2x8x5x5xf32>
    %368 = arith.addf %361, %367 : vector<2x8x5x5xf32>
    %369 = vector.broadcast %115 : vector<1x8x1x5xf32> to vector<2x8x5x5xf32>
    %370 = arith.addf %368, %369 : vector<2x8x5x5xf32>
    %cst_199 = arith.constant 0.000000e+00 : f32
    %371 = vector.broadcast %cst_199 : f32 to vector<2x8x5x5xf32>
    %372 = arith.maximumf %370, %371 : vector<2x8x5x5xf32>
    %373 = vector.extract_strided_slice %372 {offsets = [0, 0, 0, 0], sizes = [2, 8, 1, 5], strides = [1, 1, 1, 1]} : vector<2x8x5x5xf32> to vector<2x8x1x5xf32>
    %374 = vector.extract_strided_slice %372 {offsets = [0, 0, 1, 0], sizes = [2, 8, 1, 5], strides = [1, 1, 1, 1]} : vector<2x8x5x5xf32> to vector<2x8x1x5xf32>
    %375 = arith.maximumf %373, %374 : vector<2x8x1x5xf32>
    %376 = vector.extract_strided_slice %372 {offsets = [0, 0, 2, 0], sizes = [2, 8, 1, 5], strides = [1, 1, 1, 1]} : vector<2x8x5x5xf32> to vector<2x8x1x5xf32>
    %377 = vector.extract_strided_slice %372 {offsets = [0, 0, 3, 0], sizes = [2, 8, 1, 5], strides = [1, 1, 1, 1]} : vector<2x8x5x5xf32> to vector<2x8x1x5xf32>
    %378 = arith.maximumf %376, %377 : vector<2x8x1x5xf32>
    %379 = tpu.concatenate %375, %378 in 2 : vector<2x8x1x5xf32>, vector<2x8x1x5xf32> -> vector<2x8x2x5xf32>
    %380 = vector.extract_strided_slice %379 {offsets = [0, 0, 0, 0], sizes = [2, 8, 2, 1], strides = [1, 1, 1, 1]} : vector<2x8x2x5xf32> to vector<2x8x2x1xf32>
    %381 = vector.extract_strided_slice %379 {offsets = [0, 0, 0, 1], sizes = [2, 8, 2, 1], strides = [1, 1, 1, 1]} : vector<2x8x2x5xf32> to vector<2x8x2x1xf32>
    %382 = arith.maximumf %380, %381 : vector<2x8x2x1xf32>
    %383 = vector.extract_strided_slice %379 {offsets = [0, 0, 0, 2], sizes = [2, 8, 2, 1], strides = [1, 1, 1, 1]} : vector<2x8x2x5xf32> to vector<2x8x2x1xf32>
    %384 = vector.extract_strided_slice %379 {offsets = [0, 0, 0, 3], sizes = [2, 8, 2, 1], strides = [1, 1, 1, 1]} : vector<2x8x2x5xf32> to vector<2x8x2x1xf32>
    %385 = arith.maximumf %383, %384 : vector<2x8x2x1xf32>
    %386 = tpu.concatenate %382, %385 in 3 : vector<2x8x2x1xf32>, vector<2x8x2x1xf32> -> vector<2x8x2x2xf32>
    %c0_200 = arith.constant 0 : index
    %c0_201 = arith.constant 0 : index
    %387 = vector.load %arg4[%c0_200, %c0_201] : memref<32x49xf32, #tpu.memory_space<vmem>>, vector<32x49xf32>
    %c0_202 = arith.constant 0 : index
    %c0_203 = arith.constant 0 : index
    %388 = vector.load %arg5[%c0_202, %c0_203] : memref<1x49xf32, #tpu.memory_space<vmem>>, vector<1x49xf32>
    %389 = vector.extract_strided_slice %387 {offsets = [0, 0], sizes = [32, 32], strides = [1, 1]} : vector<32x49xf32> to vector<32x32xf32>
    %390 = vector.extract_strided_slice %387 {offsets = [0, 32], sizes = [32, 16], strides = [1, 1]} : vector<32x49xf32> to vector<32x16xf32>
    %391 = vector.extract_strided_slice %387 {offsets = [0, 48], sizes = [16, 1], strides = [1, 1]} : vector<32x49xf32> to vector<16x1xf32>
    %392 = vector.extract_strided_slice %388 {offsets = [0, 0], sizes = [1, 32], strides = [1, 1]} : vector<1x49xf32> to vector<1x32xf32>
    %393 = vector.extract_strided_slice %388 {offsets = [0, 32], sizes = [1, 16], strides = [1, 1]} : vector<1x49xf32> to vector<1x16xf32>
    %394 = vector.extract_strided_slice %388 {offsets = [0, 48], sizes = [1, 1], strides = [1, 1]} : vector<1x49xf32> to vector<1x1xf32>
    %cst_204 = arith.constant 0.000000e+00 : f32
    %395 = vector.broadcast %cst_204 : f32 to vector<2x32xf32>
    %396 = vector.broadcast %392 : vector<1x32xf32> to vector<2x32xf32>
    %397 = arith.addf %395, %396 : vector<2x32xf32>
    %398 = vector.extract_strided_slice %386 {offsets = [0, 0, 0, 0], sizes = [2, 1, 1, 1], strides = [1, 1, 1, 1]} : vector<2x8x2x2xf32> to vector<2x1x1x1xf32>
    %399 = vector.shape_cast %398 : vector<2x1x1x1xf32> to vector<2x1xf32>
    %400 = vector.extract_strided_slice %389 {offsets = [0, 0], sizes = [1, 32], strides = [1, 1]} : vector<32x32xf32> to vector<1x32xf32>
    %401 = vector.broadcast %399 : vector<2x1xf32> to vector<2x32xf32>
    %402 = vector.broadcast %400 : vector<1x32xf32> to vector<2x32xf32>
    %403 = arith.mulf %401, %402 : vector<2x32xf32>
    %404 = arith.addf %397, %403 : vector<2x32xf32>
    %405 = vector.extract_strided_slice %386 {offsets = [0, 0, 0, 1], sizes = [2, 1, 1, 1], strides = [1, 1, 1, 1]} : vector<2x8x2x2xf32> to vector<2x1x1x1xf32>
    %406 = vector.shape_cast %405 : vector<2x1x1x1xf32> to vector<2x1xf32>
    %407 = vector.extract_strided_slice %389 {offsets = [1, 0], sizes = [1, 32], strides = [1, 1]} : vector<32x32xf32> to vector<1x32xf32>
    %408 = vector.broadcast %406 : vector<2x1xf32> to vector<2x32xf32>
    %409 = vector.broadcast %407 : vector<1x32xf32> to vector<2x32xf32>
    %410 = arith.mulf %408, %409 : vector<2x32xf32>
    %411 = arith.addf %404, %410 : vector<2x32xf32>
    %412 = vector.extract_strided_slice %386 {offsets = [0, 0, 1, 0], sizes = [2, 1, 1, 1], strides = [1, 1, 1, 1]} : vector<2x8x2x2xf32> to vector<2x1x1x1xf32>
    %413 = vector.shape_cast %412 : vector<2x1x1x1xf32> to vector<2x1xf32>
    %414 = vector.extract_strided_slice %389 {offsets = [2, 0], sizes = [1, 32], strides = [1, 1]} : vector<32x32xf32> to vector<1x32xf32>
    %415 = vector.broadcast %413 : vector<2x1xf32> to vector<2x32xf32>
    %416 = vector.broadcast %414 : vector<1x32xf32> to vector<2x32xf32>
    %417 = arith.mulf %415, %416 : vector<2x32xf32>
    %418 = arith.addf %411, %417 : vector<2x32xf32>
    %419 = vector.extract_strided_slice %386 {offsets = [0, 0, 1, 1], sizes = [2, 1, 1, 1], strides = [1, 1, 1, 1]} : vector<2x8x2x2xf32> to vector<2x1x1x1xf32>
    %420 = vector.shape_cast %419 : vector<2x1x1x1xf32> to vector<2x1xf32>
    %421 = vector.extract_strided_slice %389 {offsets = [3, 0], sizes = [1, 32], strides = [1, 1]} : vector<32x32xf32> to vector<1x32xf32>
    %422 = vector.broadcast %420 : vector<2x1xf32> to vector<2x32xf32>
    %423 = vector.broadcast %421 : vector<1x32xf32> to vector<2x32xf32>
    %424 = arith.mulf %422, %423 : vector<2x32xf32>
    %425 = arith.addf %418, %424 : vector<2x32xf32>
    %426 = vector.extract_strided_slice %386 {offsets = [0, 1, 0, 0], sizes = [2, 1, 1, 1], strides = [1, 1, 1, 1]} : vector<2x8x2x2xf32> to vector<2x1x1x1xf32>
    %427 = vector.shape_cast %426 : vector<2x1x1x1xf32> to vector<2x1xf32>
    %428 = vector.extract_strided_slice %389 {offsets = [4, 0], sizes = [1, 32], strides = [1, 1]} : vector<32x32xf32> to vector<1x32xf32>
    %429 = vector.broadcast %427 : vector<2x1xf32> to vector<2x32xf32>
    %430 = vector.broadcast %428 : vector<1x32xf32> to vector<2x32xf32>
    %431 = arith.mulf %429, %430 : vector<2x32xf32>
    %432 = arith.addf %425, %431 : vector<2x32xf32>
    %433 = vector.extract_strided_slice %386 {offsets = [0, 1, 0, 1], sizes = [2, 1, 1, 1], strides = [1, 1, 1, 1]} : vector<2x8x2x2xf32> to vector<2x1x1x1xf32>
    %434 = vector.shape_cast %433 : vector<2x1x1x1xf32> to vector<2x1xf32>
    %435 = vector.extract_strided_slice %389 {offsets = [5, 0], sizes = [1, 32], strides = [1, 1]} : vector<32x32xf32> to vector<1x32xf32>
    %436 = vector.broadcast %434 : vector<2x1xf32> to vector<2x32xf32>
    %437 = vector.broadcast %435 : vector<1x32xf32> to vector<2x32xf32>
    %438 = arith.mulf %436, %437 : vector<2x32xf32>
    %439 = arith.addf %432, %438 : vector<2x32xf32>
    %440 = vector.extract_strided_slice %386 {offsets = [0, 1, 1, 0], sizes = [2, 1, 1, 1], strides = [1, 1, 1, 1]} : vector<2x8x2x2xf32> to vector<2x1x1x1xf32>
    %441 = vector.shape_cast %440 : vector<2x1x1x1xf32> to vector<2x1xf32>
    %442 = vector.extract_strided_slice %389 {offsets = [6, 0], sizes = [1, 32], strides = [1, 1]} : vector<32x32xf32> to vector<1x32xf32>
    %443 = vector.broadcast %441 : vector<2x1xf32> to vector<2x32xf32>
    %444 = vector.broadcast %442 : vector<1x32xf32> to vector<2x32xf32>
    %445 = arith.mulf %443, %444 : vector<2x32xf32>
    %446 = arith.addf %439, %445 : vector<2x32xf32>
    %447 = vector.extract_strided_slice %386 {offsets = [0, 1, 1, 1], sizes = [2, 1, 1, 1], strides = [1, 1, 1, 1]} : vector<2x8x2x2xf32> to vector<2x1x1x1xf32>
    %448 = vector.shape_cast %447 : vector<2x1x1x1xf32> to vector<2x1xf32>
    %449 = vector.extract_strided_slice %389 {offsets = [7, 0], sizes = [1, 32], strides = [1, 1]} : vector<32x32xf32> to vector<1x32xf32>
    %450 = vector.broadcast %448 : vector<2x1xf32> to vector<2x32xf32>
    %451 = vector.broadcast %449 : vector<1x32xf32> to vector<2x32xf32>
    %452 = arith.mulf %450, %451 : vector<2x32xf32>
    %453 = arith.addf %446, %452 : vector<2x32xf32>
    %454 = vector.extract_strided_slice %386 {offsets = [0, 2, 0, 0], sizes = [2, 1, 1, 1], strides = [1, 1, 1, 1]} : vector<2x8x2x2xf32> to vector<2x1x1x1xf32>
    %455 = vector.shape_cast %454 : vector<2x1x1x1xf32> to vector<2x1xf32>
    %456 = vector.extract_strided_slice %389 {offsets = [8, 0], sizes = [1, 32], strides = [1, 1]} : vector<32x32xf32> to vector<1x32xf32>
    %457 = vector.broadcast %455 : vector<2x1xf32> to vector<2x32xf32>
    %458 = vector.broadcast %456 : vector<1x32xf32> to vector<2x32xf32>
    %459 = arith.mulf %457, %458 : vector<2x32xf32>
    %460 = arith.addf %453, %459 : vector<2x32xf32>
    %461 = vector.extract_strided_slice %386 {offsets = [0, 2, 0, 1], sizes = [2, 1, 1, 1], strides = [1, 1, 1, 1]} : vector<2x8x2x2xf32> to vector<2x1x1x1xf32>
    %462 = vector.shape_cast %461 : vector<2x1x1x1xf32> to vector<2x1xf32>
    %463 = vector.extract_strided_slice %389 {offsets = [9, 0], sizes = [1, 32], strides = [1, 1]} : vector<32x32xf32> to vector<1x32xf32>
    %464 = vector.broadcast %462 : vector<2x1xf32> to vector<2x32xf32>
    %465 = vector.broadcast %463 : vector<1x32xf32> to vector<2x32xf32>
    %466 = arith.mulf %464, %465 : vector<2x32xf32>
    %467 = arith.addf %460, %466 : vector<2x32xf32>
    %468 = vector.extract_strided_slice %386 {offsets = [0, 2, 1, 0], sizes = [2, 1, 1, 1], strides = [1, 1, 1, 1]} : vector<2x8x2x2xf32> to vector<2x1x1x1xf32>
    %469 = vector.shape_cast %468 : vector<2x1x1x1xf32> to vector<2x1xf32>
    %470 = vector.extract_strided_slice %389 {offsets = [10, 0], sizes = [1, 32], strides = [1, 1]} : vector<32x32xf32> to vector<1x32xf32>
    %471 = vector.broadcast %469 : vector<2x1xf32> to vector<2x32xf32>
    %472 = vector.broadcast %470 : vector<1x32xf32> to vector<2x32xf32>
    %473 = arith.mulf %471, %472 : vector<2x32xf32>
    %474 = arith.addf %467, %473 : vector<2x32xf32>
    %475 = vector.extract_strided_slice %386 {offsets = [0, 2, 1, 1], sizes = [2, 1, 1, 1], strides = [1, 1, 1, 1]} : vector<2x8x2x2xf32> to vector<2x1x1x1xf32>
    %476 = vector.shape_cast %475 : vector<2x1x1x1xf32> to vector<2x1xf32>
    %477 = vector.extract_strided_slice %389 {offsets = [11, 0], sizes = [1, 32], strides = [1, 1]} : vector<32x32xf32> to vector<1x32xf32>
    %478 = vector.broadcast %476 : vector<2x1xf32> to vector<2x32xf32>
    %479 = vector.broadcast %477 : vector<1x32xf32> to vector<2x32xf32>
    %480 = arith.mulf %478, %479 : vector<2x32xf32>
    %481 = arith.addf %474, %480 : vector<2x32xf32>
    %482 = vector.extract_strided_slice %386 {offsets = [0, 3, 0, 0], sizes = [2, 1, 1, 1], strides = [1, 1, 1, 1]} : vector<2x8x2x2xf32> to vector<2x1x1x1xf32>
    %483 = vector.shape_cast %482 : vector<2x1x1x1xf32> to vector<2x1xf32>
    %484 = vector.extract_strided_slice %389 {offsets = [12, 0], sizes = [1, 32], strides = [1, 1]} : vector<32x32xf32> to vector<1x32xf32>
    %485 = vector.broadcast %483 : vector<2x1xf32> to vector<2x32xf32>
    %486 = vector.broadcast %484 : vector<1x32xf32> to vector<2x32xf32>
    %487 = arith.mulf %485, %486 : vector<2x32xf32>
    %488 = arith.addf %481, %487 : vector<2x32xf32>
    %489 = vector.extract_strided_slice %386 {offsets = [0, 3, 0, 1], sizes = [2, 1, 1, 1], strides = [1, 1, 1, 1]} : vector<2x8x2x2xf32> to vector<2x1x1x1xf32>
    %490 = vector.shape_cast %489 : vector<2x1x1x1xf32> to vector<2x1xf32>
    %491 = vector.extract_strided_slice %389 {offsets = [13, 0], sizes = [1, 32], strides = [1, 1]} : vector<32x32xf32> to vector<1x32xf32>
    %492 = vector.broadcast %490 : vector<2x1xf32> to vector<2x32xf32>
    %493 = vector.broadcast %491 : vector<1x32xf32> to vector<2x32xf32>
    %494 = arith.mulf %492, %493 : vector<2x32xf32>
    %495 = arith.addf %488, %494 : vector<2x32xf32>
    %496 = vector.extract_strided_slice %386 {offsets = [0, 3, 1, 0], sizes = [2, 1, 1, 1], strides = [1, 1, 1, 1]} : vector<2x8x2x2xf32> to vector<2x1x1x1xf32>
    %497 = vector.shape_cast %496 : vector<2x1x1x1xf32> to vector<2x1xf32>
    %498 = vector.extract_strided_slice %389 {offsets = [14, 0], sizes = [1, 32], strides = [1, 1]} : vector<32x32xf32> to vector<1x32xf32>
    %499 = vector.broadcast %497 : vector<2x1xf32> to vector<2x32xf32>
    %500 = vector.broadcast %498 : vector<1x32xf32> to vector<2x32xf32>
    %501 = arith.mulf %499, %500 : vector<2x32xf32>
    %502 = arith.addf %495, %501 : vector<2x32xf32>
    %503 = vector.extract_strided_slice %386 {offsets = [0, 3, 1, 1], sizes = [2, 1, 1, 1], strides = [1, 1, 1, 1]} : vector<2x8x2x2xf32> to vector<2x1x1x1xf32>
    %504 = vector.shape_cast %503 : vector<2x1x1x1xf32> to vector<2x1xf32>
    %505 = vector.extract_strided_slice %389 {offsets = [15, 0], sizes = [1, 32], strides = [1, 1]} : vector<32x32xf32> to vector<1x32xf32>
    %506 = vector.broadcast %504 : vector<2x1xf32> to vector<2x32xf32>
    %507 = vector.broadcast %505 : vector<1x32xf32> to vector<2x32xf32>
    %508 = arith.mulf %506, %507 : vector<2x32xf32>
    %509 = arith.addf %502, %508 : vector<2x32xf32>
    %510 = vector.extract_strided_slice %386 {offsets = [0, 4, 0, 0], sizes = [2, 1, 1, 1], strides = [1, 1, 1, 1]} : vector<2x8x2x2xf32> to vector<2x1x1x1xf32>
    %511 = vector.shape_cast %510 : vector<2x1x1x1xf32> to vector<2x1xf32>
    %512 = vector.extract_strided_slice %389 {offsets = [16, 0], sizes = [1, 32], strides = [1, 1]} : vector<32x32xf32> to vector<1x32xf32>
    %513 = vector.broadcast %511 : vector<2x1xf32> to vector<2x32xf32>
    %514 = vector.broadcast %512 : vector<1x32xf32> to vector<2x32xf32>
    %515 = arith.mulf %513, %514 : vector<2x32xf32>
    %516 = arith.addf %509, %515 : vector<2x32xf32>
    %517 = vector.extract_strided_slice %386 {offsets = [0, 4, 0, 1], sizes = [2, 1, 1, 1], strides = [1, 1, 1, 1]} : vector<2x8x2x2xf32> to vector<2x1x1x1xf32>
    %518 = vector.shape_cast %517 : vector<2x1x1x1xf32> to vector<2x1xf32>
    %519 = vector.extract_strided_slice %389 {offsets = [17, 0], sizes = [1, 32], strides = [1, 1]} : vector<32x32xf32> to vector<1x32xf32>
    %520 = vector.broadcast %518 : vector<2x1xf32> to vector<2x32xf32>
    %521 = vector.broadcast %519 : vector<1x32xf32> to vector<2x32xf32>
    %522 = arith.mulf %520, %521 : vector<2x32xf32>
    %523 = arith.addf %516, %522 : vector<2x32xf32>
    %524 = vector.extract_strided_slice %386 {offsets = [0, 4, 1, 0], sizes = [2, 1, 1, 1], strides = [1, 1, 1, 1]} : vector<2x8x2x2xf32> to vector<2x1x1x1xf32>
    %525 = vector.shape_cast %524 : vector<2x1x1x1xf32> to vector<2x1xf32>
    %526 = vector.extract_strided_slice %389 {offsets = [18, 0], sizes = [1, 32], strides = [1, 1]} : vector<32x32xf32> to vector<1x32xf32>
    %527 = vector.broadcast %525 : vector<2x1xf32> to vector<2x32xf32>
    %528 = vector.broadcast %526 : vector<1x32xf32> to vector<2x32xf32>
    %529 = arith.mulf %527, %528 : vector<2x32xf32>
    %530 = arith.addf %523, %529 : vector<2x32xf32>
    %531 = vector.extract_strided_slice %386 {offsets = [0, 4, 1, 1], sizes = [2, 1, 1, 1], strides = [1, 1, 1, 1]} : vector<2x8x2x2xf32> to vector<2x1x1x1xf32>
    %532 = vector.shape_cast %531 : vector<2x1x1x1xf32> to vector<2x1xf32>
    %533 = vector.extract_strided_slice %389 {offsets = [19, 0], sizes = [1, 32], strides = [1, 1]} : vector<32x32xf32> to vector<1x32xf32>
    %534 = vector.broadcast %532 : vector<2x1xf32> to vector<2x32xf32>
    %535 = vector.broadcast %533 : vector<1x32xf32> to vector<2x32xf32>
    %536 = arith.mulf %534, %535 : vector<2x32xf32>
    %537 = arith.addf %530, %536 : vector<2x32xf32>
    %538 = vector.extract_strided_slice %386 {offsets = [0, 5, 0, 0], sizes = [2, 1, 1, 1], strides = [1, 1, 1, 1]} : vector<2x8x2x2xf32> to vector<2x1x1x1xf32>
    %539 = vector.shape_cast %538 : vector<2x1x1x1xf32> to vector<2x1xf32>
    %540 = vector.extract_strided_slice %389 {offsets = [20, 0], sizes = [1, 32], strides = [1, 1]} : vector<32x32xf32> to vector<1x32xf32>
    %541 = vector.broadcast %539 : vector<2x1xf32> to vector<2x32xf32>
    %542 = vector.broadcast %540 : vector<1x32xf32> to vector<2x32xf32>
    %543 = arith.mulf %541, %542 : vector<2x32xf32>
    %544 = arith.addf %537, %543 : vector<2x32xf32>
    %545 = vector.extract_strided_slice %386 {offsets = [0, 5, 0, 1], sizes = [2, 1, 1, 1], strides = [1, 1, 1, 1]} : vector<2x8x2x2xf32> to vector<2x1x1x1xf32>
    %546 = vector.shape_cast %545 : vector<2x1x1x1xf32> to vector<2x1xf32>
    %547 = vector.extract_strided_slice %389 {offsets = [21, 0], sizes = [1, 32], strides = [1, 1]} : vector<32x32xf32> to vector<1x32xf32>
    %548 = vector.broadcast %546 : vector<2x1xf32> to vector<2x32xf32>
    %549 = vector.broadcast %547 : vector<1x32xf32> to vector<2x32xf32>
    %550 = arith.mulf %548, %549 : vector<2x32xf32>
    %551 = arith.addf %544, %550 : vector<2x32xf32>
    %552 = vector.extract_strided_slice %386 {offsets = [0, 5, 1, 0], sizes = [2, 1, 1, 1], strides = [1, 1, 1, 1]} : vector<2x8x2x2xf32> to vector<2x1x1x1xf32>
    %553 = vector.shape_cast %552 : vector<2x1x1x1xf32> to vector<2x1xf32>
    %554 = vector.extract_strided_slice %389 {offsets = [22, 0], sizes = [1, 32], strides = [1, 1]} : vector<32x32xf32> to vector<1x32xf32>
    %555 = vector.broadcast %553 : vector<2x1xf32> to vector<2x32xf32>
    %556 = vector.broadcast %554 : vector<1x32xf32> to vector<2x32xf32>
    %557 = arith.mulf %555, %556 : vector<2x32xf32>
    %558 = arith.addf %551, %557 : vector<2x32xf32>
    %559 = vector.extract_strided_slice %386 {offsets = [0, 5, 1, 1], sizes = [2, 1, 1, 1], strides = [1, 1, 1, 1]} : vector<2x8x2x2xf32> to vector<2x1x1x1xf32>
    %560 = vector.shape_cast %559 : vector<2x1x1x1xf32> to vector<2x1xf32>
    %561 = vector.extract_strided_slice %389 {offsets = [23, 0], sizes = [1, 32], strides = [1, 1]} : vector<32x32xf32> to vector<1x32xf32>
    %562 = vector.broadcast %560 : vector<2x1xf32> to vector<2x32xf32>
    %563 = vector.broadcast %561 : vector<1x32xf32> to vector<2x32xf32>
    %564 = arith.mulf %562, %563 : vector<2x32xf32>
    %565 = arith.addf %558, %564 : vector<2x32xf32>
    %566 = vector.extract_strided_slice %386 {offsets = [0, 6, 0, 0], sizes = [2, 1, 1, 1], strides = [1, 1, 1, 1]} : vector<2x8x2x2xf32> to vector<2x1x1x1xf32>
    %567 = vector.shape_cast %566 : vector<2x1x1x1xf32> to vector<2x1xf32>
    %568 = vector.extract_strided_slice %389 {offsets = [24, 0], sizes = [1, 32], strides = [1, 1]} : vector<32x32xf32> to vector<1x32xf32>
    %569 = vector.broadcast %567 : vector<2x1xf32> to vector<2x32xf32>
    %570 = vector.broadcast %568 : vector<1x32xf32> to vector<2x32xf32>
    %571 = arith.mulf %569, %570 : vector<2x32xf32>
    %572 = arith.addf %565, %571 : vector<2x32xf32>
    %573 = vector.extract_strided_slice %386 {offsets = [0, 6, 0, 1], sizes = [2, 1, 1, 1], strides = [1, 1, 1, 1]} : vector<2x8x2x2xf32> to vector<2x1x1x1xf32>
    %574 = vector.shape_cast %573 : vector<2x1x1x1xf32> to vector<2x1xf32>
    %575 = vector.extract_strided_slice %389 {offsets = [25, 0], sizes = [1, 32], strides = [1, 1]} : vector<32x32xf32> to vector<1x32xf32>
    %576 = vector.broadcast %574 : vector<2x1xf32> to vector<2x32xf32>
    %577 = vector.broadcast %575 : vector<1x32xf32> to vector<2x32xf32>
    %578 = arith.mulf %576, %577 : vector<2x32xf32>
    %579 = arith.addf %572, %578 : vector<2x32xf32>
    %580 = vector.extract_strided_slice %386 {offsets = [0, 6, 1, 0], sizes = [2, 1, 1, 1], strides = [1, 1, 1, 1]} : vector<2x8x2x2xf32> to vector<2x1x1x1xf32>
    %581 = vector.shape_cast %580 : vector<2x1x1x1xf32> to vector<2x1xf32>
    %582 = vector.extract_strided_slice %389 {offsets = [26, 0], sizes = [1, 32], strides = [1, 1]} : vector<32x32xf32> to vector<1x32xf32>
    %583 = vector.broadcast %581 : vector<2x1xf32> to vector<2x32xf32>
    %584 = vector.broadcast %582 : vector<1x32xf32> to vector<2x32xf32>
    %585 = arith.mulf %583, %584 : vector<2x32xf32>
    %586 = arith.addf %579, %585 : vector<2x32xf32>
    %587 = vector.extract_strided_slice %386 {offsets = [0, 6, 1, 1], sizes = [2, 1, 1, 1], strides = [1, 1, 1, 1]} : vector<2x8x2x2xf32> to vector<2x1x1x1xf32>
    %588 = vector.shape_cast %587 : vector<2x1x1x1xf32> to vector<2x1xf32>
    %589 = vector.extract_strided_slice %389 {offsets = [27, 0], sizes = [1, 32], strides = [1, 1]} : vector<32x32xf32> to vector<1x32xf32>
    %590 = vector.broadcast %588 : vector<2x1xf32> to vector<2x32xf32>
    %591 = vector.broadcast %589 : vector<1x32xf32> to vector<2x32xf32>
    %592 = arith.mulf %590, %591 : vector<2x32xf32>
    %593 = arith.addf %586, %592 : vector<2x32xf32>
    %594 = vector.extract_strided_slice %386 {offsets = [0, 7, 0, 0], sizes = [2, 1, 1, 1], strides = [1, 1, 1, 1]} : vector<2x8x2x2xf32> to vector<2x1x1x1xf32>
    %595 = vector.shape_cast %594 : vector<2x1x1x1xf32> to vector<2x1xf32>
    %596 = vector.extract_strided_slice %389 {offsets = [28, 0], sizes = [1, 32], strides = [1, 1]} : vector<32x32xf32> to vector<1x32xf32>
    %597 = vector.broadcast %595 : vector<2x1xf32> to vector<2x32xf32>
    %598 = vector.broadcast %596 : vector<1x32xf32> to vector<2x32xf32>
    %599 = arith.mulf %597, %598 : vector<2x32xf32>
    %600 = arith.addf %593, %599 : vector<2x32xf32>
    %601 = vector.extract_strided_slice %386 {offsets = [0, 7, 0, 1], sizes = [2, 1, 1, 1], strides = [1, 1, 1, 1]} : vector<2x8x2x2xf32> to vector<2x1x1x1xf32>
    %602 = vector.shape_cast %601 : vector<2x1x1x1xf32> to vector<2x1xf32>
    %603 = vector.extract_strided_slice %389 {offsets = [29, 0], sizes = [1, 32], strides = [1, 1]} : vector<32x32xf32> to vector<1x32xf32>
    %604 = vector.broadcast %602 : vector<2x1xf32> to vector<2x32xf32>
    %605 = vector.broadcast %603 : vector<1x32xf32> to vector<2x32xf32>
    %606 = arith.mulf %604, %605 : vector<2x32xf32>
    %607 = arith.addf %600, %606 : vector<2x32xf32>
    %608 = vector.extract_strided_slice %386 {offsets = [0, 7, 1, 0], sizes = [2, 1, 1, 1], strides = [1, 1, 1, 1]} : vector<2x8x2x2xf32> to vector<2x1x1x1xf32>
    %609 = vector.shape_cast %608 : vector<2x1x1x1xf32> to vector<2x1xf32>
    %610 = vector.extract_strided_slice %389 {offsets = [30, 0], sizes = [1, 32], strides = [1, 1]} : vector<32x32xf32> to vector<1x32xf32>
    %611 = vector.broadcast %609 : vector<2x1xf32> to vector<2x32xf32>
    %612 = vector.broadcast %610 : vector<1x32xf32> to vector<2x32xf32>
    %613 = arith.mulf %611, %612 : vector<2x32xf32>
    %614 = arith.addf %607, %613 : vector<2x32xf32>
    %615 = vector.extract_strided_slice %386 {offsets = [0, 7, 1, 1], sizes = [2, 1, 1, 1], strides = [1, 1, 1, 1]} : vector<2x8x2x2xf32> to vector<2x1x1x1xf32>
    %616 = vector.shape_cast %615 : vector<2x1x1x1xf32> to vector<2x1xf32>
    %617 = vector.extract_strided_slice %389 {offsets = [31, 0], sizes = [1, 32], strides = [1, 1]} : vector<32x32xf32> to vector<1x32xf32>
    %618 = vector.broadcast %616 : vector<2x1xf32> to vector<2x32xf32>
    %619 = vector.broadcast %617 : vector<1x32xf32> to vector<2x32xf32>
    %620 = arith.mulf %618, %619 : vector<2x32xf32>
    %621 = arith.addf %614, %620 : vector<2x32xf32>
    %cst_205 = arith.constant 0.000000e+00 : f32
    %622 = vector.broadcast %cst_205 : f32 to vector<2x32xf32>
    %623 = arith.maximumf %621, %622 : vector<2x32xf32>
    %cst_206 = arith.constant 0.000000e+00 : f32
    %624 = vector.broadcast %cst_206 : f32 to vector<2x16xf32>
    %625 = vector.broadcast %393 : vector<1x16xf32> to vector<2x16xf32>
    %626 = arith.addf %624, %625 : vector<2x16xf32>
    %627 = vector.extract_strided_slice %623 {offsets = [0, 0], sizes = [2, 1], strides = [1, 1]} : vector<2x32xf32> to vector<2x1xf32>
    %628 = vector.extract_strided_slice %390 {offsets = [0, 0], sizes = [1, 16], strides = [1, 1]} : vector<32x16xf32> to vector<1x16xf32>
    %629 = vector.broadcast %627 : vector<2x1xf32> to vector<2x16xf32>
    %630 = vector.broadcast %628 : vector<1x16xf32> to vector<2x16xf32>
    %631 = arith.mulf %629, %630 : vector<2x16xf32>
    %632 = arith.addf %626, %631 : vector<2x16xf32>
    %633 = vector.extract_strided_slice %623 {offsets = [0, 1], sizes = [2, 1], strides = [1, 1]} : vector<2x32xf32> to vector<2x1xf32>
    %634 = vector.extract_strided_slice %390 {offsets = [1, 0], sizes = [1, 16], strides = [1, 1]} : vector<32x16xf32> to vector<1x16xf32>
    %635 = vector.broadcast %633 : vector<2x1xf32> to vector<2x16xf32>
    %636 = vector.broadcast %634 : vector<1x16xf32> to vector<2x16xf32>
    %637 = arith.mulf %635, %636 : vector<2x16xf32>
    %638 = arith.addf %632, %637 : vector<2x16xf32>
    %639 = vector.extract_strided_slice %623 {offsets = [0, 2], sizes = [2, 1], strides = [1, 1]} : vector<2x32xf32> to vector<2x1xf32>
    %640 = vector.extract_strided_slice %390 {offsets = [2, 0], sizes = [1, 16], strides = [1, 1]} : vector<32x16xf32> to vector<1x16xf32>
    %641 = vector.broadcast %639 : vector<2x1xf32> to vector<2x16xf32>
    %642 = vector.broadcast %640 : vector<1x16xf32> to vector<2x16xf32>
    %643 = arith.mulf %641, %642 : vector<2x16xf32>
    %644 = arith.addf %638, %643 : vector<2x16xf32>
    %645 = vector.extract_strided_slice %623 {offsets = [0, 3], sizes = [2, 1], strides = [1, 1]} : vector<2x32xf32> to vector<2x1xf32>
    %646 = vector.extract_strided_slice %390 {offsets = [3, 0], sizes = [1, 16], strides = [1, 1]} : vector<32x16xf32> to vector<1x16xf32>
    %647 = vector.broadcast %645 : vector<2x1xf32> to vector<2x16xf32>
    %648 = vector.broadcast %646 : vector<1x16xf32> to vector<2x16xf32>
    %649 = arith.mulf %647, %648 : vector<2x16xf32>
    %650 = arith.addf %644, %649 : vector<2x16xf32>
    %651 = vector.extract_strided_slice %623 {offsets = [0, 4], sizes = [2, 1], strides = [1, 1]} : vector<2x32xf32> to vector<2x1xf32>
    %652 = vector.extract_strided_slice %390 {offsets = [4, 0], sizes = [1, 16], strides = [1, 1]} : vector<32x16xf32> to vector<1x16xf32>
    %653 = vector.broadcast %651 : vector<2x1xf32> to vector<2x16xf32>
    %654 = vector.broadcast %652 : vector<1x16xf32> to vector<2x16xf32>
    %655 = arith.mulf %653, %654 : vector<2x16xf32>
    %656 = arith.addf %650, %655 : vector<2x16xf32>
    %657 = vector.extract_strided_slice %623 {offsets = [0, 5], sizes = [2, 1], strides = [1, 1]} : vector<2x32xf32> to vector<2x1xf32>
    %658 = vector.extract_strided_slice %390 {offsets = [5, 0], sizes = [1, 16], strides = [1, 1]} : vector<32x16xf32> to vector<1x16xf32>
    %659 = vector.broadcast %657 : vector<2x1xf32> to vector<2x16xf32>
    %660 = vector.broadcast %658 : vector<1x16xf32> to vector<2x16xf32>
    %661 = arith.mulf %659, %660 : vector<2x16xf32>
    %662 = arith.addf %656, %661 : vector<2x16xf32>
    %663 = vector.extract_strided_slice %623 {offsets = [0, 6], sizes = [2, 1], strides = [1, 1]} : vector<2x32xf32> to vector<2x1xf32>
    %664 = vector.extract_strided_slice %390 {offsets = [6, 0], sizes = [1, 16], strides = [1, 1]} : vector<32x16xf32> to vector<1x16xf32>
    %665 = vector.broadcast %663 : vector<2x1xf32> to vector<2x16xf32>
    %666 = vector.broadcast %664 : vector<1x16xf32> to vector<2x16xf32>
    %667 = arith.mulf %665, %666 : vector<2x16xf32>
    %668 = arith.addf %662, %667 : vector<2x16xf32>
    %669 = vector.extract_strided_slice %623 {offsets = [0, 7], sizes = [2, 1], strides = [1, 1]} : vector<2x32xf32> to vector<2x1xf32>
    %670 = vector.extract_strided_slice %390 {offsets = [7, 0], sizes = [1, 16], strides = [1, 1]} : vector<32x16xf32> to vector<1x16xf32>
    %671 = vector.broadcast %669 : vector<2x1xf32> to vector<2x16xf32>
    %672 = vector.broadcast %670 : vector<1x16xf32> to vector<2x16xf32>
    %673 = arith.mulf %671, %672 : vector<2x16xf32>
    %674 = arith.addf %668, %673 : vector<2x16xf32>
    %675 = vector.extract_strided_slice %623 {offsets = [0, 8], sizes = [2, 1], strides = [1, 1]} : vector<2x32xf32> to vector<2x1xf32>
    %676 = vector.extract_strided_slice %390 {offsets = [8, 0], sizes = [1, 16], strides = [1, 1]} : vector<32x16xf32> to vector<1x16xf32>
    %677 = vector.broadcast %675 : vector<2x1xf32> to vector<2x16xf32>
    %678 = vector.broadcast %676 : vector<1x16xf32> to vector<2x16xf32>
    %679 = arith.mulf %677, %678 : vector<2x16xf32>
    %680 = arith.addf %674, %679 : vector<2x16xf32>
    %681 = vector.extract_strided_slice %623 {offsets = [0, 9], sizes = [2, 1], strides = [1, 1]} : vector<2x32xf32> to vector<2x1xf32>
    %682 = vector.extract_strided_slice %390 {offsets = [9, 0], sizes = [1, 16], strides = [1, 1]} : vector<32x16xf32> to vector<1x16xf32>
    %683 = vector.broadcast %681 : vector<2x1xf32> to vector<2x16xf32>
    %684 = vector.broadcast %682 : vector<1x16xf32> to vector<2x16xf32>
    %685 = arith.mulf %683, %684 : vector<2x16xf32>
    %686 = arith.addf %680, %685 : vector<2x16xf32>
    %687 = vector.extract_strided_slice %623 {offsets = [0, 10], sizes = [2, 1], strides = [1, 1]} : vector<2x32xf32> to vector<2x1xf32>
    %688 = vector.extract_strided_slice %390 {offsets = [10, 0], sizes = [1, 16], strides = [1, 1]} : vector<32x16xf32> to vector<1x16xf32>
    %689 = vector.broadcast %687 : vector<2x1xf32> to vector<2x16xf32>
    %690 = vector.broadcast %688 : vector<1x16xf32> to vector<2x16xf32>
    %691 = arith.mulf %689, %690 : vector<2x16xf32>
    %692 = arith.addf %686, %691 : vector<2x16xf32>
    %693 = vector.extract_strided_slice %623 {offsets = [0, 11], sizes = [2, 1], strides = [1, 1]} : vector<2x32xf32> to vector<2x1xf32>
    %694 = vector.extract_strided_slice %390 {offsets = [11, 0], sizes = [1, 16], strides = [1, 1]} : vector<32x16xf32> to vector<1x16xf32>
    %695 = vector.broadcast %693 : vector<2x1xf32> to vector<2x16xf32>
    %696 = vector.broadcast %694 : vector<1x16xf32> to vector<2x16xf32>
    %697 = arith.mulf %695, %696 : vector<2x16xf32>
    %698 = arith.addf %692, %697 : vector<2x16xf32>
    %699 = vector.extract_strided_slice %623 {offsets = [0, 12], sizes = [2, 1], strides = [1, 1]} : vector<2x32xf32> to vector<2x1xf32>
    %700 = vector.extract_strided_slice %390 {offsets = [12, 0], sizes = [1, 16], strides = [1, 1]} : vector<32x16xf32> to vector<1x16xf32>
    %701 = vector.broadcast %699 : vector<2x1xf32> to vector<2x16xf32>
    %702 = vector.broadcast %700 : vector<1x16xf32> to vector<2x16xf32>
    %703 = arith.mulf %701, %702 : vector<2x16xf32>
    %704 = arith.addf %698, %703 : vector<2x16xf32>
    %705 = vector.extract_strided_slice %623 {offsets = [0, 13], sizes = [2, 1], strides = [1, 1]} : vector<2x32xf32> to vector<2x1xf32>
    %706 = vector.extract_strided_slice %390 {offsets = [13, 0], sizes = [1, 16], strides = [1, 1]} : vector<32x16xf32> to vector<1x16xf32>
    %707 = vector.broadcast %705 : vector<2x1xf32> to vector<2x16xf32>
    %708 = vector.broadcast %706 : vector<1x16xf32> to vector<2x16xf32>
    %709 = arith.mulf %707, %708 : vector<2x16xf32>
    %710 = arith.addf %704, %709 : vector<2x16xf32>
    %711 = vector.extract_strided_slice %623 {offsets = [0, 14], sizes = [2, 1], strides = [1, 1]} : vector<2x32xf32> to vector<2x1xf32>
    %712 = vector.extract_strided_slice %390 {offsets = [14, 0], sizes = [1, 16], strides = [1, 1]} : vector<32x16xf32> to vector<1x16xf32>
    %713 = vector.broadcast %711 : vector<2x1xf32> to vector<2x16xf32>
    %714 = vector.broadcast %712 : vector<1x16xf32> to vector<2x16xf32>
    %715 = arith.mulf %713, %714 : vector<2x16xf32>
    %716 = arith.addf %710, %715 : vector<2x16xf32>
    %717 = vector.extract_strided_slice %623 {offsets = [0, 15], sizes = [2, 1], strides = [1, 1]} : vector<2x32xf32> to vector<2x1xf32>
    %718 = vector.extract_strided_slice %390 {offsets = [15, 0], sizes = [1, 16], strides = [1, 1]} : vector<32x16xf32> to vector<1x16xf32>
    %719 = vector.broadcast %717 : vector<2x1xf32> to vector<2x16xf32>
    %720 = vector.broadcast %718 : vector<1x16xf32> to vector<2x16xf32>
    %721 = arith.mulf %719, %720 : vector<2x16xf32>
    %722 = arith.addf %716, %721 : vector<2x16xf32>
    %723 = vector.extract_strided_slice %623 {offsets = [0, 16], sizes = [2, 1], strides = [1, 1]} : vector<2x32xf32> to vector<2x1xf32>
    %724 = vector.extract_strided_slice %390 {offsets = [16, 0], sizes = [1, 16], strides = [1, 1]} : vector<32x16xf32> to vector<1x16xf32>
    %725 = vector.broadcast %723 : vector<2x1xf32> to vector<2x16xf32>
    %726 = vector.broadcast %724 : vector<1x16xf32> to vector<2x16xf32>
    %727 = arith.mulf %725, %726 : vector<2x16xf32>
    %728 = arith.addf %722, %727 : vector<2x16xf32>
    %729 = vector.extract_strided_slice %623 {offsets = [0, 17], sizes = [2, 1], strides = [1, 1]} : vector<2x32xf32> to vector<2x1xf32>
    %730 = vector.extract_strided_slice %390 {offsets = [17, 0], sizes = [1, 16], strides = [1, 1]} : vector<32x16xf32> to vector<1x16xf32>
    %731 = vector.broadcast %729 : vector<2x1xf32> to vector<2x16xf32>
    %732 = vector.broadcast %730 : vector<1x16xf32> to vector<2x16xf32>
    %733 = arith.mulf %731, %732 : vector<2x16xf32>
    %734 = arith.addf %728, %733 : vector<2x16xf32>
    %735 = vector.extract_strided_slice %623 {offsets = [0, 18], sizes = [2, 1], strides = [1, 1]} : vector<2x32xf32> to vector<2x1xf32>
    %736 = vector.extract_strided_slice %390 {offsets = [18, 0], sizes = [1, 16], strides = [1, 1]} : vector<32x16xf32> to vector<1x16xf32>
    %737 = vector.broadcast %735 : vector<2x1xf32> to vector<2x16xf32>
    %738 = vector.broadcast %736 : vector<1x16xf32> to vector<2x16xf32>
    %739 = arith.mulf %737, %738 : vector<2x16xf32>
    %740 = arith.addf %734, %739 : vector<2x16xf32>
    %741 = vector.extract_strided_slice %623 {offsets = [0, 19], sizes = [2, 1], strides = [1, 1]} : vector<2x32xf32> to vector<2x1xf32>
    %742 = vector.extract_strided_slice %390 {offsets = [19, 0], sizes = [1, 16], strides = [1, 1]} : vector<32x16xf32> to vector<1x16xf32>
    %743 = vector.broadcast %741 : vector<2x1xf32> to vector<2x16xf32>
    %744 = vector.broadcast %742 : vector<1x16xf32> to vector<2x16xf32>
    %745 = arith.mulf %743, %744 : vector<2x16xf32>
    %746 = arith.addf %740, %745 : vector<2x16xf32>
    %747 = vector.extract_strided_slice %623 {offsets = [0, 20], sizes = [2, 1], strides = [1, 1]} : vector<2x32xf32> to vector<2x1xf32>
    %748 = vector.extract_strided_slice %390 {offsets = [20, 0], sizes = [1, 16], strides = [1, 1]} : vector<32x16xf32> to vector<1x16xf32>
    %749 = vector.broadcast %747 : vector<2x1xf32> to vector<2x16xf32>
    %750 = vector.broadcast %748 : vector<1x16xf32> to vector<2x16xf32>
    %751 = arith.mulf %749, %750 : vector<2x16xf32>
    %752 = arith.addf %746, %751 : vector<2x16xf32>
    %753 = vector.extract_strided_slice %623 {offsets = [0, 21], sizes = [2, 1], strides = [1, 1]} : vector<2x32xf32> to vector<2x1xf32>
    %754 = vector.extract_strided_slice %390 {offsets = [21, 0], sizes = [1, 16], strides = [1, 1]} : vector<32x16xf32> to vector<1x16xf32>
    %755 = vector.broadcast %753 : vector<2x1xf32> to vector<2x16xf32>
    %756 = vector.broadcast %754 : vector<1x16xf32> to vector<2x16xf32>
    %757 = arith.mulf %755, %756 : vector<2x16xf32>
    %758 = arith.addf %752, %757 : vector<2x16xf32>
    %759 = vector.extract_strided_slice %623 {offsets = [0, 22], sizes = [2, 1], strides = [1, 1]} : vector<2x32xf32> to vector<2x1xf32>
    %760 = vector.extract_strided_slice %390 {offsets = [22, 0], sizes = [1, 16], strides = [1, 1]} : vector<32x16xf32> to vector<1x16xf32>
    %761 = vector.broadcast %759 : vector<2x1xf32> to vector<2x16xf32>
    %762 = vector.broadcast %760 : vector<1x16xf32> to vector<2x16xf32>
    %763 = arith.mulf %761, %762 : vector<2x16xf32>
    %764 = arith.addf %758, %763 : vector<2x16xf32>
    %765 = vector.extract_strided_slice %623 {offsets = [0, 23], sizes = [2, 1], strides = [1, 1]} : vector<2x32xf32> to vector<2x1xf32>
    %766 = vector.extract_strided_slice %390 {offsets = [23, 0], sizes = [1, 16], strides = [1, 1]} : vector<32x16xf32> to vector<1x16xf32>
    %767 = vector.broadcast %765 : vector<2x1xf32> to vector<2x16xf32>
    %768 = vector.broadcast %766 : vector<1x16xf32> to vector<2x16xf32>
    %769 = arith.mulf %767, %768 : vector<2x16xf32>
    %770 = arith.addf %764, %769 : vector<2x16xf32>
    %771 = vector.extract_strided_slice %623 {offsets = [0, 24], sizes = [2, 1], strides = [1, 1]} : vector<2x32xf32> to vector<2x1xf32>
    %772 = vector.extract_strided_slice %390 {offsets = [24, 0], sizes = [1, 16], strides = [1, 1]} : vector<32x16xf32> to vector<1x16xf32>
    %773 = vector.broadcast %771 : vector<2x1xf32> to vector<2x16xf32>
    %774 = vector.broadcast %772 : vector<1x16xf32> to vector<2x16xf32>
    %775 = arith.mulf %773, %774 : vector<2x16xf32>
    %776 = arith.addf %770, %775 : vector<2x16xf32>
    %777 = vector.extract_strided_slice %623 {offsets = [0, 25], sizes = [2, 1], strides = [1, 1]} : vector<2x32xf32> to vector<2x1xf32>
    %778 = vector.extract_strided_slice %390 {offsets = [25, 0], sizes = [1, 16], strides = [1, 1]} : vector<32x16xf32> to vector<1x16xf32>
    %779 = vector.broadcast %777 : vector<2x1xf32> to vector<2x16xf32>
    %780 = vector.broadcast %778 : vector<1x16xf32> to vector<2x16xf32>
    %781 = arith.mulf %779, %780 : vector<2x16xf32>
    %782 = arith.addf %776, %781 : vector<2x16xf32>
    %783 = vector.extract_strided_slice %623 {offsets = [0, 26], sizes = [2, 1], strides = [1, 1]} : vector<2x32xf32> to vector<2x1xf32>
    %784 = vector.extract_strided_slice %390 {offsets = [26, 0], sizes = [1, 16], strides = [1, 1]} : vector<32x16xf32> to vector<1x16xf32>
    %785 = vector.broadcast %783 : vector<2x1xf32> to vector<2x16xf32>
    %786 = vector.broadcast %784 : vector<1x16xf32> to vector<2x16xf32>
    %787 = arith.mulf %785, %786 : vector<2x16xf32>
    %788 = arith.addf %782, %787 : vector<2x16xf32>
    %789 = vector.extract_strided_slice %623 {offsets = [0, 27], sizes = [2, 1], strides = [1, 1]} : vector<2x32xf32> to vector<2x1xf32>
    %790 = vector.extract_strided_slice %390 {offsets = [27, 0], sizes = [1, 16], strides = [1, 1]} : vector<32x16xf32> to vector<1x16xf32>
    %791 = vector.broadcast %789 : vector<2x1xf32> to vector<2x16xf32>
    %792 = vector.broadcast %790 : vector<1x16xf32> to vector<2x16xf32>
    %793 = arith.mulf %791, %792 : vector<2x16xf32>
    %794 = arith.addf %788, %793 : vector<2x16xf32>
    %795 = vector.extract_strided_slice %623 {offsets = [0, 28], sizes = [2, 1], strides = [1, 1]} : vector<2x32xf32> to vector<2x1xf32>
    %796 = vector.extract_strided_slice %390 {offsets = [28, 0], sizes = [1, 16], strides = [1, 1]} : vector<32x16xf32> to vector<1x16xf32>
    %797 = vector.broadcast %795 : vector<2x1xf32> to vector<2x16xf32>
    %798 = vector.broadcast %796 : vector<1x16xf32> to vector<2x16xf32>
    %799 = arith.mulf %797, %798 : vector<2x16xf32>
    %800 = arith.addf %794, %799 : vector<2x16xf32>
    %801 = vector.extract_strided_slice %623 {offsets = [0, 29], sizes = [2, 1], strides = [1, 1]} : vector<2x32xf32> to vector<2x1xf32>
    %802 = vector.extract_strided_slice %390 {offsets = [29, 0], sizes = [1, 16], strides = [1, 1]} : vector<32x16xf32> to vector<1x16xf32>
    %803 = vector.broadcast %801 : vector<2x1xf32> to vector<2x16xf32>
    %804 = vector.broadcast %802 : vector<1x16xf32> to vector<2x16xf32>
    %805 = arith.mulf %803, %804 : vector<2x16xf32>
    %806 = arith.addf %800, %805 : vector<2x16xf32>
    %807 = vector.extract_strided_slice %623 {offsets = [0, 30], sizes = [2, 1], strides = [1, 1]} : vector<2x32xf32> to vector<2x1xf32>
    %808 = vector.extract_strided_slice %390 {offsets = [30, 0], sizes = [1, 16], strides = [1, 1]} : vector<32x16xf32> to vector<1x16xf32>
    %809 = vector.broadcast %807 : vector<2x1xf32> to vector<2x16xf32>
    %810 = vector.broadcast %808 : vector<1x16xf32> to vector<2x16xf32>
    %811 = arith.mulf %809, %810 : vector<2x16xf32>
    %812 = arith.addf %806, %811 : vector<2x16xf32>
    %813 = vector.extract_strided_slice %623 {offsets = [0, 31], sizes = [2, 1], strides = [1, 1]} : vector<2x32xf32> to vector<2x1xf32>
    %814 = vector.extract_strided_slice %390 {offsets = [31, 0], sizes = [1, 16], strides = [1, 1]} : vector<32x16xf32> to vector<1x16xf32>
    %815 = vector.broadcast %813 : vector<2x1xf32> to vector<2x16xf32>
    %816 = vector.broadcast %814 : vector<1x16xf32> to vector<2x16xf32>
    %817 = arith.mulf %815, %816 : vector<2x16xf32>
    %818 = arith.addf %812, %817 : vector<2x16xf32>
    %cst_207 = arith.constant 0.000000e+00 : f32
    %819 = vector.broadcast %cst_207 : f32 to vector<2x16xf32>
    %820 = arith.maximumf %818, %819 : vector<2x16xf32>
    %cst_208 = arith.constant 0.000000e+00 : f32
    %821 = vector.broadcast %cst_208 : f32 to vector<2x1xf32>
    %822 = vector.broadcast %394 : vector<1x1xf32> to vector<2x1xf32>
    %823 = arith.addf %821, %822 : vector<2x1xf32>
    %824 = vector.extract_strided_slice %820 {offsets = [0, 0], sizes = [2, 1], strides = [1, 1]} : vector<2x16xf32> to vector<2x1xf32>
    %825 = vector.extract_strided_slice %391 {offsets = [0, 0], sizes = [1, 1], strides = [1, 1]} : vector<16x1xf32> to vector<1x1xf32>
    %826 = vector.broadcast %825 : vector<1x1xf32> to vector<2x1xf32>
    %827 = arith.mulf %824, %826 : vector<2x1xf32>
    %828 = arith.addf %823, %827 : vector<2x1xf32>
    %829 = vector.extract_strided_slice %820 {offsets = [0, 1], sizes = [2, 1], strides = [1, 1]} : vector<2x16xf32> to vector<2x1xf32>
    %830 = vector.extract_strided_slice %391 {offsets = [1, 0], sizes = [1, 1], strides = [1, 1]} : vector<16x1xf32> to vector<1x1xf32>
    %831 = vector.broadcast %830 : vector<1x1xf32> to vector<2x1xf32>
    %832 = arith.mulf %829, %831 : vector<2x1xf32>
    %833 = arith.addf %828, %832 : vector<2x1xf32>
    %834 = vector.extract_strided_slice %820 {offsets = [0, 2], sizes = [2, 1], strides = [1, 1]} : vector<2x16xf32> to vector<2x1xf32>
    %835 = vector.extract_strided_slice %391 {offsets = [2, 0], sizes = [1, 1], strides = [1, 1]} : vector<16x1xf32> to vector<1x1xf32>
    %836 = vector.broadcast %835 : vector<1x1xf32> to vector<2x1xf32>
    %837 = arith.mulf %834, %836 : vector<2x1xf32>
    %838 = arith.addf %833, %837 : vector<2x1xf32>
    %839 = vector.extract_strided_slice %820 {offsets = [0, 3], sizes = [2, 1], strides = [1, 1]} : vector<2x16xf32> to vector<2x1xf32>
    %840 = vector.extract_strided_slice %391 {offsets = [3, 0], sizes = [1, 1], strides = [1, 1]} : vector<16x1xf32> to vector<1x1xf32>
    %841 = vector.broadcast %840 : vector<1x1xf32> to vector<2x1xf32>
    %842 = arith.mulf %839, %841 : vector<2x1xf32>
    %843 = arith.addf %838, %842 : vector<2x1xf32>
    %844 = vector.extract_strided_slice %820 {offsets = [0, 4], sizes = [2, 1], strides = [1, 1]} : vector<2x16xf32> to vector<2x1xf32>
    %845 = vector.extract_strided_slice %391 {offsets = [4, 0], sizes = [1, 1], strides = [1, 1]} : vector<16x1xf32> to vector<1x1xf32>
    %846 = vector.broadcast %845 : vector<1x1xf32> to vector<2x1xf32>
    %847 = arith.mulf %844, %846 : vector<2x1xf32>
    %848 = arith.addf %843, %847 : vector<2x1xf32>
    %849 = vector.extract_strided_slice %820 {offsets = [0, 5], sizes = [2, 1], strides = [1, 1]} : vector<2x16xf32> to vector<2x1xf32>
    %850 = vector.extract_strided_slice %391 {offsets = [5, 0], sizes = [1, 1], strides = [1, 1]} : vector<16x1xf32> to vector<1x1xf32>
    %851 = vector.broadcast %850 : vector<1x1xf32> to vector<2x1xf32>
    %852 = arith.mulf %849, %851 : vector<2x1xf32>
    %853 = arith.addf %848, %852 : vector<2x1xf32>
    %854 = vector.extract_strided_slice %820 {offsets = [0, 6], sizes = [2, 1], strides = [1, 1]} : vector<2x16xf32> to vector<2x1xf32>
    %855 = vector.extract_strided_slice %391 {offsets = [6, 0], sizes = [1, 1], strides = [1, 1]} : vector<16x1xf32> to vector<1x1xf32>
    %856 = vector.broadcast %855 : vector<1x1xf32> to vector<2x1xf32>
    %857 = arith.mulf %854, %856 : vector<2x1xf32>
    %858 = arith.addf %853, %857 : vector<2x1xf32>
    %859 = vector.extract_strided_slice %820 {offsets = [0, 7], sizes = [2, 1], strides = [1, 1]} : vector<2x16xf32> to vector<2x1xf32>
    %860 = vector.extract_strided_slice %391 {offsets = [7, 0], sizes = [1, 1], strides = [1, 1]} : vector<16x1xf32> to vector<1x1xf32>
    %861 = vector.broadcast %860 : vector<1x1xf32> to vector<2x1xf32>
    %862 = arith.mulf %859, %861 : vector<2x1xf32>
    %863 = arith.addf %858, %862 : vector<2x1xf32>
    %864 = vector.extract_strided_slice %820 {offsets = [0, 8], sizes = [2, 1], strides = [1, 1]} : vector<2x16xf32> to vector<2x1xf32>
    %865 = vector.extract_strided_slice %391 {offsets = [8, 0], sizes = [1, 1], strides = [1, 1]} : vector<16x1xf32> to vector<1x1xf32>
    %866 = vector.broadcast %865 : vector<1x1xf32> to vector<2x1xf32>
    %867 = arith.mulf %864, %866 : vector<2x1xf32>
    %868 = arith.addf %863, %867 : vector<2x1xf32>
    %869 = vector.extract_strided_slice %820 {offsets = [0, 9], sizes = [2, 1], strides = [1, 1]} : vector<2x16xf32> to vector<2x1xf32>
    %870 = vector.extract_strided_slice %391 {offsets = [9, 0], sizes = [1, 1], strides = [1, 1]} : vector<16x1xf32> to vector<1x1xf32>
    %871 = vector.broadcast %870 : vector<1x1xf32> to vector<2x1xf32>
    %872 = arith.mulf %869, %871 : vector<2x1xf32>
    %873 = arith.addf %868, %872 : vector<2x1xf32>
    %874 = vector.extract_strided_slice %820 {offsets = [0, 10], sizes = [2, 1], strides = [1, 1]} : vector<2x16xf32> to vector<2x1xf32>
    %875 = vector.extract_strided_slice %391 {offsets = [10, 0], sizes = [1, 1], strides = [1, 1]} : vector<16x1xf32> to vector<1x1xf32>
    %876 = vector.broadcast %875 : vector<1x1xf32> to vector<2x1xf32>
    %877 = arith.mulf %874, %876 : vector<2x1xf32>
    %878 = arith.addf %873, %877 : vector<2x1xf32>
    %879 = vector.extract_strided_slice %820 {offsets = [0, 11], sizes = [2, 1], strides = [1, 1]} : vector<2x16xf32> to vector<2x1xf32>
    %880 = vector.extract_strided_slice %391 {offsets = [11, 0], sizes = [1, 1], strides = [1, 1]} : vector<16x1xf32> to vector<1x1xf32>
    %881 = vector.broadcast %880 : vector<1x1xf32> to vector<2x1xf32>
    %882 = arith.mulf %879, %881 : vector<2x1xf32>
    %883 = arith.addf %878, %882 : vector<2x1xf32>
    %884 = vector.extract_strided_slice %820 {offsets = [0, 12], sizes = [2, 1], strides = [1, 1]} : vector<2x16xf32> to vector<2x1xf32>
    %885 = vector.extract_strided_slice %391 {offsets = [12, 0], sizes = [1, 1], strides = [1, 1]} : vector<16x1xf32> to vector<1x1xf32>
    %886 = vector.broadcast %885 : vector<1x1xf32> to vector<2x1xf32>
    %887 = arith.mulf %884, %886 : vector<2x1xf32>
    %888 = arith.addf %883, %887 : vector<2x1xf32>
    %889 = vector.extract_strided_slice %820 {offsets = [0, 13], sizes = [2, 1], strides = [1, 1]} : vector<2x16xf32> to vector<2x1xf32>
    %890 = vector.extract_strided_slice %391 {offsets = [13, 0], sizes = [1, 1], strides = [1, 1]} : vector<16x1xf32> to vector<1x1xf32>
    %891 = vector.broadcast %890 : vector<1x1xf32> to vector<2x1xf32>
    %892 = arith.mulf %889, %891 : vector<2x1xf32>
    %893 = arith.addf %888, %892 : vector<2x1xf32>
    %894 = vector.extract_strided_slice %820 {offsets = [0, 14], sizes = [2, 1], strides = [1, 1]} : vector<2x16xf32> to vector<2x1xf32>
    %895 = vector.extract_strided_slice %391 {offsets = [14, 0], sizes = [1, 1], strides = [1, 1]} : vector<16x1xf32> to vector<1x1xf32>
    %896 = vector.broadcast %895 : vector<1x1xf32> to vector<2x1xf32>
    %897 = arith.mulf %894, %896 : vector<2x1xf32>
    %898 = arith.addf %893, %897 : vector<2x1xf32>
    %899 = vector.extract_strided_slice %820 {offsets = [0, 15], sizes = [2, 1], strides = [1, 1]} : vector<2x16xf32> to vector<2x1xf32>
    %900 = vector.extract_strided_slice %391 {offsets = [15, 0], sizes = [1, 1], strides = [1, 1]} : vector<16x1xf32> to vector<1x1xf32>
    %901 = vector.broadcast %900 : vector<1x1xf32> to vector<2x1xf32>
    %902 = arith.mulf %899, %901 : vector<2x1xf32>
    %903 = arith.addf %898, %902 : vector<2x1xf32>
    %c0_209 = arith.constant 0 : index
    %c0_210 = arith.constant 0 : index
    %904 = vector.load %arg6[%c0_209, %c0_210] : memref<2x1xf32, #tpu.memory_space<vmem>>, vector<2x1xf32>
    tpu.vector_store %arg6[%c0_209, %c0_210], %903 {strides = array<i32>} : memref<2x1xf32, #tpu.memory_space<vmem>>, vector<2x1xf32>,
    return
  }
}

</mosaic_0001>

<llo_original>
// kernel: net_forward.1
$region0: #{net_forward.1}
  #allocation0 [shape = 'u32[]', space=smem, size = 0x4, offset = 0x4, fixed_abs, tag = 'smem constant byte address 0x4 - core index']
  #allocation1 [shape = 'u32[144,128]{1,0:T(1,128)}', space=vmem, size = 0x12000, scoped, tag = 'internal scratch']
  %s0 = inlined_call_operand.vmem [shape: f32[2,1,16,16], index: 0, kind: input, shape index: {}]
  %s1 = inlined_call_operand.vmem [shape: f32[9,1,4,1,14], index: 1, kind: input, shape index: {}]
  %s2 = inlined_call_operand.vmem [shape: f32[36,1,8,1,5], index: 2, kind: input, shape index: {}]
  %s3 = inlined_call_operand.vmem [shape: f32[1,12,1,14], index: 3, kind: input, shape index: {}]
  %s4 = inlined_call_operand.vmem [shape: f32[32,49], index: 4, kind: input, shape index: {}]
  %s5 = inlined_call_operand.vmem [shape: f32[1,49], index: 5, kind: input, shape index: {}]
  %s6 = inlined_call_operand.vmem [shape: f32[2,1], index: 6, kind: output, shape index: {}]
  %s7 = sld [smem:[#allocation0]]
  $region34: #{net_forward.1} parent=0
    _
  %s9 = ssub.s32 1, %s7
  %s10 = scalar_select 0, %s9, %s7
  // Predicated region
  $region2: #{net_forward.1} parent=0 // pred_check
    _
  $region3: #{net_forward.1} parent=0 // pred_check_branch
    %12 = sbr.rel (0) target = $region5
  $region4: #{net_forward.1} parent=0 // pred_region
    _
  $region5: #{net_forward.1} parent=0 // pred_fallthru
    _
  // Predicated region
  $region6: #{net_forward.1} parent=0 // pred_check
    _
  $region7: #{net_forward.1} parent=0 // pred_check_branch
    %14 = sbr.rel (0) target = $region9
  $region8: #{net_forward.1} parent=0 // pred_region
    _
  $region9: #{net_forward.1} parent=0 // pred_fallthru
    _
  // Predicated region
  $region10: #{net_forward.1} parent=0 // pred_check
    _
  $region11: #{net_forward.1} parent=0 // pred_check_branch
    %16 = sbr.rel (0) target = $region13
  $region12: #{net_forward.1} parent=0 // pred_region
    _
  $region13: #{net_forward.1} parent=0 // pred_fallthru
    _
  // Predicated region
  $region14: #{net_forward.1} parent=0 // pred_check
    _
  $region15: #{net_forward.1} parent=0 // pred_check_branch
    %18 = sbr.rel (0) target = $region17
  $region16: #{net_forward.1} parent=0 // pred_region
    _
  $region17: #{net_forward.1} parent=0 // pred_fallthru
    _
  // Predicated region
  $region18: #{net_forward.1} parent=0 // pred_check
    _
  $region19: #{net_forward.1} parent=0 // pred_check_branch
    %20 = sbr.rel (0) target = $region21
  $region20: #{net_forward.1} parent=0 // pred_region
    _
  $region21: #{net_forward.1} parent=0 // pred_fallthru
    _
  // Predicated region
  $region22: #{net_forward.1} parent=0 // pred_check
    _
  $region23: #{net_forward.1} parent=0 // pred_check_branch
    %22 = sbr.rel (0) target = $region25
  $region24: #{net_forward.1} parent=0 // pred_region
    _
  $region25: #{net_forward.1} parent=0 // pred_fallthru
    _
  %v23 = vld [vmem:[%s0] sm:$0xff]
  %v24 = vld [vmem:[%s0 + $0x8] sm:$0xff]
  %v25 = vld [vmem:[%s0 + $0x10] sm:$0xff]
  %v26 = vld [vmem:[%s0 + $0x18] sm:$0xff]
  %v27 = vld [vmem:[%s3] sm:$0x1]
  %v28 = vld [vmem:[%s3 + $0x1] sm:$0x1]
  %v29 = vld [vmem:[%s3 + $0x2] sm:$0x1]
  %v30 = vld [vmem:[%s3 + $0x3] sm:$0x1]
  %v31 = vld [vmem:[%s3 + $0x4] sm:$0x1]
  %v32 = vld [vmem:[%s3 + $0x5] sm:$0x1]
  %v33 = vld [vmem:[%s3 + $0x6] sm:$0x1]
  %v34 = vld [vmem:[%s3 + $0x7] sm:$0x1]
  %v35 = vld [vmem:[%s3 + $0x8] sm:$0x1]
  %v36 = vld [vmem:[%s3 + $0x9] sm:$0x1]
  %v37 = vld [vmem:[%s3 + $0xa] sm:$0x1]
  %v38 = vld [vmem:[%s3 + $0xb] sm:$0x1]
  %v39 = vld [vmem:[%s1] sm:$0x1]
  %v40 = vld [vmem:[%s1 + $0x1] sm:$0x1]
  %v41 = vld [vmem:[%s1 + $0x2] sm:$0x1]
  %v42 = vld [vmem:[%s1 + $0x3] sm:$0x1]
  %v47 = vlaneseq
  %v48 = vshrl.u32 %v47, 7
  %v49 = vsub.s32 0, %v48
  %v50 = vrot.slane %v39, %v49
  %v51 = vlaneseq
  %v52 = vshrl.u32 %v51, 7
  %v53 = vsub.s32 0, %v52
  %v54 = vrot.slane %v40, %v53
  %v55 = vlaneseq
  %v56 = vshrl.u32 %v55, 7
  %v57 = vsub.s32 0, %v56
  %v58 = vrot.slane %v41, %v57
  %v59 = vlaneseq
  %v60 = vshrl.u32 %v59, 7
  %v61 = vsub.s32 0, %v60
  %v62 = vrot.slane %v42, %v61
  %v67 = vmul.f32 %v50, %v23
  %v68 = vmul.f32 %v50, %v24
  %v69 = vmul.f32 %v54, %v23
  %v70 = vmul.f32 %v54, %v24
  %v71 = vmul.f32 %v58, %v23
  %v72 = vmul.f32 %v58, %v24
  %v73 = vmul.f32 %v62, %v23
  %v74 = vmul.f32 %v62, %v24
  %v75 = vmul.f32 %v50, %v25
  %v76 = vmul.f32 %v50, %v26
  %v77 = vmul.f32 %v54, %v25
  %v78 = vmul.f32 %v54, %v26
  %v79 = vmul.f32 %v58, %v25
  %v80 = vmul.f32 %v58, %v26
  %v81 = vmul.f32 %v62, %v25
  %v82 = vmul.f32 %v62, %v26
  %v83 = vadd.f32 %v67, 0.0
  %v84 = vadd.f32 %v68, 0.0
  %v85 = vadd.f32 %v69, 0.0
  %v86 = vadd.f32 %v70, 0.0
  %v87 = vadd.f32 %v71, 0.0
  %v88 = vadd.f32 %v72, 0.0
  %v89 = vadd.f32 %v73, 0.0
  %v90 = vadd.f32 %v74, 0.0
  %v91 = vadd.f32 %v75, 0.0
  %v92 = vadd.f32 %v76, 0.0
  %v93 = vadd.f32 %v77, 0.0
  %v94 = vadd.f32 %v78, 0.0
  %v95 = vadd.f32 %v79, 0.0
  %v96 = vadd.f32 %v80, 0.0
  %v97 = vadd.f32 %v81, 0.0
  %v98 = vadd.f32 %v82, 0.0
  %s99 = scalar_lea.vmem %s1, 4
  %v100 = vld [vmem:[%s99] sm:$0x1]
  %v101 = vld [vmem:[%s99 + $0x1] sm:$0x1]
  %v102 = vld [vmem:[%s99 + $0x2] sm:$0x1]
  %v103 = vld [vmem:[%s99 + $0x3] sm:$0x1]
  %v108 = vlaneseq
  %v109 = vshrl.u32 %v108, 7
  %v110 = vsub.s32 0, %v109
  %v111 = vrot.slane %v100, %v110
  %v112 = vlaneseq
  %v113 = vshrl.u32 %v112, 7
  %v114 = vsub.s32 0, %v113
  %v115 = vrot.slane %v101, %v114
  %v116 = vlaneseq
  %v117 = vshrl.u32 %v116, 7
  %v118 = vsub.s32 0, %v117
  %v119 = vrot.slane %v102, %v118
  %v120 = vlaneseq
  %v121 = vshrl.u32 %v120, 7
  %v122 = vsub.s32 0, %v121
  %v123 = vrot.slane %v103, %v122
  %132 = vrot.lane.b32.xlu0 %v23, 127
  %v133 = vpop.permute.xlu0 %132
  %134 = vrot.lane.b32.xlu0 %v24, 127
  %v135 = vpop.permute.xlu0 %134
  %136 = vrot.lane.b32.xlu0 %v25, 127
  %v137 = vpop.permute.xlu0 %136
  %138 = vrot.lane.b32.xlu0 %v26, 127
  %v139 = vpop.permute.xlu0 %138
  %v144 = vmul.f32 %v111, %v133
  %v145 = vmul.f32 %v111, %v135
  %v146 = vmul.f32 %v115, %v133
  %v147 = vmul.f32 %v115, %v135
  %v148 = vmul.f32 %v119, %v133
  %v149 = vmul.f32 %v119, %v135
  %v150 = vmul.f32 %v123, %v133
  %v151 = vmul.f32 %v123, %v135
  %v152 = vmul.f32 %v111, %v137
  %v153 = vmul.f32 %v111, %v139
  %v154 = vmul.f32 %v115, %v137
  %v155 = vmul.f32 %v115, %v139
  %v156 = vmul.f32 %v119, %v137
  %v157 = vmul.f32 %v119, %v139
  %v158 = vmul.f32 %v123, %v137
  %v159 = vmul.f32 %v123, %v139
  %v160 = vadd.f32 %v83, %v144
  %v161 = vadd.f32 %v84, %v145
  %v162 = vadd.f32 %v85, %v146
  %v163 = vadd.f32 %v86, %v147
  %v164 = vadd.f32 %v87, %v148
  %v165 = vadd.f32 %v88, %v149
  %v166 = vadd.f32 %v89, %v150
  %v167 = vadd.f32 %v90, %v151
  %v168 = vadd.f32 %v91, %v152
  %v169 = vadd.f32 %v92, %v153
  %v170 = vadd.f32 %v93, %v154
  %v171 = vadd.f32 %v94, %v155
  %v172 = vadd.f32 %v95, %v156
  %v173 = vadd.f32 %v96, %v157
  %v174 = vadd.f32 %v97, %v158
  %v175 = vadd.f32 %v98, %v159
  %s176 = scalar_lea.vmem %s1, 8
  %v177 = vld [vmem:[%s176] sm:$0x1]
  %v178 = vld [vmem:[%s176 + $0x1] sm:$0x1]
  %v179 = vld [vmem:[%s176 + $0x2] sm:$0x1]
  %v180 = vld [vmem:[%s176 + $0x3] sm:$0x1]
  %v185 = vlaneseq
  %v186 = vshrl.u32 %v185, 7
  %v187 = vsub.s32 0, %v186
  %v188 = vrot.slane %v177, %v187
  %v189 = vlaneseq
  %v190 = vshrl.u32 %v189, 7
  %v191 = vsub.s32 0, %v190
  %v192 = vrot.slane %v178, %v191
  %v193 = vlaneseq
  %v194 = vshrl.u32 %v193, 7
  %v195 = vsub.s32 0, %v194
  %v196 = vrot.slane %v179, %v195
  %v197 = vlaneseq
  %v198 = vshrl.u32 %v197, 7
  %v199 = vsub.s32 0, %v198
  %v200 = vrot.slane %v180, %v199
  %205 = vrot.lane.b32.xlu0 %v23, 126
  %v206 = vpop.permute.xlu0 %205
  %207 = vrot.lane.b32.xlu0 %v24, 126
  %v208 = vpop.permute.xlu0 %207
  %209 = vrot.lane.b32.xlu0 %v25, 126
  %v210 = vpop.permute.xlu0 %209
  %211 = vrot.lane.b32.xlu0 %v26, 126
  %v212 = vpop.permute.xlu0 %211
  %v217 = vmul.f32 %v188, %v206
  %v218 = vmul.f32 %v188, %v208
  %v219 = vmul.f32 %v192, %v206
  %v220 = vmul.f32 %v192, %v208
  %v221 = vmul.f32 %v196, %v206
  %v222 = vmul.f32 %v196, %v208
  %v223 = vmul.f32 %v200, %v206
  %v224 = vmul.f32 %v200, %v208
  %v225 = vmul.f32 %v188, %v210
  %v226 = vmul.f32 %v188, %v212
  %v227 = vmul.f32 %v192, %v210
  %v228 = vmul.f32 %v192, %v212
  %v229 = vmul.f32 %v196, %v210
  %v230 = vmul.f32 %v196, %v212
  %v231 = vmul.f32 %v200, %v210
  %v232 = vmul.f32 %v200, %v212
  %v233 = vadd.f32 %v160, %v217
  %v234 = vadd.f32 %v161, %v218
  %v235 = vadd.f32 %v162, %v219
  %v236 = vadd.f32 %v163, %v220
  %v237 = vadd.f32 %v164, %v221
  %v238 = vadd.f32 %v165, %v222
  %v239 = vadd.f32 %v166, %v223
  %v240 = vadd.f32 %v167, %v224
  %v241 = vadd.f32 %v168, %v225
  %v242 = vadd.f32 %v169, %v226
  %v243 = vadd.f32 %v170, %v227
  %v244 = vadd.f32 %v171, %v228
  %v245 = vadd.f32 %v172, %v229
  %v246 = vadd.f32 %v173, %v230
  %v247 = vadd.f32 %v174, %v231
  %v248 = vadd.f32 %v175, %v232
  %s249 = scalar_lea.vmem %s1, 12
  %v250 = vld [vmem:[%s249] sm:$0x1]
  %v251 = vld [vmem:[%s249 + $0x1] sm:$0x1]
  %v252 = vld [vmem:[%s249 + $0x2] sm:$0x1]
  %v253 = vld [vmem:[%s249 + $0x3] sm:$0x1]
  %v258 = vlaneseq
  %v259 = vshrl.u32 %v258, 7
  %v260 = vsub.s32 0, %v259
  %v261 = vrot.slane %v250, %v260
  %v262 = vlaneseq
  %v263 = vshrl.u32 %v262, 7
  %v264 = vsub.s32 0, %v263
  %v265 = vrot.slane %v251, %v264
  %v266 = vlaneseq
  %v267 = vshrl.u32 %v266, 7
  %v268 = vsub.s32 0, %v267
  %v269 = vrot.slane %v252, %v268
  %v270 = vlaneseq
  %v271 = vshrl.u32 %v270, 7
  %v272 = vsub.s32 0, %v271
  %v273 = vrot.slane %v253, %v272
  %v278 = vmul.f32 %v261, %v23
  %v279 = vmul.f32 %v261, %v24
  %v280 = vmul.f32 %v265, %v23
  %v281 = vmul.f32 %v265, %v24
  %v282 = vmul.f32 %v269, %v23
  %v283 = vmul.f32 %v269, %v24
  %v284 = vmul.f32 %v273, %v23
  %v285 = vmul.f32 %v273, %v24
  %v286 = vmul.f32 %v261, %v25
  %v287 = vmul.f32 %v261, %v26
  %v288 = vmul.f32 %v265, %v25
  %v289 = vmul.f32 %v265, %v26
  %v290 = vmul.f32 %v269, %v25
  %v291 = vmul.f32 %v269, %v26
  %v292 = vmul.f32 %v273, %v25
  %v293 = vmul.f32 %v273, %v26
  %vm310 = vcmask 1046528
  %v311 = vrot.slane %v278, 1
  %v312 = vrot.slane %v279, 1
  %v313 = vsel %vm310, %v311, %v312
  %v314 = vrot.slane %v280, 1
  %v315 = vrot.slane %v281, 1
  %v316 = vsel %vm310, %v314, %v315
  %v317 = vrot.slane %v282, 1
  %v318 = vrot.slane %v283, 1
  %v319 = vsel %vm310, %v317, %v318
  %v320 = vrot.slane %v284, 1
  %v321 = vrot.slane %v285, 1
  %v322 = vsel %vm310, %v320, %v321
  %v323 = vrot.slane %v286, 1
  %v324 = vrot.slane %v287, 1
  %v325 = vsel %vm310, %v323, %v324
  %v326 = vrot.slane %v288, 1
  %v327 = vrot.slane %v289, 1
  %v328 = vsel %vm310, %v326, %v327
  %v329 = vrot.slane %v290, 1
  %v330 = vrot.slane %v291, 1
  %v331 = vsel %vm310, %v329, %v330
  %v332 = vrot.slane %v292, 1
  %v333 = vrot.slane %v293, 1
  %v334 = vsel %vm310, %v332, %v333
  %v351 = vadd.f32 %v233, %v313
  %v352 = vadd.f32 %v234, %v312
  %v353 = vadd.f32 %v235, %v316
  %v354 = vadd.f32 %v236, %v315
  %v355 = vadd.f32 %v237, %v319
  %v356 = vadd.f32 %v238, %v318
  %v357 = vadd.f32 %v239, %v322
  %v358 = vadd.f32 %v240, %v321
  %v359 = vadd.f32 %v241, %v325
  %v360 = vadd.f32 %v242, %v324
  %v361 = vadd.f32 %v243, %v328
  %v362 = vadd.f32 %v244, %v327
  %v363 = vadd.f32 %v245, %v331
  %v364 = vadd.f32 %v246, %v330
  %v365 = vadd.f32 %v247, %v334
  %v366 = vadd.f32 %v248, %v333
  %s367 = scalar_lea.vmem %s1, 16
  %v368 = vld [vmem:[%s367] sm:$0x1]
  %v369 = vld [vmem:[%s367 + $0x1] sm:$0x1]
  %v370 = vld [vmem:[%s367 + $0x2] sm:$0x1]
  %v371 = vld [vmem:[%s367 + $0x3] sm:$0x1]
  %v376 = vlaneseq
  %v377 = vshrl.u32 %v376, 7
  %v378 = vsub.s32 0, %v377
  %v379 = vrot.slane %v368, %v378
  %v380 = vlaneseq
  %v381 = vshrl.u32 %v380, 7
  %v382 = vsub.s32 0, %v381
  %v383 = vrot.slane %v369, %v382
  %v384 = vlaneseq
  %v385 = vshrl.u32 %v384, 7
  %v386 = vsub.s32 0, %v385
  %v387 = vrot.slane %v370, %v386
  %v388 = vlaneseq
  %v389 = vshrl.u32 %v388, 7
  %v390 = vsub.s32 0, %v389
  %v391 = vrot.slane %v371, %v390
  %v396 = vrot.slane %v23, 1
  %v397 = vrot.slane %v24, 1
  %v398 = vsel %vm310, %v396, %v397
  %v399 = vrot.slane %v25, 1
  %v400 = vrot.slane %v26, 1
  %v401 = vsel %vm310, %v399, %v400
  %402 = vrot.lane.b32.xlu0 %v398, 127
  %v403 = vpop.permute.xlu0 %402
  %404 = vrot.lane.b32.xlu0 %v397, 127
  %v405 = vpop.permute.xlu0 %404
  %406 = vrot.lane.b32.xlu0 %v401, 127
  %v407 = vpop.permute.xlu0 %406
  %408 = vrot.lane.b32.xlu0 %v400, 127
  %v409 = vpop.permute.xlu0 %408
  %v414 = vmul.f32 %v379, %v403
  %v415 = vmul.f32 %v379, %v405
  %v416 = vmul.f32 %v383, %v403
  %v417 = vmul.f32 %v383, %v405
  %v418 = vmul.f32 %v387, %v403
  %v419 = vmul.f32 %v387, %v405
  %v420 = vmul.f32 %v391, %v403
  %v421 = vmul.f32 %v391, %v405
  %v422 = vmul.f32 %v379, %v407
  %v423 = vmul.f32 %v379, %v409
  %v424 = vmul.f32 %v383, %v407
  %v425 = vmul.f32 %v383, %v409
  %v426 = vmul.f32 %v387, %v407
  %v427 = vmul.f32 %v387, %v409
  %v428 = vmul.f32 %v391, %v407
  %v429 = vmul.f32 %v391, %v409
  %v430 = vadd.f32 %v351, %v414
  %v431 = vadd.f32 %v352, %v415
  %v432 = vadd.f32 %v353, %v416
  %v433 = vadd.f32 %v354, %v417
  %v434 = vadd.f32 %v355, %v418
  %v435 = vadd.f32 %v356, %v419
  %v436 = vadd.f32 %v357, %v420
  %v437 = vadd.f32 %v358, %v421
  %v438 = vadd.f32 %v359, %v422
  %v439 = vadd.f32 %v360, %v423
  %v440 = vadd.f32 %v361, %v424
  %v441 = vadd.f32 %v362, %v425
  %v442 = vadd.f32 %v363, %v426
  %v443 = vadd.f32 %v364, %v427
  %v444 = vadd.f32 %v365, %v428
  %v445 = vadd.f32 %v366, %v429
  %s446 = scalar_lea.vmem %s1, 20
  %v447 = vld [vmem:[%s446] sm:$0x1]
  %v448 = vld [vmem:[%s446 + $0x1] sm:$0x1]
  %v449 = vld [vmem:[%s446 + $0x2] sm:$0x1]
  %v450 = vld [vmem:[%s446 + $0x3] sm:$0x1]
  %v455 = vlaneseq
  %v456 = vshrl.u32 %v455, 7
  %v457 = vsub.s32 0, %v456
  %v458 = vrot.slane %v447, %v457
  %v459 = vlaneseq
  %v460 = vshrl.u32 %v459, 7
  %v461 = vsub.s32 0, %v460
  %v462 = vrot.slane %v448, %v461
  %v463 = vlaneseq
  %v464 = vshrl.u32 %v463, 7
  %v465 = vsub.s32 0, %v464
  %v466 = vrot.slane %v449, %v465
  %v467 = vlaneseq
  %v468 = vshrl.u32 %v467, 7
  %v469 = vsub.s32 0, %v468
  %v470 = vrot.slane %v450, %v469
  %475 = vrot.lane.b32.xlu0 %v398, 126
  %v476 = vpop.permute.xlu0 %475
  %477 = vrot.lane.b32.xlu0 %v397, 126
  %v478 = vpop.permute.xlu0 %477
  %479 = vrot.lane.b32.xlu0 %v401, 126
  %v480 = vpop.permute.xlu0 %479
  %481 = vrot.lane.b32.xlu0 %v400, 126
  %v482 = vpop.permute.xlu0 %481
  %v487 = vmul.f32 %v458, %v476
  %v488 = vmul.f32 %v458, %v478
  %v489 = vmul.f32 %v462, %v476
  %v490 = vmul.f32 %v462, %v478
  %v491 = vmul.f32 %v466, %v476
  %v492 = vmul.f32 %v466, %v478
  %v493 = vmul.f32 %v470, %v476
  %v494 = vmul.f32 %v470, %v478
  %v495 = vmul.f32 %v458, %v480
  %v496 = vmul.f32 %v458, %v482
  %v497 = vmul.f32 %v462, %v480
  %v498 = vmul.f32 %v462, %v482
  %v499 = vmul.f32 %v466, %v480
  %v500 = vmul.f32 %v466, %v482
  %v501 = vmul.f32 %v470, %v480
  %v502 = vmul.f32 %v470, %v482
  %v503 = vadd.f32 %v430, %v487
  %v504 = vadd.f32 %v431, %v488
  %v505 = vadd.f32 %v432, %v489
  %v506 = vadd.f32 %v433, %v490
  %v507 = vadd.f32 %v434, %v491
  %v508 = vadd.f32 %v435, %v492
  %v509 = vadd.f32 %v436, %v493
  %v510 = vadd.f32 %v437, %v494
  %v511 = vadd.f32 %v438, %v495
  %v512 = vadd.f32 %v439, %v496
  %v513 = vadd.f32 %v440, %v497
  %v514 = vadd.f32 %v441, %v498
  %v515 = vadd.f32 %v442, %v499
  %v516 = vadd.f32 %v443, %v500
  %v517 = vadd.f32 %v444, %v501
  %v518 = vadd.f32 %v445, %v502
  %s519 = scalar_lea.vmem %s1, 24
  %v520 = vld [vmem:[%s519] sm:$0x1]
  %v521 = vld [vmem:[%s519 + $0x1] sm:$0x1]
  %v522 = vld [vmem:[%s519 + $0x2] sm:$0x1]
  %v523 = vld [vmem:[%s519 + $0x3] sm:$0x1]
  %v528 = vlaneseq
  %v529 = vshrl.u32 %v528, 7
  %v530 = vsub.s32 0, %v529
  %v531 = vrot.slane %v520, %v530
  %v532 = vlaneseq
  %v533 = vshrl.u32 %v532, 7
  %v534 = vsub.s32 0, %v533
  %v535 = vrot.slane %v521, %v534
  %v536 = vlaneseq
  %v537 = vshrl.u32 %v536, 7
  %v538 = vsub.s32 0, %v537
  %v539 = vrot.slane %v522, %v538
  %v540 = vlaneseq
  %v541 = vshrl.u32 %v540, 7
  %v542 = vsub.s32 0, %v541
  %v543 = vrot.slane %v523, %v542
  %v548 = vmul.f32 %v531, %v23
  %v549 = vmul.f32 %v531, %v24
  %v550 = vmul.f32 %v535, %v23
  %v551 = vmul.f32 %v535, %v24
  %v552 = vmul.f32 %v539, %v23
  %v553 = vmul.f32 %v539, %v24
  %v554 = vmul.f32 %v543, %v23
  %v555 = vmul.f32 %v543, %v24
  %v556 = vmul.f32 %v531, %v25
  %v557 = vmul.f32 %v531, %v26
  %v558 = vmul.f32 %v535, %v25
  %v559 = vmul.f32 %v535, %v26
  %v560 = vmul.f32 %v539, %v25
  %v561 = vmul.f32 %v539, %v26
  %v562 = vmul.f32 %v543, %v25
  %v563 = vmul.f32 %v543, %v26
  %vm580 = vcmask 1045504
  %v581 = vrot.slane %v548, 2
  %v582 = vrot.slane %v549, 2
  %v583 = vsel %vm580, %v581, %v582
  %v584 = vrot.slane %v550, 2
  %v585 = vrot.slane %v551, 2
  %v586 = vsel %vm580, %v584, %v585
  %v587 = vrot.slane %v552, 2
  %v588 = vrot.slane %v553, 2
  %v589 = vsel %vm580, %v587, %v588
  %v590 = vrot.slane %v554, 2
  %v591 = vrot.slane %v555, 2
  %v592 = vsel %vm580, %v590, %v591
  %v593 = vrot.slane %v556, 2
  %v594 = vrot.slane %v557, 2
  %v595 = vsel %vm580, %v593, %v594
  %v596 = vrot.slane %v558, 2
  %v597 = vrot.slane %v559, 2
  %v598 = vsel %vm580, %v596, %v597
  %v599 = vrot.slane %v560, 2
  %v600 = vrot.slane %v561, 2
  %v601 = vsel %vm580, %v599, %v600
  %v602 = vrot.slane %v562, 2
  %v603 = vrot.slane %v563, 2
  %v604 = vsel %vm580, %v602, %v603
  %v621 = vadd.f32 %v503, %v583
  %v622 = vadd.f32 %v504, %v582
  %v623 = vadd.f32 %v505, %v586
  %v624 = vadd.f32 %v506, %v585
  %v625 = vadd.f32 %v507, %v589
  %v626 = vadd.f32 %v508, %v588
  %v627 = vadd.f32 %v509, %v592
  %v628 = vadd.f32 %v510, %v591
  %v629 = vadd.f32 %v511, %v595
  %v630 = vadd.f32 %v512, %v594
  %v631 = vadd.f32 %v513, %v598
  %v632 = vadd.f32 %v514, %v597
  %v633 = vadd.f32 %v515, %v601
  %v634 = vadd.f32 %v516, %v600
  %v635 = vadd.f32 %v517, %v604
  %v636 = vadd.f32 %v518, %v603
  %s637 = scalar_lea.vmem %s1, 28
  %v638 = vld [vmem:[%s637] sm:$0x1]
  %v639 = vld [vmem:[%s637 + $0x1] sm:$0x1]
  %v640 = vld [vmem:[%s637 + $0x2] sm:$0x1]
  %v641 = vld [vmem:[%s637 + $0x3] sm:$0x1]
  %v646 = vlaneseq
  %v647 = vshrl.u32 %v646, 7
  %v648 = vsub.s32 0, %v647
  %v649 = vrot.slane %v638, %v648
  %v650 = vlaneseq
  %v651 = vshrl.u32 %v650, 7
  %v652 = vsub.s32 0, %v651
  %v653 = vrot.slane %v639, %v652
  %v654 = vlaneseq
  %v655 = vshrl.u32 %v654, 7
  %v656 = vsub.s32 0, %v655
  %v657 = vrot.slane %v640, %v656
  %v658 = vlaneseq
  %v659 = vshrl.u32 %v658, 7
  %v660 = vsub.s32 0, %v659
  %v661 = vrot.slane %v641, %v660
  %v666 = vrot.slane %v23, 2
  %v667 = vrot.slane %v24, 2
  %v668 = vsel %vm580, %v666, %v667
  %v669 = vrot.slane %v25, 2
  %v670 = vrot.slane %v26, 2
  %v671 = vsel %vm580, %v669, %v670
  %672 = vrot.lane.b32.xlu0 %v668, 127
  %v673 = vpop.permute.xlu0 %672
  %674 = vrot.lane.b32.xlu0 %v667, 127
  %v675 = vpop.permute.xlu0 %674
  %676 = vrot.lane.b32.xlu0 %v671, 127
  %v677 = vpop.permute.xlu0 %676
  %678 = vrot.lane.b32.xlu0 %v670, 127
  %v679 = vpop.permute.xlu0 %678
  %v684 = vmul.f32 %v649, %v673
  %v685 = vmul.f32 %v649, %v675
  %v686 = vmul.f32 %v653, %v673
  %v687 = vmul.f32 %v653, %v675
  %v688 = vmul.f32 %v657, %v673
  %v689 = vmul.f32 %v657, %v675
  %v690 = vmul.f32 %v661, %v673
  %v691 = vmul.f32 %v661, %v675
  %v692 = vmul.f32 %v649, %v677
  %v693 = vmul.f32 %v649, %v679
  %v694 = vmul.f32 %v653, %v677
  %v695 = vmul.f32 %v653, %v679
  %v696 = vmul.f32 %v657, %v677
  %v697 = vmul.f32 %v657, %v679
  %v698 = vmul.f32 %v661, %v677
  %v699 = vmul.f32 %v661, %v679
  %v700 = vadd.f32 %v621, %v684
  %v701 = vadd.f32 %v622, %v685
  %v702 = vadd.f32 %v623, %v686
  %v703 = vadd.f32 %v624, %v687
  %v704 = vadd.f32 %v625, %v688
  %v705 = vadd.f32 %v626, %v689
  %v706 = vadd.f32 %v627, %v690
  %v707 = vadd.f32 %v628, %v691
  %v708 = vadd.f32 %v629, %v692
  %v709 = vadd.f32 %v630, %v693
  %v710 = vadd.f32 %v631, %v694
  %v711 = vadd.f32 %v632, %v695
  %v712 = vadd.f32 %v633, %v696
  %v713 = vadd.f32 %v634, %v697
  %v714 = vadd.f32 %v635, %v698
  %v715 = vadd.f32 %v636, %v699
  %s716 = scalar_lea.vmem %s1, 32
  %v717 = vld [vmem:[%s716] sm:$0x1]
  %v718 = vld [vmem:[%s716 + $0x1] sm:$0x1]
  %v719 = vld [vmem:[%s716 + $0x2] sm:$0x1]
  %v720 = vld [vmem:[%s716 + $0x3] sm:$0x1]
  %v725 = vlaneseq
  %v726 = vshrl.u32 %v725, 7
  %v727 = vsub.s32 0, %v726
  %v728 = vrot.slane %v717, %v727
  %v729 = vlaneseq
  %v730 = vshrl.u32 %v729, 7
  %v731 = vsub.s32 0, %v730
  %v732 = vrot.slane %v718, %v731
  %v733 = vlaneseq
  %v734 = vshrl.u32 %v733, 7
  %v735 = vsub.s32 0, %v734
  %v736 = vrot.slane %v719, %v735
  %v737 = vlaneseq
  %v738 = vshrl.u32 %v737, 7
  %v739 = vsub.s32 0, %v738
  %v740 = vrot.slane %v720, %v739
  %745 = vrot.lane.b32.xlu0 %v668, 126
  %v746 = vpop.permute.xlu0 %745
  %747 = vrot.lane.b32.xlu0 %v667, 126
  %v748 = vpop.permute.xlu0 %747
  %749 = vrot.lane.b32.xlu0 %v671, 126
  %v750 = vpop.permute.xlu0 %749
  %751 = vrot.lane.b32.xlu0 %v670, 126
  %v752 = vpop.permute.xlu0 %751
  %v757 = vmul.f32 %v728, %v746
  %v758 = vmul.f32 %v728, %v748
  %v759 = vmul.f32 %v732, %v746
  %v760 = vmul.f32 %v732, %v748
  %v761 = vmul.f32 %v736, %v746
  %v762 = vmul.f32 %v736, %v748
  %v763 = vmul.f32 %v740, %v746
  %v764 = vmul.f32 %v740, %v748
  %v765 = vmul.f32 %v728, %v750
  %v766 = vmul.f32 %v728, %v752
  %v767 = vmul.f32 %v732, %v750
  %v768 = vmul.f32 %v732, %v752
  %v769 = vmul.f32 %v736, %v750
  %v770 = vmul.f32 %v736, %v752
  %v771 = vmul.f32 %v740, %v750
  %v772 = vmul.f32 %v740, %v752
  %v773 = vadd.f32 %v700, %v757
  %v774 = vadd.f32 %v701, %v758
  %v775 = vadd.f32 %v702, %v759
  %v776 = vadd.f32 %v703, %v760
  %v777 = vadd.f32 %v704, %v761
  %v778 = vadd.f32 %v705, %v762
  %v779 = vadd.f32 %v706, %v763
  %v780 = vadd.f32 %v707, %v764
  %v781 = vadd.f32 %v708, %v765
  %v782 = vadd.f32 %v709, %v766
  %v783 = vadd.f32 %v710, %v767
  %v784 = vadd.f32 %v711, %v768
  %v785 = vadd.f32 %v712, %v769
  %v786 = vadd.f32 %v713, %v770
  %v787 = vadd.f32 %v714, %v771
  %v788 = vadd.f32 %v715, %v772
  %v793 = vlaneseq
  %v794 = vshrl.u32 %v793, 7
  %v795 = vsub.s32 0, %v794
  %v796 = vrot.slane %v27, %v795
  %v797 = vlaneseq
  %v798 = vshrl.u32 %v797, 7
  %v799 = vsub.s32 0, %v798
  %v800 = vrot.slane %v28, %v799
  %v801 = vlaneseq
  %v802 = vshrl.u32 %v801, 7
  %v803 = vsub.s32 0, %v802
  %v804 = vrot.slane %v29, %v803
  %v805 = vlaneseq
  %v806 = vshrl.u32 %v805, 7
  %v807 = vsub.s32 0, %v806
  %v808 = vrot.slane %v30, %v807
  %v813 = vadd.f32 %v773, %v796
  %v814 = vadd.f32 %v774, %v796
  %v815 = vadd.f32 %v775, %v800
  %v816 = vadd.f32 %v776, %v800
  %v817 = vadd.f32 %v777, %v804
  %v818 = vadd.f32 %v778, %v804
  %v819 = vadd.f32 %v779, %v808
  %v820 = vadd.f32 %v780, %v808
  %v821 = vadd.f32 %v781, %v796
  %v822 = vadd.f32 %v782, %v796
  %v823 = vadd.f32 %v783, %v800
  %v824 = vadd.f32 %v784, %v800
  %v825 = vadd.f32 %v785, %v804
  %v826 = vadd.f32 %v786, %v804
  %v827 = vadd.f32 %v787, %v808
  %v828 = vadd.f32 %v788, %v808
  %v829 = vmax.f32 %v813, 0.0
  %v830 = vmax.f32 %v814, 0.0
  %v831 = vmax.f32 %v815, 0.0
  %v832 = vmax.f32 %v816, 0.0
  %v833 = vmax.f32 %v817, 0.0
  %v834 = vmax.f32 %v818, 0.0
  %v835 = vmax.f32 %v819, 0.0
  %v836 = vmax.f32 %v820, 0.0
  %v837 = vmax.f32 %v821, 0.0
  %v838 = vmax.f32 %v822, 0.0
  %v839 = vmax.f32 %v823, 0.0
  %v840 = vmax.f32 %v824, 0.0
  %v841 = vmax.f32 %v825, 0.0
  %v842 = vmax.f32 %v826, 0.0
  %v843 = vmax.f32 %v827, 0.0
  %v844 = vmax.f32 %v828, 0.0
  %v853 = vrot.slane %v829, 1
  %v854 = vrot.slane %v831, 1
  %v855 = vrot.slane %v833, 1
  %v856 = vrot.slane %v835, 1
  %v857 = vrot.slane %v837, 1
  %v858 = vrot.slane %v839, 1
  %v859 = vrot.slane %v841, 1
  %v860 = vrot.slane %v843, 1
  %v869 = vmax.f32 %v829, %v853
  %v870 = vmax.f32 %v831, %v854
  %v871 = vmax.f32 %v833, %v855
  %v872 = vmax.f32 %v835, %v856
  %v873 = vmax.f32 %v837, %v857
  %v874 = vmax.f32 %v839, %v858
  %v875 = vmax.f32 %v841, %v859
  %v876 = vmax.f32 %v843, %v860
  %v885 = vrot.slane %v830, 1
  %v886 = vrot.slane %v832, 1
  %v887 = vrot.slane %v834, 1
  %v888 = vrot.slane %v836, 1
  %v889 = vrot.slane %v838, 1
  %v890 = vrot.slane %v840, 1
  %v891 = vrot.slane %v842, 1
  %v892 = vrot.slane %v844, 1
  %v901 = vmax.f32 %v830, %v885
  %v902 = vmax.f32 %v832, %v886
  %v903 = vmax.f32 %v834, %v887
  %v904 = vmax.f32 %v836, %v888
  %v905 = vmax.f32 %v838, %v889
  %v906 = vmax.f32 %v840, %v890
  %v907 = vmax.f32 %v842, %v891
  %v908 = vmax.f32 %v844, %v892
  %v917 = vrot.slane %v869, 1
  %v918 = vrot.slane %v870, 1
  %v919 = vrot.slane %v871, 1
  %v920 = vrot.slane %v872, 1
  %v921 = vrot.slane %v873, 1
  %v922 = vrot.slane %v874, 1
  %v923 = vrot.slane %v875, 1
  %v924 = vrot.slane %v876, 1
  %v933 = vrot.slane %v869, 2
  %v934 = vrot.slane %v870, 2
  %v935 = vrot.slane %v871, 2
  %v936 = vrot.slane %v872, 2
  %v937 = vrot.slane %v873, 2
  %v938 = vrot.slane %v874, 2
  %v939 = vrot.slane %v875, 2
  %v940 = vrot.slane %v876, 2
  %v949 = vrot.slane %v869, 3
  %v950 = vrot.slane %v870, 3
  %v951 = vrot.slane %v871, 3
  %v952 = vrot.slane %v872, 3
  %v953 = vrot.slane %v873, 3
  %v954 = vrot.slane %v874, 3
  %v955 = vrot.slane %v875, 3
  %v956 = vrot.slane %v876, 3
  %v973 = vrot.slane %v901, 4
  %v974 = vrot.slane %v902, 4
  %v975 = vrot.slane %v903, 4
  %v976 = vrot.slane %v904, 4
  %v977 = vrot.slane %v905, 4
  %v978 = vrot.slane %v906, 4
  %v979 = vrot.slane %v907, 4
  %v980 = vrot.slane %v908, 4
  %v989 = vrot.slane %v901, 5
  %v990 = vrot.slane %v902, 5
  %v991 = vrot.slane %v903, 5
  %v992 = vrot.slane %v904, 5
  %v993 = vrot.slane %v905, 5
  %v994 = vrot.slane %v906, 5
  %v995 = vrot.slane %v907, 5
  %v996 = vrot.slane %v908, 5
  %v1005 = vrot.slane %v901, 6
  %v1006 = vrot.slane %v902, 6
  %v1007 = vrot.slane %v903, 6
  %v1008 = vrot.slane %v904, 6
  %v1009 = vrot.slane %v905, 6
  %v1010 = vrot.slane %v906, 6
  %v1011 = vrot.slane %v907, 6
  %v1012 = vrot.slane %v908, 6
  %vm1021 = vcmask 1040384
  %v1022 = vsel %vm1021, %v869, %v917
  %v1023 = vsel %vm1021, %v870, %v918
  %v1024 = vsel %vm1021, %v871, %v919
  %v1025 = vsel %vm1021, %v872, %v920
  %v1026 = vsel %vm1021, %v873, %v921
  %v1027 = vsel %vm1021, %v874, %v922
  %v1028 = vsel %vm1021, %v875, %v923
  %v1029 = vsel %vm1021, %v876, %v924
  %vm1030 = vcmask 1041408
  %v1031 = vsel %vm1030, %v1022, %v933
  %v1032 = vsel %vm1030, %v1023, %v934
  %v1033 = vsel %vm1030, %v1024, %v935
  %v1034 = vsel %vm1030, %v1025, %v936
  %v1035 = vsel %vm1030, %v1026, %v937
  %v1036 = vsel %vm1030, %v1027, %v938
  %v1037 = vsel %vm1030, %v1028, %v939
  %v1038 = vsel %vm1030, %v1029, %v940
  %vm1039 = vcmask 1042432
  %v1040 = vsel %vm1039, %v1031, %v949
  %v1041 = vsel %vm1039, %v1032, %v950
  %v1042 = vsel %vm1039, %v1033, %v951
  %v1043 = vsel %vm1039, %v1034, %v952
  %v1044 = vsel %vm1039, %v1035, %v953
  %v1045 = vsel %vm1039, %v1036, %v954
  %v1046 = vsel %vm1039, %v1037, %v955
  %v1047 = vsel %vm1039, %v1038, %v956
  %vm1048 = vcmask 1043456
  %v1049 = vsel %vm1048, %v1040, %v973
  %v1050 = vsel %vm1048, %v1041, %v974
  %v1051 = vsel %vm1048, %v1042, %v975
  %v1052 = vsel %vm1048, %v1043, %v976
  %v1053 = vsel %vm1048, %v1044, %v977
  %v1054 = vsel %vm1048, %v1045, %v978
  %v1055 = vsel %vm1048, %v1046, %v979
  %v1056 = vsel %vm1048, %v1047, %v980
  %vm1057 = vcmask 1044480
  %v1058 = vsel %vm1057, %v1049, %v989
  %v1059 = vsel %vm1057, %v1050, %v990
  %v1060 = vsel %vm1057, %v1051, %v991
  %v1061 = vsel %vm1057, %v1052, %v992
  %v1062 = vsel %vm1057, %v1053, %v993
  %v1063 = vsel %vm1057, %v1054, %v994
  %v1064 = vsel %vm1057, %v1055, %v995
  %v1065 = vsel %vm1057, %v1056, %v996
  %v1066 = vsel %vm580, %v1058, %v1005
  %v1067 = vsel %vm580, %v1059, %v1006
  %v1068 = vsel %vm580, %v1060, %v1007
  %v1069 = vsel %vm580, %v1061, %v1008
  %v1070 = vsel %vm580, %v1062, %v1009
  %v1071 = vsel %vm580, %v1063, %v1010
  %v1072 = vsel %vm580, %v1064, %v1011
  %v1073 = vsel %vm580, %v1065, %v1012
  %1082 = vrot.lane.b32.xlu0 %v1066, 127
  %v1083 = vpop.permute.xlu0 %1082
  %1084 = vrot.lane.b32.xlu0 %v1067, 127
  %v1085 = vpop.permute.xlu0 %1084
  %1086 = vrot.lane.b32.xlu0 %v1068, 127
  %v1087 = vpop.permute.xlu0 %1086
  %1088 = vrot.lane.b32.xlu0 %v1069, 127
  %v1089 = vpop.permute.xlu0 %1088
  %1090 = vrot.lane.b32.xlu0 %v1070, 127
  %v1091 = vpop.permute.xlu0 %1090
  %1092 = vrot.lane.b32.xlu0 %v1071, 127
  %v1093 = vpop.permute.xlu0 %1092
  %1094 = vrot.lane.b32.xlu0 %v1072, 127
  %v1095 = vpop.permute.xlu0 %1094
  %1096 = vrot.lane.b32.xlu0 %v1073, 127
  %v1097 = vpop.permute.xlu0 %1096
  %v1106 = vmax.f32 %v1066, %v1083
  %v1107 = vmax.f32 %v1067, %v1085
  %v1108 = vmax.f32 %v1068, %v1087
  %v1109 = vmax.f32 %v1069, %v1089
  %v1110 = vmax.f32 %v1070, %v1091
  %v1111 = vmax.f32 %v1071, %v1093
  %v1112 = vmax.f32 %v1072, %v1095
  %v1113 = vmax.f32 %v1073, %v1097
  %1122 = vrot.lane.b32.xlu0 %v1106, 127
  %v1123 = vpop.permute.xlu0 %1122
  %1124 = vrot.lane.b32.xlu0 %v1107, 127
  %v1125 = vpop.permute.xlu0 %1124
  %1126 = vrot.lane.b32.xlu0 %v1108, 127
  %v1127 = vpop.permute.xlu0 %1126
  %1128 = vrot.lane.b32.xlu0 %v1109, 127
  %v1129 = vpop.permute.xlu0 %1128
  %1130 = vrot.lane.b32.xlu0 %v1110, 127
  %v1131 = vpop.permute.xlu0 %1130
  %1132 = vrot.lane.b32.xlu0 %v1111, 127
  %v1133 = vpop.permute.xlu0 %1132
  %1134 = vrot.lane.b32.xlu0 %v1112, 127
  %v1135 = vpop.permute.xlu0 %1134
  %1136 = vrot.lane.b32.xlu0 %v1113, 127
  %v1137 = vpop.permute.xlu0 %1136
  %1146 = vrot.lane.b32.xlu0 %v1106, 126
  %v1147 = vpop.permute.xlu0 %1146
  %1148 = vrot.lane.b32.xlu0 %v1107, 126
  %v1149 = vpop.permute.xlu0 %1148
  %1150 = vrot.lane.b32.xlu0 %v1108, 126
  %v1151 = vpop.permute.xlu0 %1150
  %1152 = vrot.lane.b32.xlu0 %v1109, 126
  %v1153 = vpop.permute.xlu0 %1152
  %1154 = vrot.lane.b32.xlu0 %v1110, 126
  %v1155 = vpop.permute.xlu0 %1154
  %1156 = vrot.lane.b32.xlu0 %v1111, 126
  %v1157 = vpop.permute.xlu0 %1156
  %1158 = vrot.lane.b32.xlu0 %v1112, 126
  %v1159 = vpop.permute.xlu0 %1158
  %1160 = vrot.lane.b32.xlu0 %v1113, 126
  %v1161 = vpop.permute.xlu0 %1160
  %1170 = vrot.lane.b32.xlu0 %v1106, 125
  %v1171 = vpop.permute.xlu0 %1170
  %1172 = vrot.lane.b32.xlu0 %v1107, 125
  %v1173 = vpop.permute.xlu0 %1172
  %1174 = vrot.lane.b32.xlu0 %v1108, 125
  %v1175 = vpop.permute.xlu0 %1174
  %1176 = vrot.lane.b32.xlu0 %v1109, 125
  %v1177 = vpop.permute.xlu0 %1176
  %1178 = vrot.lane.b32.xlu0 %v1110, 125
  %v1179 = vpop.permute.xlu0 %1178
  %1180 = vrot.lane.b32.xlu0 %v1111, 125
  %v1181 = vpop.permute.xlu0 %1180
  %1182 = vrot.lane.b32.xlu0 %v1112, 125
  %v1183 = vpop.permute.xlu0 %1182
  %1184 = vrot.lane.b32.xlu0 %v1113, 125
  %v1185 = vpop.permute.xlu0 %1184
  %1194 = vrot.lane.b32.xlu0 %v1106, 124
  %v1195 = vpop.permute.xlu0 %1194
  %1196 = vrot.lane.b32.xlu0 %v1107, 124
  %v1197 = vpop.permute.xlu0 %1196
  %1198 = vrot.lane.b32.xlu0 %v1108, 124
  %v1199 = vpop.permute.xlu0 %1198
  %1200 = vrot.lane.b32.xlu0 %v1109, 124
  %v1201 = vpop.permute.xlu0 %1200
  %1202 = vrot.lane.b32.xlu0 %v1110, 124
  %v1203 = vpop.permute.xlu0 %1202
  %1204 = vrot.lane.b32.xlu0 %v1111, 124
  %v1205 = vpop.permute.xlu0 %1204
  %1206 = vrot.lane.b32.xlu0 %v1112, 124
  %v1207 = vpop.permute.xlu0 %1206
  %1208 = vrot.lane.b32.xlu0 %v1113, 124
  %v1209 = vpop.permute.xlu0 %1208
  %1218 = vrot.lane.b32.xlu0 %v1106, 123
  %v1219 = vpop.permute.xlu0 %1218
  %1220 = vrot.lane.b32.xlu0 %v1107, 123
  %v1221 = vpop.permute.xlu0 %1220
  %1222 = vrot.lane.b32.xlu0 %v1108, 123
  %v1223 = vpop.permute.xlu0 %1222
  %1224 = vrot.lane.b32.xlu0 %v1109, 123
  %v1225 = vpop.permute.xlu0 %1224
  %1226 = vrot.lane.b32.xlu0 %v1110, 123
  %v1227 = vpop.permute.xlu0 %1226
  %1228 = vrot.lane.b32.xlu0 %v1111, 123
  %v1229 = vpop.permute.xlu0 %1228
  %1230 = vrot.lane.b32.xlu0 %v1112, 123
  %v1231 = vpop.permute.xlu0 %1230
  %1232 = vrot.lane.b32.xlu0 %v1113, 123
  %v1233 = vpop.permute.xlu0 %1232
  %1242 = vrot.lane.b32.xlu0 %v1106, 122
  %v1243 = vpop.permute.xlu0 %1242
  %1244 = vrot.lane.b32.xlu0 %v1107, 122
  %v1245 = vpop.permute.xlu0 %1244
  %1246 = vrot.lane.b32.xlu0 %v1108, 122
  %v1247 = vpop.permute.xlu0 %1246
  %1248 = vrot.lane.b32.xlu0 %v1109, 122
  %v1249 = vpop.permute.xlu0 %1248
  %1250 = vrot.lane.b32.xlu0 %v1110, 122
  %v1251 = vpop.permute.xlu0 %1250
  %1252 = vrot.lane.b32.xlu0 %v1111, 122
  %v1253 = vpop.permute.xlu0 %1252
  %1254 = vrot.lane.b32.xlu0 %v1112, 122
  %v1255 = vpop.permute.xlu0 %1254
  %1256 = vrot.lane.b32.xlu0 %v1113, 122
  %v1257 = vpop.permute.xlu0 %1256
  %vm1266 = vcmask 7168
  %v1267 = vsel %vm1266, %v1106, %v1123
  %v1268 = vsel %vm1266, %v1107, %v1125
  %v1269 = vsel %vm1266, %v1108, %v1127
  %v1270 = vsel %vm1266, %v1109, %v1129
  %v1271 = vsel %vm1266, %v1110, %v1131
  %v1272 = vsel %vm1266, %v1111, %v1133
  %v1273 = vsel %vm1266, %v1112, %v1135
  %v1274 = vsel %vm1266, %v1113, %v1137
  %vm1275 = vcmask 15360
  %v1276 = vsel %vm1275, %v1267, %v1147
  %v1277 = vsel %vm1275, %v1268, %v1149
  %v1278 = vsel %vm1275, %v1269, %v1151
  %v1279 = vsel %vm1275, %v1270, %v1153
  %v1280 = vsel %vm1275, %v1271, %v1155
  %v1281 = vsel %vm1275, %v1272, %v1157
  %v1282 = vsel %vm1275, %v1273, %v1159
  %v1283 = vsel %vm1275, %v1274, %v1161
  %vm1284 = vcmask 23552
  %v1285 = vsel %vm1284, %v1276, %v1171
  %v1286 = vsel %vm1284, %v1277, %v1173
  %v1287 = vsel %vm1284, %v1278, %v1175
  %v1288 = vsel %vm1284, %v1279, %v1177
  %v1289 = vsel %vm1284, %v1280, %v1179
  %v1290 = vsel %vm1284, %v1281, %v1181
  %v1291 = vsel %vm1284, %v1282, %v1183
  %v1292 = vsel %vm1284, %v1283, %v1185
  %vm1293 = vcmask 31744
  %v1294 = vsel %vm1293, %v1285, %v1195
  %v1295 = vsel %vm1293, %v1286, %v1197
  %v1296 = vsel %vm1293, %v1287, %v1199
  %v1297 = vsel %vm1293, %v1288, %v1201
  %v1298 = vsel %vm1293, %v1289, %v1203
  %v1299 = vsel %vm1293, %v1290, %v1205
  %v1300 = vsel %vm1293, %v1291, %v1207
  %v1301 = vsel %vm1293, %v1292, %v1209
  %vm1302 = vcmask 39936
  %v1303 = vsel %vm1302, %v1294, %v1219
  %v1304 = vsel %vm1302, %v1295, %v1221
  %v1305 = vsel %vm1302, %v1296, %v1223
  %v1306 = vsel %vm1302, %v1297, %v1225
  %v1307 = vsel %vm1302, %v1298, %v1227
  %v1308 = vsel %vm1302, %v1299, %v1229
  %v1309 = vsel %vm1302, %v1300, %v1231
  %v1310 = vsel %vm1302, %v1301, %v1233
  %vm1311 = vcmask 48128
  %v1312 = vsel %vm1311, %v1303, %v1243
  %v1313 = vsel %vm1311, %v1304, %v1245
  %v1314 = vsel %vm1311, %v1305, %v1247
  %v1315 = vsel %vm1311, %v1306, %v1249
  %v1316 = vsel %vm1311, %v1307, %v1251
  %v1317 = vsel %vm1311, %v1308, %v1253
  %v1318 = vsel %vm1311, %v1309, %v1255
  %v1319 = vsel %vm1311, %v1310, %v1257
  %v1320 = vld [vmem:[%s2] sm:$0x1]
  %v1321 = vld [vmem:[%s2 + $0x1] sm:$0x1]
  %v1322 = vld [vmem:[%s2 + $0x2] sm:$0x1]
  %v1323 = vld [vmem:[%s2 + $0x3] sm:$0x1]
  %v1324 = vld [vmem:[%s2 + $0x4] sm:$0x1]
  %v1325 = vld [vmem:[%s2 + $0x5] sm:$0x1]
  %v1326 = vld [vmem:[%s2 + $0x6] sm:$0x1]
  %v1327 = vld [vmem:[%s2 + $0x7] sm:$0x1]
  %v1336 = vlaneseq
  %v1337 = vshrl.u32 %v1336, 7
  %v1338 = vsub.s32 0, %v1337
  %v1339 = vrot.slane %v1320, %v1338
  %v1340 = vlaneseq
  %v1341 = vshrl.u32 %v1340, 7
  %v1342 = vsub.s32 0, %v1341
  %v1343 = vrot.slane %v1321, %v1342
  %v1344 = vlaneseq
  %v1345 = vshrl.u32 %v1344, 7
  %v1346 = vsub.s32 0, %v1345
  %v1347 = vrot.slane %v1322, %v1346
  %v1348 = vlaneseq
  %v1349 = vshrl.u32 %v1348, 7
  %v1350 = vsub.s32 0, %v1349
  %v1351 = vrot.slane %v1323, %v1350
  %v1352 = vlaneseq
  %v1353 = vshrl.u32 %v1352, 7
  %v1354 = vsub.s32 0, %v1353
  %v1355 = vrot.slane %v1324, %v1354
  %v1356 = vlaneseq
  %v1357 = vshrl.u32 %v1356, 7
  %v1358 = vsub.s32 0, %v1357
  %v1359 = vrot.slane %v1325, %v1358
  %v1360 = vlaneseq
  %v1361 = vshrl.u32 %v1360, 7
  %v1362 = vsub.s32 0, %v1361
  %v1363 = vrot.slane %v1326, %v1362
  %v1364 = vlaneseq
  %v1365 = vshrl.u32 %v1364, 7
  %v1366 = vsub.s32 0, %v1365
  %v1367 = vrot.slane %v1327, %v1366
  %v1376 = vmul.f32 %v1339, %v1312
  %v1377 = vmul.f32 %v1343, %v1312
  %v1378 = vmul.f32 %v1347, %v1312
  %v1379 = vmul.f32 %v1351, %v1312
  %v1380 = vmul.f32 %v1355, %v1312
  %v1381 = vmul.f32 %v1359, %v1312
  %v1382 = vmul.f32 %v1363, %v1312
  %v1383 = vmul.f32 %v1367, %v1312
  %v1384 = vmul.f32 %v1339, %v1316
  %v1385 = vmul.f32 %v1343, %v1316
  %v1386 = vmul.f32 %v1347, %v1316
  %v1387 = vmul.f32 %v1351, %v1316
  %v1388 = vmul.f32 %v1355, %v1316
  %v1389 = vmul.f32 %v1359, %v1316
  %v1390 = vmul.f32 %v1363, %v1316
  %v1391 = vmul.f32 %v1367, %v1316
  %v1392 = vadd.f32 %v1376, 0.0
  %v1393 = vadd.f32 %v1377, 0.0
  %v1394 = vadd.f32 %v1378, 0.0
  %v1395 = vadd.f32 %v1379, 0.0
  %v1396 = vadd.f32 %v1380, 0.0
  %v1397 = vadd.f32 %v1381, 0.0
  %v1398 = vadd.f32 %v1382, 0.0
  %v1399 = vadd.f32 %v1383, 0.0
  %v1400 = vadd.f32 %v1384, 0.0
  %v1401 = vadd.f32 %v1385, 0.0
  %v1402 = vadd.f32 %v1386, 0.0
  %v1403 = vadd.f32 %v1387, 0.0
  %v1404 = vadd.f32 %v1388, 0.0
  %v1405 = vadd.f32 %v1389, 0.0
  %v1406 = vadd.f32 %v1390, 0.0
  %v1407 = vadd.f32 %v1391, 0.0
  %s1408 = scalar_lea.vmem %s2, 8
  %v1409 = vld [vmem:[%s1408] sm:$0x1]
  %v1410 = vld [vmem:[%s1408 + $0x1] sm:$0x1]
  %v1411 = vld [vmem:[%s1408 + $0x2] sm:$0x1]
  %v1412 = vld [vmem:[%s1408 + $0x3] sm:$0x1]
  %v1413 = vld [vmem:[%s1408 + $0x4] sm:$0x1]
  %v1414 = vld [vmem:[%s1408 + $0x5] sm:$0x1]
  %v1415 = vld [vmem:[%s1408 + $0x6] sm:$0x1]
  %v1416 = vld [vmem:[%s1408 + $0x7] sm:$0x1]
  %v1425 = vlaneseq
  %v1426 = vshrl.u32 %v1425, 7
  %v1427 = vsub.s32 0, %v1426
  %v1428 = vrot.slane %v1409, %v1427
  %v1429 = vlaneseq
  %v1430 = vshrl.u32 %v1429, 7
  %v1431 = vsub.s32 0, %v1430
  %v1432 = vrot.slane %v1410, %v1431
  %v1433 = vlaneseq
  %v1434 = vshrl.u32 %v1433, 7
  %v1435 = vsub.s32 0, %v1434
  %v1436 = vrot.slane %v1411, %v1435
  %v1437 = vlaneseq
  %v1438 = vshrl.u32 %v1437, 7
  %v1439 = vsub.s32 0, %v1438
  %v1440 = vrot.slane %v1412, %v1439
  %v1441 = vlaneseq
  %v1442 = vshrl.u32 %v1441, 7
  %v1443 = vsub.s32 0, %v1442
  %v1444 = vrot.slane %v1413, %v1443
  %v1445 = vlaneseq
  %v1446 = vshrl.u32 %v1445, 7
  %v1447 = vsub.s32 0, %v1446
  %v1448 = vrot.slane %v1414, %v1447
  %v1449 = vlaneseq
  %v1450 = vshrl.u32 %v1449, 7
  %v1451 = vsub.s32 0, %v1450
  %v1452 = vrot.slane %v1415, %v1451
  %v1453 = vlaneseq
  %v1454 = vshrl.u32 %v1453, 7
  %v1455 = vsub.s32 0, %v1454
  %v1456 = vrot.slane %v1416, %v1455
  %1467 = vrot.lane.b32.xlu0 %v1312, 127
  %v1468 = vpop.permute.xlu0 %1467
  %1469 = vrot.lane.b32.xlu0 %v1316, 127
  %v1470 = vpop.permute.xlu0 %1469
  %v1473 = vmul.f32 %v1428, %v1468
  %v1474 = vmul.f32 %v1432, %v1468
  %v1475 = vmul.f32 %v1436, %v1468
  %v1476 = vmul.f32 %v1440, %v1468
  %v1477 = vmul.f32 %v1444, %v1468
  %v1478 = vmul.f32 %v1448, %v1468
  %v1479 = vmul.f32 %v1452, %v1468
  %v1480 = vmul.f32 %v1456, %v1468
  %v1481 = vmul.f32 %v1428, %v1470
  %v1482 = vmul.f32 %v1432, %v1470
  %v1483 = vmul.f32 %v1436, %v1470
  %v1484 = vmul.f32 %v1440, %v1470
  %v1485 = vmul.f32 %v1444, %v1470
  %v1486 = vmul.f32 %v1448, %v1470
  %v1487 = vmul.f32 %v1452, %v1470
  %v1488 = vmul.f32 %v1456, %v1470
  %v1489 = vadd.f32 %v1392, %v1473
  %v1490 = vadd.f32 %v1393, %v1474
  %v1491 = vadd.f32 %v1394, %v1475
  %v1492 = vadd.f32 %v1395, %v1476
  %v1493 = vadd.f32 %v1396, %v1477
  %v1494 = vadd.f32 %v1397, %v1478
  %v1495 = vadd.f32 %v1398, %v1479
  %v1496 = vadd.f32 %v1399, %v1480
  %v1497 = vadd.f32 %v1400, %v1481
  %v1498 = vadd.f32 %v1401, %v1482
  %v1499 = vadd.f32 %v1402, %v1483
  %v1500 = vadd.f32 %v1403, %v1484
  %v1501 = vadd.f32 %v1404, %v1485
  %v1502 = vadd.f32 %v1405, %v1486
  %v1503 = vadd.f32 %v1406, %v1487
  %v1504 = vadd.f32 %v1407, %v1488
  %s1505 = scalar_lea.vmem %s2, 16
  %v1506 = vld [vmem:[%s1505] sm:$0x1]
  %v1507 = vld [vmem:[%s1505 + $0x1] sm:$0x1]
  %v1508 = vld [vmem:[%s1505 + $0x2] sm:$0x1]
  %v1509 = vld [vmem:[%s1505 + $0x3] sm:$0x1]
  %v1510 = vld [vmem:[%s1505 + $0x4] sm:$0x1]
  %v1511 = vld [vmem:[%s1505 + $0x5] sm:$0x1]
  %v1512 = vld [vmem:[%s1505 + $0x6] sm:$0x1]
  %v1513 = vld [vmem:[%s1505 + $0x7] sm:$0x1]
  %v1522 = vlaneseq
  %v1523 = vshrl.u32 %v1522, 7
  %v1524 = vsub.s32 0, %v1523
  %v1525 = vrot.slane %v1506, %v1524
  %v1526 = vlaneseq
  %v1527 = vshrl.u32 %v1526, 7
  %v1528 = vsub.s32 0, %v1527
  %v1529 = vrot.slane %v1507, %v1528
  %v1530 = vlaneseq
  %v1531 = vshrl.u32 %v1530, 7
  %v1532 = vsub.s32 0, %v1531
  %v1533 = vrot.slane %v1508, %v1532
  %v1534 = vlaneseq
  %v1535 = vshrl.u32 %v1534, 7
  %v1536 = vsub.s32 0, %v1535
  %v1537 = vrot.slane %v1509, %v1536
  %v1538 = vlaneseq
  %v1539 = vshrl.u32 %v1538, 7
  %v1540 = vsub.s32 0, %v1539
  %v1541 = vrot.slane %v1510, %v1540
  %v1542 = vlaneseq
  %v1543 = vshrl.u32 %v1542, 7
  %v1544 = vsub.s32 0, %v1543
  %v1545 = vrot.slane %v1511, %v1544
  %v1546 = vlaneseq
  %v1547 = vshrl.u32 %v1546, 7
  %v1548 = vsub.s32 0, %v1547
  %v1549 = vrot.slane %v1512, %v1548
  %v1550 = vlaneseq
  %v1551 = vshrl.u32 %v1550, 7
  %v1552 = vsub.s32 0, %v1551
  %v1553 = vrot.slane %v1513, %v1552
  %1562 = vrot.lane.b32.xlu0 %v1312, 126
  %v1563 = vpop.permute.xlu0 %1562
  %1564 = vrot.lane.b32.xlu0 %v1316, 126
  %v1565 = vpop.permute.xlu0 %1564
  %v1568 = vmul.f32 %v1525, %v1563
  %v1569 = vmul.f32 %v1529, %v1563
  %v1570 = vmul.f32 %v1533, %v1563
  %v1571 = vmul.f32 %v1537, %v1563
  %v1572 = vmul.f32 %v1541, %v1563
  %v1573 = vmul.f32 %v1545, %v1563
  %v1574 = vmul.f32 %v1549, %v1563
  %v1575 = vmul.f32 %v1553, %v1563
  %v1576 = vmul.f32 %v1525, %v1565
  %v1577 = vmul.f32 %v1529, %v1565
  %v1578 = vmul.f32 %v1533, %v1565
  %v1579 = vmul.f32 %v1537, %v1565
  %v1580 = vmul.f32 %v1541, %v1565
  %v1581 = vmul.f32 %v1545, %v1565
  %v1582 = vmul.f32 %v1549, %v1565
  %v1583 = vmul.f32 %v1553, %v1565
  %v1584 = vadd.f32 %v1489, %v1568
  %v1585 = vadd.f32 %v1490, %v1569
  %v1586 = vadd.f32 %v1491, %v1570
  %v1587 = vadd.f32 %v1492, %v1571
  %v1588 = vadd.f32 %v1493, %v1572
  %v1589 = vadd.f32 %v1494, %v1573
  %v1590 = vadd.f32 %v1495, %v1574
  %v1591 = vadd.f32 %v1496, %v1575
  %v1592 = vadd.f32 %v1497, %v1576
  %v1593 = vadd.f32 %v1498, %v1577
  %v1594 = vadd.f32 %v1499, %v1578
  %v1595 = vadd.f32 %v1500, %v1579
  %v1596 = vadd.f32 %v1501, %v1580
  %v1597 = vadd.f32 %v1502, %v1581
  %v1598 = vadd.f32 %v1503, %v1582
  %v1599 = vadd.f32 %v1504, %v1583
  %s1600 = scalar_lea.vmem %s2, 24
  %v1601 = vld [vmem:[%s1600] sm:$0x1]
  %v1602 = vld [vmem:[%s1600 + $0x1] sm:$0x1]
  %v1603 = vld [vmem:[%s1600 + $0x2] sm:$0x1]
  %v1604 = vld [vmem:[%s1600 + $0x3] sm:$0x1]
  %v1605 = vld [vmem:[%s1600 + $0x4] sm:$0x1]
  %v1606 = vld [vmem:[%s1600 + $0x5] sm:$0x1]
  %v1607 = vld [vmem:[%s1600 + $0x6] sm:$0x1]
  %v1608 = vld [vmem:[%s1600 + $0x7] sm:$0x1]
  %v1617 = vlaneseq
  %v1618 = vshrl.u32 %v1617, 7
  %v1619 = vsub.s32 0, %v1618
  %v1620 = vrot.slane %v1601, %v1619
  %v1621 = vlaneseq
  %v1622 = vshrl.u32 %v1621, 7
  %v1623 = vsub.s32 0, %v1622
  %v1624 = vrot.slane %v1602, %v1623
  %v1625 = vlaneseq
  %v1626 = vshrl.u32 %v1625, 7
  %v1627 = vsub.s32 0, %v1626
  %v1628 = vrot.slane %v1603, %v1627
  %v1629 = vlaneseq
  %v1630 = vshrl.u32 %v1629, 7
  %v1631 = vsub.s32 0, %v1630
  %v1632 = vrot.slane %v1604, %v1631
  %v1633 = vlaneseq
  %v1634 = vshrl.u32 %v1633, 7
  %v1635 = vsub.s32 0, %v1634
  %v1636 = vrot.slane %v1605, %v1635
  %v1637 = vlaneseq
  %v1638 = vshrl.u32 %v1637, 7
  %v1639 = vsub.s32 0, %v1638
  %v1640 = vrot.slane %v1606, %v1639
  %v1641 = vlaneseq
  %v1642 = vshrl.u32 %v1641, 7
  %v1643 = vsub.s32 0, %v1642
  %v1644 = vrot.slane %v1607, %v1643
  %v1645 = vlaneseq
  %v1646 = vshrl.u32 %v1645, 7
  %v1647 = vsub.s32 0, %v1646
  %v1648 = vrot.slane %v1608, %v1647
  %v1657 = vmul.f32 %v1620, %v1312
  %v1658 = vmul.f32 %v1624, %v1312
  %v1659 = vmul.f32 %v1628, %v1312
  %v1660 = vmul.f32 %v1632, %v1312
  %v1661 = vmul.f32 %v1636, %v1312
  %v1662 = vmul.f32 %v1640, %v1312
  %v1663 = vmul.f32 %v1644, %v1312
  %v1664 = vmul.f32 %v1648, %v1312
  %v1665 = vmul.f32 %v1620, %v1316
  %v1666 = vmul.f32 %v1624, %v1316
  %v1667 = vmul.f32 %v1628, %v1316
  %v1668 = vmul.f32 %v1632, %v1316
  %v1669 = vmul.f32 %v1636, %v1316
  %v1670 = vmul.f32 %v1640, %v1316
  %v1671 = vmul.f32 %v1644, %v1316
  %v1672 = vmul.f32 %v1648, %v1316
  %v1689 = vrot.slane %v1657, 1
  %v1690 = vrot.slane %v1658, 1
  %v1691 = vrot.slane %v1659, 1
  %v1692 = vrot.slane %v1660, 1
  %v1693 = vrot.slane %v1661, 1
  %v1694 = vrot.slane %v1662, 1
  %v1695 = vrot.slane %v1663, 1
  %v1696 = vrot.slane %v1664, 1
  %v1697 = vrot.slane %v1665, 1
  %v1698 = vrot.slane %v1666, 1
  %v1699 = vrot.slane %v1667, 1
  %v1700 = vrot.slane %v1668, 1
  %v1701 = vrot.slane %v1669, 1
  %v1702 = vrot.slane %v1670, 1
  %v1703 = vrot.slane %v1671, 1
  %v1704 = vrot.slane %v1672, 1
  %v1721 = vadd.f32 %v1584, %v1689
  %v1722 = vadd.f32 %v1585, %v1690
  %v1723 = vadd.f32 %v1586, %v1691
  %v1724 = vadd.f32 %v1587, %v1692
  %v1725 = vadd.f32 %v1588, %v1693
  %v1726 = vadd.f32 %v1589, %v1694
  %v1727 = vadd.f32 %v1590, %v1695
  %v1728 = vadd.f32 %v1591, %v1696
  %v1729 = vadd.f32 %v1592, %v1697
  %v1730 = vadd.f32 %v1593, %v1698
  %v1731 = vadd.f32 %v1594, %v1699
  %v1732 = vadd.f32 %v1595, %v1700
  %v1733 = vadd.f32 %v1596, %v1701
  %v1734 = vadd.f32 %v1597, %v1702
  %v1735 = vadd.f32 %v1598, %v1703
  %v1736 = vadd.f32 %v1599, %v1704
  %s1737 = scalar_lea.vmem %s2, 32
  %v1738 = vld [vmem:[%s1737] sm:$0x1]
  %v1739 = vld [vmem:[%s1737 + $0x1] sm:$0x1]
  %v1740 = vld [vmem:[%s1737 + $0x2] sm:$0x1]
  %v1741 = vld [vmem:[%s1737 + $0x3] sm:$0x1]
  %v1742 = vld [vmem:[%s1737 + $0x4] sm:$0x1]
  %v1743 = vld [vmem:[%s1737 + $0x5] sm:$0x1]
  %v1744 = vld [vmem:[%s1737 + $0x6] sm:$0x1]
  %v1745 = vld [vmem:[%s1737 + $0x7] sm:$0x1]
  %v1754 = vlaneseq
  %v1755 = vshrl.u32 %v1754, 7
  %v1756 = vsub.s32 0, %v1755
  %v1757 = vrot.slane %v1738, %v1756
  %v1758 = vlaneseq
  %v1759 = vshrl.u32 %v1758, 7
  %v1760 = vsub.s32 0, %v1759
  %v1761 = vrot.slane %v1739, %v1760
  %v1762 = vlaneseq
  %v1763 = vshrl.u32 %v1762, 7
  %v1764 = vsub.s32 0, %v1763
  %v1765 = vrot.slane %v1740, %v1764
  %v1766 = vlaneseq
  %v1767 = vshrl.u32 %v1766, 7
  %v1768 = vsub.s32 0, %v1767
  %v1769 = vrot.slane %v1741, %v1768
  %v1770 = vlaneseq
  %v1771 = vshrl.u32 %v1770, 7
  %v1772 = vsub.s32 0, %v1771
  %v1773 = vrot.slane %v1742, %v1772
  %v1774 = vlaneseq
  %v1775 = vshrl.u32 %v1774, 7
  %v1776 = vsub.s32 0, %v1775
  %v1777 = vrot.slane %v1743, %v1776
  %v1778 = vlaneseq
  %v1779 = vshrl.u32 %v1778, 7
  %v1780 = vsub.s32 0, %v1779
  %v1781 = vrot.slane %v1744, %v1780
  %v1782 = vlaneseq
  %v1783 = vshrl.u32 %v1782, 7
  %v1784 = vsub.s32 0, %v1783
  %v1785 = vrot.slane %v1745, %v1784
  %v1794 = vrot.slane %v1312, 1
  %v1795 = vrot.slane %v1316, 1
  %1796 = vrot.lane.b32.xlu0 %v1794, 127
  %v1797 = vpop.permute.xlu0 %1796
  %1798 = vrot.lane.b32.xlu0 %v1795, 127
  %v1799 = vpop.permute.xlu0 %1798
  %v1802 = vmul.f32 %v1757, %v1797
  %v1803 = vmul.f32 %v1761, %v1797
  %v1804 = vmul.f32 %v1765, %v1797
  %v1805 = vmul.f32 %v1769, %v1797
  %v1806 = vmul.f32 %v1773, %v1797
  %v1807 = vmul.f32 %v1777, %v1797
  %v1808 = vmul.f32 %v1781, %v1797
  %v1809 = vmul.f32 %v1785, %v1797
  %v1810 = vmul.f32 %v1757, %v1799
  %v1811 = vmul.f32 %v1761, %v1799
  %v1812 = vmul.f32 %v1765, %v1799
  %v1813 = vmul.f32 %v1769, %v1799
  %v1814 = vmul.f32 %v1773, %v1799
  %v1815 = vmul.f32 %v1777, %v1799
  %v1816 = vmul.f32 %v1781, %v1799
  %v1817 = vmul.f32 %v1785, %v1799
  %v1818 = vadd.f32 %v1721, %v1802
  %v1819 = vadd.f32 %v1722, %v1803
  %v1820 = vadd.f32 %v1723, %v1804
  %v1821 = vadd.f32 %v1724, %v1805
  %v1822 = vadd.f32 %v1725, %v1806
  %v1823 = vadd.f32 %v1726, %v1807
  %v1824 = vadd.f32 %v1727, %v1808
  %v1825 = vadd.f32 %v1728, %v1809
  %v1826 = vadd.f32 %v1729, %v1810
  %v1827 = vadd.f32 %v1730, %v1811
  %v1828 = vadd.f32 %v1731, %v1812
  %v1829 = vadd.f32 %v1732, %v1813
  %v1830 = vadd.f32 %v1733, %v1814
  %v1831 = vadd.f32 %v1734, %v1815
  %v1832 = vadd.f32 %v1735, %v1816
  %v1833 = vadd.f32 %v1736, %v1817
  %s1834 = scalar_lea.vmem %s2, 40
  %v1835 = vld [vmem:[%s1834] sm:$0x1]
  %v1836 = vld [vmem:[%s1834 + $0x1] sm:$0x1]
  %v1837 = vld [vmem:[%s1834 + $0x2] sm:$0x1]
  %v1838 = vld [vmem:[%s1834 + $0x3] sm:$0x1]
  %v1839 = vld [vmem:[%s1834 + $0x4] sm:$0x1]
  %v1840 = vld [vmem:[%s1834 + $0x5] sm:$0x1]
  %v1841 = vld [vmem:[%s1834 + $0x6] sm:$0x1]
  %v1842 = vld [vmem:[%s1834 + $0x7] sm:$0x1]
  %v1851 = vlaneseq
  %v1852 = vshrl.u32 %v1851, 7
  %v1853 = vsub.s32 0, %v1852
  %v1854 = vrot.slane %v1835, %v1853
  %v1855 = vlaneseq
  %v1856 = vshrl.u32 %v1855, 7
  %v1857 = vsub.s32 0, %v1856
  %v1858 = vrot.slane %v1836, %v1857
  %v1859 = vlaneseq
  %v1860 = vshrl.u32 %v1859, 7
  %v1861 = vsub.s32 0, %v1860
  %v1862 = vrot.slane %v1837, %v1861
  %v1863 = vlaneseq
  %v1864 = vshrl.u32 %v1863, 7
  %v1865 = vsub.s32 0, %v1864
  %v1866 = vrot.slane %v1838, %v1865
  %v1867 = vlaneseq
  %v1868 = vshrl.u32 %v1867, 7
  %v1869 = vsub.s32 0, %v1868
  %v1870 = vrot.slane %v1839, %v1869
  %v1871 = vlaneseq
  %v1872 = vshrl.u32 %v1871, 7
  %v1873 = vsub.s32 0, %v1872
  %v1874 = vrot.slane %v1840, %v1873
  %v1875 = vlaneseq
  %v1876 = vshrl.u32 %v1875, 7
  %v1877 = vsub.s32 0, %v1876
  %v1878 = vrot.slane %v1841, %v1877
  %v1879 = vlaneseq
  %v1880 = vshrl.u32 %v1879, 7
  %v1881 = vsub.s32 0, %v1880
  %v1882 = vrot.slane %v1842, %v1881
  %1891 = vrot.lane.b32.xlu0 %v1794, 126
  %v1892 = vpop.permute.xlu0 %1891
  %1893 = vrot.lane.b32.xlu0 %v1795, 126
  %v1894 = vpop.permute.xlu0 %1893
  %v1897 = vmul.f32 %v1854, %v1892
  %v1898 = vmul.f32 %v1858, %v1892
  %v1899 = vmul.f32 %v1862, %v1892
  %v1900 = vmul.f32 %v1866, %v1892
  %v1901 = vmul.f32 %v1870, %v1892
  %v1902 = vmul.f32 %v1874, %v1892
  %v1903 = vmul.f32 %v1878, %v1892
  %v1904 = vmul.f32 %v1882, %v1892
  %v1905 = vmul.f32 %v1854, %v1894
  %v1906 = vmul.f32 %v1858, %v1894
  %v1907 = vmul.f32 %v1862, %v1894
  %v1908 = vmul.f32 %v1866, %v1894
  %v1909 = vmul.f32 %v1870, %v1894
  %v1910 = vmul.f32 %v1874, %v1894
  %v1911 = vmul.f32 %v1878, %v1894
  %v1912 = vmul.f32 %v1882, %v1894
  %v1913 = vadd.f32 %v1818, %v1897
  %v1914 = vadd.f32 %v1819, %v1898
  %v1915 = vadd.f32 %v1820, %v1899
  %v1916 = vadd.f32 %v1821, %v1900
  %v1917 = vadd.f32 %v1822, %v1901
  %v1918 = vadd.f32 %v1823, %v1902
  %v1919 = vadd.f32 %v1824, %v1903
  %v1920 = vadd.f32 %v1825, %v1904
  %v1921 = vadd.f32 %v1826, %v1905
  %v1922 = vadd.f32 %v1827, %v1906
  %v1923 = vadd.f32 %v1828, %v1907
  %v1924 = vadd.f32 %v1829, %v1908
  %v1925 = vadd.f32 %v1830, %v1909
  %v1926 = vadd.f32 %v1831, %v1910
  %v1927 = vadd.f32 %v1832, %v1911
  %v1928 = vadd.f32 %v1833, %v1912
  %s1929 = scalar_lea.vmem %s2, 48
  %v1930 = vld [vmem:[%s1929] sm:$0x1]
  %v1931 = vld [vmem:[%s1929 + $0x1] sm:$0x1]
  %v1932 = vld [vmem:[%s1929 + $0x2] sm:$0x1]
  %v1933 = vld [vmem:[%s1929 + $0x3] sm:$0x1]
  %v1934 = vld [vmem:[%s1929 + $0x4] sm:$0x1]
  %v1935 = vld [vmem:[%s1929 + $0x5] sm:$0x1]
  %v1936 = vld [vmem:[%s1929 + $0x6] sm:$0x1]
  %v1937 = vld [vmem:[%s1929 + $0x7] sm:$0x1]
  %v1946 = vlaneseq
  %v1947 = vshrl.u32 %v1946, 7
  %v1948 = vsub.s32 0, %v1947
  %v1949 = vrot.slane %v1930, %v1948
  %v1950 = vlaneseq
  %v1951 = vshrl.u32 %v1950, 7
  %v1952 = vsub.s32 0, %v1951
  %v1953 = vrot.slane %v1931, %v1952
  %v1954 = vlaneseq
  %v1955 = vshrl.u32 %v1954, 7
  %v1956 = vsub.s32 0, %v1955
  %v1957 = vrot.slane %v1932, %v1956
  %v1958 = vlaneseq
  %v1959 = vshrl.u32 %v1958, 7
  %v1960 = vsub.s32 0, %v1959
  %v1961 = vrot.slane %v1933, %v1960
  %v1962 = vlaneseq
  %v1963 = vshrl.u32 %v1962, 7
  %v1964 = vsub.s32 0, %v1963
  %v1965 = vrot.slane %v1934, %v1964
  %v1966 = vlaneseq
  %v1967 = vshrl.u32 %v1966, 7
  %v1968 = vsub.s32 0, %v1967
  %v1969 = vrot.slane %v1935, %v1968
  %v1970 = vlaneseq
  %v1971 = vshrl.u32 %v1970, 7
  %v1972 = vsub.s32 0, %v1971
  %v1973 = vrot.slane %v1936, %v1972
  %v1974 = vlaneseq
  %v1975 = vshrl.u32 %v1974, 7
  %v1976 = vsub.s32 0, %v1975
  %v1977 = vrot.slane %v1937, %v1976
  %v1986 = vmul.f32 %v1949, %v1312
  %v1987 = vmul.f32 %v1953, %v1312
  %v1988 = vmul.f32 %v1957, %v1312
  %v1989 = vmul.f32 %v1961, %v1312
  %v1990 = vmul.f32 %v1965, %v1312
  %v1991 = vmul.f32 %v1969, %v1312
  %v1992 = vmul.f32 %v1973, %v1312
  %v1993 = vmul.f32 %v1977, %v1312
  %v1994 = vmul.f32 %v1949, %v1316
  %v1995 = vmul.f32 %v1953, %v1316
  %v1996 = vmul.f32 %v1957, %v1316
  %v1997 = vmul.f32 %v1961, %v1316
  %v1998 = vmul.f32 %v1965, %v1316
  %v1999 = vmul.f32 %v1969, %v1316
  %v2000 = vmul.f32 %v1973, %v1316
  %v2001 = vmul.f32 %v1977, %v1316
  %v2018 = vrot.slane %v1986, 2
  %v2019 = vrot.slane %v1987, 2
  %v2020 = vrot.slane %v1988, 2
  %v2021 = vrot.slane %v1989, 2
  %v2022 = vrot.slane %v1990, 2
  %v2023 = vrot.slane %v1991, 2
  %v2024 = vrot.slane %v1992, 2
  %v2025 = vrot.slane %v1993, 2
  %v2026 = vrot.slane %v1994, 2
  %v2027 = vrot.slane %v1995, 2
  %v2028 = vrot.slane %v1996, 2
  %v2029 = vrot.slane %v1997, 2
  %v2030 = vrot.slane %v1998, 2
  %v2031 = vrot.slane %v1999, 2
  %v2032 = vrot.slane %v2000, 2
  %v2033 = vrot.slane %v2001, 2
  %v2050 = vadd.f32 %v1913, %v2018
  %v2051 = vadd.f32 %v1914, %v2019
  %v2052 = vadd.f32 %v1915, %v2020
  %v2053 = vadd.f32 %v1916, %v2021
  %v2054 = vadd.f32 %v1917, %v2022
  %v2055 = vadd.f32 %v1918, %v2023
  %v2056 = vadd.f32 %v1919, %v2024
  %v2057 = vadd.f32 %v1920, %v2025
  %v2058 = vadd.f32 %v1921, %v2026
  %v2059 = vadd.f32 %v1922, %v2027
  %v2060 = vadd.f32 %v1923, %v2028
  %v2061 = vadd.f32 %v1924, %v2029
  %v2062 = vadd.f32 %v1925, %v2030
  %v2063 = vadd.f32 %v1926, %v2031
  %v2064 = vadd.f32 %v1927, %v2032
  %v2065 = vadd.f32 %v1928, %v2033
  %s2066 = scalar_lea.vmem %s2, 56
  %v2067 = vld [vmem:[%s2066] sm:$0x1]
  %v2068 = vld [vmem:[%s2066 + $0x1] sm:$0x1]
  %v2069 = vld [vmem:[%s2066 + $0x2] sm:$0x1]
  %v2070 = vld [vmem:[%s2066 + $0x3] sm:$0x1]
  %v2071 = vld [vmem:[%s2066 + $0x4] sm:$0x1]
  %v2072 = vld [vmem:[%s2066 + $0x5] sm:$0x1]
  %v2073 = vld [vmem:[%s2066 + $0x6] sm:$0x1]
  %v2074 = vld [vmem:[%s2066 + $0x7] sm:$0x1]
  %v2083 = vlaneseq
  %v2084 = vshrl.u32 %v2083, 7
  %v2085 = vsub.s32 0, %v2084
  %v2086 = vrot.slane %v2067, %v2085
  %v2087 = vlaneseq
  %v2088 = vshrl.u32 %v2087, 7
  %v2089 = vsub.s32 0, %v2088
  %v2090 = vrot.slane %v2068, %v2089
  %v2091 = vlaneseq
  %v2092 = vshrl.u32 %v2091, 7
  %v2093 = vsub.s32 0, %v2092
  %v2094 = vrot.slane %v2069, %v2093
  %v2095 = vlaneseq
  %v2096 = vshrl.u32 %v2095, 7
  %v2097 = vsub.s32 0, %v2096
  %v2098 = vrot.slane %v2070, %v2097
  %v2099 = vlaneseq
  %v2100 = vshrl.u32 %v2099, 7
  %v2101 = vsub.s32 0, %v2100
  %v2102 = vrot.slane %v2071, %v2101
  %v2103 = vlaneseq
  %v2104 = vshrl.u32 %v2103, 7
  %v2105 = vsub.s32 0, %v2104
  %v2106 = vrot.slane %v2072, %v2105
  %v2107 = vlaneseq
  %v2108 = vshrl.u32 %v2107, 7
  %v2109 = vsub.s32 0, %v2108
  %v2110 = vrot.slane %v2073, %v2109
  %v2111 = vlaneseq
  %v2112 = vshrl.u32 %v2111, 7
  %v2113 = vsub.s32 0, %v2112
  %v2114 = vrot.slane %v2074, %v2113
  %v2123 = vrot.slane %v1312, 2
  %v2124 = vrot.slane %v1316, 2
  %2125 = vrot.lane.b32.xlu0 %v2123, 127
  %v2126 = vpop.permute.xlu0 %2125
  %2127 = vrot.lane.b32.xlu0 %v2124, 127
  %v2128 = vpop.permute.xlu0 %2127
  %v2131 = vmul.f32 %v2086, %v2126
  %v2132 = vmul.f32 %v2090, %v2126
  %v2133 = vmul.f32 %v2094, %v2126
  %v2134 = vmul.f32 %v2098, %v2126
  %v2135 = vmul.f32 %v2102, %v2126
  %v2136 = vmul.f32 %v2106, %v2126
  %v2137 = vmul.f32 %v2110, %v2126
  %v2138 = vmul.f32 %v2114, %v2126
  %v2139 = vmul.f32 %v2086, %v2128
  %v2140 = vmul.f32 %v2090, %v2128
  %v2141 = vmul.f32 %v2094, %v2128
  %v2142 = vmul.f32 %v2098, %v2128
  %v2143 = vmul.f32 %v2102, %v2128
  %v2144 = vmul.f32 %v2106, %v2128
  %v2145 = vmul.f32 %v2110, %v2128
  %v2146 = vmul.f32 %v2114, %v2128
  %v2147 = vadd.f32 %v2050, %v2131
  %v2148 = vadd.f32 %v2051, %v2132
  %v2149 = vadd.f32 %v2052, %v2133
  %v2150 = vadd.f32 %v2053, %v2134
  %v2151 = vadd.f32 %v2054, %v2135
  %v2152 = vadd.f32 %v2055, %v2136
  %v2153 = vadd.f32 %v2056, %v2137
  %v2154 = vadd.f32 %v2057, %v2138
  %v2155 = vadd.f32 %v2058, %v2139
  %v2156 = vadd.f32 %v2059, %v2140
  %v2157 = vadd.f32 %v2060, %v2141
  %v2158 = vadd.f32 %v2061, %v2142
  %v2159 = vadd.f32 %v2062, %v2143
  %v2160 = vadd.f32 %v2063, %v2144
  %v2161 = vadd.f32 %v2064, %v2145
  %v2162 = vadd.f32 %v2065, %v2146
  %s2163 = scalar_lea.vmem %s2, 64
  %v2164 = vld [vmem:[%s2163] sm:$0x1]
  %v2165 = vld [vmem:[%s2163 + $0x1] sm:$0x1]
  %v2166 = vld [vmem:[%s2163 + $0x2] sm:$0x1]
  %v2167 = vld [vmem:[%s2163 + $0x3] sm:$0x1]
  %v2168 = vld [vmem:[%s2163 + $0x4] sm:$0x1]
  %v2169 = vld [vmem:[%s2163 + $0x5] sm:$0x1]
  %v2170 = vld [vmem:[%s2163 + $0x6] sm:$0x1]
  %v2171 = vld [vmem:[%s2163 + $0x7] sm:$0x1]
  %v2180 = vlaneseq
  %v2181 = vshrl.u32 %v2180, 7
  %v2182 = vsub.s32 0, %v2181
  %v2183 = vrot.slane %v2164, %v2182
  %v2184 = vlaneseq
  %v2185 = vshrl.u32 %v2184, 7
  %v2186 = vsub.s32 0, %v2185
  %v2187 = vrot.slane %v2165, %v2186
  %v2188 = vlaneseq
  %v2189 = vshrl.u32 %v2188, 7
  %v2190 = vsub.s32 0, %v2189
  %v2191 = vrot.slane %v2166, %v2190
  %v2192 = vlaneseq
  %v2193 = vshrl.u32 %v2192, 7
  %v2194 = vsub.s32 0, %v2193
  %v2195 = vrot.slane %v2167, %v2194
  %v2196 = vlaneseq
  %v2197 = vshrl.u32 %v2196, 7
  %v2198 = vsub.s32 0, %v2197
  %v2199 = vrot.slane %v2168, %v2198
  %v2200 = vlaneseq
  %v2201 = vshrl.u32 %v2200, 7
  %v2202 = vsub.s32 0, %v2201
  %v2203 = vrot.slane %v2169, %v2202
  %v2204 = vlaneseq
  %v2205 = vshrl.u32 %v2204, 7
  %v2206 = vsub.s32 0, %v2205
  %v2207 = vrot.slane %v2170, %v2206
  %v2208 = vlaneseq
  %v2209 = vshrl.u32 %v2208, 7
  %v2210 = vsub.s32 0, %v2209
  %v2211 = vrot.slane %v2171, %v2210
  %2220 = vrot.lane.b32.xlu0 %v2123, 126
  %v2221 = vpop.permute.xlu0 %2220
  %2222 = vrot.lane.b32.xlu0 %v2124, 126
  %v2223 = vpop.permute.xlu0 %2222
  %v2226 = vmul.f32 %v2183, %v2221
  %v2227 = vmul.f32 %v2187, %v2221
  %v2228 = vmul.f32 %v2191, %v2221
  %v2229 = vmul.f32 %v2195, %v2221
  %v2230 = vmul.f32 %v2199, %v2221
  %v2231 = vmul.f32 %v2203, %v2221
  %v2232 = vmul.f32 %v2207, %v2221
  %v2233 = vmul.f32 %v2211, %v2221
  %v2234 = vmul.f32 %v2183, %v2223
  %v2235 = vmul.f32 %v2187, %v2223
  %v2236 = vmul.f32 %v2191, %v2223
  %v2237 = vmul.f32 %v2195, %v2223
  %v2238 = vmul.f32 %v2199, %v2223
  %v2239 = vmul.f32 %v2203, %v2223
  %v2240 = vmul.f32 %v2207, %v2223
  %v2241 = vmul.f32 %v2211, %v2223
  %v2242 = vadd.f32 %v2147, %v2226
  %v2243 = vadd.f32 %v2148, %v2227
  %v2244 = vadd.f32 %v2149, %v2228
  %v2245 = vadd.f32 %v2150, %v2229
  %v2246 = vadd.f32 %v2151, %v2230
  %v2247 = vadd.f32 %v2152, %v2231
  %v2248 = vadd.f32 %v2153, %v2232
  %v2249 = vadd.f32 %v2154, %v2233
  %v2250 = vadd.f32 %v2155, %v2234
  %v2251 = vadd.f32 %v2156, %v2235
  %v2252 = vadd.f32 %v2157, %v2236
  %v2253 = vadd.f32 %v2158, %v2237
  %v2254 = vadd.f32 %v2159, %v2238
  %v2255 = vadd.f32 %v2160, %v2239
  %v2256 = vadd.f32 %v2161, %v2240
  %v2257 = vadd.f32 %v2162, %v2241
  %s2258 = scalar_lea.vmem %s2, 72
  %v2259 = vld [vmem:[%s2258] sm:$0x1]
  %v2260 = vld [vmem:[%s2258 + $0x1] sm:$0x1]
  %v2261 = vld [vmem:[%s2258 + $0x2] sm:$0x1]
  %v2262 = vld [vmem:[%s2258 + $0x3] sm:$0x1]
  %v2263 = vld [vmem:[%s2258 + $0x4] sm:$0x1]
  %v2264 = vld [vmem:[%s2258 + $0x5] sm:$0x1]
  %v2265 = vld [vmem:[%s2258 + $0x6] sm:$0x1]
  %v2266 = vld [vmem:[%s2258 + $0x7] sm:$0x1]
  %v2275 = vlaneseq
  %v2276 = vshrl.u32 %v2275, 7
  %v2277 = vsub.s32 0, %v2276
  %v2278 = vrot.slane %v2259, %v2277
  %v2279 = vlaneseq
  %v2280 = vshrl.u32 %v2279, 7
  %v2281 = vsub.s32 0, %v2280
  %v2282 = vrot.slane %v2260, %v2281
  %v2283 = vlaneseq
  %v2284 = vshrl.u32 %v2283, 7
  %v2285 = vsub.s32 0, %v2284
  %v2286 = vrot.slane %v2261, %v2285
  %v2287 = vlaneseq
  %v2288 = vshrl.u32 %v2287, 7
  %v2289 = vsub.s32 0, %v2288
  %v2290 = vrot.slane %v2262, %v2289
  %v2291 = vlaneseq
  %v2292 = vshrl.u32 %v2291, 7
  %v2293 = vsub.s32 0, %v2292
  %v2294 = vrot.slane %v2263, %v2293
  %v2295 = vlaneseq
  %v2296 = vshrl.u32 %v2295, 7
  %v2297 = vsub.s32 0, %v2296
  %v2298 = vrot.slane %v2264, %v2297
  %v2299 = vlaneseq
  %v2300 = vshrl.u32 %v2299, 7
  %v2301 = vsub.s32 0, %v2300
  %v2302 = vrot.slane %v2265, %v2301
  %v2303 = vlaneseq
  %v2304 = vshrl.u32 %v2303, 7
  %v2305 = vsub.s32 0, %v2304
  %v2306 = vrot.slane %v2266, %v2305
  %v2315 = vmul.f32 %v2278, %v1313
  %v2316 = vmul.f32 %v2282, %v1313
  %v2317 = vmul.f32 %v2286, %v1313
  %v2318 = vmul.f32 %v2290, %v1313
  %v2319 = vmul.f32 %v2294, %v1313
  %v2320 = vmul.f32 %v2298, %v1313
  %v2321 = vmul.f32 %v2302, %v1313
  %v2322 = vmul.f32 %v2306, %v1313
  %v2323 = vmul.f32 %v2278, %v1317
  %v2324 = vmul.f32 %v2282, %v1317
  %v2325 = vmul.f32 %v2286, %v1317
  %v2326 = vmul.f32 %v2290, %v1317
  %v2327 = vmul.f32 %v2294, %v1317
  %v2328 = vmul.f32 %v2298, %v1317
  %v2329 = vmul.f32 %v2302, %v1317
  %v2330 = vmul.f32 %v2306, %v1317
  %v2331 = vadd.f32 %v2242, %v2315
  %v2332 = vadd.f32 %v2243, %v2316
  %v2333 = vadd.f32 %v2244, %v2317
  %v2334 = vadd.f32 %v2245, %v2318
  %v2335 = vadd.f32 %v2246, %v2319
  %v2336 = vadd.f32 %v2247, %v2320
  %v2337 = vadd.f32 %v2248, %v2321
  %v2338 = vadd.f32 %v2249, %v2322
  %v2339 = vadd.f32 %v2250, %v2323
  %v2340 = vadd.f32 %v2251, %v2324
  %v2341 = vadd.f32 %v2252, %v2325
  %v2342 = vadd.f32 %v2253, %v2326
  %v2343 = vadd.f32 %v2254, %v2327
  %v2344 = vadd.f32 %v2255, %v2328
  %v2345 = vadd.f32 %v2256, %v2329
  %v2346 = vadd.f32 %v2257, %v2330
  %s2347 = scalar_lea.vmem %s2, 80
  %v2348 = vld [vmem:[%s2347] sm:$0x1]
  %v2349 = vld [vmem:[%s2347 + $0x1] sm:$0x1]
  %v2350 = vld [vmem:[%s2347 + $0x2] sm:$0x1]
  %v2351 = vld [vmem:[%s2347 + $0x3] sm:$0x1]
  %v2352 = vld [vmem:[%s2347 + $0x4] sm:$0x1]
  %v2353 = vld [vmem:[%s2347 + $0x5] sm:$0x1]
  %v2354 = vld [vmem:[%s2347 + $0x6] sm:$0x1]
  %v2355 = vld [vmem:[%s2347 + $0x7] sm:$0x1]
  %v2364 = vlaneseq
  %v2365 = vshrl.u32 %v2364, 7
  %v2366 = vsub.s32 0, %v2365
  %v2367 = vrot.slane %v2348, %v2366
  %v2368 = vlaneseq
  %v2369 = vshrl.u32 %v2368, 7
  %v2370 = vsub.s32 0, %v2369
  %v2371 = vrot.slane %v2349, %v2370
  %v2372 = vlaneseq
  %v2373 = vshrl.u32 %v2372, 7
  %v2374 = vsub.s32 0, %v2373
  %v2375 = vrot.slane %v2350, %v2374
  %v2376 = vlaneseq
  %v2377 = vshrl.u32 %v2376, 7
  %v2378 = vsub.s32 0, %v2377
  %v2379 = vrot.slane %v2351, %v2378
  %v2380 = vlaneseq
  %v2381 = vshrl.u32 %v2380, 7
  %v2382 = vsub.s32 0, %v2381
  %v2383 = vrot.slane %v2352, %v2382
  %v2384 = vlaneseq
  %v2385 = vshrl.u32 %v2384, 7
  %v2386 = vsub.s32 0, %v2385
  %v2387 = vrot.slane %v2353, %v2386
  %v2388 = vlaneseq
  %v2389 = vshrl.u32 %v2388, 7
  %v2390 = vsub.s32 0, %v2389
  %v2391 = vrot.slane %v2354, %v2390
  %v2392 = vlaneseq
  %v2393 = vshrl.u32 %v2392, 7
  %v2394 = vsub.s32 0, %v2393
  %v2395 = vrot.slane %v2355, %v2394
  %2406 = vrot.lane.b32.xlu0 %v1313, 127
  %v2407 = vpop.permute.xlu0 %2406
  %2408 = vrot.lane.b32.xlu0 %v1317, 127
  %v2409 = vpop.permute.xlu0 %2408
  %v2412 = vmul.f32 %v2367, %v2407
  %v2413 = vmul.f32 %v2371, %v2407
  %v2414 = vmul.f32 %v2375, %v2407
  %v2415 = vmul.f32 %v2379, %v2407
  %v2416 = vmul.f32 %v2383, %v2407
  %v2417 = vmul.f32 %v2387, %v2407
  %v2418 = vmul.f32 %v2391, %v2407
  %v2419 = vmul.f32 %v2395, %v2407
  %v2420 = vmul.f32 %v2367, %v2409
  %v2421 = vmul.f32 %v2371, %v2409
  %v2422 = vmul.f32 %v2375, %v2409
  %v2423 = vmul.f32 %v2379, %v2409
  %v2424 = vmul.f32 %v2383, %v2409
  %v2425 = vmul.f32 %v2387, %v2409
  %v2426 = vmul.f32 %v2391, %v2409
  %v2427 = vmul.f32 %v2395, %v2409
  %v2428 = vadd.f32 %v2331, %v2412
  %v2429 = vadd.f32 %v2332, %v2413
  %v2430 = vadd.f32 %v2333, %v2414
  %v2431 = vadd.f32 %v2334, %v2415
  %v2432 = vadd.f32 %v2335, %v2416
  %v2433 = vadd.f32 %v2336, %v2417
  %v2434 = vadd.f32 %v2337, %v2418
  %v2435 = vadd.f32 %v2338, %v2419
  %v2436 = vadd.f32 %v2339, %v2420
  %v2437 = vadd.f32 %v2340, %v2421
  %v2438 = vadd.f32 %v2341, %v2422
  %v2439 = vadd.f32 %v2342, %v2423
  %v2440 = vadd.f32 %v2343, %v2424
  %v2441 = vadd.f32 %v2344, %v2425
  %v2442 = vadd.f32 %v2345, %v2426
  %v2443 = vadd.f32 %v2346, %v2427
  %s2444 = scalar_lea.vmem %s2, 88
  %v2445 = vld [vmem:[%s2444] sm:$0x1]
  %v2446 = vld [vmem:[%s2444 + $0x1] sm:$0x1]
  %v2447 = vld [vmem:[%s2444 + $0x2] sm:$0x1]
  %v2448 = vld [vmem:[%s2444 + $0x3] sm:$0x1]
  %v2449 = vld [vmem:[%s2444 + $0x4] sm:$0x1]
  %v2450 = vld [vmem:[%s2444 + $0x5] sm:$0x1]
  %v2451 = vld [vmem:[%s2444 + $0x6] sm:$0x1]
  %v2452 = vld [vmem:[%s2444 + $0x7] sm:$0x1]
  %v2461 = vlaneseq
  %v2462 = vshrl.u32 %v2461, 7
  %v2463 = vsub.s32 0, %v2462
  %v2464 = vrot.slane %v2445, %v2463
  %v2465 = vlaneseq
  %v2466 = vshrl.u32 %v2465, 7
  %v2467 = vsub.s32 0, %v2466
  %v2468 = vrot.slane %v2446, %v2467
  %v2469 = vlaneseq
  %v2470 = vshrl.u32 %v2469, 7
  %v2471 = vsub.s32 0, %v2470
  %v2472 = vrot.slane %v2447, %v2471
  %v2473 = vlaneseq
  %v2474 = vshrl.u32 %v2473, 7
  %v2475 = vsub.s32 0, %v2474
  %v2476 = vrot.slane %v2448, %v2475
  %v2477 = vlaneseq
  %v2478 = vshrl.u32 %v2477, 7
  %v2479 = vsub.s32 0, %v2478
  %v2480 = vrot.slane %v2449, %v2479
  %v2481 = vlaneseq
  %v2482 = vshrl.u32 %v2481, 7
  %v2483 = vsub.s32 0, %v2482
  %v2484 = vrot.slane %v2450, %v2483
  %v2485 = vlaneseq
  %v2486 = vshrl.u32 %v2485, 7
  %v2487 = vsub.s32 0, %v2486
  %v2488 = vrot.slane %v2451, %v2487
  %v2489 = vlaneseq
  %v2490 = vshrl.u32 %v2489, 7
  %v2491 = vsub.s32 0, %v2490
  %v2492 = vrot.slane %v2452, %v2491
  %2501 = vrot.lane.b32.xlu0 %v1313, 126
  %v2502 = vpop.permute.xlu0 %2501
  %2503 = vrot.lane.b32.xlu0 %v1317, 126
  %v2504 = vpop.permute.xlu0 %2503
  %v2507 = vmul.f32 %v2464, %v2502
  %v2508 = vmul.f32 %v2468, %v2502
  %v2509 = vmul.f32 %v2472, %v2502
  %v2510 = vmul.f32 %v2476, %v2502
  %v2511 = vmul.f32 %v2480, %v2502
  %v2512 = vmul.f32 %v2484, %v2502
  %v2513 = vmul.f32 %v2488, %v2502
  %v2514 = vmul.f32 %v2492, %v2502
  %v2515 = vmul.f32 %v2464, %v2504
  %v2516 = vmul.f32 %v2468, %v2504
  %v2517 = vmul.f32 %v2472, %v2504
  %v2518 = vmul.f32 %v2476, %v2504
  %v2519 = vmul.f32 %v2480, %v2504
  %v2520 = vmul.f32 %v2484, %v2504
  %v2521 = vmul.f32 %v2488, %v2504
  %v2522 = vmul.f32 %v2492, %v2504
  %v2523 = vadd.f32 %v2428, %v2507
  %v2524 = vadd.f32 %v2429, %v2508
  %v2525 = vadd.f32 %v2430, %v2509
  %v2526 = vadd.f32 %v2431, %v2510
  %v2527 = vadd.f32 %v2432, %v2511
  %v2528 = vadd.f32 %v2433, %v2512
  %v2529 = vadd.f32 %v2434, %v2513
  %v2530 = vadd.f32 %v2435, %v2514
  %v2531 = vadd.f32 %v2436, %v2515
  %v2532 = vadd.f32 %v2437, %v2516
  %v2533 = vadd.f32 %v2438, %v2517
  %v2534 = vadd.f32 %v2439, %v2518
  %v2535 = vadd.f32 %v2440, %v2519
  %v2536 = vadd.f32 %v2441, %v2520
  %v2537 = vadd.f32 %v2442, %v2521
  %v2538 = vadd.f32 %v2443, %v2522
  %s2539 = scalar_lea.vmem %s2, 96
  %v2540 = vld [vmem:[%s2539] sm:$0x1]
  %v2541 = vld [vmem:[%s2539 + $0x1] sm:$0x1]
  %v2542 = vld [vmem:[%s2539 + $0x2] sm:$0x1]
  %v2543 = vld [vmem:[%s2539 + $0x3] sm:$0x1]
  %v2544 = vld [vmem:[%s2539 + $0x4] sm:$0x1]
  %v2545 = vld [vmem:[%s2539 + $0x5] sm:$0x1]
  %v2546 = vld [vmem:[%s2539 + $0x6] sm:$0x1]
  %v2547 = vld [vmem:[%s2539 + $0x7] sm:$0x1]
  %v2556 = vlaneseq
  %v2557 = vshrl.u32 %v2556, 7
  %v2558 = vsub.s32 0, %v2557
  %v2559 = vrot.slane %v2540, %v2558
  %v2560 = vlaneseq
  %v2561 = vshrl.u32 %v2560, 7
  %v2562 = vsub.s32 0, %v2561
  %v2563 = vrot.slane %v2541, %v2562
  %v2564 = vlaneseq
  %v2565 = vshrl.u32 %v2564, 7
  %v2566 = vsub.s32 0, %v2565
  %v2567 = vrot.slane %v2542, %v2566
  %v2568 = vlaneseq
  %v2569 = vshrl.u32 %v2568, 7
  %v2570 = vsub.s32 0, %v2569
  %v2571 = vrot.slane %v2543, %v2570
  %v2572 = vlaneseq
  %v2573 = vshrl.u32 %v2572, 7
  %v2574 = vsub.s32 0, %v2573
  %v2575 = vrot.slane %v2544, %v2574
  %v2576 = vlaneseq
  %v2577 = vshrl.u32 %v2576, 7
  %v2578 = vsub.s32 0, %v2577
  %v2579 = vrot.slane %v2545, %v2578
  %v2580 = vlaneseq
  %v2581 = vshrl.u32 %v2580, 7
  %v2582 = vsub.s32 0, %v2581
  %v2583 = vrot.slane %v2546, %v2582
  %v2584 = vlaneseq
  %v2585 = vshrl.u32 %v2584, 7
  %v2586 = vsub.s32 0, %v2585
  %v2587 = vrot.slane %v2547, %v2586
  %v2596 = vmul.f32 %v2559, %v1313
  %v2597 = vmul.f32 %v2563, %v1313
  %v2598 = vmul.f32 %v2567, %v1313
  %v2599 = vmul.f32 %v2571, %v1313
  %v2600 = vmul.f32 %v2575, %v1313
  %v2601 = vmul.f32 %v2579, %v1313
  %v2602 = vmul.f32 %v2583, %v1313
  %v2603 = vmul.f32 %v2587, %v1313
  %v2604 = vmul.f32 %v2559, %v1317
  %v2605 = vmul.f32 %v2563, %v1317
  %v2606 = vmul.f32 %v2567, %v1317
  %v2607 = vmul.f32 %v2571, %v1317
  %v2608 = vmul.f32 %v2575, %v1317
  %v2609 = vmul.f32 %v2579, %v1317
  %v2610 = vmul.f32 %v2583, %v1317
  %v2611 = vmul.f32 %v2587, %v1317
  %v2628 = vrot.slane %v2596, 1
  %v2629 = vrot.slane %v2597, 1
  %v2630 = vrot.slane %v2598, 1
  %v2631 = vrot.slane %v2599, 1
  %v2632 = vrot.slane %v2600, 1
  %v2633 = vrot.slane %v2601, 1
  %v2634 = vrot.slane %v2602, 1
  %v2635 = vrot.slane %v2603, 1
  %v2636 = vrot.slane %v2604, 1
  %v2637 = vrot.slane %v2605, 1
  %v2638 = vrot.slane %v2606, 1
  %v2639 = vrot.slane %v2607, 1
  %v2640 = vrot.slane %v2608, 1
  %v2641 = vrot.slane %v2609, 1
  %v2642 = vrot.slane %v2610, 1
  %v2643 = vrot.slane %v2611, 1
  %v2660 = vadd.f32 %v2523, %v2628
  %v2661 = vadd.f32 %v2524, %v2629
  %v2662 = vadd.f32 %v2525, %v2630
  %v2663 = vadd.f32 %v2526, %v2631
  %v2664 = vadd.f32 %v2527, %v2632
  %v2665 = vadd.f32 %v2528, %v2633
  %v2666 = vadd.f32 %v2529, %v2634
  %v2667 = vadd.f32 %v2530, %v2635
  %v2668 = vadd.f32 %v2531, %v2636
  %v2669 = vadd.f32 %v2532, %v2637
  %v2670 = vadd.f32 %v2533, %v2638
  %v2671 = vadd.f32 %v2534, %v2639
  %v2672 = vadd.f32 %v2535, %v2640
  %v2673 = vadd.f32 %v2536, %v2641
  %v2674 = vadd.f32 %v2537, %v2642
  %v2675 = vadd.f32 %v2538, %v2643
  %s2676 = scalar_lea.vmem %s2, 104
  %v2677 = vld [vmem:[%s2676] sm:$0x1]
  %v2678 = vld [vmem:[%s2676 + $0x1] sm:$0x1]
  %v2679 = vld [vmem:[%s2676 + $0x2] sm:$0x1]
  %v2680 = vld [vmem:[%s2676 + $0x3] sm:$0x1]
  %v2681 = vld [vmem:[%s2676 + $0x4] sm:$0x1]
  %v2682 = vld [vmem:[%s2676 + $0x5] sm:$0x1]
  %v2683 = vld [vmem:[%s2676 + $0x6] sm:$0x1]
  %v2684 = vld [vmem:[%s2676 + $0x7] sm:$0x1]
  %v2693 = vlaneseq
  %v2694 = vshrl.u32 %v2693, 7
  %v2695 = vsub.s32 0, %v2694
  %v2696 = vrot.slane %v2677, %v2695
  %v2697 = vlaneseq
  %v2698 = vshrl.u32 %v2697, 7
  %v2699 = vsub.s32 0, %v2698
  %v2700 = vrot.slane %v2678, %v2699
  %v2701 = vlaneseq
  %v2702 = vshrl.u32 %v2701, 7
  %v2703 = vsub.s32 0, %v2702
  %v2704 = vrot.slane %v2679, %v2703
  %v2705 = vlaneseq
  %v2706 = vshrl.u32 %v2705, 7
  %v2707 = vsub.s32 0, %v2706
  %v2708 = vrot.slane %v2680, %v2707
  %v2709 = vlaneseq
  %v2710 = vshrl.u32 %v2709, 7
  %v2711 = vsub.s32 0, %v2710
  %v2712 = vrot.slane %v2681, %v2711
  %v2713 = vlaneseq
  %v2714 = vshrl.u32 %v2713, 7
  %v2715 = vsub.s32 0, %v2714
  %v2716 = vrot.slane %v2682, %v2715
  %v2717 = vlaneseq
  %v2718 = vshrl.u32 %v2717, 7
  %v2719 = vsub.s32 0, %v2718
  %v2720 = vrot.slane %v2683, %v2719
  %v2721 = vlaneseq
  %v2722 = vshrl.u32 %v2721, 7
  %v2723 = vsub.s32 0, %v2722
  %v2724 = vrot.slane %v2684, %v2723
  %v2733 = vrot.slane %v1313, 1
  %v2734 = vrot.slane %v1317, 1
  %2735 = vrot.lane.b32.xlu0 %v2733, 127
  %v2736 = vpop.permute.xlu0 %2735
  %2737 = vrot.lane.b32.xlu0 %v2734, 127
  %v2738 = vpop.permute.xlu0 %2737
  %v2741 = vmul.f32 %v2696, %v2736
  %v2742 = vmul.f32 %v2700, %v2736
  %v2743 = vmul.f32 %v2704, %v2736
  %v2744 = vmul.f32 %v2708, %v2736
  %v2745 = vmul.f32 %v2712, %v2736
  %v2746 = vmul.f32 %v2716, %v2736
  %v2747 = vmul.f32 %v2720, %v2736
  %v2748 = vmul.f32 %v2724, %v2736
  %v2749 = vmul.f32 %v2696, %v2738
  %v2750 = vmul.f32 %v2700, %v2738
  %v2751 = vmul.f32 %v2704, %v2738
  %v2752 = vmul.f32 %v2708, %v2738
  %v2753 = vmul.f32 %v2712, %v2738
  %v2754 = vmul.f32 %v2716, %v2738
  %v2755 = vmul.f32 %v2720, %v2738
  %v2756 = vmul.f32 %v2724, %v2738
  %v2757 = vadd.f32 %v2660, %v2741
  %v2758 = vadd.f32 %v2661, %v2742
  %v2759 = vadd.f32 %v2662, %v2743
  %v2760 = vadd.f32 %v2663, %v2744
  %v2761 = vadd.f32 %v2664, %v2745
  %v2762 = vadd.f32 %v2665, %v2746
  %v2763 = vadd.f32 %v2666, %v2747
  %v2764 = vadd.f32 %v2667, %v2748
  %v2765 = vadd.f32 %v2668, %v2749
  %v2766 = vadd.f32 %v2669, %v2750
  %v2767 = vadd.f32 %v2670, %v2751
  %v2768 = vadd.f32 %v2671, %v2752
  %v2769 = vadd.f32 %v2672, %v2753
  %v2770 = vadd.f32 %v2673, %v2754
  %v2771 = vadd.f32 %v2674, %v2755
  %v2772 = vadd.f32 %v2675, %v2756
  %s2773 = scalar_lea.vmem %s2, 112
  %v2774 = vld [vmem:[%s2773] sm:$0x1]
  %v2775 = vld [vmem:[%s2773 + $0x1] sm:$0x1]
  %v2776 = vld [vmem:[%s2773 + $0x2] sm:$0x1]
  %v2777 = vld [vmem:[%s2773 + $0x3] sm:$0x1]
  %v2778 = vld [vmem:[%s2773 + $0x4] sm:$0x1]
  %v2779 = vld [vmem:[%s2773 + $0x5] sm:$0x1]
  %v2780 = vld [vmem:[%s2773 + $0x6] sm:$0x1]
  %v2781 = vld [vmem:[%s2773 + $0x7] sm:$0x1]
  %v2790 = vlaneseq
  %v2791 = vshrl.u32 %v2790, 7
  %v2792 = vsub.s32 0, %v2791
  %v2793 = vrot.slane %v2774, %v2792
  %v2794 = vlaneseq
  %v2795 = vshrl.u32 %v2794, 7
  %v2796 = vsub.s32 0, %v2795
  %v2797 = vrot.slane %v2775, %v2796
  %v2798 = vlaneseq
  %v2799 = vshrl.u32 %v2798, 7
  %v2800 = vsub.s32 0, %v2799
  %v2801 = vrot.slane %v2776, %v2800
  %v2802 = vlaneseq
  %v2803 = vshrl.u32 %v2802, 7
  %v2804 = vsub.s32 0, %v2803
  %v2805 = vrot.slane %v2777, %v2804
  %v2806 = vlaneseq
  %v2807 = vshrl.u32 %v2806, 7
  %v2808 = vsub.s32 0, %v2807
  %v2809 = vrot.slane %v2778, %v2808
  %v2810 = vlaneseq
  %v2811 = vshrl.u32 %v2810, 7
  %v2812 = vsub.s32 0, %v2811
  %v2813 = vrot.slane %v2779, %v2812
  %v2814 = vlaneseq
  %v2815 = vshrl.u32 %v2814, 7
  %v2816 = vsub.s32 0, %v2815
  %v2817 = vrot.slane %v2780, %v2816
  %v2818 = vlaneseq
  %v2819 = vshrl.u32 %v2818, 7
  %v2820 = vsub.s32 0, %v2819
  %v2821 = vrot.slane %v2781, %v2820
  %2830 = vrot.lane.b32.xlu0 %v2733, 126
  %v2831 = vpop.permute.xlu0 %2830
  %2832 = vrot.lane.b32.xlu0 %v2734, 126
  %v2833 = vpop.permute.xlu0 %2832
  %v2836 = vmul.f32 %v2793, %v2831
  %v2837 = vmul.f32 %v2797, %v2831
  %v2838 = vmul.f32 %v2801, %v2831
  %v2839 = vmul.f32 %v2805, %v2831
  %v2840 = vmul.f32 %v2809, %v2831
  %v2841 = vmul.f32 %v2813, %v2831
  %v2842 = vmul.f32 %v2817, %v2831
  %v2843 = vmul.f32 %v2821, %v2831
  %v2844 = vmul.f32 %v2793, %v2833
  %v2845 = vmul.f32 %v2797, %v2833
  %v2846 = vmul.f32 %v2801, %v2833
  %v2847 = vmul.f32 %v2805, %v2833
  %v2848 = vmul.f32 %v2809, %v2833
  %v2849 = vmul.f32 %v2813, %v2833
  %v2850 = vmul.f32 %v2817, %v2833
  %v2851 = vmul.f32 %v2821, %v2833
  %v2852 = vadd.f32 %v2757, %v2836
  %v2853 = vadd.f32 %v2758, %v2837
  %v2854 = vadd.f32 %v2759, %v2838
  %v2855 = vadd.f32 %v2760, %v2839
  %v2856 = vadd.f32 %v2761, %v2840
  %v2857 = vadd.f32 %v2762, %v2841
  %v2858 = vadd.f32 %v2763, %v2842
  %v2859 = vadd.f32 %v2764, %v2843
  %v2860 = vadd.f32 %v2765, %v2844
  %v2861 = vadd.f32 %v2766, %v2845
  %v2862 = vadd.f32 %v2767, %v2846
  %v2863 = vadd.f32 %v2768, %v2847
  %v2864 = vadd.f32 %v2769, %v2848
  %v2865 = vadd.f32 %v2770, %v2849
  %v2866 = vadd.f32 %v2771, %v2850
  %v2867 = vadd.f32 %v2772, %v2851
  %s2868 = scalar_lea.vmem %s2, 120
  %v2869 = vld [vmem:[%s2868] sm:$0x1]
  %v2870 = vld [vmem:[%s2868 + $0x1] sm:$0x1]
  %v2871 = vld [vmem:[%s2868 + $0x2] sm:$0x1]
  %v2872 = vld [vmem:[%s2868 + $0x3] sm:$0x1]
  %v2873 = vld [vmem:[%s2868 + $0x4] sm:$0x1]
  %v2874 = vld [vmem:[%s2868 + $0x5] sm:$0x1]
  %v2875 = vld [vmem:[%s2868 + $0x6] sm:$0x1]
  %v2876 = vld [vmem:[%s2868 + $0x7] sm:$0x1]
  %v2885 = vlaneseq
  %v2886 = vshrl.u32 %v2885, 7
  %v2887 = vsub.s32 0, %v2886
  %v2888 = vrot.slane %v2869, %v2887
  %v2889 = vlaneseq
  %v2890 = vshrl.u32 %v2889, 7
  %v2891 = vsub.s32 0, %v2890
  %v2892 = vrot.slane %v2870, %v2891
  %v2893 = vlaneseq
  %v2894 = vshrl.u32 %v2893, 7
  %v2895 = vsub.s32 0, %v2894
  %v2896 = vrot.slane %v2871, %v2895
  %v2897 = vlaneseq
  %v2898 = vshrl.u32 %v2897, 7
  %v2899 = vsub.s32 0, %v2898
  %v2900 = vrot.slane %v2872, %v2899
  %v2901 = vlaneseq
  %v2902 = vshrl.u32 %v2901, 7
  %v2903 = vsub.s32 0, %v2902
  %v2904 = vrot.slane %v2873, %v2903
  %v2905 = vlaneseq
  %v2906 = vshrl.u32 %v2905, 7
  %v2907 = vsub.s32 0, %v2906
  %v2908 = vrot.slane %v2874, %v2907
  %v2909 = vlaneseq
  %v2910 = vshrl.u32 %v2909, 7
  %v2911 = vsub.s32 0, %v2910
  %v2912 = vrot.slane %v2875, %v2911
  %v2913 = vlaneseq
  %v2914 = vshrl.u32 %v2913, 7
  %v2915 = vsub.s32 0, %v2914
  %v2916 = vrot.slane %v2876, %v2915
  %v2925 = vmul.f32 %v2888, %v1313
  %v2926 = vmul.f32 %v2892, %v1313
  %v2927 = vmul.f32 %v2896, %v1313
  %v2928 = vmul.f32 %v2900, %v1313
  %v2929 = vmul.f32 %v2904, %v1313
  %v2930 = vmul.f32 %v2908, %v1313
  %v2931 = vmul.f32 %v2912, %v1313
  %v2932 = vmul.f32 %v2916, %v1313
  %v2933 = vmul.f32 %v2888, %v1317
  %v2934 = vmul.f32 %v2892, %v1317
  %v2935 = vmul.f32 %v2896, %v1317
  %v2936 = vmul.f32 %v2900, %v1317
  %v2937 = vmul.f32 %v2904, %v1317
  %v2938 = vmul.f32 %v2908, %v1317
  %v2939 = vmul.f32 %v2912, %v1317
  %v2940 = vmul.f32 %v2916, %v1317
  %v2957 = vrot.slane %v2925, 2
  %v2958 = vrot.slane %v2926, 2
  %v2959 = vrot.slane %v2927, 2
  %v2960 = vrot.slane %v2928, 2
  %v2961 = vrot.slane %v2929, 2
  %v2962 = vrot.slane %v2930, 2
  %v2963 = vrot.slane %v2931, 2
  %v2964 = vrot.slane %v2932, 2
  %v2965 = vrot.slane %v2933, 2
  %v2966 = vrot.slane %v2934, 2
  %v2967 = vrot.slane %v2935, 2
  %v2968 = vrot.slane %v2936, 2
  %v2969 = vrot.slane %v2937, 2
  %v2970 = vrot.slane %v2938, 2
  %v2971 = vrot.slane %v2939, 2
  %v2972 = vrot.slane %v2940, 2
  %v2989 = vadd.f32 %v2852, %v2957
  %v2990 = vadd.f32 %v2853, %v2958
  %v2991 = vadd.f32 %v2854, %v2959
  %v2992 = vadd.f32 %v2855, %v2960
  %v2993 = vadd.f32 %v2856, %v2961
  %v2994 = vadd.f32 %v2857, %v2962
  %v2995 = vadd.f32 %v2858, %v2963
  %v2996 = vadd.f32 %v2859, %v2964
  %v2997 = vadd.f32 %v2860, %v2965
  %v2998 = vadd.f32 %v2861, %v2966
  %v2999 = vadd.f32 %v2862, %v2967
  %v3000 = vadd.f32 %v2863, %v2968
  %v3001 = vadd.f32 %v2864, %v2969
  %v3002 = vadd.f32 %v2865, %v2970
  %v3003 = vadd.f32 %v2866, %v2971
  %v3004 = vadd.f32 %v2867, %v2972
  %s3005 = scalar_lea.vmem %s2, 128
  %v3006 = vld [vmem:[%s3005] sm:$0x1]
  %v3007 = vld [vmem:[%s3005 + $0x1] sm:$0x1]
  %v3008 = vld [vmem:[%s3005 + $0x2] sm:$0x1]
  %v3009 = vld [vmem:[%s3005 + $0x3] sm:$0x1]
  %v3010 = vld [vmem:[%s3005 + $0x4] sm:$0x1]
  %v3011 = vld [vmem:[%s3005 + $0x5] sm:$0x1]
  %v3012 = vld [vmem:[%s3005 + $0x6] sm:$0x1]
  %v3013 = vld [vmem:[%s3005 + $0x7] sm:$0x1]
  %v3022 = vlaneseq
  %v3023 = vshrl.u32 %v3022, 7
  %v3024 = vsub.s32 0, %v3023
  %v3025 = vrot.slane %v3006, %v3024
  %v3026 = vlaneseq
  %v3027 = vshrl.u32 %v3026, 7
  %v3028 = vsub.s32 0, %v3027
  %v3029 = vrot.slane %v3007, %v3028
  %v3030 = vlaneseq
  %v3031 = vshrl.u32 %v3030, 7
  %v3032 = vsub.s32 0, %v3031
  %v3033 = vrot.slane %v3008, %v3032
  %v3034 = vlaneseq
  %v3035 = vshrl.u32 %v3034, 7
  %v3036 = vsub.s32 0, %v3035
  %v3037 = vrot.slane %v3009, %v3036
  %v3038 = vlaneseq
  %v3039 = vshrl.u32 %v3038, 7
  %v3040 = vsub.s32 0, %v3039
  %v3041 = vrot.slane %v3010, %v3040
  %v3042 = vlaneseq
  %v3043 = vshrl.u32 %v3042, 7
  %v3044 = vsub.s32 0, %v3043
  %v3045 = vrot.slane %v3011, %v3044
  %v3046 = vlaneseq
  %v3047 = vshrl.u32 %v3046, 7
  %v3048 = vsub.s32 0, %v3047
  %v3049 = vrot.slane %v3012, %v3048
  %v3050 = vlaneseq
  %v3051 = vshrl.u32 %v3050, 7
  %v3052 = vsub.s32 0, %v3051
  %v3053 = vrot.slane %v3013, %v3052
  %v3062 = vrot.slane %v1313, 2
  %v3063 = vrot.slane %v1317, 2
  %3064 = vrot.lane.b32.xlu0 %v3062, 127
  %v3065 = vpop.permute.xlu0 %3064
  %3066 = vrot.lane.b32.xlu0 %v3063, 127
  %v3067 = vpop.permute.xlu0 %3066
  %v3070 = vmul.f32 %v3025, %v3065
  %v3071 = vmul.f32 %v3029, %v3065
  %v3072 = vmul.f32 %v3033, %v3065
  %v3073 = vmul.f32 %v3037, %v3065
  %v3074 = vmul.f32 %v3041, %v3065
  %v3075 = vmul.f32 %v3045, %v3065
  %v3076 = vmul.f32 %v3049, %v3065
  %v3077 = vmul.f32 %v3053, %v3065
  %v3078 = vmul.f32 %v3025, %v3067
  %v3079 = vmul.f32 %v3029, %v3067
  %v3080 = vmul.f32 %v3033, %v3067
  %v3081 = vmul.f32 %v3037, %v3067
  %v3082 = vmul.f32 %v3041, %v3067
  %v3083 = vmul.f32 %v3045, %v3067
  %v3084 = vmul.f32 %v3049, %v3067
  %v3085 = vmul.f32 %v3053, %v3067
  %v3086 = vadd.f32 %v2989, %v3070
  %v3087 = vadd.f32 %v2990, %v3071
  %v3088 = vadd.f32 %v2991, %v3072
  %v3089 = vadd.f32 %v2992, %v3073
  %v3090 = vadd.f32 %v2993, %v3074
  %v3091 = vadd.f32 %v2994, %v3075
  %v3092 = vadd.f32 %v2995, %v3076
  %v3093 = vadd.f32 %v2996, %v3077
  %v3094 = vadd.f32 %v2997, %v3078
  %v3095 = vadd.f32 %v2998, %v3079
  %v3096 = vadd.f32 %v2999, %v3080
  %v3097 = vadd.f32 %v3000, %v3081
  %v3098 = vadd.f32 %v3001, %v3082
  %v3099 = vadd.f32 %v3002, %v3083
  %v3100 = vadd.f32 %v3003, %v3084
  %v3101 = vadd.f32 %v3004, %v3085
  %s3102 = scalar_lea.vmem %s2, 136
  %v3103 = vld [vmem:[%s3102] sm:$0x1]
  %v3104 = vld [vmem:[%s3102 + $0x1] sm:$0x1]
  %v3105 = vld [vmem:[%s3102 + $0x2] sm:$0x1]
  %v3106 = vld [vmem:[%s3102 + $0x3] sm:$0x1]
  %v3107 = vld [vmem:[%s3102 + $0x4] sm:$0x1]
  %v3108 = vld [vmem:[%s3102 + $0x5] sm:$0x1]
  %v3109 = vld [vmem:[%s3102 + $0x6] sm:$0x1]
  %v3110 = vld [vmem:[%s3102 + $0x7] sm:$0x1]
  %v3119 = vlaneseq
  %v3120 = vshrl.u32 %v3119, 7
  %v3121 = vsub.s32 0, %v3120
  %v3122 = vrot.slane %v3103, %v3121
  %v3123 = vlaneseq
  %v3124 = vshrl.u32 %v3123, 7
  %v3125 = vsub.s32 0, %v3124
  %v3126 = vrot.slane %v3104, %v3125
  %v3127 = vlaneseq
  %v3128 = vshrl.u32 %v3127, 7
  %v3129 = vsub.s32 0, %v3128
  %v3130 = vrot.slane %v3105, %v3129
  %v3131 = vlaneseq
  %v3132 = vshrl.u32 %v3131, 7
  %v3133 = vsub.s32 0, %v3132
  %v3134 = vrot.slane %v3106, %v3133
  %v3135 = vlaneseq
  %v3136 = vshrl.u32 %v3135, 7
  %v3137 = vsub.s32 0, %v3136
  %v3138 = vrot.slane %v3107, %v3137
  %v3139 = vlaneseq
  %v3140 = vshrl.u32 %v3139, 7
  %v3141 = vsub.s32 0, %v3140
  %v3142 = vrot.slane %v3108, %v3141
  %v3143 = vlaneseq
  %v3144 = vshrl.u32 %v3143, 7
  %v3145 = vsub.s32 0, %v3144
  %v3146 = vrot.slane %v3109, %v3145
  %v3147 = vlaneseq
  %v3148 = vshrl.u32 %v3147, 7
  %v3149 = vsub.s32 0, %v3148
  %v3150 = vrot.slane %v3110, %v3149
  %3159 = vrot.lane.b32.xlu0 %v3062, 126
  %v3160 = vpop.permute.xlu0 %3159
  %3161 = vrot.lane.b32.xlu0 %v3063, 126
  %v3162 = vpop.permute.xlu0 %3161
  %v3165 = vmul.f32 %v3122, %v3160
  %v3166 = vmul.f32 %v3126, %v3160
  %v3167 = vmul.f32 %v3130, %v3160
  %v3168 = vmul.f32 %v3134, %v3160
  %v3169 = vmul.f32 %v3138, %v3160
  %v3170 = vmul.f32 %v3142, %v3160
  %v3171 = vmul.f32 %v3146, %v3160
  %v3172 = vmul.f32 %v3150, %v3160
  %v3173 = vmul.f32 %v3122, %v3162
  %v3174 = vmul.f32 %v3126, %v3162
  %v3175 = vmul.f32 %v3130, %v3162
  %v3176 = vmul.f32 %v3134, %v3162
  %v3177 = vmul.f32 %v3138, %v3162
  %v3178 = vmul.f32 %v3142, %v3162
  %v3179 = vmul.f32 %v3146, %v3162
  %v3180 = vmul.f32 %v3150, %v3162
  %v3181 = vadd.f32 %v3086, %v3165
  %v3182 = vadd.f32 %v3087, %v3166
  %v3183 = vadd.f32 %v3088, %v3167
  %v3184 = vadd.f32 %v3089, %v3168
  %v3185 = vadd.f32 %v3090, %v3169
  %v3186 = vadd.f32 %v3091, %v3170
  %v3187 = vadd.f32 %v3092, %v3171
  %v3188 = vadd.f32 %v3093, %v3172
  %v3189 = vadd.f32 %v3094, %v3173
  %v3190 = vadd.f32 %v3095, %v3174
  %v3191 = vadd.f32 %v3096, %v3175
  %v3192 = vadd.f32 %v3097, %v3176
  %v3193 = vadd.f32 %v3098, %v3177
  %v3194 = vadd.f32 %v3099, %v3178
  %v3195 = vadd.f32 %v3100, %v3179
  %v3196 = vadd.f32 %v3101, %v3180
  %s3197 = scalar_lea.vmem %s2, 144
  %v3198 = vld [vmem:[%s3197] sm:$0x1]
  %v3199 = vld [vmem:[%s3197 + $0x1] sm:$0x1]
  %v3200 = vld [vmem:[%s3197 + $0x2] sm:$0x1]
  %v3201 = vld [vmem:[%s3197 + $0x3] sm:$0x1]
  %v3202 = vld [vmem:[%s3197 + $0x4] sm:$0x1]
  %v3203 = vld [vmem:[%s3197 + $0x5] sm:$0x1]
  %v3204 = vld [vmem:[%s3197 + $0x6] sm:$0x1]
  %v3205 = vld [vmem:[%s3197 + $0x7] sm:$0x1]
  %v3214 = vlaneseq
  %v3215 = vshrl.u32 %v3214, 7
  %v3216 = vsub.s32 0, %v3215
  %v3217 = vrot.slane %v3198, %v3216
  %v3218 = vlaneseq
  %v3219 = vshrl.u32 %v3218, 7
  %v3220 = vsub.s32 0, %v3219
  %v3221 = vrot.slane %v3199, %v3220
  %v3222 = vlaneseq
  %v3223 = vshrl.u32 %v3222, 7
  %v3224 = vsub.s32 0, %v3223
  %v3225 = vrot.slane %v3200, %v3224
  %v3226 = vlaneseq
  %v3227 = vshrl.u32 %v3226, 7
  %v3228 = vsub.s32 0, %v3227
  %v3229 = vrot.slane %v3201, %v3228
  %v3230 = vlaneseq
  %v3231 = vshrl.u32 %v3230, 7
  %v3232 = vsub.s32 0, %v3231
  %v3233 = vrot.slane %v3202, %v3232
  %v3234 = vlaneseq
  %v3235 = vshrl.u32 %v3234, 7
  %v3236 = vsub.s32 0, %v3235
  %v3237 = vrot.slane %v3203, %v3236
  %v3238 = vlaneseq
  %v3239 = vshrl.u32 %v3238, 7
  %v3240 = vsub.s32 0, %v3239
  %v3241 = vrot.slane %v3204, %v3240
  %v3242 = vlaneseq
  %v3243 = vshrl.u32 %v3242, 7
  %v3244 = vsub.s32 0, %v3243
  %v3245 = vrot.slane %v3205, %v3244
  %v3254 = vmul.f32 %v3217, %v1314
  %v3255 = vmul.f32 %v3221, %v1314
  %v3256 = vmul.f32 %v3225, %v1314
  %v3257 = vmul.f32 %v3229, %v1314
  %v3258 = vmul.f32 %v3233, %v1314
  %v3259 = vmul.f32 %v3237, %v1314
  %v3260 = vmul.f32 %v3241, %v1314
  %v3261 = vmul.f32 %v3245, %v1314
  %v3262 = vmul.f32 %v3217, %v1318
  %v3263 = vmul.f32 %v3221, %v1318
  %v3264 = vmul.f32 %v3225, %v1318
  %v3265 = vmul.f32 %v3229, %v1318
  %v3266 = vmul.f32 %v3233, %v1318
  %v3267 = vmul.f32 %v3237, %v1318
  %v3268 = vmul.f32 %v3241, %v1318
  %v3269 = vmul.f32 %v3245, %v1318
  %v3270 = vadd.f32 %v3181, %v3254
  %v3271 = vadd.f32 %v3182, %v3255
  %v3272 = vadd.f32 %v3183, %v3256
  %v3273 = vadd.f32 %v3184, %v3257
  %v3274 = vadd.f32 %v3185, %v3258
  %v3275 = vadd.f32 %v3186, %v3259
  %v3276 = vadd.f32 %v3187, %v3260
  %v3277 = vadd.f32 %v3188, %v3261
  %v3278 = vadd.f32 %v3189, %v3262
  %v3279 = vadd.f32 %v3190, %v3263
  %v3280 = vadd.f32 %v3191, %v3264
  %v3281 = vadd.f32 %v3192, %v3265
  %v3282 = vadd.f32 %v3193, %v3266
  %v3283 = vadd.f32 %v3194, %v3267
  %v3284 = vadd.f32 %v3195, %v3268
  %v3285 = vadd.f32 %v3196, %v3269
  %s3286 = scalar_lea.vmem %s2, 152
  %v3287 = vld [vmem:[%s3286] sm:$0x1]
  %v3288 = vld [vmem:[%s3286 + $0x1] sm:$0x1]
  %v3289 = vld [vmem:[%s3286 + $0x2] sm:$0x1]
  %v3290 = vld [vmem:[%s3286 + $0x3] sm:$0x1]
  %v3291 = vld [vmem:[%s3286 + $0x4] sm:$0x1]
  %v3292 = vld [vmem:[%s3286 + $0x5] sm:$0x1]
  %v3293 = vld [vmem:[%s3286 + $0x6] sm:$0x1]
  %v3294 = vld [vmem:[%s3286 + $0x7] sm:$0x1]
  %v3303 = vlaneseq
  %v3304 = vshrl.u32 %v3303, 7
  %v3305 = vsub.s32 0, %v3304
  %v3306 = vrot.slane %v3287, %v3305
  %v3307 = vlaneseq
  %v3308 = vshrl.u32 %v3307, 7
  %v3309 = vsub.s32 0, %v3308
  %v3310 = vrot.slane %v3288, %v3309
  %v3311 = vlaneseq
  %v3312 = vshrl.u32 %v3311, 7
  %v3313 = vsub.s32 0, %v3312
  %v3314 = vrot.slane %v3289, %v3313
  %v3315 = vlaneseq
  %v3316 = vshrl.u32 %v3315, 7
  %v3317 = vsub.s32 0, %v3316
  %v3318 = vrot.slane %v3290, %v3317
  %v3319 = vlaneseq
  %v3320 = vshrl.u32 %v3319, 7
  %v3321 = vsub.s32 0, %v3320
  %v3322 = vrot.slane %v3291, %v3321
  %v3323 = vlaneseq
  %v3324 = vshrl.u32 %v3323, 7
  %v3325 = vsub.s32 0, %v3324
  %v3326 = vrot.slane %v3292, %v3325
  %v3327 = vlaneseq
  %v3328 = vshrl.u32 %v3327, 7
  %v3329 = vsub.s32 0, %v3328
  %v3330 = vrot.slane %v3293, %v3329
  %v3331 = vlaneseq
  %v3332 = vshrl.u32 %v3331, 7
  %v3333 = vsub.s32 0, %v3332
  %v3334 = vrot.slane %v3294, %v3333
  %3345 = vrot.lane.b32.xlu0 %v1314, 127
  %v3346 = vpop.permute.xlu0 %3345
  %3347 = vrot.lane.b32.xlu0 %v1318, 127
  %v3348 = vpop.permute.xlu0 %3347
  %v3351 = vmul.f32 %v3306, %v3346
  %v3352 = vmul.f32 %v3310, %v3346
  %v3353 = vmul.f32 %v3314, %v3346
  %v3354 = vmul.f32 %v3318, %v3346
  %v3355 = vmul.f32 %v3322, %v3346
  %v3356 = vmul.f32 %v3326, %v3346
  %v3357 = vmul.f32 %v3330, %v3346
  %v3358 = vmul.f32 %v3334, %v3346
  %v3359 = vmul.f32 %v3306, %v3348
  %v3360 = vmul.f32 %v3310, %v3348
  %v3361 = vmul.f32 %v3314, %v3348
  %v3362 = vmul.f32 %v3318, %v3348
  %v3363 = vmul.f32 %v3322, %v3348
  %v3364 = vmul.f32 %v3326, %v3348
  %v3365 = vmul.f32 %v3330, %v3348
  %v3366 = vmul.f32 %v3334, %v3348
  %v3367 = vadd.f32 %v3270, %v3351
  %v3368 = vadd.f32 %v3271, %v3352
  %v3369 = vadd.f32 %v3272, %v3353
  %v3370 = vadd.f32 %v3273, %v3354
  %v3371 = vadd.f32 %v3274, %v3355
  %v3372 = vadd.f32 %v3275, %v3356
  %v3373 = vadd.f32 %v3276, %v3357
  %v3374 = vadd.f32 %v3277, %v3358
  %v3375 = vadd.f32 %v3278, %v3359
  %v3376 = vadd.f32 %v3279, %v3360
  %v3377 = vadd.f32 %v3280, %v3361
  %v3378 = vadd.f32 %v3281, %v3362
  %v3379 = vadd.f32 %v3282, %v3363
  %v3380 = vadd.f32 %v3283, %v3364
  %v3381 = vadd.f32 %v3284, %v3365
  %v3382 = vadd.f32 %v3285, %v3366
  %s3383 = scalar_lea.vmem %s2, 160
  %v3384 = vld [vmem:[%s3383] sm:$0x1]
  %v3385 = vld [vmem:[%s3383 + $0x1] sm:$0x1]
  %v3386 = vld [vmem:[%s3383 + $0x2] sm:$0x1]
  %v3387 = vld [vmem:[%s3383 + $0x3] sm:$0x1]
  %v3388 = vld [vmem:[%s3383 + $0x4] sm:$0x1]
  %v3389 = vld [vmem:[%s3383 + $0x5] sm:$0x1]
  %v3390 = vld [vmem:[%s3383 + $0x6] sm:$0x1]
  %v3391 = vld [vmem:[%s3383 + $0x7] sm:$0x1]
  %v3400 = vlaneseq
  %v3401 = vshrl.u32 %v3400, 7
  %v3402 = vsub.s32 0, %v3401
  %v3403 = vrot.slane %v3384, %v3402
  %v3404 = vlaneseq
  %v3405 = vshrl.u32 %v3404, 7
  %v3406 = vsub.s32 0, %v3405
  %v3407 = vrot.slane %v3385, %v3406
  %v3408 = vlaneseq
  %v3409 = vshrl.u32 %v3408, 7
  %v3410 = vsub.s32 0, %v3409
  %v3411 = vrot.slane %v3386, %v3410
  %v3412 = vlaneseq
  %v3413 = vshrl.u32 %v3412, 7
  %v3414 = vsub.s32 0, %v3413
  %v3415 = vrot.slane %v3387, %v3414
  %v3416 = vlaneseq
  %v3417 = vshrl.u32 %v3416, 7
  %v3418 = vsub.s32 0, %v3417
  %v3419 = vrot.slane %v3388, %v3418
  %v3420 = vlaneseq
  %v3421 = vshrl.u32 %v3420, 7
  %v3422 = vsub.s32 0, %v3421
  %v3423 = vrot.slane %v3389, %v3422
  %v3424 = vlaneseq
  %v3425 = vshrl.u32 %v3424, 7
  %v3426 = vsub.s32 0, %v3425
  %v3427 = vrot.slane %v3390, %v3426
  %v3428 = vlaneseq
  %v3429 = vshrl.u32 %v3428, 7
  %v3430 = vsub.s32 0, %v3429
  %v3431 = vrot.slane %v3391, %v3430
  %3440 = vrot.lane.b32.xlu0 %v1314, 126
  %v3441 = vpop.permute.xlu0 %3440
  %3442 = vrot.lane.b32.xlu0 %v1318, 126
  %v3443 = vpop.permute.xlu0 %3442
  %v3446 = vmul.f32 %v3403, %v3441
  %v3447 = vmul.f32 %v3407, %v3441
  %v3448 = vmul.f32 %v3411, %v3441
  %v3449 = vmul.f32 %v3415, %v3441
  %v3450 = vmul.f32 %v3419, %v3441
  %v3451 = vmul.f32 %v3423, %v3441
  %v3452 = vmul.f32 %v3427, %v3441
  %v3453 = vmul.f32 %v3431, %v3441
  %v3454 = vmul.f32 %v3403, %v3443
  %v3455 = vmul.f32 %v3407, %v3443
  %v3456 = vmul.f32 %v3411, %v3443
  %v3457 = vmul.f32 %v3415, %v3443
  %v3458 = vmul.f32 %v3419, %v3443
  %v3459 = vmul.f32 %v3423, %v3443
  %v3460 = vmul.f32 %v3427, %v3443
  %v3461 = vmul.f32 %v3431, %v3443
  %v3462 = vadd.f32 %v3367, %v3446
  %v3463 = vadd.f32 %v3368, %v3447
  %v3464 = vadd.f32 %v3369, %v3448
  %v3465 = vadd.f32 %v3370, %v3449
  %v3466 = vadd.f32 %v3371, %v3450
  %v3467 = vadd.f32 %v3372, %v3451
  %v3468 = vadd.f32 %v3373, %v3452
  %v3469 = vadd.f32 %v3374, %v3453
  %v3470 = vadd.f32 %v3375, %v3454
  %v3471 = vadd.f32 %v3376, %v3455
  %v3472 = vadd.f32 %v3377, %v3456
  %v3473 = vadd.f32 %v3378, %v3457
  %v3474 = vadd.f32 %v3379, %v3458
  %v3475 = vadd.f32 %v3380, %v3459
  %v3476 = vadd.f32 %v3381, %v3460
  %v3477 = vadd.f32 %v3382, %v3461
  %s3478 = scalar_lea.vmem %s2, 168
  %v3479 = vld [vmem:[%s3478] sm:$0x1]
  %v3480 = vld [vmem:[%s3478 + $0x1] sm:$0x1]
  %v3481 = vld [vmem:[%s3478 + $0x2] sm:$0x1]
  %v3482 = vld [vmem:[%s3478 + $0x3] sm:$0x1]
  %v3483 = vld [vmem:[%s3478 + $0x4] sm:$0x1]
  %v3484 = vld [vmem:[%s3478 + $0x5] sm:$0x1]
  %v3485 = vld [vmem:[%s3478 + $0x6] sm:$0x1]
  %v3486 = vld [vmem:[%s3478 + $0x7] sm:$0x1]
  %v3495 = vlaneseq
  %v3496 = vshrl.u32 %v3495, 7
  %v3497 = vsub.s32 0, %v3496
  %v3498 = vrot.slane %v3479, %v3497
  %v3499 = vlaneseq
  %v3500 = vshrl.u32 %v3499, 7
  %v3501 = vsub.s32 0, %v3500
  %v3502 = vrot.slane %v3480, %v3501
  %v3503 = vlaneseq
  %v3504 = vshrl.u32 %v3503, 7
  %v3505 = vsub.s32 0, %v3504
  %v3506 = vrot.slane %v3481, %v3505
  %v3507 = vlaneseq
  %v3508 = vshrl.u32 %v3507, 7
  %v3509 = vsub.s32 0, %v3508
  %v3510 = vrot.slane %v3482, %v3509
  %v3511 = vlaneseq
  %v3512 = vshrl.u32 %v3511, 7
  %v3513 = vsub.s32 0, %v3512
  %v3514 = vrot.slane %v3483, %v3513
  %v3515 = vlaneseq
  %v3516 = vshrl.u32 %v3515, 7
  %v3517 = vsub.s32 0, %v3516
  %v3518 = vrot.slane %v3484, %v3517
  %v3519 = vlaneseq
  %v3520 = vshrl.u32 %v3519, 7
  %v3521 = vsub.s32 0, %v3520
  %v3522 = vrot.slane %v3485, %v3521
  %v3523 = vlaneseq
  %v3524 = vshrl.u32 %v3523, 7
  %v3525 = vsub.s32 0, %v3524
  %v3526 = vrot.slane %v3486, %v3525
  %v3535 = vmul.f32 %v3498, %v1314
  %v3536 = vmul.f32 %v3502, %v1314
  %v3537 = vmul.f32 %v3506, %v1314
  %v3538 = vmul.f32 %v3510, %v1314
  %v3539 = vmul.f32 %v3514, %v1314
  %v3540 = vmul.f32 %v3518, %v1314
  %v3541 = vmul.f32 %v3522, %v1314
  %v3542 = vmul.f32 %v3526, %v1314
  %v3543 = vmul.f32 %v3498, %v1318
  %v3544 = vmul.f32 %v3502, %v1318
  %v3545 = vmul.f32 %v3506, %v1318
  %v3546 = vmul.f32 %v3510, %v1318
  %v3547 = vmul.f32 %v3514, %v1318
  %v3548 = vmul.f32 %v3518, %v1318
  %v3549 = vmul.f32 %v3522, %v1318
  %v3550 = vmul.f32 %v3526, %v1318
  %v3567 = vrot.slane %v3535, 1
  %v3568 = vrot.slane %v3536, 1
  %v3569 = vrot.slane %v3537, 1
  %v3570 = vrot.slane %v3538, 1
  %v3571 = vrot.slane %v3539, 1
  %v3572 = vrot.slane %v3540, 1
  %v3573 = vrot.slane %v3541, 1
  %v3574 = vrot.slane %v3542, 1
  %v3575 = vrot.slane %v3543, 1
  %v3576 = vrot.slane %v3544, 1
  %v3577 = vrot.slane %v3545, 1
  %v3578 = vrot.slane %v3546, 1
  %v3579 = vrot.slane %v3547, 1
  %v3580 = vrot.slane %v3548, 1
  %v3581 = vrot.slane %v3549, 1
  %v3582 = vrot.slane %v3550, 1
  %v3599 = vadd.f32 %v3462, %v3567
  %v3600 = vadd.f32 %v3463, %v3568
  %v3601 = vadd.f32 %v3464, %v3569
  %v3602 = vadd.f32 %v3465, %v3570
  %v3603 = vadd.f32 %v3466, %v3571
  %v3604 = vadd.f32 %v3467, %v3572
  %v3605 = vadd.f32 %v3468, %v3573
  %v3606 = vadd.f32 %v3469, %v3574
  %v3607 = vadd.f32 %v3470, %v3575
  %v3608 = vadd.f32 %v3471, %v3576
  %v3609 = vadd.f32 %v3472, %v3577
  %v3610 = vadd.f32 %v3473, %v3578
  %v3611 = vadd.f32 %v3474, %v3579
  %v3612 = vadd.f32 %v3475, %v3580
  %v3613 = vadd.f32 %v3476, %v3581
  %v3614 = vadd.f32 %v3477, %v3582
  %s3615 = scalar_lea.vmem %s2, 176
  %v3616 = vld [vmem:[%s3615] sm:$0x1]
  %v3617 = vld [vmem:[%s3615 + $0x1] sm:$0x1]
  %v3618 = vld [vmem:[%s3615 + $0x2] sm:$0x1]
  %v3619 = vld [vmem:[%s3615 + $0x3] sm:$0x1]
  %v3620 = vld [vmem:[%s3615 + $0x4] sm:$0x1]
  %v3621 = vld [vmem:[%s3615 + $0x5] sm:$0x1]
  %v3622 = vld [vmem:[%s3615 + $0x6] sm:$0x1]
  %v3623 = vld [vmem:[%s3615 + $0x7] sm:$0x1]
  %v3632 = vlaneseq
  %v3633 = vshrl.u32 %v3632, 7
  %v3634 = vsub.s32 0, %v3633
  %v3635 = vrot.slane %v3616, %v3634
  %v3636 = vlaneseq
  %v3637 = vshrl.u32 %v3636, 7
  %v3638 = vsub.s32 0, %v3637
  %v3639 = vrot.slane %v3617, %v3638
  %v3640 = vlaneseq
  %v3641 = vshrl.u32 %v3640, 7
  %v3642 = vsub.s32 0, %v3641
  %v3643 = vrot.slane %v3618, %v3642
  %v3644 = vlaneseq
  %v3645 = vshrl.u32 %v3644, 7
  %v3646 = vsub.s32 0, %v3645
  %v3647 = vrot.slane %v3619, %v3646
  %v3648 = vlaneseq
  %v3649 = vshrl.u32 %v3648, 7
  %v3650 = vsub.s32 0, %v3649
  %v3651 = vrot.slane %v3620, %v3650
  %v3652 = vlaneseq
  %v3653 = vshrl.u32 %v3652, 7
  %v3654 = vsub.s32 0, %v3653
  %v3655 = vrot.slane %v3621, %v3654
  %v3656 = vlaneseq
  %v3657 = vshrl.u32 %v3656, 7
  %v3658 = vsub.s32 0, %v3657
  %v3659 = vrot.slane %v3622, %v3658
  %v3660 = vlaneseq
  %v3661 = vshrl.u32 %v3660, 7
  %v3662 = vsub.s32 0, %v3661
  %v3663 = vrot.slane %v3623, %v3662
  %v3672 = vrot.slane %v1314, 1
  %v3673 = vrot.slane %v1318, 1
  %3674 = vrot.lane.b32.xlu0 %v3672, 127
  %v3675 = vpop.permute.xlu0 %3674
  %3676 = vrot.lane.b32.xlu0 %v3673, 127
  %v3677 = vpop.permute.xlu0 %3676
  %v3680 = vmul.f32 %v3635, %v3675
  %v3681 = vmul.f32 %v3639, %v3675
  %v3682 = vmul.f32 %v3643, %v3675
  %v3683 = vmul.f32 %v3647, %v3675
  %v3684 = vmul.f32 %v3651, %v3675
  %v3685 = vmul.f32 %v3655, %v3675
  %v3686 = vmul.f32 %v3659, %v3675
  %v3687 = vmul.f32 %v3663, %v3675
  %v3688 = vmul.f32 %v3635, %v3677
  %v3689 = vmul.f32 %v3639, %v3677
  %v3690 = vmul.f32 %v3643, %v3677
  %v3691 = vmul.f32 %v3647, %v3677
  %v3692 = vmul.f32 %v3651, %v3677
  %v3693 = vmul.f32 %v3655, %v3677
  %v3694 = vmul.f32 %v3659, %v3677
  %v3695 = vmul.f32 %v3663, %v3677
  %v3696 = vadd.f32 %v3599, %v3680
  %v3697 = vadd.f32 %v3600, %v3681
  %v3698 = vadd.f32 %v3601, %v3682
  %v3699 = vadd.f32 %v3602, %v3683
  %v3700 = vadd.f32 %v3603, %v3684
  %v3701 = vadd.f32 %v3604, %v3685
  %v3702 = vadd.f32 %v3605, %v3686
  %v3703 = vadd.f32 %v3606, %v3687
  %v3704 = vadd.f32 %v3607, %v3688
  %v3705 = vadd.f32 %v3608, %v3689
  %v3706 = vadd.f32 %v3609, %v3690
  %v3707 = vadd.f32 %v3610, %v3691
  %v3708 = vadd.f32 %v3611, %v3692
  %v3709 = vadd.f32 %v3612, %v3693
  %v3710 = vadd.f32 %v3613, %v3694
  %v3711 = vadd.f32 %v3614, %v3695
  %s3712 = scalar_lea.vmem %s2, 184
  %v3713 = vld [vmem:[%s3712] sm:$0x1]
  %v3714 = vld [vmem:[%s3712 + $0x1] sm:$0x1]
  %v3715 = vld [vmem:[%s3712 + $0x2] sm:$0x1]
  %v3716 = vld [vmem:[%s3712 + $0x3] sm:$0x1]
  %v3717 = vld [vmem:[%s3712 + $0x4] sm:$0x1]
  %v3718 = vld [vmem:[%s3712 + $0x5] sm:$0x1]
  %v3719 = vld [vmem:[%s3712 + $0x6] sm:$0x1]
  %v3720 = vld [vmem:[%s3712 + $0x7] sm:$0x1]
  %v3729 = vlaneseq
  %v3730 = vshrl.u32 %v3729, 7
  %v3731 = vsub.s32 0, %v3730
  %v3732 = vrot.slane %v3713, %v3731
  %v3733 = vlaneseq
  %v3734 = vshrl.u32 %v3733, 7
  %v3735 = vsub.s32 0, %v3734
  %v3736 = vrot.slane %v3714, %v3735
  %v3737 = vlaneseq
  %v3738 = vshrl.u32 %v3737, 7
  %v3739 = vsub.s32 0, %v3738
  %v3740 = vrot.slane %v3715, %v3739
  %v3741 = vlaneseq
  %v3742 = vshrl.u32 %v3741, 7
  %v3743 = vsub.s32 0, %v3742
  %v3744 = vrot.slane %v3716, %v3743
  %v3745 = vlaneseq
  %v3746 = vshrl.u32 %v3745, 7
  %v3747 = vsub.s32 0, %v3746
  %v3748 = vrot.slane %v3717, %v3747
  %v3749 = vlaneseq
  %v3750 = vshrl.u32 %v3749, 7
  %v3751 = vsub.s32 0, %v3750
  %v3752 = vrot.slane %v3718, %v3751
  %v3753 = vlaneseq
  %v3754 = vshrl.u32 %v3753, 7
  %v3755 = vsub.s32 0, %v3754
  %v3756 = vrot.slane %v3719, %v3755
  %v3757 = vlaneseq
  %v3758 = vshrl.u32 %v3757, 7
  %v3759 = vsub.s32 0, %v3758
  %v3760 = vrot.slane %v3720, %v3759
  %3769 = vrot.lane.b32.xlu0 %v3672, 126
  %v3770 = vpop.permute.xlu0 %3769
  %3771 = vrot.lane.b32.xlu0 %v3673, 126
  %v3772 = vpop.permute.xlu0 %3771
  %v3775 = vmul.f32 %v3732, %v3770
  %v3776 = vmul.f32 %v3736, %v3770
  %v3777 = vmul.f32 %v3740, %v3770
  %v3778 = vmul.f32 %v3744, %v3770
  %v3779 = vmul.f32 %v3748, %v3770
  %v3780 = vmul.f32 %v3752, %v3770
  %v3781 = vmul.f32 %v3756, %v3770
  %v3782 = vmul.f32 %v3760, %v3770
  %v3783 = vmul.f32 %v3732, %v3772
  %v3784 = vmul.f32 %v3736, %v3772
  %v3785 = vmul.f32 %v3740, %v3772
  %v3786 = vmul.f32 %v3744, %v3772
  %v3787 = vmul.f32 %v3748, %v3772
  %v3788 = vmul.f32 %v3752, %v3772
  %v3789 = vmul.f32 %v3756, %v3772
  %v3790 = vmul.f32 %v3760, %v3772
  %v3791 = vadd.f32 %v3696, %v3775
  %v3792 = vadd.f32 %v3697, %v3776
  %v3793 = vadd.f32 %v3698, %v3777
  %v3794 = vadd.f32 %v3699, %v3778
  %v3795 = vadd.f32 %v3700, %v3779
  %v3796 = vadd.f32 %v3701, %v3780
  %v3797 = vadd.f32 %v3702, %v3781
  %v3798 = vadd.f32 %v3703, %v3782
  %v3799 = vadd.f32 %v3704, %v3783
  %v3800 = vadd.f32 %v3705, %v3784
  %v3801 = vadd.f32 %v3706, %v3785
  %v3802 = vadd.f32 %v3707, %v3786
  %v3803 = vadd.f32 %v3708, %v3787
  %v3804 = vadd.f32 %v3709, %v3788
  %v3805 = vadd.f32 %v3710, %v3789
  %v3806 = vadd.f32 %v3711, %v3790
  %s3807 = scalar_lea.vmem %s2, 192
  %v3808 = vld [vmem:[%s3807] sm:$0x1]
  %v3809 = vld [vmem:[%s3807 + $0x1] sm:$0x1]
  %v3810 = vld [vmem:[%s3807 + $0x2] sm:$0x1]
  %v3811 = vld [vmem:[%s3807 + $0x3] sm:$0x1]
  %v3812 = vld [vmem:[%s3807 + $0x4] sm:$0x1]
  %v3813 = vld [vmem:[%s3807 + $0x5] sm:$0x1]
  %v3814 = vld [vmem:[%s3807 + $0x6] sm:$0x1]
  %v3815 = vld [vmem:[%s3807 + $0x7] sm:$0x1]
  %v3824 = vlaneseq
  %v3825 = vshrl.u32 %v3824, 7
  %v3826 = vsub.s32 0, %v3825
  %v3827 = vrot.slane %v3808, %v3826
  %v3828 = vlaneseq
  %v3829 = vshrl.u32 %v3828, 7
  %v3830 = vsub.s32 0, %v3829
  %v3831 = vrot.slane %v3809, %v3830
  %v3832 = vlaneseq
  %v3833 = vshrl.u32 %v3832, 7
  %v3834 = vsub.s32 0, %v3833
  %v3835 = vrot.slane %v3810, %v3834
  %v3836 = vlaneseq
  %v3837 = vshrl.u32 %v3836, 7
  %v3838 = vsub.s32 0, %v3837
  %v3839 = vrot.slane %v3811, %v3838
  %v3840 = vlaneseq
  %v3841 = vshrl.u32 %v3840, 7
  %v3842 = vsub.s32 0, %v3841
  %v3843 = vrot.slane %v3812, %v3842
  %v3844 = vlaneseq
  %v3845 = vshrl.u32 %v3844, 7
  %v3846 = vsub.s32 0, %v3845
  %v3847 = vrot.slane %v3813, %v3846
  %v3848 = vlaneseq
  %v3849 = vshrl.u32 %v3848, 7
  %v3850 = vsub.s32 0, %v3849
  %v3851 = vrot.slane %v3814, %v3850
  %v3852 = vlaneseq
  %v3853 = vshrl.u32 %v3852, 7
  %v3854 = vsub.s32 0, %v3853
  %v3855 = vrot.slane %v3815, %v3854
  %v3864 = vmul.f32 %v3827, %v1314
  %v3865 = vmul.f32 %v3831, %v1314
  %v3866 = vmul.f32 %v3835, %v1314
  %v3867 = vmul.f32 %v3839, %v1314
  %v3868 = vmul.f32 %v3843, %v1314
  %v3869 = vmul.f32 %v3847, %v1314
  %v3870 = vmul.f32 %v3851, %v1314
  %v3871 = vmul.f32 %v3855, %v1314
  %v3872 = vmul.f32 %v3827, %v1318
  %v3873 = vmul.f32 %v3831, %v1318
  %v3874 = vmul.f32 %v3835, %v1318
  %v3875 = vmul.f32 %v3839, %v1318
  %v3876 = vmul.f32 %v3843, %v1318
  %v3877 = vmul.f32 %v3847, %v1318
  %v3878 = vmul.f32 %v3851, %v1318
  %v3879 = vmul.f32 %v3855, %v1318
  %v3896 = vrot.slane %v3864, 2
  %v3897 = vrot.slane %v3865, 2
  %v3898 = vrot.slane %v3866, 2
  %v3899 = vrot.slane %v3867, 2
  %v3900 = vrot.slane %v3868, 2
  %v3901 = vrot.slane %v3869, 2
  %v3902 = vrot.slane %v3870, 2
  %v3903 = vrot.slane %v3871, 2
  %v3904 = vrot.slane %v3872, 2
  %v3905 = vrot.slane %v3873, 2
  %v3906 = vrot.slane %v3874, 2
  %v3907 = vrot.slane %v3875, 2
  %v3908 = vrot.slane %v3876, 2
  %v3909 = vrot.slane %v3877, 2
  %v3910 = vrot.slane %v3878, 2
  %v3911 = vrot.slane %v3879, 2
  %v3928 = vadd.f32 %v3791, %v3896
  %v3929 = vadd.f32 %v3792, %v3897
  %v3930 = vadd.f32 %v3793, %v3898
  %v3931 = vadd.f32 %v3794, %v3899
  %v3932 = vadd.f32 %v3795, %v3900
  %v3933 = vadd.f32 %v3796, %v3901
  %v3934 = vadd.f32 %v3797, %v3902
  %v3935 = vadd.f32 %v3798, %v3903
  %v3936 = vadd.f32 %v3799, %v3904
  %v3937 = vadd.f32 %v3800, %v3905
  %v3938 = vadd.f32 %v3801, %v3906
  %v3939 = vadd.f32 %v3802, %v3907
  %v3940 = vadd.f32 %v3803, %v3908
  %v3941 = vadd.f32 %v3804, %v3909
  %v3942 = vadd.f32 %v3805, %v3910
  %v3943 = vadd.f32 %v3806, %v3911
  %s3944 = scalar_lea.vmem %s2, 200
  %v3945 = vld [vmem:[%s3944] sm:$0x1]
  %v3946 = vld [vmem:[%s3944 + $0x1] sm:$0x1]
  %v3947 = vld [vmem:[%s3944 + $0x2] sm:$0x1]
  %v3948 = vld [vmem:[%s3944 + $0x3] sm:$0x1]
  %v3949 = vld [vmem:[%s3944 + $0x4] sm:$0x1]
  %v3950 = vld [vmem:[%s3944 + $0x5] sm:$0x1]
  %v3951 = vld [vmem:[%s3944 + $0x6] sm:$0x1]
  %v3952 = vld [vmem:[%s3944 + $0x7] sm:$0x1]
  %v3961 = vlaneseq
  %v3962 = vshrl.u32 %v3961, 7
  %v3963 = vsub.s32 0, %v3962
  %v3964 = vrot.slane %v3945, %v3963
  %v3965 = vlaneseq
  %v3966 = vshrl.u32 %v3965, 7
  %v3967 = vsub.s32 0, %v3966
  %v3968 = vrot.slane %v3946, %v3967
  %v3969 = vlaneseq
  %v3970 = vshrl.u32 %v3969, 7
  %v3971 = vsub.s32 0, %v3970
  %v3972 = vrot.slane %v3947, %v3971
  %v3973 = vlaneseq
  %v3974 = vshrl.u32 %v3973, 7
  %v3975 = vsub.s32 0, %v3974
  %v3976 = vrot.slane %v3948, %v3975
  %v3977 = vlaneseq
  %v3978 = vshrl.u32 %v3977, 7
  %v3979 = vsub.s32 0, %v3978
  %v3980 = vrot.slane %v3949, %v3979
  %v3981 = vlaneseq
  %v3982 = vshrl.u32 %v3981, 7
  %v3983 = vsub.s32 0, %v3982
  %v3984 = vrot.slane %v3950, %v3983
  %v3985 = vlaneseq
  %v3986 = vshrl.u32 %v3985, 7
  %v3987 = vsub.s32 0, %v3986
  %v3988 = vrot.slane %v3951, %v3987
  %v3989 = vlaneseq
  %v3990 = vshrl.u32 %v3989, 7
  %v3991 = vsub.s32 0, %v3990
  %v3992 = vrot.slane %v3952, %v3991
  %v4001 = vrot.slane %v1314, 2
  %v4002 = vrot.slane %v1318, 2
  %4003 = vrot.lane.b32.xlu0 %v4001, 127
  %v4004 = vpop.permute.xlu0 %4003
  %4005 = vrot.lane.b32.xlu0 %v4002, 127
  %v4006 = vpop.permute.xlu0 %4005
  %v4009 = vmul.f32 %v3964, %v4004
  %v4010 = vmul.f32 %v3968, %v4004
  %v4011 = vmul.f32 %v3972, %v4004
  %v4012 = vmul.f32 %v3976, %v4004
  %v4013 = vmul.f32 %v3980, %v4004
  %v4014 = vmul.f32 %v3984, %v4004
  %v4015 = vmul.f32 %v3988, %v4004
  %v4016 = vmul.f32 %v3992, %v4004
  %v4017 = vmul.f32 %v3964, %v4006
  %v4018 = vmul.f32 %v3968, %v4006
  %v4019 = vmul.f32 %v3972, %v4006
  %v4020 = vmul.f32 %v3976, %v4006
  %v4021 = vmul.f32 %v3980, %v4006
  %v4022 = vmul.f32 %v3984, %v4006
  %v4023 = vmul.f32 %v3988, %v4006
  %v4024 = vmul.f32 %v3992, %v4006
  %v4025 = vadd.f32 %v3928, %v4009
  %v4026 = vadd.f32 %v3929, %v4010
  %v4027 = vadd.f32 %v3930, %v4011
  %v4028 = vadd.f32 %v3931, %v4012
  %v4029 = vadd.f32 %v3932, %v4013
  %v4030 = vadd.f32 %v3933, %v4014
  %v4031 = vadd.f32 %v3934, %v4015
  %v4032 = vadd.f32 %v3935, %v4016
  %v4033 = vadd.f32 %v3936, %v4017
  %v4034 = vadd.f32 %v3937, %v4018
  %v4035 = vadd.f32 %v3938, %v4019
  %v4036 = vadd.f32 %v3939, %v4020
  %v4037 = vadd.f32 %v3940, %v4021
  %v4038 = vadd.f32 %v3941, %v4022
  %v4039 = vadd.f32 %v3942, %v4023
  %v4040 = vadd.f32 %v3943, %v4024
  %s4041 = scalar_lea.vmem %s2, 208
  %v4042 = vld [vmem:[%s4041] sm:$0x1]
  %v4043 = vld [vmem:[%s4041 + $0x1] sm:$0x1]
  %v4044 = vld [vmem:[%s4041 + $0x2] sm:$0x1]
  %v4045 = vld [vmem:[%s4041 + $0x3] sm:$0x1]
  %v4046 = vld [vmem:[%s4041 + $0x4] sm:$0x1]
  %v4047 = vld [vmem:[%s4041 + $0x5] sm:$0x1]
  %v4048 = vld [vmem:[%s4041 + $0x6] sm:$0x1]
  %v4049 = vld [vmem:[%s4041 + $0x7] sm:$0x1]
  %v4058 = vlaneseq
  %v4059 = vshrl.u32 %v4058, 7
  %v4060 = vsub.s32 0, %v4059
  %v4061 = vrot.slane %v4042, %v4060
  %v4062 = vlaneseq
  %v4063 = vshrl.u32 %v4062, 7
  %v4064 = vsub.s32 0, %v4063
  %v4065 = vrot.slane %v4043, %v4064
  %v4066 = vlaneseq
  %v4067 = vshrl.u32 %v4066, 7
  %v4068 = vsub.s32 0, %v4067
  %v4069 = vrot.slane %v4044, %v4068
  %v4070 = vlaneseq
  %v4071 = vshrl.u32 %v4070, 7
  %v4072 = vsub.s32 0, %v4071
  %v4073 = vrot.slane %v4045, %v4072
  %v4074 = vlaneseq
  %v4075 = vshrl.u32 %v4074, 7
  %v4076 = vsub.s32 0, %v4075
  %v4077 = vrot.slane %v4046, %v4076
  %v4078 = vlaneseq
  %v4079 = vshrl.u32 %v4078, 7
  %v4080 = vsub.s32 0, %v4079
  %v4081 = vrot.slane %v4047, %v4080
  %v4082 = vlaneseq
  %v4083 = vshrl.u32 %v4082, 7
  %v4084 = vsub.s32 0, %v4083
  %v4085 = vrot.slane %v4048, %v4084
  %v4086 = vlaneseq
  %v4087 = vshrl.u32 %v4086, 7
  %v4088 = vsub.s32 0, %v4087
  %v4089 = vrot.slane %v4049, %v4088
  %4098 = vrot.lane.b32.xlu0 %v4001, 126
  %v4099 = vpop.permute.xlu0 %4098
  %4100 = vrot.lane.b32.xlu0 %v4002, 126
  %v4101 = vpop.permute.xlu0 %4100
  %v4104 = vmul.f32 %v4061, %v4099
  %v4105 = vmul.f32 %v4065, %v4099
  %v4106 = vmul.f32 %v4069, %v4099
  %v4107 = vmul.f32 %v4073, %v4099
  %v4108 = vmul.f32 %v4077, %v4099
  %v4109 = vmul.f32 %v4081, %v4099
  %v4110 = vmul.f32 %v4085, %v4099
  %v4111 = vmul.f32 %v4089, %v4099
  %v4112 = vmul.f32 %v4061, %v4101
  %v4113 = vmul.f32 %v4065, %v4101
  %v4114 = vmul.f32 %v4069, %v4101
  %v4115 = vmul.f32 %v4073, %v4101
  %v4116 = vmul.f32 %v4077, %v4101
  %v4117 = vmul.f32 %v4081, %v4101
  %v4118 = vmul.f32 %v4085, %v4101
  %v4119 = vmul.f32 %v4089, %v4101
  %v4120 = vadd.f32 %v4025, %v4104
  %v4121 = vadd.f32 %v4026, %v4105
  %v4122 = vadd.f32 %v4027, %v4106
  %v4123 = vadd.f32 %v4028, %v4107
  %v4124 = vadd.f32 %v4029, %v4108
  %v4125 = vadd.f32 %v4030, %v4109
  %v4126 = vadd.f32 %v4031, %v4110
  %v4127 = vadd.f32 %v4032, %v4111
  %v4128 = vadd.f32 %v4033, %v4112
  %v4129 = vadd.f32 %v4034, %v4113
  %v4130 = vadd.f32 %v4035, %v4114
  %v4131 = vadd.f32 %v4036, %v4115
  %v4132 = vadd.f32 %v4037, %v4116
  %v4133 = vadd.f32 %v4038, %v4117
  %v4134 = vadd.f32 %v4039, %v4118
  %v4135 = vadd.f32 %v4040, %v4119
  %s4136 = scalar_lea.vmem %s2, 216
  %v4137 = vld [vmem:[%s4136] sm:$0x1]
  %v4138 = vld [vmem:[%s4136 + $0x1] sm:$0x1]
  %v4139 = vld [vmem:[%s4136 + $0x2] sm:$0x1]
  %v4140 = vld [vmem:[%s4136 + $0x3] sm:$0x1]
  %v4141 = vld [vmem:[%s4136 + $0x4] sm:$0x1]
  %v4142 = vld [vmem:[%s4136 + $0x5] sm:$0x1]
  %v4143 = vld [vmem:[%s4136 + $0x6] sm:$0x1]
  %v4144 = vld [vmem:[%s4136 + $0x7] sm:$0x1]
  %v4153 = vlaneseq
  %v4154 = vshrl.u32 %v4153, 7
  %v4155 = vsub.s32 0, %v4154
  %v4156 = vrot.slane %v4137, %v4155
  %v4157 = vlaneseq
  %v4158 = vshrl.u32 %v4157, 7
  %v4159 = vsub.s32 0, %v4158
  %v4160 = vrot.slane %v4138, %v4159
  %v4161 = vlaneseq
  %v4162 = vshrl.u32 %v4161, 7
  %v4163 = vsub.s32 0, %v4162
  %v4164 = vrot.slane %v4139, %v4163
  %v4165 = vlaneseq
  %v4166 = vshrl.u32 %v4165, 7
  %v4167 = vsub.s32 0, %v4166
  %v4168 = vrot.slane %v4140, %v4167
  %v4169 = vlaneseq
  %v4170 = vshrl.u32 %v4169, 7
  %v4171 = vsub.s32 0, %v4170
  %v4172 = vrot.slane %v4141, %v4171
  %v4173 = vlaneseq
  %v4174 = vshrl.u32 %v4173, 7
  %v4175 = vsub.s32 0, %v4174
  %v4176 = vrot.slane %v4142, %v4175
  %v4177 = vlaneseq
  %v4178 = vshrl.u32 %v4177, 7
  %v4179 = vsub.s32 0, %v4178
  %v4180 = vrot.slane %v4143, %v4179
  %v4181 = vlaneseq
  %v4182 = vshrl.u32 %v4181, 7
  %v4183 = vsub.s32 0, %v4182
  %v4184 = vrot.slane %v4144, %v4183
  %v4193 = vmul.f32 %v4156, %v1315
  %v4194 = vmul.f32 %v4160, %v1315
  %v4195 = vmul.f32 %v4164, %v1315
  %v4196 = vmul.f32 %v4168, %v1315
  %v4197 = vmul.f32 %v4172, %v1315
  %v4198 = vmul.f32 %v4176, %v1315
  %v4199 = vmul.f32 %v4180, %v1315
  %v4200 = vmul.f32 %v4184, %v1315
  %v4201 = vmul.f32 %v4156, %v1319
  %v4202 = vmul.f32 %v4160, %v1319
  %v4203 = vmul.f32 %v4164, %v1319
  %v4204 = vmul.f32 %v4168, %v1319
  %v4205 = vmul.f32 %v4172, %v1319
  %v4206 = vmul.f32 %v4176, %v1319
  %v4207 = vmul.f32 %v4180, %v1319
  %v4208 = vmul.f32 %v4184, %v1319
  %v4209 = vadd.f32 %v4120, %v4193
  %v4210 = vadd.f32 %v4121, %v4194
  %v4211 = vadd.f32 %v4122, %v4195
  %v4212 = vadd.f32 %v4123, %v4196
  %v4213 = vadd.f32 %v4124, %v4197
  %v4214 = vadd.f32 %v4125, %v4198
  %v4215 = vadd.f32 %v4126, %v4199
  %v4216 = vadd.f32 %v4127, %v4200
  %v4217 = vadd.f32 %v4128, %v4201
  %v4218 = vadd.f32 %v4129, %v4202
  %v4219 = vadd.f32 %v4130, %v4203
  %v4220 = vadd.f32 %v4131, %v4204
  %v4221 = vadd.f32 %v4132, %v4205
  %v4222 = vadd.f32 %v4133, %v4206
  %v4223 = vadd.f32 %v4134, %v4207
  %v4224 = vadd.f32 %v4135, %v4208
  %s4225 = scalar_lea.vmem %s2, 224
  %v4226 = vld [vmem:[%s4225] sm:$0x1]
  %v4227 = vld [vmem:[%s4225 + $0x1] sm:$0x1]
  %v4228 = vld [vmem:[%s4225 + $0x2] sm:$0x1]
  %v4229 = vld [vmem:[%s4225 + $0x3] sm:$0x1]
  %v4230 = vld [vmem:[%s4225 + $0x4] sm:$0x1]
  %v4231 = vld [vmem:[%s4225 + $0x5] sm:$0x1]
  %v4232 = vld [vmem:[%s4225 + $0x6] sm:$0x1]
  %v4233 = vld [vmem:[%s4225 + $0x7] sm:$0x1]
  %v4242 = vlaneseq
  %v4243 = vshrl.u32 %v4242, 7
  %v4244 = vsub.s32 0, %v4243
  %v4245 = vrot.slane %v4226, %v4244
  %v4246 = vlaneseq
  %v4247 = vshrl.u32 %v4246, 7
  %v4248 = vsub.s32 0, %v4247
  %v4249 = vrot.slane %v4227, %v4248
  %v4250 = vlaneseq
  %v4251 = vshrl.u32 %v4250, 7
  %v4252 = vsub.s32 0, %v4251
  %v4253 = vrot.slane %v4228, %v4252
  %v4254 = vlaneseq
  %v4255 = vshrl.u32 %v4254, 7
  %v4256 = vsub.s32 0, %v4255
  %v4257 = vrot.slane %v4229, %v4256
  %v4258 = vlaneseq
  %v4259 = vshrl.u32 %v4258, 7
  %v4260 = vsub.s32 0, %v4259
  %v4261 = vrot.slane %v4230, %v4260
  %v4262 = vlaneseq
  %v4263 = vshrl.u32 %v4262, 7
  %v4264 = vsub.s32 0, %v4263
  %v4265 = vrot.slane %v4231, %v4264
  %v4266 = vlaneseq
  %v4267 = vshrl.u32 %v4266, 7
  %v4268 = vsub.s32 0, %v4267
  %v4269 = vrot.slane %v4232, %v4268
  %v4270 = vlaneseq
  %v4271 = vshrl.u32 %v4270, 7
  %v4272 = vsub.s32 0, %v4271
  %v4273 = vrot.slane %v4233, %v4272
  %4284 = vrot.lane.b32.xlu0 %v1315, 127
  %v4285 = vpop.permute.xlu0 %4284
  %4286 = vrot.lane.b32.xlu0 %v1319, 127
  %v4287 = vpop.permute.xlu0 %4286
  %v4290 = vmul.f32 %v4245, %v4285
  %v4291 = vmul.f32 %v4249, %v4285
  %v4292 = vmul.f32 %v4253, %v4285
  %v4293 = vmul.f32 %v4257, %v4285
  %v4294 = vmul.f32 %v4261, %v4285
  %v4295 = vmul.f32 %v4265, %v4285
  %v4296 = vmul.f32 %v4269, %v4285
  %v4297 = vmul.f32 %v4273, %v4285
  %v4298 = vmul.f32 %v4245, %v4287
  %v4299 = vmul.f32 %v4249, %v4287
  %v4300 = vmul.f32 %v4253, %v4287
  %v4301 = vmul.f32 %v4257, %v4287
  %v4302 = vmul.f32 %v4261, %v4287
  %v4303 = vmul.f32 %v4265, %v4287
  %v4304 = vmul.f32 %v4269, %v4287
  %v4305 = vmul.f32 %v4273, %v4287
  %v4306 = vadd.f32 %v4209, %v4290
  %v4307 = vadd.f32 %v4210, %v4291
  %v4308 = vadd.f32 %v4211, %v4292
  %v4309 = vadd.f32 %v4212, %v4293
  %v4310 = vadd.f32 %v4213, %v4294
  %v4311 = vadd.f32 %v4214, %v4295
  %v4312 = vadd.f32 %v4215, %v4296
  %v4313 = vadd.f32 %v4216, %v4297
  %v4314 = vadd.f32 %v4217, %v4298
  %v4315 = vadd.f32 %v4218, %v4299
  %v4316 = vadd.f32 %v4219, %v4300
  %v4317 = vadd.f32 %v4220, %v4301
  %v4318 = vadd.f32 %v4221, %v4302
  %v4319 = vadd.f32 %v4222, %v4303
  %v4320 = vadd.f32 %v4223, %v4304
  %v4321 = vadd.f32 %v4224, %v4305
  %s4322 = scalar_lea.vmem %s2, 232
  %v4323 = vld [vmem:[%s4322] sm:$0x1]
  %v4324 = vld [vmem:[%s4322 + $0x1] sm:$0x1]
  %v4325 = vld [vmem:[%s4322 + $0x2] sm:$0x1]
  %v4326 = vld [vmem:[%s4322 + $0x3] sm:$0x1]
  %v4327 = vld [vmem:[%s4322 + $0x4] sm:$0x1]
  %v4328 = vld [vmem:[%s4322 + $0x5] sm:$0x1]
  %v4329 = vld [vmem:[%s4322 + $0x6] sm:$0x1]
  %v4330 = vld [vmem:[%s4322 + $0x7] sm:$0x1]
  %v4339 = vlaneseq
  %v4340 = vshrl.u32 %v4339, 7
  %v4341 = vsub.s32 0, %v4340
  %v4342 = vrot.slane %v4323, %v4341
  %v4343 = vlaneseq
  %v4344 = vshrl.u32 %v4343, 7
  %v4345 = vsub.s32 0, %v4344
  %v4346 = vrot.slane %v4324, %v4345
  %v4347 = vlaneseq
  %v4348 = vshrl.u32 %v4347, 7
  %v4349 = vsub.s32 0, %v4348
  %v4350 = vrot.slane %v4325, %v4349
  %v4351 = vlaneseq
  %v4352 = vshrl.u32 %v4351, 7
  %v4353 = vsub.s32 0, %v4352
  %v4354 = vrot.slane %v4326, %v4353
  %v4355 = vlaneseq
  %v4356 = vshrl.u32 %v4355, 7
  %v4357 = vsub.s32 0, %v4356
  %v4358 = vrot.slane %v4327, %v4357
  %v4359 = vlaneseq
  %v4360 = vshrl.u32 %v4359, 7
  %v4361 = vsub.s32 0, %v4360
  %v4362 = vrot.slane %v4328, %v4361
  %v4363 = vlaneseq
  %v4364 = vshrl.u32 %v4363, 7
  %v4365 = vsub.s32 0, %v4364
  %v4366 = vrot.slane %v4329, %v4365
  %v4367 = vlaneseq
  %v4368 = vshrl.u32 %v4367, 7
  %v4369 = vsub.s32 0, %v4368
  %v4370 = vrot.slane %v4330, %v4369
  %4379 = vrot.lane.b32.xlu0 %v1315, 126
  %v4380 = vpop.permute.xlu0 %4379
  %4381 = vrot.lane.b32.xlu0 %v1319, 126
  %v4382 = vpop.permute.xlu0 %4381
  %v4385 = vmul.f32 %v4342, %v4380
  %v4386 = vmul.f32 %v4346, %v4380
  %v4387 = vmul.f32 %v4350, %v4380
  %v4388 = vmul.f32 %v4354, %v4380
  %v4389 = vmul.f32 %v4358, %v4380
  %v4390 = vmul.f32 %v4362, %v4380
  %v4391 = vmul.f32 %v4366, %v4380
  %v4392 = vmul.f32 %v4370, %v4380
  %v4393 = vmul.f32 %v4342, %v4382
  %v4394 = vmul.f32 %v4346, %v4382
  %v4395 = vmul.f32 %v4350, %v4382
  %v4396 = vmul.f32 %v4354, %v4382
  %v4397 = vmul.f32 %v4358, %v4382
  %v4398 = vmul.f32 %v4362, %v4382
  %v4399 = vmul.f32 %v4366, %v4382
  %v4400 = vmul.f32 %v4370, %v4382
  %v4401 = vadd.f32 %v4306, %v4385
  %v4402 = vadd.f32 %v4307, %v4386
  %v4403 = vadd.f32 %v4308, %v4387
  %v4404 = vadd.f32 %v4309, %v4388
  %v4405 = vadd.f32 %v4310, %v4389
  %v4406 = vadd.f32 %v4311, %v4390
  %v4407 = vadd.f32 %v4312, %v4391
  %v4408 = vadd.f32 %v4313, %v4392
  %v4409 = vadd.f32 %v4314, %v4393
  %v4410 = vadd.f32 %v4315, %v4394
  %v4411 = vadd.f32 %v4316, %v4395
  %v4412 = vadd.f32 %v4317, %v4396
  %v4413 = vadd.f32 %v4318, %v4397
  %v4414 = vadd.f32 %v4319, %v4398
  %v4415 = vadd.f32 %v4320, %v4399
  %v4416 = vadd.f32 %v4321, %v4400
  %s4417 = scalar_lea.vmem %s2, 240
  %v4418 = vld [vmem:[%s4417] sm:$0x1]
  %v4419 = vld [vmem:[%s4417 + $0x1] sm:$0x1]
  %v4420 = vld [vmem:[%s4417 + $0x2] sm:$0x1]
  %v4421 = vld [vmem:[%s4417 + $0x3] sm:$0x1]
  %v4422 = vld [vmem:[%s4417 + $0x4] sm:$0x1]
  %v4423 = vld [vmem:[%s4417 + $0x5] sm:$0x1]
  %v4424 = vld [vmem:[%s4417 + $0x6] sm:$0x1]
  %v4425 = vld [vmem:[%s4417 + $0x7] sm:$0x1]
  %v4434 = vlaneseq
  %v4435 = vshrl.u32 %v4434, 7
  %v4436 = vsub.s32 0, %v4435
  %v4437 = vrot.slane %v4418, %v4436
  %v4438 = vlaneseq
  %v4439 = vshrl.u32 %v4438, 7
  %v4440 = vsub.s32 0, %v4439
  %v4441 = vrot.slane %v4419, %v4440
  %v4442 = vlaneseq
  %v4443 = vshrl.u32 %v4442, 7
  %v4444 = vsub.s32 0, %v4443
  %v4445 = vrot.slane %v4420, %v4444
  %v4446 = vlaneseq
  %v4447 = vshrl.u32 %v4446, 7
  %v4448 = vsub.s32 0, %v4447
  %v4449 = vrot.slane %v4421, %v4448
  %v4450 = vlaneseq
  %v4451 = vshrl.u32 %v4450, 7
  %v4452 = vsub.s32 0, %v4451
  %v4453 = vrot.slane %v4422, %v4452
  %v4454 = vlaneseq
  %v4455 = vshrl.u32 %v4454, 7
  %v4456 = vsub.s32 0, %v4455
  %v4457 = vrot.slane %v4423, %v4456
  %v4458 = vlaneseq
  %v4459 = vshrl.u32 %v4458, 7
  %v4460 = vsub.s32 0, %v4459
  %v4461 = vrot.slane %v4424, %v4460
  %v4462 = vlaneseq
  %v4463 = vshrl.u32 %v4462, 7
  %v4464 = vsub.s32 0, %v4463
  %v4465 = vrot.slane %v4425, %v4464
  %v4474 = vmul.f32 %v4437, %v1315
  %v4475 = vmul.f32 %v4441, %v1315
  %v4476 = vmul.f32 %v4445, %v1315
  %v4477 = vmul.f32 %v4449, %v1315
  %v4478 = vmul.f32 %v4453, %v1315
  %v4479 = vmul.f32 %v4457, %v1315
  %v4480 = vmul.f32 %v4461, %v1315
  %v4481 = vmul.f32 %v4465, %v1315
  %v4482 = vmul.f32 %v4437, %v1319
  %v4483 = vmul.f32 %v4441, %v1319
  %v4484 = vmul.f32 %v4445, %v1319
  %v4485 = vmul.f32 %v4449, %v1319
  %v4486 = vmul.f32 %v4453, %v1319
  %v4487 = vmul.f32 %v4457, %v1319
  %v4488 = vmul.f32 %v4461, %v1319
  %v4489 = vmul.f32 %v4465, %v1319
  %v4506 = vrot.slane %v4474, 1
  %v4507 = vrot.slane %v4475, 1
  %v4508 = vrot.slane %v4476, 1
  %v4509 = vrot.slane %v4477, 1
  %v4510 = vrot.slane %v4478, 1
  %v4511 = vrot.slane %v4479, 1
  %v4512 = vrot.slane %v4480, 1
  %v4513 = vrot.slane %v4481, 1
  %v4514 = vrot.slane %v4482, 1
  %v4515 = vrot.slane %v4483, 1
  %v4516 = vrot.slane %v4484, 1
  %v4517 = vrot.slane %v4485, 1
  %v4518 = vrot.slane %v4486, 1
  %v4519 = vrot.slane %v4487, 1
  %v4520 = vrot.slane %v4488, 1
  %v4521 = vrot.slane %v4489, 1
  %v4538 = vadd.f32 %v4401, %v4506
  %v4539 = vadd.f32 %v4402, %v4507
  %v4540 = vadd.f32 %v4403, %v4508
  %v4541 = vadd.f32 %v4404, %v4509
  %v4542 = vadd.f32 %v4405, %v4510
  %v4543 = vadd.f32 %v4406, %v4511
  %v4544 = vadd.f32 %v4407, %v4512
  %v4545 = vadd.f32 %v4408, %v4513
  %v4546 = vadd.f32 %v4409, %v4514
  %v4547 = vadd.f32 %v4410, %v4515
  %v4548 = vadd.f32 %v4411, %v4516
  %v4549 = vadd.f32 %v4412, %v4517
  %v4550 = vadd.f32 %v4413, %v4518
  %v4551 = vadd.f32 %v4414, %v4519
  %v4552 = vadd.f32 %v4415, %v4520
  %v4553 = vadd.f32 %v4416, %v4521
  %s4554 = scalar_lea.vmem %s2, 248
  %v4555 = vld [vmem:[%s4554] sm:$0x1]
  %v4556 = vld [vmem:[%s4554 + $0x1] sm:$0x1]
  %v4557 = vld [vmem:[%s4554 + $0x2] sm:$0x1]
  %v4558 = vld [vmem:[%s4554 + $0x3] sm:$0x1]
  %v4559 = vld [vmem:[%s4554 + $0x4] sm:$0x1]
  %v4560 = vld [vmem:[%s4554 + $0x5] sm:$0x1]
  %v4561 = vld [vmem:[%s4554 + $0x6] sm:$0x1]
  %v4562 = vld [vmem:[%s4554 + $0x7] sm:$0x1]
  %v4571 = vlaneseq
  %v4572 = vshrl.u32 %v4571, 7
  %v4573 = vsub.s32 0, %v4572
  %v4574 = vrot.slane %v4555, %v4573
  %v4575 = vlaneseq
  %v4576 = vshrl.u32 %v4575, 7
  %v4577 = vsub.s32 0, %v4576
  %v4578 = vrot.slane %v4556, %v4577
  %v4579 = vlaneseq
  %v4580 = vshrl.u32 %v4579, 7
  %v4581 = vsub.s32 0, %v4580
  %v4582 = vrot.slane %v4557, %v4581
  %v4583 = vlaneseq
  %v4584 = vshrl.u32 %v4583, 7
  %v4585 = vsub.s32 0, %v4584
  %v4586 = vrot.slane %v4558, %v4585
  %v4587 = vlaneseq
  %v4588 = vshrl.u32 %v4587, 7
  %v4589 = vsub.s32 0, %v4588
  %v4590 = vrot.slane %v4559, %v4589
  %v4591 = vlaneseq
  %v4592 = vshrl.u32 %v4591, 7
  %v4593 = vsub.s32 0, %v4592
  %v4594 = vrot.slane %v4560, %v4593
  %v4595 = vlaneseq
  %v4596 = vshrl.u32 %v4595, 7
  %v4597 = vsub.s32 0, %v4596
  %v4598 = vrot.slane %v4561, %v4597
  %v4599 = vlaneseq
  %v4600 = vshrl.u32 %v4599, 7
  %v4601 = vsub.s32 0, %v4600
  %v4602 = vrot.slane %v4562, %v4601
  %v4611 = vrot.slane %v1315, 1
  %v4612 = vrot.slane %v1319, 1
  %4613 = vrot.lane.b32.xlu0 %v4611, 127
  %v4614 = vpop.permute.xlu0 %4613
  %4615 = vrot.lane.b32.xlu0 %v4612, 127
  %v4616 = vpop.permute.xlu0 %4615
  %v4619 = vmul.f32 %v4574, %v4614
  %v4620 = vmul.f32 %v4578, %v4614
  %v4621 = vmul.f32 %v4582, %v4614
  %v4622 = vmul.f32 %v4586, %v4614
  %v4623 = vmul.f32 %v4590, %v4614
  %v4624 = vmul.f32 %v4594, %v4614
  %v4625 = vmul.f32 %v4598, %v4614
  %v4626 = vmul.f32 %v4602, %v4614
  %v4627 = vmul.f32 %v4574, %v4616
  %v4628 = vmul.f32 %v4578, %v4616
  %v4629 = vmul.f32 %v4582, %v4616
  %v4630 = vmul.f32 %v4586, %v4616
  %v4631 = vmul.f32 %v4590, %v4616
  %v4632 = vmul.f32 %v4594, %v4616
  %v4633 = vmul.f32 %v4598, %v4616
  %v4634 = vmul.f32 %v4602, %v4616
  %v4635 = vadd.f32 %v4538, %v4619
  %v4636 = vadd.f32 %v4539, %v4620
  %v4637 = vadd.f32 %v4540, %v4621
  %v4638 = vadd.f32 %v4541, %v4622
  %v4639 = vadd.f32 %v4542, %v4623
  %v4640 = vadd.f32 %v4543, %v4624
  %v4641 = vadd.f32 %v4544, %v4625
  %v4642 = vadd.f32 %v4545, %v4626
  %v4643 = vadd.f32 %v4546, %v4627
  %v4644 = vadd.f32 %v4547, %v4628
  %v4645 = vadd.f32 %v4548, %v4629
  %v4646 = vadd.f32 %v4549, %v4630
  %v4647 = vadd.f32 %v4550, %v4631
  %v4648 = vadd.f32 %v4551, %v4632
  %v4649 = vadd.f32 %v4552, %v4633
  %v4650 = vadd.f32 %v4553, %v4634
  %s4651 = scalar_lea.vmem %s2, 256
  %v4652 = vld [vmem:[%s4651] sm:$0x1]
  %v4653 = vld [vmem:[%s4651 + $0x1] sm:$0x1]
  %v4654 = vld [vmem:[%s4651 + $0x2] sm:$0x1]
  %v4655 = vld [vmem:[%s4651 + $0x3] sm:$0x1]
  %v4656 = vld [vmem:[%s4651 + $0x4] sm:$0x1]
  %v4657 = vld [vmem:[%s4651 + $0x5] sm:$0x1]
  %v4658 = vld [vmem:[%s4651 + $0x6] sm:$0x1]
  %v4659 = vld [vmem:[%s4651 + $0x7] sm:$0x1]
  %v4668 = vlaneseq
  %v4669 = vshrl.u32 %v4668, 7
  %v4670 = vsub.s32 0, %v4669
  %v4671 = vrot.slane %v4652, %v4670
  %v4672 = vlaneseq
  %v4673 = vshrl.u32 %v4672, 7
  %v4674 = vsub.s32 0, %v4673
  %v4675 = vrot.slane %v4653, %v4674
  %v4676 = vlaneseq
  %v4677 = vshrl.u32 %v4676, 7
  %v4678 = vsub.s32 0, %v4677
  %v4679 = vrot.slane %v4654, %v4678
  %v4680 = vlaneseq
  %v4681 = vshrl.u32 %v4680, 7
  %v4682 = vsub.s32 0, %v4681
  %v4683 = vrot.slane %v4655, %v4682
  %v4684 = vlaneseq
  %v4685 = vshrl.u32 %v4684, 7
  %v4686 = vsub.s32 0, %v4685
  %v4687 = vrot.slane %v4656, %v4686
  %v4688 = vlaneseq
  %v4689 = vshrl.u32 %v4688, 7
  %v4690 = vsub.s32 0, %v4689
  %v4691 = vrot.slane %v4657, %v4690
  %v4692 = vlaneseq
  %v4693 = vshrl.u32 %v4692, 7
  %v4694 = vsub.s32 0, %v4693
  %v4695 = vrot.slane %v4658, %v4694
  %v4696 = vlaneseq
  %v4697 = vshrl.u32 %v4696, 7
  %v4698 = vsub.s32 0, %v4697
  %v4699 = vrot.slane %v4659, %v4698
  %4708 = vrot.lane.b32.xlu0 %v4611, 126
  %v4709 = vpop.permute.xlu0 %4708
  %4710 = vrot.lane.b32.xlu0 %v4612, 126
  %v4711 = vpop.permute.xlu0 %4710
  %v4714 = vmul.f32 %v4671, %v4709
  %v4715 = vmul.f32 %v4675, %v4709
  %v4716 = vmul.f32 %v4679, %v4709
  %v4717 = vmul.f32 %v4683, %v4709
  %v4718 = vmul.f32 %v4687, %v4709
  %v4719 = vmul.f32 %v4691, %v4709
  %v4720 = vmul.f32 %v4695, %v4709
  %v4721 = vmul.f32 %v4699, %v4709
  %v4722 = vmul.f32 %v4671, %v4711
  %v4723 = vmul.f32 %v4675, %v4711
  %v4724 = vmul.f32 %v4679, %v4711
  %v4725 = vmul.f32 %v4683, %v4711
  %v4726 = vmul.f32 %v4687, %v4711
  %v4727 = vmul.f32 %v4691, %v4711
  %v4728 = vmul.f32 %v4695, %v4711
  %v4729 = vmul.f32 %v4699, %v4711
  %v4730 = vadd.f32 %v4635, %v4714
  %v4731 = vadd.f32 %v4636, %v4715
  %v4732 = vadd.f32 %v4637, %v4716
  %v4733 = vadd.f32 %v4638, %v4717
  %v4734 = vadd.f32 %v4639, %v4718
  %v4735 = vadd.f32 %v4640, %v4719
  %v4736 = vadd.f32 %v4641, %v4720
  %v4737 = vadd.f32 %v4642, %v4721
  %v4738 = vadd.f32 %v4643, %v4722
  %v4739 = vadd.f32 %v4644, %v4723
  %v4740 = vadd.f32 %v4645, %v4724
  %v4741 = vadd.f32 %v4646, %v4725
  %v4742 = vadd.f32 %v4647, %v4726
  %v4743 = vadd.f32 %v4648, %v4727
  %v4744 = vadd.f32 %v4649, %v4728
  %v4745 = vadd.f32 %v4650, %v4729
  %s4746 = scalar_lea.vmem %s2, 264
  %v4747 = vld [vmem:[%s4746] sm:$0x1]
  %v4748 = vld [vmem:[%s4746 + $0x1] sm:$0x1]
  %v4749 = vld [vmem:[%s4746 + $0x2] sm:$0x1]
  %v4750 = vld [vmem:[%s4746 + $0x3] sm:$0x1]
  %v4751 = vld [vmem:[%s4746 + $0x4] sm:$0x1]
  %v4752 = vld [vmem:[%s4746 + $0x5] sm:$0x1]
  %v4753 = vld [vmem:[%s4746 + $0x6] sm:$0x1]
  %v4754 = vld [vmem:[%s4746 + $0x7] sm:$0x1]
  %v4763 = vlaneseq
  %v4764 = vshrl.u32 %v4763, 7
  %v4765 = vsub.s32 0, %v4764
  %v4766 = vrot.slane %v4747, %v4765
  %v4767 = vlaneseq
  %v4768 = vshrl.u32 %v4767, 7
  %v4769 = vsub.s32 0, %v4768
  %v4770 = vrot.slane %v4748, %v4769
  %v4771 = vlaneseq
  %v4772 = vshrl.u32 %v4771, 7
  %v4773 = vsub.s32 0, %v4772
  %v4774 = vrot.slane %v4749, %v4773
  %v4775 = vlaneseq
  %v4776 = vshrl.u32 %v4775, 7
  %v4777 = vsub.s32 0, %v4776
  %v4778 = vrot.slane %v4750, %v4777
  %v4779 = vlaneseq
  %v4780 = vshrl.u32 %v4779, 7
  %v4781 = vsub.s32 0, %v4780
  %v4782 = vrot.slane %v4751, %v4781
  %v4783 = vlaneseq
  %v4784 = vshrl.u32 %v4783, 7
  %v4785 = vsub.s32 0, %v4784
  %v4786 = vrot.slane %v4752, %v4785
  %v4787 = vlaneseq
  %v4788 = vshrl.u32 %v4787, 7
  %v4789 = vsub.s32 0, %v4788
  %v4790 = vrot.slane %v4753, %v4789
  %v4791 = vlaneseq
  %v4792 = vshrl.u32 %v4791, 7
  %v4793 = vsub.s32 0, %v4792
  %v4794 = vrot.slane %v4754, %v4793
  %v4803 = vmul.f32 %v4766, %v1315
  %v4804 = vmul.f32 %v4770, %v1315
  %v4805 = vmul.f32 %v4774, %v1315
  %v4806 = vmul.f32 %v4778, %v1315
  %v4807 = vmul.f32 %v4782, %v1315
  %v4808 = vmul.f32 %v4786, %v1315
  %v4809 = vmul.f32 %v4790, %v1315
  %v4810 = vmul.f32 %v4794, %v1315
  %v4811 = vmul.f32 %v4766, %v1319
  %v4812 = vmul.f32 %v4770, %v1319
  %v4813 = vmul.f32 %v4774, %v1319
  %v4814 = vmul.f32 %v4778, %v1319
  %v4815 = vmul.f32 %v4782, %v1319
  %v4816 = vmul.f32 %v4786, %v1319
  %v4817 = vmul.f32 %v4790, %v1319
  %v4818 = vmul.f32 %v4794, %v1319
  %v4835 = vrot.slane %v4803, 2
  %v4836 = vrot.slane %v4804, 2
  %v4837 = vrot.slane %v4805, 2
  %v4838 = vrot.slane %v4806, 2
  %v4839 = vrot.slane %v4807, 2
  %v4840 = vrot.slane %v4808, 2
  %v4841 = vrot.slane %v4809, 2
  %v4842 = vrot.slane %v4810, 2
  %v4843 = vrot.slane %v4811, 2
  %v4844 = vrot.slane %v4812, 2
  %v4845 = vrot.slane %v4813, 2
  %v4846 = vrot.slane %v4814, 2
  %v4847 = vrot.slane %v4815, 2
  %v4848 = vrot.slane %v4816, 2
  %v4849 = vrot.slane %v4817, 2
  %v4850 = vrot.slane %v4818, 2
  %v4867 = vadd.f32 %v4730, %v4835
  %v4868 = vadd.f32 %v4731, %v4836
  %v4869 = vadd.f32 %v4732, %v4837
  %v4870 = vadd.f32 %v4733, %v4838
  %v4871 = vadd.f32 %v4734, %v4839
  %v4872 = vadd.f32 %v4735, %v4840
  %v4873 = vadd.f32 %v4736, %v4841
  %v4874 = vadd.f32 %v4737, %v4842
  %v4875 = vadd.f32 %v4738, %v4843
  %v4876 = vadd.f32 %v4739, %v4844
  %v4877 = vadd.f32 %v4740, %v4845
  %v4878 = vadd.f32 %v4741, %v4846
  %v4879 = vadd.f32 %v4742, %v4847
  %v4880 = vadd.f32 %v4743, %v4848
  %v4881 = vadd.f32 %v4744, %v4849
  %v4882 = vadd.f32 %v4745, %v4850
  %s4883 = scalar_lea.vmem %s2, 272
  %v4884 = vld [vmem:[%s4883] sm:$0x1]
  %v4885 = vld [vmem:[%s4883 + $0x1] sm:$0x1]
  %v4886 = vld [vmem:[%s4883 + $0x2] sm:$0x1]
  %v4887 = vld [vmem:[%s4883 + $0x3] sm:$0x1]
  %v4888 = vld [vmem:[%s4883 + $0x4] sm:$0x1]
  %v4889 = vld [vmem:[%s4883 + $0x5] sm:$0x1]
  %v4890 = vld [vmem:[%s4883 + $0x6] sm:$0x1]
  %v4891 = vld [vmem:[%s4883 + $0x7] sm:$0x1]
  %v4900 = vlaneseq
  %v4901 = vshrl.u32 %v4900, 7
  %v4902 = vsub.s32 0, %v4901
  %v4903 = vrot.slane %v4884, %v4902
  %v4904 = vlaneseq
  %v4905 = vshrl.u32 %v4904, 7
  %v4906 = vsub.s32 0, %v4905
  %v4907 = vrot.slane %v4885, %v4906
  %v4908 = vlaneseq
  %v4909 = vshrl.u32 %v4908, 7
  %v4910 = vsub.s32 0, %v4909
  %v4911 = vrot.slane %v4886, %v4910
  %v4912 = vlaneseq
  %v4913 = vshrl.u32 %v4912, 7
  %v4914 = vsub.s32 0, %v4913
  %v4915 = vrot.slane %v4887, %v4914
  %v4916 = vlaneseq
  %v4917 = vshrl.u32 %v4916, 7
  %v4918 = vsub.s32 0, %v4917
  %v4919 = vrot.slane %v4888, %v4918
  %v4920 = vlaneseq
  %v4921 = vshrl.u32 %v4920, 7
  %v4922 = vsub.s32 0, %v4921
  %v4923 = vrot.slane %v4889, %v4922
  %v4924 = vlaneseq
  %v4925 = vshrl.u32 %v4924, 7
  %v4926 = vsub.s32 0, %v4925
  %v4927 = vrot.slane %v4890, %v4926
  %v4928 = vlaneseq
  %v4929 = vshrl.u32 %v4928, 7
  %v4930 = vsub.s32 0, %v4929
  %v4931 = vrot.slane %v4891, %v4930
  %v4940 = vrot.slane %v1315, 2
  %v4941 = vrot.slane %v1319, 2
  %4942 = vrot.lane.b32.xlu0 %v4940, 127
  %v4943 = vpop.permute.xlu0 %4942
  %4944 = vrot.lane.b32.xlu0 %v4941, 127
  %v4945 = vpop.permute.xlu0 %4944
  %v4948 = vmul.f32 %v4903, %v4943
  %v4949 = vmul.f32 %v4907, %v4943
  %v4950 = vmul.f32 %v4911, %v4943
  %v4951 = vmul.f32 %v4915, %v4943
  %v4952 = vmul.f32 %v4919, %v4943
  %v4953 = vmul.f32 %v4923, %v4943
  %v4954 = vmul.f32 %v4927, %v4943
  %v4955 = vmul.f32 %v4931, %v4943
  %v4956 = vmul.f32 %v4903, %v4945
  %v4957 = vmul.f32 %v4907, %v4945
  %v4958 = vmul.f32 %v4911, %v4945
  %v4959 = vmul.f32 %v4915, %v4945
  %v4960 = vmul.f32 %v4919, %v4945
  %v4961 = vmul.f32 %v4923, %v4945
  %v4962 = vmul.f32 %v4927, %v4945
  %v4963 = vmul.f32 %v4931, %v4945
  %v4964 = vadd.f32 %v4867, %v4948
  %v4965 = vadd.f32 %v4868, %v4949
  %v4966 = vadd.f32 %v4869, %v4950
  %v4967 = vadd.f32 %v4870, %v4951
  %v4968 = vadd.f32 %v4871, %v4952
  %v4969 = vadd.f32 %v4872, %v4953
  %v4970 = vadd.f32 %v4873, %v4954
  %v4971 = vadd.f32 %v4874, %v4955
  %v4972 = vadd.f32 %v4875, %v4956
  %v4973 = vadd.f32 %v4876, %v4957
  %v4974 = vadd.f32 %v4877, %v4958
  %v4975 = vadd.f32 %v4878, %v4959
  %v4976 = vadd.f32 %v4879, %v4960
  %v4977 = vadd.f32 %v4880, %v4961
  %v4978 = vadd.f32 %v4881, %v4962
  %v4979 = vadd.f32 %v4882, %v4963
  %s4980 = scalar_lea.vmem %s2, 280
  %v4981 = vld [vmem:[%s4980] sm:$0x1]
  %v4982 = vld [vmem:[%s4980 + $0x1] sm:$0x1]
  %v4983 = vld [vmem:[%s4980 + $0x2] sm:$0x1]
  %v4984 = vld [vmem:[%s4980 + $0x3] sm:$0x1]
  %v4985 = vld [vmem:[%s4980 + $0x4] sm:$0x1]
  %v4986 = vld [vmem:[%s4980 + $0x5] sm:$0x1]
  %v4987 = vld [vmem:[%s4980 + $0x6] sm:$0x1]
  %v4988 = vld [vmem:[%s4980 + $0x7] sm:$0x1]
  %v4997 = vlaneseq
  %v4998 = vshrl.u32 %v4997, 7
  %v4999 = vsub.s32 0, %v4998
  %v5000 = vrot.slane %v4981, %v4999
  %v5001 = vlaneseq
  %v5002 = vshrl.u32 %v5001, 7
  %v5003 = vsub.s32 0, %v5002
  %v5004 = vrot.slane %v4982, %v5003
  %v5005 = vlaneseq
  %v5006 = vshrl.u32 %v5005, 7
  %v5007 = vsub.s32 0, %v5006
  %v5008 = vrot.slane %v4983, %v5007
  %v5009 = vlaneseq
  %v5010 = vshrl.u32 %v5009, 7
  %v5011 = vsub.s32 0, %v5010
  %v5012 = vrot.slane %v4984, %v5011
  %v5013 = vlaneseq
  %v5014 = vshrl.u32 %v5013, 7
  %v5015 = vsub.s32 0, %v5014
  %v5016 = vrot.slane %v4985, %v5015
  %v5017 = vlaneseq
  %v5018 = vshrl.u32 %v5017, 7
  %v5019 = vsub.s32 0, %v5018
  %v5020 = vrot.slane %v4986, %v5019
  %v5021 = vlaneseq
  %v5022 = vshrl.u32 %v5021, 7
  %v5023 = vsub.s32 0, %v5022
  %v5024 = vrot.slane %v4987, %v5023
  %v5025 = vlaneseq
  %v5026 = vshrl.u32 %v5025, 7
  %v5027 = vsub.s32 0, %v5026
  %v5028 = vrot.slane %v4988, %v5027
  %5037 = vrot.lane.b32.xlu0 %v4940, 126
  %v5038 = vpop.permute.xlu0 %5037
  %5039 = vrot.lane.b32.xlu0 %v4941, 126
  %v5040 = vpop.permute.xlu0 %5039
  %v5043 = vmul.f32 %v5000, %v5038
  %v5044 = vmul.f32 %v5004, %v5038
  %v5045 = vmul.f32 %v5008, %v5038
  %v5046 = vmul.f32 %v5012, %v5038
  %v5047 = vmul.f32 %v5016, %v5038
  %v5048 = vmul.f32 %v5020, %v5038
  %v5049 = vmul.f32 %v5024, %v5038
  %v5050 = vmul.f32 %v5028, %v5038
  %v5051 = vmul.f32 %v5000, %v5040
  %v5052 = vmul.f32 %v5004, %v5040
  %v5053 = vmul.f32 %v5008, %v5040
  %v5054 = vmul.f32 %v5012, %v5040
  %v5055 = vmul.f32 %v5016, %v5040
  %v5056 = vmul.f32 %v5020, %v5040
  %v5057 = vmul.f32 %v5024, %v5040
  %v5058 = vmul.f32 %v5028, %v5040
  %v5059 = vadd.f32 %v4964, %v5043
  %v5060 = vadd.f32 %v4965, %v5044
  %v5061 = vadd.f32 %v4966, %v5045
  %v5062 = vadd.f32 %v4967, %v5046
  %v5063 = vadd.f32 %v4968, %v5047
  %v5064 = vadd.f32 %v4969, %v5048
  %v5065 = vadd.f32 %v4970, %v5049
  %v5066 = vadd.f32 %v4971, %v5050
  %v5067 = vadd.f32 %v4972, %v5051
  %v5068 = vadd.f32 %v4973, %v5052
  %v5069 = vadd.f32 %v4974, %v5053
  %v5070 = vadd.f32 %v4975, %v5054
  %v5071 = vadd.f32 %v4976, %v5055
  %v5072 = vadd.f32 %v4977, %v5056
  %v5073 = vadd.f32 %v4978, %v5057
  %v5074 = vadd.f32 %v4979, %v5058
  %v5083 = vlaneseq
  %v5084 = vshrl.u32 %v5083, 7
  %v5085 = vsub.s32 0, %v5084
  %v5086 = vrot.slane %v31, %v5085
  %v5087 = vlaneseq
  %v5088 = vshrl.u32 %v5087, 7
  %v5089 = vsub.s32 0, %v5088
  %v5090 = vrot.slane %v32, %v5089
  %v5091 = vlaneseq
  %v5092 = vshrl.u32 %v5091, 7
  %v5093 = vsub.s32 0, %v5092
  %v5094 = vrot.slane %v33, %v5093
  %v5095 = vlaneseq
  %v5096 = vshrl.u32 %v5095, 7
  %v5097 = vsub.s32 0, %v5096
  %v5098 = vrot.slane %v34, %v5097
  %v5099 = vlaneseq
  %v5100 = vshrl.u32 %v5099, 7
  %v5101 = vsub.s32 0, %v5100
  %v5102 = vrot.slane %v35, %v5101
  %v5103 = vlaneseq
  %v5104 = vshrl.u32 %v5103, 7
  %v5105 = vsub.s32 0, %v5104
  %v5106 = vrot.slane %v36, %v5105
  %v5107 = vlaneseq
  %v5108 = vshrl.u32 %v5107, 7
  %v5109 = vsub.s32 0, %v5108
  %v5110 = vrot.slane %v37, %v5109
  %v5111 = vlaneseq
  %v5112 = vshrl.u32 %v5111, 7
  %v5113 = vsub.s32 0, %v5112
  %v5114 = vrot.slane %v38, %v5113
  %v5123 = vadd.f32 %v5059, %v5086
  %v5124 = vadd.f32 %v5060, %v5090
  %v5125 = vadd.f32 %v5061, %v5094
  %v5126 = vadd.f32 %v5062, %v5098
  %v5127 = vadd.f32 %v5063, %v5102
  %v5128 = vadd.f32 %v5064, %v5106
  %v5129 = vadd.f32 %v5065, %v5110
  %v5130 = vadd.f32 %v5066, %v5114
  %v5131 = vadd.f32 %v5067, %v5086
  %v5132 = vadd.f32 %v5068, %v5090
  %v5133 = vadd.f32 %v5069, %v5094
  %v5134 = vadd.f32 %v5070, %v5098
  %v5135 = vadd.f32 %v5071, %v5102
  %v5136 = vadd.f32 %v5072, %v5106
  %v5137 = vadd.f32 %v5073, %v5110
  %v5138 = vadd.f32 %v5074, %v5114
  %v5139 = vmax.f32 %v5123, 0.0
  %v5140 = vmax.f32 %v5124, 0.0
  %v5141 = vmax.f32 %v5125, 0.0
  %v5142 = vmax.f32 %v5126, 0.0
  %v5143 = vmax.f32 %v5127, 0.0
  %v5144 = vmax.f32 %v5128, 0.0
  %v5145 = vmax.f32 %v5129, 0.0
  %v5146 = vmax.f32 %v5130, 0.0
  %v5147 = vmax.f32 %v5131, 0.0
  %v5148 = vmax.f32 %v5132, 0.0
  %v5149 = vmax.f32 %v5133, 0.0
  %v5150 = vmax.f32 %v5134, 0.0
  %v5151 = vmax.f32 %v5135, 0.0
  %v5152 = vmax.f32 %v5136, 0.0
  %v5153 = vmax.f32 %v5137, 0.0
  %v5154 = vmax.f32 %v5138, 0.0
  %v5171 = vrot.slane %v5139, 1
  %v5172 = vrot.slane %v5140, 1
  %v5173 = vrot.slane %v5141, 1
  %v5174 = vrot.slane %v5142, 1
  %v5175 = vrot.slane %v5143, 1
  %v5176 = vrot.slane %v5144, 1
  %v5177 = vrot.slane %v5145, 1
  %v5178 = vrot.slane %v5146, 1
  %v5179 = vrot.slane %v5147, 1
  %v5180 = vrot.slane %v5148, 1
  %v5181 = vrot.slane %v5149, 1
  %v5182 = vrot.slane %v5150, 1
  %v5183 = vrot.slane %v5151, 1
  %v5184 = vrot.slane %v5152, 1
  %v5185 = vrot.slane %v5153, 1
  %v5186 = vrot.slane %v5154, 1
  %v5203 = vmax.f32 %v5139, %v5171
  %v5204 = vmax.f32 %v5140, %v5172
  %v5205 = vmax.f32 %v5141, %v5173
  %v5206 = vmax.f32 %v5142, %v5174
  %v5207 = vmax.f32 %v5143, %v5175
  %v5208 = vmax.f32 %v5144, %v5176
  %v5209 = vmax.f32 %v5145, %v5177
  %v5210 = vmax.f32 %v5146, %v5178
  %v5211 = vmax.f32 %v5147, %v5179
  %v5212 = vmax.f32 %v5148, %v5180
  %v5213 = vmax.f32 %v5149, %v5181
  %v5214 = vmax.f32 %v5150, %v5182
  %v5215 = vmax.f32 %v5151, %v5183
  %v5216 = vmax.f32 %v5152, %v5184
  %v5217 = vmax.f32 %v5153, %v5185
  %v5218 = vmax.f32 %v5154, %v5186
  %v5235 = vrot.slane %v5203, 1
  %v5236 = vrot.slane %v5204, 1
  %v5237 = vrot.slane %v5205, 1
  %v5238 = vrot.slane %v5206, 1
  %v5239 = vrot.slane %v5207, 1
  %v5240 = vrot.slane %v5208, 1
  %v5241 = vrot.slane %v5209, 1
  %v5242 = vrot.slane %v5210, 1
  %v5243 = vrot.slane %v5211, 1
  %v5244 = vrot.slane %v5212, 1
  %v5245 = vrot.slane %v5213, 1
  %v5246 = vrot.slane %v5214, 1
  %v5247 = vrot.slane %v5215, 1
  %v5248 = vrot.slane %v5216, 1
  %v5249 = vrot.slane %v5217, 1
  %v5250 = vrot.slane %v5218, 1
  %v5267 = vsel %vm1021, %v5203, %v5235
  %v5268 = vsel %vm1021, %v5204, %v5236
  %v5269 = vsel %vm1021, %v5205, %v5237
  %v5270 = vsel %vm1021, %v5206, %v5238
  %v5271 = vsel %vm1021, %v5207, %v5239
  %v5272 = vsel %vm1021, %v5208, %v5240
  %v5273 = vsel %vm1021, %v5209, %v5241
  %v5274 = vsel %vm1021, %v5210, %v5242
  %v5275 = vsel %vm1021, %v5211, %v5243
  %v5276 = vsel %vm1021, %v5212, %v5244
  %v5277 = vsel %vm1021, %v5213, %v5245
  %v5278 = vsel %vm1021, %v5214, %v5246
  %v5279 = vsel %vm1021, %v5215, %v5247
  %v5280 = vsel %vm1021, %v5216, %v5248
  %v5281 = vsel %vm1021, %v5217, %v5249
  %v5282 = vsel %vm1021, %v5218, %v5250
  %5299 = vrot.lane.b32.xlu0 %v5267, 127
  %v5300 = vpop.permute.xlu0 %5299
  %5301 = vrot.lane.b32.xlu0 %v5268, 127
  %v5302 = vpop.permute.xlu0 %5301
  %5303 = vrot.lane.b32.xlu0 %v5269, 127
  %v5304 = vpop.permute.xlu0 %5303
  %5305 = vrot.lane.b32.xlu0 %v5270, 127
  %v5306 = vpop.permute.xlu0 %5305
  %5307 = vrot.lane.b32.xlu0 %v5271, 127
  %v5308 = vpop.permute.xlu0 %5307
  %5309 = vrot.lane.b32.xlu0 %v5272, 127
  %v5310 = vpop.permute.xlu0 %5309
  %5311 = vrot.lane.b32.xlu0 %v5273, 127
  %v5312 = vpop.permute.xlu0 %5311
  %5313 = vrot.lane.b32.xlu0 %v5274, 127
  %v5314 = vpop.permute.xlu0 %5313
  %5315 = vrot.lane.b32.xlu0 %v5275, 127
  %v5316 = vpop.permute.xlu0 %5315
  %5317 = vrot.lane.b32.xlu0 %v5276, 127
  %v5318 = vpop.permute.xlu0 %5317
  %5319 = vrot.lane.b32.xlu0 %v5277, 127
  %v5320 = vpop.permute.xlu0 %5319
  %5321 = vrot.lane.b32.xlu0 %v5278, 127
  %v5322 = vpop.permute.xlu0 %5321
  %5323 = vrot.lane.b32.xlu0 %v5279, 127
  %v5324 = vpop.permute.xlu0 %5323
  %5325 = vrot.lane.b32.xlu0 %v5280, 127
  %v5326 = vpop.permute.xlu0 %5325
  %5327 = vrot.lane.b32.xlu0 %v5281, 127
  %v5328 = vpop.permute.xlu0 %5327
  %5329 = vrot.lane.b32.xlu0 %v5282, 127
  %v5330 = vpop.permute.xlu0 %5329
  %v5347 = vmax.f32 %v5267, %v5300
  %v5348 = vmax.f32 %v5268, %v5302
  %v5349 = vmax.f32 %v5269, %v5304
  %v5350 = vmax.f32 %v5270, %v5306
  %v5351 = vmax.f32 %v5271, %v5308
  %v5352 = vmax.f32 %v5272, %v5310
  %v5353 = vmax.f32 %v5273, %v5312
  %v5354 = vmax.f32 %v5274, %v5314
  %v5355 = vmax.f32 %v5275, %v5316
  %v5356 = vmax.f32 %v5276, %v5318
  %v5357 = vmax.f32 %v5277, %v5320
  %v5358 = vmax.f32 %v5278, %v5322
  %v5359 = vmax.f32 %v5279, %v5324
  %v5360 = vmax.f32 %v5280, %v5326
  %v5361 = vmax.f32 %v5281, %v5328
  %v5362 = vmax.f32 %v5282, %v5330
  %5379 = vrot.lane.b32.xlu0 %v5347, 127
  %v5380 = vpop.permute.xlu0 %5379
  %5381 = vrot.lane.b32.xlu0 %v5348, 127
  %v5382 = vpop.permute.xlu0 %5381
  %5383 = vrot.lane.b32.xlu0 %v5349, 127
  %v5384 = vpop.permute.xlu0 %5383
  %5385 = vrot.lane.b32.xlu0 %v5350, 127
  %v5386 = vpop.permute.xlu0 %5385
  %5387 = vrot.lane.b32.xlu0 %v5351, 127
  %v5388 = vpop.permute.xlu0 %5387
  %5389 = vrot.lane.b32.xlu0 %v5352, 127
  %v5390 = vpop.permute.xlu0 %5389
  %5391 = vrot.lane.b32.xlu0 %v5353, 127
  %v5392 = vpop.permute.xlu0 %5391
  %5393 = vrot.lane.b32.xlu0 %v5354, 127
  %v5394 = vpop.permute.xlu0 %5393
  %5395 = vrot.lane.b32.xlu0 %v5355, 127
  %v5396 = vpop.permute.xlu0 %5395
  %5397 = vrot.lane.b32.xlu0 %v5356, 127
  %v5398 = vpop.permute.xlu0 %5397
  %5399 = vrot.lane.b32.xlu0 %v5357, 127
  %v5400 = vpop.permute.xlu0 %5399
  %5401 = vrot.lane.b32.xlu0 %v5358, 127
  %v5402 = vpop.permute.xlu0 %5401
  %5403 = vrot.lane.b32.xlu0 %v5359, 127
  %v5404 = vpop.permute.xlu0 %5403
  %5405 = vrot.lane.b32.xlu0 %v5360, 127
  %v5406 = vpop.permute.xlu0 %5405
  %5407 = vrot.lane.b32.xlu0 %v5361, 127
  %v5408 = vpop.permute.xlu0 %5407
  %5409 = vrot.lane.b32.xlu0 %v5362, 127
  %v5410 = vpop.permute.xlu0 %5409
  %v5427 = vsel %vm1266, %v5347, %v5380
  %v5428 = vsel %vm1266, %v5348, %v5382
  %v5429 = vsel %vm1266, %v5349, %v5384
  %v5430 = vsel %vm1266, %v5350, %v5386
  %v5431 = vsel %vm1266, %v5351, %v5388
  %v5432 = vsel %vm1266, %v5352, %v5390
  %v5433 = vsel %vm1266, %v5353, %v5392
  %v5434 = vsel %vm1266, %v5354, %v5394
  %v5435 = vsel %vm1266, %v5355, %v5396
  %v5436 = vsel %vm1266, %v5356, %v5398
  %v5437 = vsel %vm1266, %v5357, %v5400
  %v5438 = vsel %vm1266, %v5358, %v5402
  %v5439 = vsel %vm1266, %v5359, %v5404
  %v5440 = vsel %vm1266, %v5360, %v5406
  %v5441 = vsel %vm1266, %v5361, %v5408
  %v5442 = vsel %vm1266, %v5362, %v5410
  %v5443 = vld [vmem:[%s4] sm:$0xff]
  %v5444 = vld [vmem:[%s4 + $0x8] sm:$0xff]
  %v5445 = vld [vmem:[%s4 + $0x10] sm:$0xff]
  %v5446 = vld [vmem:[%s4 + $0x18] sm:$0xff]
  %v5447 = vld [vmem:[%s5] sm:$0x1]
  %v5449 = vlaneseq
  %v5450 = vshrl.u32 %v5449, 7
  %v5451 = vsub.s32 0, %v5450
  %v5452 = vrot.slane %v5447, %v5451
  %v5454 = vadd.f32 %v5452, 0.0
  %5456 = vset.pattern.permute.xlu0 0
  %5457 = vperm.xlu0 %5456, %v5427
  %v5458 = vpop.permute.xlu0 %5457
  %5461 = vset.pattern.permute.xlu0 0
  %5462 = vperm.xlu0 %5461, %v5435
  %v5463 = vpop.permute.xlu0 %5462
  %v5465 = vlaneseq
  %v5466 = vshrl.u32 %v5465, 7
  %v5467 = vsub.s32 0, %v5466
  %v5468 = vrot.slane %v5443, %v5467
  %v5469 = vmul.f32 %v5458, %v5468
  %v5470 = vmul.f32 %v5463, %v5468
  %v5473 = vrot.slane %v5470, 7
  %vm5474 = vcmask 1041409
  %v5475 = vsel %vm5474, %v5473, %v5469
  %v5477 = vadd.f32 %v5454, %v5475
  %5478 = vset.pattern.permute.xlu0 1
  %5479 = vperm.xlu0 %5478, %v5427
  %v5480 = vpop.permute.xlu0 %5479
  %5482 = vset.pattern.permute.xlu0 1
  %5483 = vperm.xlu0 %5482, %v5435
  %v5484 = vpop.permute.xlu0 %5483
  %v5486 = vlaneseq
  %v5487 = vshrl.u32 %v5486, 7
  %v5488 = vsub.s32 1, %v5487
  %v5489 = vrot.slane %v5443, %v5488
  %v5490 = vmul.f32 %v5480, %v5489
  %v5491 = vmul.f32 %v5484, %v5489
  %v5494 = vrot.slane %v5491, 7
  %v5495 = vsel %vm5474, %v5494, %v5490
  %v5497 = vadd.f32 %v5477, %v5495
  %v5498 = vlaneseq
  %v5499 = vshrl.u32 %v5498, 7
  %v5500 = vsub.s32 2, %v5499
  %v5501 = vrot.slane %v5443, %v5500
  %v5502 = vmul.f32 %v5458, %v5501
  %v5503 = vmul.f32 %v5463, %v5501
  %v5506 = vrot.slane %v5502, 1
  %v5507 = vsel %vm5474, %v5503, %v5506
  %v5509 = vadd.f32 %v5497, %v5507
  %v5510 = vlaneseq
  %v5511 = vshrl.u32 %v5510, 7
  %v5512 = vsub.s32 3, %v5511
  %v5513 = vrot.slane %v5443, %v5512
  %v5514 = vmul.f32 %v5480, %v5513
  %v5515 = vmul.f32 %v5484, %v5513
  %v5518 = vrot.slane %v5514, 1
  %v5519 = vsel %vm5474, %v5515, %v5518
  %v5521 = vadd.f32 %v5509, %v5519
  %5523 = vset.pattern.permute.xlu0 0
  %5524 = vperm.xlu0 %5523, %v5428
  %v5525 = vpop.permute.xlu0 %5524
  %5528 = vset.pattern.permute.xlu0 0
  %5529 = vperm.xlu0 %5528, %v5436
  %v5530 = vpop.permute.xlu0 %5529
  %v5532 = vlaneseq
  %v5533 = vshrl.u32 %v5532, 7
  %v5534 = vsub.s32 4, %v5533
  %v5535 = vrot.slane %v5443, %v5534
  %v5536 = vmul.f32 %v5525, %v5535
  %v5537 = vmul.f32 %v5530, %v5535
  %v5540 = vrot.slane %v5537, 7
  %v5541 = vsel %vm5474, %v5540, %v5536
  %v5543 = vadd.f32 %v5521, %v5541
  %5544 = vset.pattern.permute.xlu0 1
  %5545 = vperm.xlu0 %5544, %v5428
  %v5546 = vpop.permute.xlu0 %5545
  %5548 = vset.pattern.permute.xlu0 1
  %5549 = vperm.xlu0 %5548, %v5436
  %v5550 = vpop.permute.xlu0 %5549
  %v5552 = vlaneseq
  %v5553 = vshrl.u32 %v5552, 7
  %v5554 = vsub.s32 5, %v5553
  %v5555 = vrot.slane %v5443, %v5554
  %v5556 = vmul.f32 %v5546, %v5555
  %v5557 = vmul.f32 %v5550, %v5555
  %v5560 = vrot.slane %v5557, 7
  %v5561 = vsel %vm5474, %v5560, %v5556
  %v5563 = vadd.f32 %v5543, %v5561
  %v5564 = vlaneseq
  %v5565 = vshrl.u32 %v5564, 7
  %v5566 = vsub.s32 6, %v5565
  %v5567 = vrot.slane %v5443, %v5566
  %v5568 = vmul.f32 %v5525, %v5567
  %v5569 = vmul.f32 %v5530, %v5567
  %v5572 = vrot.slane %v5568, 1
  %v5573 = vsel %vm5474, %v5569, %v5572
  %v5575 = vadd.f32 %v5563, %v5573
  %v5576 = vlaneseq
  %v5577 = vshrl.u32 %v5576, 7
  %v5578 = vsub.s32 7, %v5577
  %v5579 = vrot.slane %v5443, %v5578
  %v5580 = vmul.f32 %v5546, %v5579
  %v5581 = vmul.f32 %v5550, %v5579
  %v5584 = vrot.slane %v5580, 1
  %v5585 = vsel %vm5474, %v5581, %v5584
  %v5587 = vadd.f32 %v5575, %v5585
  %5589 = vset.pattern.permute.xlu0 0
  %5590 = vperm.xlu0 %5589, %v5429
  %v5591 = vpop.permute.xlu0 %5590
  %5594 = vset.pattern.permute.xlu0 0
  %5595 = vperm.xlu0 %5594, %v5437
  %v5596 = vpop.permute.xlu0 %5595
  %v5598 = vlaneseq
  %v5599 = vshrl.u32 %v5598, 7
  %v5600 = vsub.s32 0, %v5599
  %v5601 = vrot.slane %v5444, %v5600
  %v5602 = vmul.f32 %v5591, %v5601
  %v5603 = vmul.f32 %v5596, %v5601
  %v5606 = vrot.slane %v5603, 7
  %v5607 = vsel %vm5474, %v5606, %v5602
  %v5609 = vadd.f32 %v5587, %v5607
  %5610 = vset.pattern.permute.xlu0 1
  %5611 = vperm.xlu0 %5610, %v5429
  %v5612 = vpop.permute.xlu0 %5611
  %5614 = vset.pattern.permute.xlu0 1
  %5615 = vperm.xlu0 %5614, %v5437
  %v5616 = vpop.permute.xlu0 %5615
  %v5618 = vlaneseq
  %v5619 = vshrl.u32 %v5618, 7
  %v5620 = vsub.s32 1, %v5619
  %v5621 = vrot.slane %v5444, %v5620
  %v5622 = vmul.f32 %v5612, %v5621
  %v5623 = vmul.f32 %v5616, %v5621
  %v5626 = vrot.slane %v5623, 7
  %v5627 = vsel %vm5474, %v5626, %v5622
  %v5629 = vadd.f32 %v5609, %v5627
  %v5630 = vlaneseq
  %v5631 = vshrl.u32 %v5630, 7
  %v5632 = vsub.s32 2, %v5631
  %v5633 = vrot.slane %v5444, %v5632
  %v5634 = vmul.f32 %v5591, %v5633
  %v5635 = vmul.f32 %v5596, %v5633
  %v5638 = vrot.slane %v5634, 1
  %v5639 = vsel %vm5474, %v5635, %v5638
  %v5641 = vadd.f32 %v5629, %v5639
  %v5642 = vlaneseq
  %v5643 = vshrl.u32 %v5642, 7
  %v5644 = vsub.s32 3, %v5643
  %v5645 = vrot.slane %v5444, %v5644
  %v5646 = vmul.f32 %v5612, %v5645
  %v5647 = vmul.f32 %v5616, %v5645
  %v5650 = vrot.slane %v5646, 1
  %v5651 = vsel %vm5474, %v5647, %v5650
  %v5653 = vadd.f32 %v5641, %v5651
  %5655 = vset.pattern.permute.xlu0 0
  %5656 = vperm.xlu0 %5655, %v5430
  %v5657 = vpop.permute.xlu0 %5656
  %5660 = vset.pattern.permute.xlu0 0
  %5661 = vperm.xlu0 %5660, %v5438
  %v5662 = vpop.permute.xlu0 %5661
  %v5664 = vlaneseq
  %v5665 = vshrl.u32 %v5664, 7
  %v5666 = vsub.s32 4, %v5665
  %v5667 = vrot.slane %v5444, %v5666
  %v5668 = vmul.f32 %v5657, %v5667
  %v5669 = vmul.f32 %v5662, %v5667
  %v5672 = vrot.slane %v5669, 7
  %v5673 = vsel %vm5474, %v5672, %v5668
  %v5675 = vadd.f32 %v5653, %v5673
  %5676 = vset.pattern.permute.xlu0 1
  %5677 = vperm.xlu0 %5676, %v5430
  %v5678 = vpop.permute.xlu0 %5677
  %5680 = vset.pattern.permute.xlu0 1
  %5681 = vperm.xlu0 %5680, %v5438
  %v5682 = vpop.permute.xlu0 %5681
  %v5684 = vlaneseq
  %v5685 = vshrl.u32 %v5684, 7
  %v5686 = vsub.s32 5, %v5685
  %v5687 = vrot.slane %v5444, %v5686
  %v5688 = vmul.f32 %v5678, %v5687
  %v5689 = vmul.f32 %v5682, %v5687
  %v5692 = vrot.slane %v5689, 7
  %v5693 = vsel %vm5474, %v5692, %v5688
  %v5695 = vadd.f32 %v5675, %v5693
  %v5696 = vlaneseq
  %v5697 = vshrl.u32 %v5696, 7
  %v5698 = vsub.s32 6, %v5697
  %v5699 = vrot.slane %v5444, %v5698
  %v5700 = vmul.f32 %v5657, %v5699
  %v5701 = vmul.f32 %v5662, %v5699
  %v5704 = vrot.slane %v5700, 1
  %v5705 = vsel %vm5474, %v5701, %v5704
  %v5707 = vadd.f32 %v5695, %v5705
  %v5708 = vlaneseq
  %v5709 = vshrl.u32 %v5708, 7
  %v5710 = vsub.s32 7, %v5709
  %v5711 = vrot.slane %v5444, %v5710
  %v5712 = vmul.f32 %v5678, %v5711
  %v5713 = vmul.f32 %v5682, %v5711
  %v5716 = vrot.slane %v5712, 1
  %v5717 = vsel %vm5474, %v5713, %v5716
  %v5719 = vadd.f32 %v5707, %v5717
  %5721 = vset.pattern.permute.xlu0 0
  %5722 = vperm.xlu0 %5721, %v5431
  %v5723 = vpop.permute.xlu0 %5722
  %5726 = vset.pattern.permute.xlu0 0
  %5727 = vperm.xlu0 %5726, %v5439
  %v5728 = vpop.permute.xlu0 %5727
  %v5730 = vlaneseq
  %v5731 = vshrl.u32 %v5730, 7
  %v5732 = vsub.s32 0, %v5731
  %v5733 = vrot.slane %v5445, %v5732
  %v5734 = vmul.f32 %v5723, %v5733
  %v5735 = vmul.f32 %v5728, %v5733
  %v5738 = vrot.slane %v5735, 7
  %v5739 = vsel %vm5474, %v5738, %v5734
  %v5741 = vadd.f32 %v5719, %v5739
  %5742 = vset.pattern.permute.xlu0 1
  %5743 = vperm.xlu0 %5742, %v5431
  %v5744 = vpop.permute.xlu0 %5743
  %5746 = vset.pattern.permute.xlu0 1
  %5747 = vperm.xlu0 %5746, %v5439
  %v5748 = vpop.permute.xlu0 %5747
  %v5750 = vlaneseq
  %v5751 = vshrl.u32 %v5750, 7
  %v5752 = vsub.s32 1, %v5751
  %v5753 = vrot.slane %v5445, %v5752
  %v5754 = vmul.f32 %v5744, %v5753
  %v5755 = vmul.f32 %v5748, %v5753
  %v5758 = vrot.slane %v5755, 7
  %v5759 = vsel %vm5474, %v5758, %v5754
  %v5761 = vadd.f32 %v5741, %v5759
  %v5762 = vlaneseq
  %v5763 = vshrl.u32 %v5762, 7
  %v5764 = vsub.s32 2, %v5763
  %v5765 = vrot.slane %v5445, %v5764
  %v5766 = vmul.f32 %v5723, %v5765
  %v5767 = vmul.f32 %v5728, %v5765
  %v5770 = vrot.slane %v5766, 1
  %v5771 = vsel %vm5474, %v5767, %v5770
  %v5773 = vadd.f32 %v5761, %v5771
  %v5774 = vlaneseq
  %v5775 = vshrl.u32 %v5774, 7
  %v5776 = vsub.s32 3, %v5775
  %v5777 = vrot.slane %v5445, %v5776
  %v5778 = vmul.f32 %v5744, %v5777
  %v5779 = vmul.f32 %v5748, %v5777
  %v5782 = vrot.slane %v5778, 1
  %v5783 = vsel %vm5474, %v5779, %v5782
  %v5785 = vadd.f32 %v5773, %v5783
  %5787 = vset.pattern.permute.xlu0 0
  %5788 = vperm.xlu0 %5787, %v5432
  %v5789 = vpop.permute.xlu0 %5788
  %5792 = vset.pattern.permute.xlu0 0
  %5793 = vperm.xlu0 %5792, %v5440
  %v5794 = vpop.permute.xlu0 %5793
  %v5796 = vlaneseq
  %v5797 = vshrl.u32 %v5796, 7
  %v5798 = vsub.s32 4, %v5797
  %v5799 = vrot.slane %v5445, %v5798
  %v5800 = vmul.f32 %v5789, %v5799
  %v5801 = vmul.f32 %v5794, %v5799
  %v5804 = vrot.slane %v5801, 7
  %v5805 = vsel %vm5474, %v5804, %v5800
  %v5807 = vadd.f32 %v5785, %v5805
  %5808 = vset.pattern.permute.xlu0 1
  %5809 = vperm.xlu0 %5808, %v5432
  %v5810 = vpop.permute.xlu0 %5809
  %5812 = vset.pattern.permute.xlu0 1
  %5813 = vperm.xlu0 %5812, %v5440
  %v5814 = vpop.permute.xlu0 %5813
  %v5816 = vlaneseq
  %v5817 = vshrl.u32 %v5816, 7
  %v5818 = vsub.s32 5, %v5817
  %v5819 = vrot.slane %v5445, %v5818
  %v5820 = vmul.f32 %v5810, %v5819
  %v5821 = vmul.f32 %v5814, %v5819
  %v5824 = vrot.slane %v5821, 7
  %v5825 = vsel %vm5474, %v5824, %v5820
  %v5827 = vadd.f32 %v5807, %v5825
  %v5828 = vlaneseq
  %v5829 = vshrl.u32 %v5828, 7
  %v5830 = vsub.s32 6, %v5829
  %v5831 = vrot.slane %v5445, %v5830
  %v5832 = vmul.f32 %v5789, %v5831
  %v5833 = vmul.f32 %v5794, %v5831
  %v5836 = vrot.slane %v5832, 1
  %v5837 = vsel %vm5474, %v5833, %v5836
  %v5839 = vadd.f32 %v5827, %v5837
  %v5840 = vlaneseq
  %v5841 = vshrl.u32 %v5840, 7
  %v5842 = vsub.s32 7, %v5841
  %v5843 = vrot.slane %v5445, %v5842
  %v5844 = vmul.f32 %v5810, %v5843
  %v5845 = vmul.f32 %v5814, %v5843
  %v5848 = vrot.slane %v5844, 1
  %v5849 = vsel %vm5474, %v5845, %v5848
  %v5851 = vadd.f32 %v5839, %v5849
  %5853 = vset.pattern.permute.xlu0 0
  %5854 = vperm.xlu0 %5853, %v5433
  %v5855 = vpop.permute.xlu0 %5854
  %5858 = vset.pattern.permute.xlu0 0
  %5859 = vperm.xlu0 %5858, %v5441
  %v5860 = vpop.permute.xlu0 %5859
  %v5862 = vlaneseq
  %v5863 = vshrl.u32 %v5862, 7
  %v5864 = vsub.s32 0, %v5863
  %v5865 = vrot.slane %v5446, %v5864
  %v5866 = vmul.f32 %v5855, %v5865
  %v5867 = vmul.f32 %v5860, %v5865
  %v5870 = vrot.slane %v5867, 7
  %v5871 = vsel %vm5474, %v5870, %v5866
  %v5873 = vadd.f32 %v5851, %v5871
  %5874 = vset.pattern.permute.xlu0 1
  %5875 = vperm.xlu0 %5874, %v5433
  %v5876 = vpop.permute.xlu0 %5875
  %5878 = vset.pattern.permute.xlu0 1
  %5879 = vperm.xlu0 %5878, %v5441
  %v5880 = vpop.permute.xlu0 %5879
  %v5882 = vlaneseq
  %v5883 = vshrl.u32 %v5882, 7
  %v5884 = vsub.s32 1, %v5883
  %v5885 = vrot.slane %v5446, %v5884
  %v5886 = vmul.f32 %v5876, %v5885
  %v5887 = vmul.f32 %v5880, %v5885
  %v5890 = vrot.slane %v5887, 7
  %v5891 = vsel %vm5474, %v5890, %v5886
  %v5893 = vadd.f32 %v5873, %v5891
  %v5894 = vlaneseq
  %v5895 = vshrl.u32 %v5894, 7
  %v5896 = vsub.s32 2, %v5895
  %v5897 = vrot.slane %v5446, %v5896
  %v5898 = vmul.f32 %v5855, %v5897
  %v5899 = vmul.f32 %v5860, %v5897
  %v5902 = vrot.slane %v5898, 1
  %v5903 = vsel %vm5474, %v5899, %v5902
  %v5905 = vadd.f32 %v5893, %v5903
  %v5906 = vlaneseq
  %v5907 = vshrl.u32 %v5906, 7
  %v5908 = vsub.s32 3, %v5907
  %v5909 = vrot.slane %v5446, %v5908
  %v5910 = vmul.f32 %v5876, %v5909
  %v5911 = vmul.f32 %v5880, %v5909
  %v5914 = vrot.slane %v5910, 1
  %v5915 = vsel %vm5474, %v5911, %v5914
  %v5917 = vadd.f32 %v5905, %v5915
  %5919 = vset.pattern.permute.xlu0 0
  %5920 = vperm.xlu0 %5919, %v5434
  %v5921 = vpop.permute.xlu0 %5920
  %5924 = vset.pattern.permute.xlu0 0
  %5925 = vperm.xlu0 %5924, %v5442
  %v5926 = vpop.permute.xlu0 %5925
  %v5928 = vlaneseq
  %v5929 = vshrl.u32 %v5928, 7
  %v5930 = vsub.s32 4, %v5929
  %v5931 = vrot.slane %v5446, %v5930
  %v5932 = vmul.f32 %v5921, %v5931
  %v5933 = vmul.f32 %v5926, %v5931
  %v5936 = vrot.slane %v5933, 7
  %v5937 = vsel %vm5474, %v5936, %v5932
  %v5939 = vadd.f32 %v5917, %v5937
  %5940 = vset.pattern.permute.xlu0 1
  %5941 = vperm.xlu0 %5940, %v5434
  %v5942 = vpop.permute.xlu0 %5941
  %5944 = vset.pattern.permute.xlu0 1
  %5945 = vperm.xlu0 %5944, %v5442
  %v5946 = vpop.permute.xlu0 %5945
  %v5948 = vlaneseq
  %v5949 = vshrl.u32 %v5948, 7
  %v5950 = vsub.s32 5, %v5949
  %v5951 = vrot.slane %v5446, %v5950
  %v5952 = vmul.f32 %v5942, %v5951
  %v5953 = vmul.f32 %v5946, %v5951
  %v5956 = vrot.slane %v5953, 7
  %v5957 = vsel %vm5474, %v5956, %v5952
  %v5959 = vadd.f32 %v5939, %v5957
  %v5960 = vlaneseq
  %v5961 = vshrl.u32 %v5960, 7
  %v5962 = vsub.s32 6, %v5961
  %v5963 = vrot.slane %v5446, %v5962
  %v5964 = vmul.f32 %v5921, %v5963
  %v5965 = vmul.f32 %v5926, %v5963
  %v5968 = vrot.slane %v5964, 1
  %v5969 = vsel %vm5474, %v5965, %v5968
  %v5971 = vadd.f32 %v5959, %v5969
  %v5972 = vlaneseq
  %v5973 = vshrl.u32 %v5972, 7
  %v5974 = vsub.s32 7, %v5973
  %v5975 = vrot.slane %v5446, %v5974
  %v5976 = vmul.f32 %v5942, %v5975
  %v5977 = vmul.f32 %v5946, %v5975
  %v5980 = vrot.slane %v5976, 1
  %v5981 = vsel %vm5474, %v5977, %v5980
  %v5983 = vadd.f32 %v5971, %v5981
  %v5984 = vmax.f32 %v5983, 0.0
  %5986 = vset.pattern.permute.xlu0 0
  %5987 = vperm.xlu0 %5986, %v5984
  %v5988 = vpop.permute.xlu0 %5987
  %v5990 = vmul.f32 %v5988, %v5468
  %v5991 = vadd.f32 %v5454, %v5990
  %5992 = vset.pattern.permute.xlu0 1
  %5993 = vperm.xlu0 %5992, %v5984
  %v5994 = vpop.permute.xlu0 %5993
  %v5996 = vmul.f32 %v5994, %v5489
  %v5997 = vadd.f32 %v5991, %v5996
  %5998 = vset.pattern.permute.xlu0 2
  %5999 = vperm.xlu0 %5998, %v5984
  %v6000 = vpop.permute.xlu0 %5999
  %v6002 = vmul.f32 %v6000, %v5501
  %v6003 = vadd.f32 %v5997, %v6002
  %6004 = vset.pattern.permute.xlu0 3
  %6005 = vperm.xlu0 %6004, %v5984
  %v6006 = vpop.permute.xlu0 %6005
  %v6008 = vmul.f32 %v6006, %v5513
  %v6009 = vadd.f32 %v6003, %v6008
  %6010 = vset.pattern.permute.xlu0 4
  %6011 = vperm.xlu0 %6010, %v5984
  %v6012 = vpop.permute.xlu0 %6011
  %v6014 = vmul.f32 %v6012, %v5535
  %v6015 = vadd.f32 %v6009, %v6014
  %6016 = vset.pattern.permute.xlu0 5
  %6017 = vperm.xlu0 %6016, %v5984
  %v6018 = vpop.permute.xlu0 %6017
  %v6020 = vmul.f32 %v6018, %v5555
  %v6021 = vadd.f32 %v6015, %v6020
  %6022 = vset.pattern.permute.xlu0 6
  %6023 = vperm.xlu0 %6022, %v5984
  %v6024 = vpop.permute.xlu0 %6023
  %v6026 = vmul.f32 %v6024, %v5567
  %v6027 = vadd.f32 %v6021, %v6026
  %6028 = vset.pattern.permute.xlu0 7
  %6029 = vperm.xlu0 %6028, %v5984
  %v6030 = vpop.permute.xlu0 %6029
  %v6032 = vmul.f32 %v6030, %v5579
  %v6033 = vadd.f32 %v6027, %v6032
  %6034 = vset.pattern.permute.xlu0 8
  %6035 = vperm.xlu0 %6034, %v5984
  %v6036 = vpop.permute.xlu0 %6035
  %v6038 = vmul.f32 %v6036, %v5601
  %v6039 = vadd.f32 %v6033, %v6038
  %6040 = vset.pattern.permute.xlu0 9
  %6041 = vperm.xlu0 %6040, %v5984
  %v6042 = vpop.permute.xlu0 %6041
  %v6044 = vmul.f32 %v6042, %v5621
  %v6045 = vadd.f32 %v6039, %v6044
  %6046 = vset.pattern.permute.xlu0 10
  %6047 = vperm.xlu0 %6046, %v5984
  %v6048 = vpop.permute.xlu0 %6047
  %v6050 = vmul.f32 %v6048, %v5633
  %v6051 = vadd.f32 %v6045, %v6050
  %6052 = vset.pattern.permute.xlu0 11
  %6053 = vperm.xlu0 %6052, %v5984
  %v6054 = vpop.permute.xlu0 %6053
  %v6056 = vmul.f32 %v6054, %v5645
  %v6057 = vadd.f32 %v6051, %v6056
  %6058 = vset.pattern.permute.xlu0 12
  %6059 = vperm.xlu0 %6058, %v5984
  %v6060 = vpop.permute.xlu0 %6059
  %v6062 = vmul.f32 %v6060, %v5667
  %v6063 = vadd.f32 %v6057, %v6062
  %6064 = vset.pattern.permute.xlu0 13
  %6065 = vperm.xlu0 %6064, %v5984
  %v6066 = vpop.permute.xlu0 %6065
  %v6068 = vmul.f32 %v6066, %v5687
  %v6069 = vadd.f32 %v6063, %v6068
  %6070 = vset.pattern.permute.xlu0 14
  %6071 = vperm.xlu0 %6070, %v5984
  %v6072 = vpop.permute.xlu0 %6071
  %v6074 = vmul.f32 %v6072, %v5699
  %v6075 = vadd.f32 %v6069, %v6074
  %6076 = vset.pattern.permute.xlu0 15
  %6077 = vperm.xlu0 %6076, %v5984
  %v6078 = vpop.permute.xlu0 %6077
  %v6080 = vmul.f32 %v6078, %v5711
  %v6081 = vadd.f32 %v6075, %v6080
  %6082 = vset.pattern.permute.xlu0 16
  %6083 = vperm.xlu0 %6082, %v5984
  %v6084 = vpop.permute.xlu0 %6083
  %v6086 = vmul.f32 %v6084, %v5733
  %v6087 = vadd.f32 %v6081, %v6086
  %6088 = vset.pattern.permute.xlu0 17
  %6089 = vperm.xlu0 %6088, %v5984
  %v6090 = vpop.permute.xlu0 %6089
  %v6092 = vmul.f32 %v6090, %v5753
  %v6093 = vadd.f32 %v6087, %v6092
  %6094 = vset.pattern.permute.xlu0 18
  %6095 = vperm.xlu0 %6094, %v5984
  %v6096 = vpop.permute.xlu0 %6095
  %v6098 = vmul.f32 %v6096, %v5765
  %v6099 = vadd.f32 %v6093, %v6098
  %6100 = vset.pattern.permute.xlu0 19
  %6101 = vperm.xlu0 %6100, %v5984
  %v6102 = vpop.permute.xlu0 %6101
  %v6104 = vmul.f32 %v6102, %v5777
  %v6105 = vadd.f32 %v6099, %v6104
  %6106 = vset.pattern.permute.xlu0 20
  %6107 = vperm.xlu0 %6106, %v5984
  %v6108 = vpop.permute.xlu0 %6107
  %v6110 = vmul.f32 %v6108, %v5799
  %v6111 = vadd.f32 %v6105, %v6110
  %6112 = vset.pattern.permute.xlu0 21
  %6113 = vperm.xlu0 %6112, %v5984
  %v6114 = vpop.permute.xlu0 %6113
  %v6116 = vmul.f32 %v6114, %v5819
  %v6117 = vadd.f32 %v6111, %v6116
  %6118 = vset.pattern.permute.xlu0 22
  %6119 = vperm.xlu0 %6118, %v5984
  %v6120 = vpop.permute.xlu0 %6119
  %v6122 = vmul.f32 %v6120, %v5831
  %v6123 = vadd.f32 %v6117, %v6122
  %6124 = vset.pattern.permute.xlu0 23
  %6125 = vperm.xlu0 %6124, %v5984
  %v6126 = vpop.permute.xlu0 %6125
  %v6128 = vmul.f32 %v6126, %v5843
  %v6129 = vadd.f32 %v6123, %v6128
  %6130 = vset.pattern.permute.xlu0 24
  %6131 = vperm.xlu0 %6130, %v5984
  %v6132 = vpop.permute.xlu0 %6131
  %v6134 = vmul.f32 %v6132, %v5865
  %v6135 = vadd.f32 %v6129, %v6134
  %6136 = vset.pattern.permute.xlu0 25
  %6137 = vperm.xlu0 %6136, %v5984
  %v6138 = vpop.permute.xlu0 %6137
  %v6140 = vmul.f32 %v6138, %v5885
  %v6141 = vadd.f32 %v6135, %v6140
  %6142 = vset.pattern.permute.xlu0 26
  %6143 = vperm.xlu0 %6142, %v5984
  %v6144 = vpop.permute.xlu0 %6143
  %v6146 = vmul.f32 %v6144, %v5897
  %v6147 = vadd.f32 %v6141, %v6146
  %6148 = vset.pattern.permute.xlu0 27
  %6149 = vperm.xlu0 %6148, %v5984
  %v6150 = vpop.permute.xlu0 %6149
  %v6152 = vmul.f32 %v6150, %v5909
  %v6153 = vadd.f32 %v6147, %v6152
  %6154 = vset.pattern.permute.xlu0 28
  %6155 = vperm.xlu0 %6154, %v5984
  %v6156 = vpop.permute.xlu0 %6155
  %v6158 = vmul.f32 %v6156, %v5931
  %v6159 = vadd.f32 %v6153, %v6158
  %6160 = vset.pattern.permute.xlu0 29
  %6161 = vperm.xlu0 %6160, %v5984
  %v6162 = vpop.permute.xlu0 %6161
  %v6164 = vmul.f32 %v6162, %v5951
  %v6165 = vadd.f32 %v6159, %v6164
  %6166 = vset.pattern.permute.xlu0 30
  %6167 = vperm.xlu0 %6166, %v5984
  %v6168 = vpop.permute.xlu0 %6167
  %v6170 = vmul.f32 %v6168, %v5963
  %v6171 = vadd.f32 %v6165, %v6170
  %6172 = vset.pattern.permute.xlu0 31
  %6173 = vperm.xlu0 %6172, %v5984
  %v6174 = vpop.permute.xlu0 %6173
  %v6176 = vmul.f32 %v6174, %v5975
  %v6177 = vadd.f32 %v6171, %v6176
  %v6178 = vmax.f32 %v6177, 0.0
  %6180 = vrot.lane.b32.xlu0 %v5468, 112
  %v6181 = vpop.permute.xlu0 %6180
  %v6183 = vmul.f32 %v6178, %v6181
  %6185 = vrot.lane.b32.xlu0 %v6183, 16
  %v6186 = vpop.permute.xlu0 %6185
  %v6188 = vadd.f32 %v5454, %v6186
  %6190 = vrot.lane.b32.xlu0 %v5489, 113
  %v6191 = vpop.permute.xlu0 %6190
  %v6193 = vmul.f32 %v6178, %v6191
  %6195 = vrot.lane.b32.xlu0 %v6193, 15
  %v6196 = vpop.permute.xlu0 %6195
  %v6198 = vadd.f32 %v6188, %v6196
  %6200 = vrot.lane.b32.xlu0 %v5501, 114
  %v6201 = vpop.permute.xlu0 %6200
  %v6203 = vmul.f32 %v6178, %v6201
  %6205 = vrot.lane.b32.xlu0 %v6203, 14
  %v6206 = vpop.permute.xlu0 %6205
  %v6208 = vadd.f32 %v6198, %v6206
  %6210 = vrot.lane.b32.xlu0 %v5513, 115
  %v6211 = vpop.permute.xlu0 %6210
  %v6213 = vmul.f32 %v6178, %v6211
  %6215 = vrot.lane.b32.xlu0 %v6213, 13
  %v6216 = vpop.permute.xlu0 %6215
  %v6218 = vadd.f32 %v6208, %v6216
  %6220 = vrot.lane.b32.xlu0 %v5535, 116
  %v6221 = vpop.permute.xlu0 %6220
  %v6223 = vmul.f32 %v6178, %v6221
  %6225 = vrot.lane.b32.xlu0 %v6223, 12
  %v6226 = vpop.permute.xlu0 %6225
  %v6228 = vadd.f32 %v6218, %v6226
  %6230 = vrot.lane.b32.xlu0 %v5555, 117
  %v6231 = vpop.permute.xlu0 %6230
  %v6233 = vmul.f32 %v6178, %v6231
  %6235 = vrot.lane.b32.xlu0 %v6233, 11
  %v6236 = vpop.permute.xlu0 %6235
  %v6238 = vadd.f32 %v6228, %v6236
  %6240 = vrot.lane.b32.xlu0 %v5567, 118
  %v6241 = vpop.permute.xlu0 %6240
  %v6243 = vmul.f32 %v6178, %v6241
  %6245 = vrot.lane.b32.xlu0 %v6243, 10
  %v6246 = vpop.permute.xlu0 %6245
  %v6248 = vadd.f32 %v6238, %v6246
  %6250 = vrot.lane.b32.xlu0 %v5579, 119
  %v6251 = vpop.permute.xlu0 %6250
  %v6253 = vmul.f32 %v6178, %v6251
  %6255 = vrot.lane.b32.xlu0 %v6253, 9
  %v6256 = vpop.permute.xlu0 %6255
  %v6258 = vadd.f32 %v6248, %v6256
  %6260 = vrot.lane.b32.xlu0 %v5601, 120
  %v6261 = vpop.permute.xlu0 %6260
  %v6263 = vmul.f32 %v6178, %v6261
  %6265 = vrot.lane.b32.xlu0 %v6263, 8
  %v6266 = vpop.permute.xlu0 %6265
  %v6268 = vadd.f32 %v6258, %v6266
  %6270 = vrot.lane.b32.xlu0 %v5621, 121
  %v6271 = vpop.permute.xlu0 %6270
  %v6273 = vmul.f32 %v6178, %v6271
  %6275 = vrot.lane.b32.xlu0 %v6273, 7
  %v6276 = vpop.permute.xlu0 %6275
  %v6278 = vadd.f32 %v6268, %v6276
  %6280 = vrot.lane.b32.xlu0 %v5633, 122
  %v6281 = vpop.permute.xlu0 %6280
  %v6283 = vmul.f32 %v6178, %v6281
  %6285 = vrot.lane.b32.xlu0 %v6283, 6
  %v6286 = vpop.permute.xlu0 %6285
  %v6288 = vadd.f32 %v6278, %v6286
  %6290 = vrot.lane.b32.xlu0 %v5645, 123
  %v6291 = vpop.permute.xlu0 %6290
  %v6293 = vmul.f32 %v6178, %v6291
  %6295 = vrot.lane.b32.xlu0 %v6293, 5
  %v6296 = vpop.permute.xlu0 %6295
  %v6298 = vadd.f32 %v6288, %v6296
  %6300 = vrot.lane.b32.xlu0 %v5667, 124
  %v6301 = vpop.permute.xlu0 %6300
  %v6303 = vmul.f32 %v6178, %v6301
  %6305 = vrot.lane.b32.xlu0 %v6303, 4
  %v6306 = vpop.permute.xlu0 %6305
  %v6308 = vadd.f32 %v6298, %v6306
  %6310 = vrot.lane.b32.xlu0 %v5687, 125
  %v6311 = vpop.permute.xlu0 %6310
  %v6313 = vmul.f32 %v6178, %v6311
  %6315 = vrot.lane.b32.xlu0 %v6313, 3
  %v6316 = vpop.permute.xlu0 %6315
  %v6318 = vadd.f32 %v6308, %v6316
  %6320 = vrot.lane.b32.xlu0 %v5699, 126
  %v6321 = vpop.permute.xlu0 %6320
  %v6323 = vmul.f32 %v6178, %v6321
  %6325 = vrot.lane.b32.xlu0 %v6323, 2
  %v6326 = vpop.permute.xlu0 %6325
  %v6328 = vadd.f32 %v6318, %v6326
  %6330 = vrot.lane.b32.xlu0 %v5711, 127
  %v6331 = vpop.permute.xlu0 %6330
  %v6333 = vmul.f32 %v6178, %v6331
  %6335 = vrot.lane.b32.xlu0 %v6333, 1
  %v6336 = vpop.permute.xlu0 %6335
  %v6338 = vadd.f32 %v6328, %v6336
  %6340 = vrot.lane.b32.xlu0 %v6338, 80
  %v6341 = vpop.permute.xlu0 %6340
  %vm6343 = vcmask 1024
  %6344 = vst.msk [vmem:[%s6] sm:$0x3] %vm6343, %v6341
  // Predicated region
  $region26: #{net_forward.1} parent=0 // pred_check
    _
  $region27: #{net_forward.1} parent=0 // pred_check_branch
    %6346 = sbr.rel (0) target = $region29
  $region28: #{net_forward.1} parent=0 // pred_region
    _
  $region29: #{net_forward.1} parent=0 // pred_fallthru
    _
  // Predicated region
  $region30: #{net_forward.1} parent=0 // pred_check
    _
  $region31: #{net_forward.1} parent=0 // pred_check_branch
    %6348 = sbr.rel (0) target = $region33
  $region32: #{net_forward.1} parent=0 // pred_region
    _
  $region33: #{net_forward.1} parent=0 // pred_fallthru
    _

</llo_original>
